<compile_context>
chip_gen: v7x
topology: tpu7x:2x2x1
jax: 0.10.0
libtpu: 0.0.40
codegen_flags: <defaults>
</compile_context>

<pallas_src>
import jax
import jax.numpy as jnp
from jax.experimental import pallas as pl
from jax.experimental.pallas import tpu as pltpu

# ----------------------------- model hyper-params -----------------------------
NODE_NUM = 16
NODE_DIM = 4                      # forced: network_structure_e[0] = node_dim
NUM_FILTERS = 2
NSE = [NODE_DIM, 32, 32]          # network_structure_e
NSL = [NODE_NUM, 32, 32]          # network_structure_l (l[0] == node_num == LSTM input size)
NSD = [16, 16]                    # network_structure_d
LATENT_DIM = 32
LATENT_DIM_L = 16
VEC_DIM = 256


def _const_map(ndim):
    """Index map that always returns block (0,...,0) — whole array resident."""
    return lambda i: (0,) * ndim


# =========================== in-kernel building blocks =========================
def _gcn(a2, x, wb, relu):
    """MultiGraphCNN on one batch element.

    a2: (K*N, N) stacked filters, x: (N, Fin), wb["w"]: (K*Fin, Fout).
    One stacked (K*N,N)@(N,Fin) MXU push, then K small (N,Fin)@(Fin,Fout)
    matmuls accumulated in vregs (K=2, statically unrolled).
    """
    w = wb["w"][...]
    b = wb["b"][0]
    n = x.shape[0]
    fin = x.shape[1]
    k_filters = a2.shape[0] // n
    ax = jnp.dot(a2, x, preferred_element_type=jnp.float32)        # (K*N, Fin)
    acc = jnp.zeros((n, w.shape[1]), jnp.float32)
    for k in range(k_filters):
        acc = acc + jnp.dot(ax[k * n:(k + 1) * n],
                            w[k * fin:(k + 1) * fin],
                            preferred_element_type=jnp.float32)
    acc = acc + b
    if relu:
        acc = jnp.maximum(acc, 0.0)
    return acc


def _conv_block(a2, x, p):
    y = _gcn(a2, x, p["c1"], True)
    y = _gcn(a2, y, p["c2"], True)
    y = _gcn(a2, y, p["c3"], False)
    s = _gcn(a2, x, p["sc"], False)
    return jnp.maximum(y + s, 0.0)          # residual add + relu fused in-kernel


def _identity_block(a2, x, p):
    y = _gcn(a2, x, p["c1"], True)
    y = _gcn(a2, y, p["c2"], True)
    y = _gcn(a2, y, p["c3"], False)
    return jnp.maximum(y + x, 0.0)


# =============================== fused kernels =================================
def graph_encoder(X, A2, params):
    """All encoder graph blocks in one kernel, grid over batch ("parallel")."""
    B, N, Din = X.shape
    KN = A2.shape[1]
    Fout = NSE[-1]
    leaves, treedef = jax.tree_util.tree_flatten(params)
    n_p = len(leaves)

    def kernel(x_ref, a_ref, *rest):
        p = jax.tree_util.tree_unflatten(treedef, list(rest[:n_p]))
        o_ref = rest[n_p]
        a2 = a_ref[0]
        g = x_ref[0]
        for blk in range(len(p["conv"])):
            g = _conv_block(a2, g, p["conv"][blk])
            g = _identity_block(a2, g, p["id"][blk])
        o_ref[0] = g.astype(o_ref.dtype)

    in_specs = [pl.BlockSpec((1, N, Din), lambda i: (i, 0, 0)),
                pl.BlockSpec((1, KN, N), lambda i: (i, 0, 0))]
    in_specs += [pl.BlockSpec(l.shape, _const_map(l.ndim)) for l in leaves]
    return pl.pallas_call(
        kernel,
        out_shape=jax.ShapeDtypeStruct((B, N, Fout), jnp.float32),
        grid=(B,),
        in_specs=in_specs,
        out_specs=pl.BlockSpec((1, N, Fout), lambda i: (i, 0, 0)),
        compiler_params=pltpu.CompilerParams(dimension_semantics=("parallel",)),
    )(X, A2, *leaves)


def lstm_fusion(x_lstm, g_flat, params):
    """Both LSTM layers + Linear_1/2/3 fused; whole batch in one grid step.

    The per-layer sequence output stays in registers (never written to HBM);
    the torch.cat is replaced by ge @ W3[:L] + le @ W3[L:].  Output (B, 256)
    is lane-dense (2 x 128 lanes).
    """
    B, T, I0 = x_lstm.shape
    GF = g_flat.shape[1]
    OUT = NODE_NUM * NSD[0]
    leaves, treedef = jax.tree_util.tree_flatten(params)
    n_p = len(leaves)

    def kernel(xl_ref, gf_ref, *rest):
        p = jax.tree_util.tree_unflatten(treedef, list(rest[:n_p]))
        o_ref = rest[n_p]

        def lstm_layer(seq, wih_ref, whh_ref, b_ref):
            wih = wih_ref[...]                  # (I, 4H)
            whh = whh_ref[...]                  # (H, 4H)
            bias = b_ref[0]                     # (4H,) = b_ih + b_hh
            H = whh.shape[0]
            h = jnp.zeros((B, H), jnp.float32)
            c = jnp.zeros((B, H), jnp.float32)
            outs = []
            for x_t in seq:                     # T is tiny & static -> unrolled
                gates = (jnp.dot(x_t, wih, preferred_element_type=jnp.float32)
                         + jnp.dot(h, whh, preferred_element_type=jnp.float32)
                         + bias)
                i_g = jax.nn.sigmoid(gates[:, 0 * H:1 * H])
                f_g = jax.nn.sigmoid(gates[:, 1 * H:2 * H])
                g_g = jnp.tanh(gates[:, 2 * H:3 * H])
                o_g = jax.nn.sigmoid(gates[:, 3 * H:4 * H])
                c = f_g * c + i_g * g_g
                h = o_g * jnp.tanh(c)
                outs.append(h)
            return outs, h

        seq = [xl_ref[:, t, :] for t in range(T)]
        hT = None
        for layer in p["lstm"]:
            seq, hT = lstm_layer(seq, *layer)

        ge = jnp.dot(gf_ref[...], p["lin1"]["w"][...],
                     preferred_element_type=jnp.float32) + p["lin1"]["b"][0]
        ge = jnp.maximum(ge, 0.0)
        le = jnp.dot(hT, p["lin2"]["w"][...],
                     preferred_element_type=jnp.float32) + p["lin2"]["b"][0]
        le = jnp.maximum(le, 0.0)
        w3 = p["lin3"]["w"][...]                # (LATENT_DIM + LATENT_DIM_L, OUT)
        dec = (jnp.dot(ge, w3[:LATENT_DIM], preferred_element_type=jnp.float32)
               + jnp.dot(le, w3[LATENT_DIM:], preferred_element_type=jnp.float32)
               + p["lin3"]["b"][0])
        dec = jnp.maximum(dec, 0.0)
        o_ref[...] = dec.astype(o_ref.dtype)

    in_specs = [pl.BlockSpec((B, T, I0), _const_map(3)),
                pl.BlockSpec((B, GF), _const_map(2))]
    in_specs += [pl.BlockSpec(l.shape, _const_map(l.ndim)) for l in leaves]
    return pl.pallas_call(
        kernel,
        out_shape=jax.ShapeDtypeStruct((B, OUT), jnp.float32),
        grid=(1,),
        in_specs=in_specs,
        out_specs=pl.BlockSpec((B, OUT), _const_map(2)),
        compiler_params=pltpu.CompilerParams(dimension_semantics=("arbitrary",)),
    )(x_lstm, g_flat, *leaves)


def graph_decoder(dec_in, A2, params):
    """Decoder graph blocks + 2-layer decoder MLP, grid over batch ("parallel")."""
    B, N, Din = dec_in.shape
    KN = A2.shape[1]
    leaves, treedef = jax.tree_util.tree_flatten(params)
    n_p = len(leaves)

    def kernel(d_ref, a_ref, *rest):
        p = jax.tree_util.tree_unflatten(treedef, list(rest[:n_p]))
        o_ref = rest[n_p]
        a2 = a_ref[0]
        g = d_ref[0]
        for blk in range(len(p["conv"])):
            g = _conv_block(a2, g, p["conv"][blk])
            g = _identity_block(a2, g, p["id"][blk])
        y = jnp.dot(g, p["mlp1"]["w"][...],
                    preferred_element_type=jnp.float32) + p["mlp1"]["b"][0]
        y = jnp.maximum(y, 0.0)
        y = jnp.dot(y, p["mlp2"]["w"][...],
                    preferred_element_type=jnp.float32) + p["mlp2"]["b"][0]
        o_ref[0] = y.astype(o_ref.dtype)

    in_specs = [pl.BlockSpec((1, N, Din), lambda i: (i, 0, 0)),
                pl.BlockSpec((1, KN, N), lambda i: (i, 0, 0))]
    in_specs += [pl.BlockSpec(l.shape, _const_map(l.ndim)) for l in leaves]
    return pl.pallas_call(
        kernel,
        out_shape=jax.ShapeDtypeStruct((B, N, 1), jnp.float32),
        grid=(B,),
        in_specs=in_specs,
        out_specs=pl.BlockSpec((1, N, 1), lambda i: (i, 0, 0)),
        compiler_params=pltpu.CompilerParams(dimension_semantics=("parallel",)),
    )(dec_in, A2, *leaves)


# ================================== forward ====================================
def residual_graph_lstm_forward(params, X, A, vec=None):
    # TODO(synk): vec = self.vec_norm(vec) is computed-then-discarded when
    # use_three_branch=False; omitted here so `vec` is never transferred/used.
    del vec
    B = X.shape[0]
    K = A.shape[1]
    # Stack the K graph filters once: (B, K, N, N) -> (B, K*N, N)  (free XLA reshape).
    A2 = A.reshape(B, K * NODE_NUM, NODE_NUM)

    # ----- graph encoder (fused kernel 1) -----
    g = graph_encoder(X, A2, {"conv": params["enc_conv"], "id": params["enc_id"]})

    # ----- LSTM branch + fusion MLP (fused kernel 2) -----
    x_lstm = jnp.transpose(X, (0, 2, 1))                # (B, node_dim, node_num)
    g_flat = g.reshape(B, -1)                           # (B, N * e[-1])
    dec = lstm_fusion(x_lstm, g_flat,
                      {"lstm": params["lstm"], "lin1": params["lin1"],
                       "lin2": params["lin2"], "lin3": params["lin3"]})
    dec = dec.reshape(B, NODE_NUM, NSD[0])              # (B, N, d[0])

    # ----- graph decoder + decoder MLP (fused kernel 3) -----
    y = graph_decoder(dec, A2,
                      {"conv": params["dec_conv"], "id": params["dec_id"],
                       "mlp1": params["mlp1"], "mlp2": params["mlp2"]})
    return y                                            # (B, N, 1)


# ================================ param init ===================================
def _glorot(key, shape):
    scale = jnp.sqrt(2.0 / (shape[0] + shape[-1]))
    return (scale * jax.random.normal(key, shape)).astype(jnp.float32)


def _init_gcn(key, fin, fout, K):
    return {"w": _glorot(key, (K * fin, fout)),
            "b": jnp.zeros((1, fout), jnp.float32)}


def _init_conv_block(key, units, K):
    ks = jax.random.split(key, 4)
    return {"c1": _init_gcn(ks[0], units[0], units[1], K),
            "c2": _init_gcn(ks[1], units[1], units[2], K),
            "c3": _init_gcn(ks[2], units[2], units[3], K),
            "sc": _init_gcn(ks[3], units[0], units[3], K)}


def _init_identity_block(key, units, K):
    ks = jax.random.split(key, 3)
    return {"c1": _init_gcn(ks[0], units[0], units[1], K),
            "c2": _init_gcn(ks[1], units[1], units[2], K),
            "c3": _init_gcn(ks[2], units[2], units[3], K)}


def _init_dense(key, fin, fout):
    return {"w": _glorot(key, (fin, fout)),
            "b": jnp.zeros((1, fout), jnp.float32)}


def _init_lstm(key, I, H):
    k1, k2 = jax.random.split(key)
    wih = _glorot(k1, (I, 4 * H))
    whh = _glorot(k2, (H, 4 * H))
    b = jnp.zeros((1, 4 * H), jnp.float32)     # b_ih + b_hh combined
    return (wih, whh, b)


def init_params(key):
    keys = iter(jax.random.split(key, 64))
    p = {}
    enc_conv, enc_id = [], []
    for i in range(1, len(NSE)):
        cu = [NSE[i - 1], NSE[i] // 4, NSE[i] // 4, NSE[i]]
        iu = [NSE[i], NSE[i] // 4, NSE[i] // 4, NSE[i]]
        enc_conv.append(_init_conv_block(next(keys), cu, NUM_FILTERS))
        enc_id.append(_init_identity_block(next(keys), iu, NUM_FILTERS))
    p["enc_conv"], p["enc_id"] = enc_conv, enc_id

    p["lstm"] = [_init_lstm(next(keys), NSL[l - 1], NSL[l]) for l in range(1, len(NSL))]

    p["lin1"] = _init_dense(next(keys), NSE[-1] * NODE_NUM, LATENT_DIM)
    p["lin2"] = _init_dense(next(keys), NSL[-1], LATENT_DIM_L)
    p["lin3"] = _init_dense(next(keys), LATENT_DIM + LATENT_DIM_L, NODE_NUM * NSD[0])

    dec_conv, dec_id = [], []
    for i in range(1, len(NSD)):
        cu = [NSD[i - 1], NSD[i] // 4, NSD[i] // 4, NSD[i]]
        iu = [NSD[i], NSD[i] // 4, NSD[i] // 4, NSD[i]]
        dec_conv.append(_init_conv_block(next(keys), cu, NUM_FILTERS))
        dec_id.append(_init_identity_block(next(keys), iu, NUM_FILTERS))
    p["dec_conv"], p["dec_id"] = dec_conv, dec_id

    p["mlp1"] = _init_dense(next(keys), NSD[-1], NSD[-1] // 2)
    p["mlp2"] = _init_dense(next(keys), NSD[-1] // 2, 1)

    # vec_norm parameters exist in the module but are dead when use_three_branch=False.
    p["ln_gamma"] = jnp.ones((VEC_DIM,), jnp.float32)
    p["ln_beta"] = jnp.zeros((VEC_DIM,), jnp.float32)
    return p


# ==================================== main =====================================
if __name__ == "__main__":
    key = jax.random.PRNGKey(0)
    kx, ka, kp = jax.random.split(key, 3)
    B = 2
    X = jax.random.normal(kx, (B, NODE_NUM, NODE_DIM), jnp.float32)
    A = jax.random.normal(ka, (B, NUM_FILTERS, NODE_NUM, NODE_NUM), jnp.float32) / NODE_NUM
    params = init_params(kp)

    fwd = jax.jit(residual_graph_lstm_forward)
    out = jax.block_until_ready(fwd(params, X, A))
    assert out.shape == (B, NODE_NUM, 1), out.shape
    assert bool(jnp.all(jnp.isfinite(out)))
    print("KERNEL_OK")
</pallas_src>

<mosaic_0001>
module attributes {stable_mosaic.version = 11 : i64} {
  func.func @kernel(%arg0: i32, %arg1: memref<1x16x4xf32, #tpu.memory_space<vmem>>, %arg2: memref<1x32x16xf32, #tpu.memory_space<vmem>>, %arg3: memref<1x8xf32, #tpu.memory_space<vmem>>, %arg4: memref<8x8xf32, #tpu.memory_space<vmem>>, %arg5: memref<1x8xf32, #tpu.memory_space<vmem>>, %arg6: memref<16x8xf32, #tpu.memory_space<vmem>>, %arg7: memref<1x32xf32, #tpu.memory_space<vmem>>, %arg8: memref<16x32xf32, #tpu.memory_space<vmem>>, %arg9: memref<1x32xf32, #tpu.memory_space<vmem>>, %arg10: memref<8x32xf32, #tpu.memory_space<vmem>>, %arg11: memref<1x8xf32, #tpu.memory_space<vmem>>, %arg12: memref<64x8xf32, #tpu.memory_space<vmem>>, %arg13: memref<1x8xf32, #tpu.memory_space<vmem>>, %arg14: memref<16x8xf32, #tpu.memory_space<vmem>>, %arg15: memref<1x32xf32, #tpu.memory_space<vmem>>, %arg16: memref<16x32xf32, #tpu.memory_space<vmem>>, %arg17: memref<1x32xf32, #tpu.memory_space<vmem>>, %arg18: memref<64x32xf32, #tpu.memory_space<vmem>>, %arg19: memref<1x8xf32, #tpu.memory_space<vmem>>, %arg20: memref<64x8xf32, #tpu.memory_space<vmem>>, %arg21: memref<1x8xf32, #tpu.memory_space<vmem>>, %arg22: memref<16x8xf32, #tpu.memory_space<vmem>>, %arg23: memref<1x32xf32, #tpu.memory_space<vmem>>, %arg24: memref<16x32xf32, #tpu.memory_space<vmem>>, %arg25: memref<1x8xf32, #tpu.memory_space<vmem>>, %arg26: memref<64x8xf32, #tpu.memory_space<vmem>>, %arg27: memref<1x8xf32, #tpu.memory_space<vmem>>, %arg28: memref<16x8xf32, #tpu.memory_space<vmem>>, %arg29: memref<1x32xf32, #tpu.memory_space<vmem>>, %arg30: memref<16x32xf32, #tpu.memory_space<vmem>>, %arg31: memref<1x16x32xf32, #tpu.memory_space<vmem>>) attributes {dimension_semantics = [#tpu.dimension_semantics<parallel>], iteration_bounds = array<i64: 2>, scalar_prefetch = 0 : i64, scratch_operands = 0 : i64, tpu.core_type = #tpu.core_type<tc>, window_params = [{transform_indices = @transform_0, window_bounds = array<i64: 1, 16, 4>}, {transform_indices = @transform_1, window_bounds = array<i64: 1, 32, 16>}, {pipeline_mode = #tpu.pipeline_mode<synchronous>, transform_indices = @transform_2, window_bounds = array<i64: 1, 8>}, {pipeline_mode = #tpu.pipeline_mode<synchronous>, transform_indices = @transform_3, window_bounds = array<i64: 8, 8>}, {pipeline_mode = #tpu.pipeline_mode<synchronous>, transform_indices = @transform_4, window_bounds = array<i64: 1, 8>}, {pipeline_mode = #tpu.pipeline_mode<synchronous>, transform_indices = @transform_5, window_bounds = array<i64: 16, 8>}, {pipeline_mode = #tpu.pipeline_mode<synchronous>, transform_indices = @transform_6, window_bounds = array<i64: 1, 32>}, {pipeline_mode = #tpu.pipeline_mode<synchronous>, transform_indices = @transform_7, window_bounds = array<i64: 16, 32>}, {pipeline_mode = #tpu.pipeline_mode<synchronous>, transform_indices = @transform_8, window_bounds = array<i64: 1, 32>}, {pipeline_mode = #tpu.pipeline_mode<synchronous>, transform_indices = @transform_9, window_bounds = array<i64: 8, 32>}, {pipeline_mode = #tpu.pipeline_mode<synchronous>, transform_indices = @transform_10, window_bounds = array<i64: 1, 8>}, {pipeline_mode = #tpu.pipeline_mode<synchronous>, transform_indices = @transform_11, window_bounds = array<i64: 64, 8>}, {pipeline_mode = #tpu.pipeline_mode<synchronous>, transform_indices = @transform_12, window_bounds = array<i64: 1, 8>}, {pipeline_mode = #tpu.pipeline_mode<synchronous>, transform_indices = @transform_13, window_bounds = array<i64: 16, 8>}, {pipeline_mode = #tpu.pipeline_mode<synchronous>, transform_indices = @transform_14, window_bounds = array<i64: 1, 32>}, {pipeline_mode = #tpu.pipeline_mode<synchronous>, transform_indices = @transform_15, window_bounds = array<i64: 16, 32>}, {pipeline_mode = #tpu.pipeline_mode<synchronous>, transform_indices = @transform_16, window_bounds = array<i64: 1, 32>}, {pipeline_mode = #tpu.pipeline_mode<synchronous>, transform_indices = @transform_17, window_bounds = array<i64: 64, 32>}, {pipeline_mode = #tpu.pipeline_mode<synchronous>, transform_indices = @transform_18, window_bounds = array<i64: 1, 8>}, {pipeline_mode = #tpu.pipeline_mode<synchronous>, transform_indices = @transform_19, window_bounds = array<i64: 64, 8>}, {pipeline_mode = #tpu.pipeline_mode<synchronous>, transform_indices = @transform_20, window_bounds = array<i64: 1, 8>}, {pipeline_mode = #tpu.pipeline_mode<synchronous>, transform_indices = @transform_21, window_bounds = array<i64: 16, 8>}, {pipeline_mode = #tpu.pipeline_mode<synchronous>, transform_indices = @transform_22, window_bounds = array<i64: 1, 32>}, {pipeline_mode = #tpu.pipeline_mode<synchronous>, transform_indices = @transform_23, window_bounds = array<i64: 16, 32>}, {pipeline_mode = #tpu.pipeline_mode<synchronous>, transform_indices = @transform_24, window_bounds = array<i64: 1, 8>}, {pipeline_mode = #tpu.pipeline_mode<synchronous>, transform_indices = @transform_25, window_bounds = array<i64: 64, 8>}, {pipeline_mode = #tpu.pipeline_mode<synchronous>, transform_indices = @transform_26, window_bounds = array<i64: 1, 8>}, {pipeline_mode = #tpu.pipeline_mode<synchronous>, transform_indices = @transform_27, window_bounds = array<i64: 16, 8>}, {pipeline_mode = #tpu.pipeline_mode<synchronous>, transform_indices = @transform_28, window_bounds = array<i64: 1, 32>}, {pipeline_mode = #tpu.pipeline_mode<synchronous>, transform_indices = @transform_29, window_bounds = array<i64: 16, 32>}, {transform_indices = @transform_30, window_bounds = array<i64: 1, 16, 32>}]} {
    %c0 = arith.constant 0 : index
    %c0_0 = arith.constant 0 : index
    %c0_1 = arith.constant 0 : index
    %0 = vector.load %arg2[%c0, %c0_0, %c0_1] : memref<1x32x16xf32, #tpu.memory_space<vmem>>, vector<1x32x16xf32>
    %1 = vector.shape_cast %0 : vector<1x32x16xf32> to vector<32x16xf32>
    %c0_2 = arith.constant 0 : index
    %c0_3 = arith.constant 0 : index
    %c0_4 = arith.constant 0 : index
    %2 = vector.load %arg1[%c0_2, %c0_3, %c0_4] : memref<1x16x4xf32, #tpu.memory_space<vmem>>, vector<1x16x4xf32>
    %3 = vector.shape_cast %2 : vector<1x16x4xf32> to vector<16x4xf32>
    %c0_5 = arith.constant 0 : index
    %c0_6 = arith.constant 0 : index
    %4 = vector.load %arg4[%c0_5, %c0_6] : memref<8x8xf32, #tpu.memory_space<vmem>>, vector<8x8xf32>
    %c0_7 = arith.constant 0 : index
    %c0_8 = arith.constant 0 : index
    %5 = vector.load %arg3[%c0_7, %c0_8] : memref<1x8xf32, #tpu.memory_space<vmem>>, vector<1x8xf32>
    %6 = vector.shape_cast %5 : vector<1x8xf32> to vector<8xf32>
    %cst = arith.constant dense<0.000000e+00> : vector<32x4xf32>
    %7 = tpu.matmul %1, %3, %cst {dimension_numbers = #tpu.dot_dimension_numbers<[1], [0], [0], [1], [0, 0, 1, 1], [], []>} : vector<32x16xf32>, vector<16x4xf32>, vector<32x4xf32> -> vector<32x4xf32>
    %cst_9 = arith.constant 0.000000e+00 : f32
    %8 = vector.broadcast %cst_9 : f32 to vector<16x8xf32>
    %9 = vector.extract_strided_slice %7 {offsets = [0, 0], sizes = [16, 4], strides = [1, 1]} : vector<32x4xf32> to vector<16x4xf32>
    %10 = vector.extract_strided_slice %4 {offsets = [0, 0], sizes = [4, 8], strides = [1, 1]} : vector<8x8xf32> to vector<4x8xf32>
    %cst_10 = arith.constant dense<0.000000e+00> : vector<16x8xf32>
    %11 = tpu.matmul %9, %10, %cst_10 {dimension_numbers = #tpu.dot_dimension_numbers<[1], [0], [0], [1], [0, 0, 1, 1], [], []>} : vector<16x4xf32>, vector<4x8xf32>, vector<16x8xf32> -> vector<16x8xf32>
    %12 = arith.addf %8, %11 : vector<16x8xf32>
    %13 = vector.extract_strided_slice %7 {offsets = [16, 0], sizes = [16, 4], strides = [1, 1]} : vector<32x4xf32> to vector<16x4xf32>
    %14 = vector.extract_strided_slice %4 {offsets = [4, 0], sizes = [4, 8], strides = [1, 1]} : vector<8x8xf32> to vector<4x8xf32>
    %cst_11 = arith.constant dense<0.000000e+00> : vector<16x8xf32>
    %15 = tpu.matmul %13, %14, %cst_11 {dimension_numbers = #tpu.dot_dimension_numbers<[1], [0], [0], [1], [0, 0, 1, 1], [], []>} : vector<16x4xf32>, vector<4x8xf32>, vector<16x8xf32> -> vector<16x8xf32>
    %16 = arith.addf %12, %15 : vector<16x8xf32>
    %17 = vector.shape_cast %6 : vector<8xf32> to vector<1x8xf32>
    %18 = vector.broadcast %17 : vector<1x8xf32> to vector<16x8xf32>
    %19 = arith.addf %16, %18 : vector<16x8xf32>
    %cst_12 = arith.constant 0.000000e+00 : f32
    %20 = vector.broadcast %cst_12 : f32 to vector<16x8xf32>
    %21 = arith.maximumf %19, %20 : vector<16x8xf32>
    %c0_13 = arith.constant 0 : index
    %c0_14 = arith.constant 0 : index
    %22 = vector.load %arg6[%c0_13, %c0_14] : memref<16x8xf32, #tpu.memory_space<vmem>>, vector<16x8xf32>
    %c0_15 = arith.constant 0 : index
    %c0_16 = arith.constant 0 : index
    %23 = vector.load %arg5[%c0_15, %c0_16] : memref<1x8xf32, #tpu.memory_space<vmem>>, vector<1x8xf32>
    %24 = vector.shape_cast %23 : vector<1x8xf32> to vector<8xf32>
    %cst_17 = arith.constant dense<0.000000e+00> : vector<32x8xf32>
    %25 = tpu.matmul %1, %21, %cst_17 {dimension_numbers = #tpu.dot_dimension_numbers<[1], [0], [0], [1], [0, 0, 1, 1], [], []>} : vector<32x16xf32>, vector<16x8xf32>, vector<32x8xf32> -> vector<32x8xf32>
    %cst_18 = arith.constant 0.000000e+00 : f32
    %26 = vector.broadcast %cst_18 : f32 to vector<16x8xf32>
    %27 = vector.extract_strided_slice %25 {offsets = [0, 0], sizes = [16, 8], strides = [1, 1]} : vector<32x8xf32> to vector<16x8xf32>
    %28 = vector.extract_strided_slice %22 {offsets = [0, 0], sizes = [8, 8], strides = [1, 1]} : vector<16x8xf32> to vector<8x8xf32>
    %cst_19 = arith.constant dense<0.000000e+00> : vector<16x8xf32>
    %29 = tpu.matmul %27, %28, %cst_19 {dimension_numbers = #tpu.dot_dimension_numbers<[1], [0], [0], [1], [0, 0, 1, 1], [], []>} : vector<16x8xf32>, vector<8x8xf32>, vector<16x8xf32> -> vector<16x8xf32>
    %30 = arith.addf %26, %29 : vector<16x8xf32>
    %31 = vector.extract_strided_slice %25 {offsets = [16, 0], sizes = [16, 8], strides = [1, 1]} : vector<32x8xf32> to vector<16x8xf32>
    %32 = vector.extract_strided_slice %22 {offsets = [8, 0], sizes = [8, 8], strides = [1, 1]} : vector<16x8xf32> to vector<8x8xf32>
    %cst_20 = arith.constant dense<0.000000e+00> : vector<16x8xf32>
    %33 = tpu.matmul %31, %32, %cst_20 {dimension_numbers = #tpu.dot_dimension_numbers<[1], [0], [0], [1], [0, 0, 1, 1], [], []>} : vector<16x8xf32>, vector<8x8xf32>, vector<16x8xf32> -> vector<16x8xf32>
    %34 = arith.addf %30, %33 : vector<16x8xf32>
    %35 = vector.shape_cast %24 : vector<8xf32> to vector<1x8xf32>
    %36 = vector.broadcast %35 : vector<1x8xf32> to vector<16x8xf32>
    %37 = arith.addf %34, %36 : vector<16x8xf32>
    %cst_21 = arith.constant 0.000000e+00 : f32
    %38 = vector.broadcast %cst_21 : f32 to vector<16x8xf32>
    %39 = arith.maximumf %37, %38 : vector<16x8xf32>
    %c0_22 = arith.constant 0 : index
    %c0_23 = arith.constant 0 : index
    %40 = vector.load %arg8[%c0_22, %c0_23] : memref<16x32xf32, #tpu.memory_space<vmem>>, vector<16x32xf32>
    %c0_24 = arith.constant 0 : index
    %c0_25 = arith.constant 0 : index
    %41 = vector.load %arg7[%c0_24, %c0_25] : memref<1x32xf32, #tpu.memory_space<vmem>>, vector<1x32xf32>
    %42 = vector.shape_cast %41 : vector<1x32xf32> to vector<32xf32>
    %cst_26 = arith.constant dense<0.000000e+00> : vector<32x8xf32>
    %43 = tpu.matmul %1, %39, %cst_26 {dimension_numbers = #tpu.dot_dimension_numbers<[1], [0], [0], [1], [0, 0, 1, 1], [], []>} : vector<32x16xf32>, vector<16x8xf32>, vector<32x8xf32> -> vector<32x8xf32>
    %cst_27 = arith.constant 0.000000e+00 : f32
    %44 = vector.broadcast %cst_27 : f32 to vector<16x32xf32>
    %45 = vector.extract_strided_slice %43 {offsets = [0, 0], sizes = [16, 8], strides = [1, 1]} : vector<32x8xf32> to vector<16x8xf32>
    %46 = vector.extract_strided_slice %40 {offsets = [0, 0], sizes = [8, 32], strides = [1, 1]} : vector<16x32xf32> to vector<8x32xf32>
    %cst_28 = arith.constant dense<0.000000e+00> : vector<16x32xf32>
    %47 = tpu.matmul %45, %46, %cst_28 {dimension_numbers = #tpu.dot_dimension_numbers<[1], [0], [0], [1], [0, 0, 1, 1], [], []>} : vector<16x8xf32>, vector<8x32xf32>, vector<16x32xf32> -> vector<16x32xf32>
    %48 = arith.addf %44, %47 : vector<16x32xf32>
    %49 = vector.extract_strided_slice %43 {offsets = [16, 0], sizes = [16, 8], strides = [1, 1]} : vector<32x8xf32> to vector<16x8xf32>
    %50 = vector.extract_strided_slice %40 {offsets = [8, 0], sizes = [8, 32], strides = [1, 1]} : vector<16x32xf32> to vector<8x32xf32>
    %cst_29 = arith.constant dense<0.000000e+00> : vector<16x32xf32>
    %51 = tpu.matmul %49, %50, %cst_29 {dimension_numbers = #tpu.dot_dimension_numbers<[1], [0], [0], [1], [0, 0, 1, 1], [], []>} : vector<16x8xf32>, vector<8x32xf32>, vector<16x32xf32> -> vector<16x32xf32>
    %52 = arith.addf %48, %51 : vector<16x32xf32>
    %53 = vector.shape_cast %42 : vector<32xf32> to vector<1x32xf32>
    %54 = vector.broadcast %53 : vector<1x32xf32> to vector<16x32xf32>
    %55 = arith.addf %52, %54 : vector<16x32xf32>
    %c0_30 = arith.constant 0 : index
    %c0_31 = arith.constant 0 : index
    %56 = vector.load %arg10[%c0_30, %c0_31] : memref<8x32xf32, #tpu.memory_space<vmem>>, vector<8x32xf32>
    %c0_32 = arith.constant 0 : index
    %c0_33 = arith.constant 0 : index
    %57 = vector.load %arg9[%c0_32, %c0_33] : memref<1x32xf32, #tpu.memory_space<vmem>>, vector<1x32xf32>
    %58 = vector.shape_cast %57 : vector<1x32xf32> to vector<32xf32>
    %cst_34 = arith.constant dense<0.000000e+00> : vector<32x4xf32>
    %59 = tpu.matmul %1, %3, %cst_34 {dimension_numbers = #tpu.dot_dimension_numbers<[1], [0], [0], [1], [0, 0, 1, 1], [], []>} : vector<32x16xf32>, vector<16x4xf32>, vector<32x4xf32> -> vector<32x4xf32>
    %cst_35 = arith.constant 0.000000e+00 : f32
    %60 = vector.broadcast %cst_35 : f32 to vector<16x32xf32>
    %61 = vector.extract_strided_slice %59 {offsets = [0, 0], sizes = [16, 4], strides = [1, 1]} : vector<32x4xf32> to vector<16x4xf32>
    %62 = vector.extract_strided_slice %56 {offsets = [0, 0], sizes = [4, 32], strides = [1, 1]} : vector<8x32xf32> to vector<4x32xf32>
    %cst_36 = arith.constant dense<0.000000e+00> : vector<16x32xf32>
    %63 = tpu.matmul %61, %62, %cst_36 {dimension_numbers = #tpu.dot_dimension_numbers<[1], [0], [0], [1], [0, 0, 1, 1], [], []>} : vector<16x4xf32>, vector<4x32xf32>, vector<16x32xf32> -> vector<16x32xf32>
    %64 = arith.addf %60, %63 : vector<16x32xf32>
    %65 = vector.extract_strided_slice %59 {offsets = [16, 0], sizes = [16, 4], strides = [1, 1]} : vector<32x4xf32> to vector<16x4xf32>
    %66 = vector.extract_strided_slice %56 {offsets = [4, 0], sizes = [4, 32], strides = [1, 1]} : vector<8x32xf32> to vector<4x32xf32>
    %cst_37 = arith.constant dense<0.000000e+00> : vector<16x32xf32>
    %67 = tpu.matmul %65, %66, %cst_37 {dimension_numbers = #tpu.dot_dimension_numbers<[1], [0], [0], [1], [0, 0, 1, 1], [], []>} : vector<16x4xf32>, vector<4x32xf32>, vector<16x32xf32> -> vector<16x32xf32>
    %68 = arith.addf %64, %67 : vector<16x32xf32>
    %69 = vector.shape_cast %58 : vector<32xf32> to vector<1x32xf32>
    %70 = vector.broadcast %69 : vector<1x32xf32> to vector<16x32xf32>
    %71 = arith.addf %68, %70 : vector<16x32xf32>
    %72 = arith.addf %55, %71 : vector<16x32xf32>
    %cst_38 = arith.constant 0.000000e+00 : f32
    %73 = vector.broadcast %cst_38 : f32 to vector<16x32xf32>
    %74 = arith.maximumf %72, %73 : vector<16x32xf32>
    %c0_39 = arith.constant 0 : index
    %c0_40 = arith.constant 0 : index
    %75 = vector.load %arg20[%c0_39, %c0_40] : memref<64x8xf32, #tpu.memory_space<vmem>>, vector<64x8xf32>
    %c0_41 = arith.constant 0 : index
    %c0_42 = arith.constant 0 : index
    %76 = vector.load %arg19[%c0_41, %c0_42] : memref<1x8xf32, #tpu.memory_space<vmem>>, vector<1x8xf32>
    %77 = vector.shape_cast %76 : vector<1x8xf32> to vector<8xf32>
    %cst_43 = arith.constant dense<0.000000e+00> : vector<32x32xf32>
    %78 = tpu.matmul %1, %74, %cst_43 {dimension_numbers = #tpu.dot_dimension_numbers<[1], [0], [0], [1], [0, 0, 1, 1], [], []>} : vector<32x16xf32>, vector<16x32xf32>, vector<32x32xf32> -> vector<32x32xf32>
    %cst_44 = arith.constant 0.000000e+00 : f32
    %79 = vector.broadcast %cst_44 : f32 to vector<16x8xf32>
    %80 = vector.extract_strided_slice %78 {offsets = [0, 0], sizes = [16, 32], strides = [1, 1]} : vector<32x32xf32> to vector<16x32xf32>
    %81 = vector.extract_strided_slice %75 {offsets = [0, 0], sizes = [32, 8], strides = [1, 1]} : vector<64x8xf32> to vector<32x8xf32>
    %cst_45 = arith.constant dense<0.000000e+00> : vector<16x8xf32>
    %82 = tpu.matmul %80, %81, %cst_45 {dimension_numbers = #tpu.dot_dimension_numbers<[1], [0], [0], [1], [0, 0, 1, 1], [], []>} : vector<16x32xf32>, vector<32x8xf32>, vector<16x8xf32> -> vector<16x8xf32>
    %83 = arith.addf %79, %82 : vector<16x8xf32>
    %84 = vector.extract_strided_slice %78 {offsets = [16, 0], sizes = [16, 32], strides = [1, 1]} : vector<32x32xf32> to vector<16x32xf32>
    %85 = vector.extract_strided_slice %75 {offsets = [32, 0], sizes = [32, 8], strides = [1, 1]} : vector<64x8xf32> to vector<32x8xf32>
    %cst_46 = arith.constant dense<0.000000e+00> : vector<16x8xf32>
    %86 = tpu.matmul %84, %85, %cst_46 {dimension_numbers = #tpu.dot_dimension_numbers<[1], [0], [0], [1], [0, 0, 1, 1], [], []>} : vector<16x32xf32>, vector<32x8xf32>, vector<16x8xf32> -> vector<16x8xf32>
    %87 = arith.addf %83, %86 : vector<16x8xf32>
    %88 = vector.shape_cast %77 : vector<8xf32> to vector<1x8xf32>
    %89 = vector.broadcast %88 : vector<1x8xf32> to vector<16x8xf32>
    %90 = arith.addf %87, %89 : vector<16x8xf32>
    %cst_47 = arith.constant 0.000000e+00 : f32
    %91 = vector.broadcast %cst_47 : f32 to vector<16x8xf32>
    %92 = arith.maximumf %90, %91 : vector<16x8xf32>
    %c0_48 = arith.constant 0 : index
    %c0_49 = arith.constant 0 : index
    %93 = vector.load %arg22[%c0_48, %c0_49] : memref<16x8xf32, #tpu.memory_space<vmem>>, vector<16x8xf32>
    %c0_50 = arith.constant 0 : index
    %c0_51 = arith.constant 0 : index
    %94 = vector.load %arg21[%c0_50, %c0_51] : memref<1x8xf32, #tpu.memory_space<vmem>>, vector<1x8xf32>
    %95 = vector.shape_cast %94 : vector<1x8xf32> to vector<8xf32>
    %cst_52 = arith.constant dense<0.000000e+00> : vector<32x8xf32>
    %96 = tpu.matmul %1, %92, %cst_52 {dimension_numbers = #tpu.dot_dimension_numbers<[1], [0], [0], [1], [0, 0, 1, 1], [], []>} : vector<32x16xf32>, vector<16x8xf32>, vector<32x8xf32> -> vector<32x8xf32>
    %cst_53 = arith.constant 0.000000e+00 : f32
    %97 = vector.broadcast %cst_53 : f32 to vector<16x8xf32>
    %98 = vector.extract_strided_slice %96 {offsets = [0, 0], sizes = [16, 8], strides = [1, 1]} : vector<32x8xf32> to vector<16x8xf32>
    %99 = vector.extract_strided_slice %93 {offsets = [0, 0], sizes = [8, 8], strides = [1, 1]} : vector<16x8xf32> to vector<8x8xf32>
    %cst_54 = arith.constant dense<0.000000e+00> : vector<16x8xf32>
    %100 = tpu.matmul %98, %99, %cst_54 {dimension_numbers = #tpu.dot_dimension_numbers<[1], [0], [0], [1], [0, 0, 1, 1], [], []>} : vector<16x8xf32>, vector<8x8xf32>, vector<16x8xf32> -> vector<16x8xf32>
    %101 = arith.addf %97, %100 : vector<16x8xf32>
    %102 = vector.extract_strided_slice %96 {offsets = [16, 0], sizes = [16, 8], strides = [1, 1]} : vector<32x8xf32> to vector<16x8xf32>
    %103 = vector.extract_strided_slice %93 {offsets = [8, 0], sizes = [8, 8], strides = [1, 1]} : vector<16x8xf32> to vector<8x8xf32>
    %cst_55 = arith.constant dense<0.000000e+00> : vector<16x8xf32>
    %104 = tpu.matmul %102, %103, %cst_55 {dimension_numbers = #tpu.dot_dimension_numbers<[1], [0], [0], [1], [0, 0, 1, 1], [], []>} : vector<16x8xf32>, vector<8x8xf32>, vector<16x8xf32> -> vector<16x8xf32>
    %105 = arith.addf %101, %104 : vector<16x8xf32>
    %106 = vector.shape_cast %95 : vector<8xf32> to vector<1x8xf32>
    %107 = vector.broadcast %106 : vector<1x8xf32> to vector<16x8xf32>
    %108 = arith.addf %105, %107 : vector<16x8xf32>
    %cst_56 = arith.constant 0.000000e+00 : f32
    %109 = vector.broadcast %cst_56 : f32 to vector<16x8xf32>
    %110 = arith.maximumf %108, %109 : vector<16x8xf32>
    %c0_57 = arith.constant 0 : index
    %c0_58 = arith.constant 0 : index
    %111 = vector.load %arg24[%c0_57, %c0_58] : memref<16x32xf32, #tpu.memory_space<vmem>>, vector<16x32xf32>
    %c0_59 = arith.constant 0 : index
    %c0_60 = arith.constant 0 : index
    %112 = vector.load %arg23[%c0_59, %c0_60] : memref<1x32xf32, #tpu.memory_space<vmem>>, vector<1x32xf32>
    %113 = vector.shape_cast %112 : vector<1x32xf32> to vector<32xf32>
    %cst_61 = arith.constant dense<0.000000e+00> : vector<32x8xf32>
    %114 = tpu.matmul %1, %110, %cst_61 {dimension_numbers = #tpu.dot_dimension_numbers<[1], [0], [0], [1], [0, 0, 1, 1], [], []>} : vector<32x16xf32>, vector<16x8xf32>, vector<32x8xf32> -> vector<32x8xf32>
    %cst_62 = arith.constant 0.000000e+00 : f32
    %115 = vector.broadcast %cst_62 : f32 to vector<16x32xf32>
    %116 = vector.extract_strided_slice %114 {offsets = [0, 0], sizes = [16, 8], strides = [1, 1]} : vector<32x8xf32> to vector<16x8xf32>
    %117 = vector.extract_strided_slice %111 {offsets = [0, 0], sizes = [8, 32], strides = [1, 1]} : vector<16x32xf32> to vector<8x32xf32>
    %cst_63 = arith.constant dense<0.000000e+00> : vector<16x32xf32>
    %118 = tpu.matmul %116, %117, %cst_63 {dimension_numbers = #tpu.dot_dimension_numbers<[1], [0], [0], [1], [0, 0, 1, 1], [], []>} : vector<16x8xf32>, vector<8x32xf32>, vector<16x32xf32> -> vector<16x32xf32>
    %119 = arith.addf %115, %118 : vector<16x32xf32>
    %120 = vector.extract_strided_slice %114 {offsets = [16, 0], sizes = [16, 8], strides = [1, 1]} : vector<32x8xf32> to vector<16x8xf32>
    %121 = vector.extract_strided_slice %111 {offsets = [8, 0], sizes = [8, 32], strides = [1, 1]} : vector<16x32xf32> to vector<8x32xf32>
    %cst_64 = arith.constant dense<0.000000e+00> : vector<16x32xf32>
    %122 = tpu.matmul %120, %121, %cst_64 {dimension_numbers = #tpu.dot_dimension_numbers<[1], [0], [0], [1], [0, 0, 1, 1], [], []>} : vector<16x8xf32>, vector<8x32xf32>, vector<16x32xf32> -> vector<16x32xf32>
    %123 = arith.addf %119, %122 : vector<16x32xf32>
    %124 = vector.shape_cast %113 : vector<32xf32> to vector<1x32xf32>
    %125 = vector.broadcast %124 : vector<1x32xf32> to vector<16x32xf32>
    %126 = arith.addf %123, %125 : vector<16x32xf32>
    %127 = arith.addf %126, %74 : vector<16x32xf32>
    %cst_65 = arith.constant 0.000000e+00 : f32
    %128 = vector.broadcast %cst_65 : f32 to vector<16x32xf32>
    %129 = arith.maximumf %127, %128 : vector<16x32xf32>
    %c0_66 = arith.constant 0 : index
    %c0_67 = arith.constant 0 : index
    %130 = vector.load %arg12[%c0_66, %c0_67] : memref<64x8xf32, #tpu.memory_space<vmem>>, vector<64x8xf32>
    %c0_68 = arith.constant 0 : index
    %c0_69 = arith.constant 0 : index
    %131 = vector.load %arg11[%c0_68, %c0_69] : memref<1x8xf32, #tpu.memory_space<vmem>>, vector<1x8xf32>
    %132 = vector.shape_cast %131 : vector<1x8xf32> to vector<8xf32>
    %cst_70 = arith.constant dense<0.000000e+00> : vector<32x32xf32>
    %133 = tpu.matmul %1, %129, %cst_70 {dimension_numbers = #tpu.dot_dimension_numbers<[1], [0], [0], [1], [0, 0, 1, 1], [], []>} : vector<32x16xf32>, vector<16x32xf32>, vector<32x32xf32> -> vector<32x32xf32>
    %cst_71 = arith.constant 0.000000e+00 : f32
    %134 = vector.broadcast %cst_71 : f32 to vector<16x8xf32>
    %135 = vector.extract_strided_slice %133 {offsets = [0, 0], sizes = [16, 32], strides = [1, 1]} : vector<32x32xf32> to vector<16x32xf32>
    %136 = vector.extract_strided_slice %130 {offsets = [0, 0], sizes = [32, 8], strides = [1, 1]} : vector<64x8xf32> to vector<32x8xf32>
    %cst_72 = arith.constant dense<0.000000e+00> : vector<16x8xf32>
    %137 = tpu.matmul %135, %136, %cst_72 {dimension_numbers = #tpu.dot_dimension_numbers<[1], [0], [0], [1], [0, 0, 1, 1], [], []>} : vector<16x32xf32>, vector<32x8xf32>, vector<16x8xf32> -> vector<16x8xf32>
    %138 = arith.addf %134, %137 : vector<16x8xf32>
    %139 = vector.extract_strided_slice %133 {offsets = [16, 0], sizes = [16, 32], strides = [1, 1]} : vector<32x32xf32> to vector<16x32xf32>
    %140 = vector.extract_strided_slice %130 {offsets = [32, 0], sizes = [32, 8], strides = [1, 1]} : vector<64x8xf32> to vector<32x8xf32>
    %cst_73 = arith.constant dense<0.000000e+00> : vector<16x8xf32>
    %141 = tpu.matmul %139, %140, %cst_73 {dimension_numbers = #tpu.dot_dimension_numbers<[1], [0], [0], [1], [0, 0, 1, 1], [], []>} : vector<16x32xf32>, vector<32x8xf32>, vector<16x8xf32> -> vector<16x8xf32>
    %142 = arith.addf %138, %141 : vector<16x8xf32>
    %143 = vector.shape_cast %132 : vector<8xf32> to vector<1x8xf32>
    %144 = vector.broadcast %143 : vector<1x8xf32> to vector<16x8xf32>
    %145 = arith.addf %142, %144 : vector<16x8xf32>
    %cst_74 = arith.constant 0.000000e+00 : f32
    %146 = vector.broadcast %cst_74 : f32 to vector<16x8xf32>
    %147 = arith.maximumf %145, %146 : vector<16x8xf32>
    %c0_75 = arith.constant 0 : index
    %c0_76 = arith.constant 0 : index
    %148 = vector.load %arg14[%c0_75, %c0_76] : memref<16x8xf32, #tpu.memory_space<vmem>>, vector<16x8xf32>
    %c0_77 = arith.constant 0 : index
    %c0_78 = arith.constant 0 : index
    %149 = vector.load %arg13[%c0_77, %c0_78] : memref<1x8xf32, #tpu.memory_space<vmem>>, vector<1x8xf32>
    %150 = vector.shape_cast %149 : vector<1x8xf32> to vector<8xf32>
    %cst_79 = arith.constant dense<0.000000e+00> : vector<32x8xf32>
    %151 = tpu.matmul %1, %147, %cst_79 {dimension_numbers = #tpu.dot_dimension_numbers<[1], [0], [0], [1], [0, 0, 1, 1], [], []>} : vector<32x16xf32>, vector<16x8xf32>, vector<32x8xf32> -> vector<32x8xf32>
    %cst_80 = arith.constant 0.000000e+00 : f32
    %152 = vector.broadcast %cst_80 : f32 to vector<16x8xf32>
    %153 = vector.extract_strided_slice %151 {offsets = [0, 0], sizes = [16, 8], strides = [1, 1]} : vector<32x8xf32> to vector<16x8xf32>
    %154 = vector.extract_strided_slice %148 {offsets = [0, 0], sizes = [8, 8], strides = [1, 1]} : vector<16x8xf32> to vector<8x8xf32>
    %cst_81 = arith.constant dense<0.000000e+00> : vector<16x8xf32>
    %155 = tpu.matmul %153, %154, %cst_81 {dimension_numbers = #tpu.dot_dimension_numbers<[1], [0], [0], [1], [0, 0, 1, 1], [], []>} : vector<16x8xf32>, vector<8x8xf32>, vector<16x8xf32> -> vector<16x8xf32>
    %156 = arith.addf %152, %155 : vector<16x8xf32>
    %157 = vector.extract_strided_slice %151 {offsets = [16, 0], sizes = [16, 8], strides = [1, 1]} : vector<32x8xf32> to vector<16x8xf32>
    %158 = vector.extract_strided_slice %148 {offsets = [8, 0], sizes = [8, 8], strides = [1, 1]} : vector<16x8xf32> to vector<8x8xf32>
    %cst_82 = arith.constant dense<0.000000e+00> : vector<16x8xf32>
    %159 = tpu.matmul %157, %158, %cst_82 {dimension_numbers = #tpu.dot_dimension_numbers<[1], [0], [0], [1], [0, 0, 1, 1], [], []>} : vector<16x8xf32>, vector<8x8xf32>, vector<16x8xf32> -> vector<16x8xf32>
    %160 = arith.addf %156, %159 : vector<16x8xf32>
    %161 = vector.shape_cast %150 : vector<8xf32> to vector<1x8xf32>
    %162 = vector.broadcast %161 : vector<1x8xf32> to vector<16x8xf32>
    %163 = arith.addf %160, %162 : vector<16x8xf32>
    %cst_83 = arith.constant 0.000000e+00 : f32
    %164 = vector.broadcast %cst_83 : f32 to vector<16x8xf32>
    %165 = arith.maximumf %163, %164 : vector<16x8xf32>
    %c0_84 = arith.constant 0 : index
    %c0_85 = arith.constant 0 : index
    %166 = vector.load %arg16[%c0_84, %c0_85] : memref<16x32xf32, #tpu.memory_space<vmem>>, vector<16x32xf32>
    %c0_86 = arith.constant 0 : index
    %c0_87 = arith.constant 0 : index
    %167 = vector.load %arg15[%c0_86, %c0_87] : memref<1x32xf32, #tpu.memory_space<vmem>>, vector<1x32xf32>
    %168 = vector.shape_cast %167 : vector<1x32xf32> to vector<32xf32>
    %cst_88 = arith.constant dense<0.000000e+00> : vector<32x8xf32>
    %169 = tpu.matmul %1, %165, %cst_88 {dimension_numbers = #tpu.dot_dimension_numbers<[1], [0], [0], [1], [0, 0, 1, 1], [], []>} : vector<32x16xf32>, vector<16x8xf32>, vector<32x8xf32> -> vector<32x8xf32>
    %cst_89 = arith.constant 0.000000e+00 : f32
    %170 = vector.broadcast %cst_89 : f32 to vector<16x32xf32>
    %171 = vector.extract_strided_slice %169 {offsets = [0, 0], sizes = [16, 8], strides = [1, 1]} : vector<32x8xf32> to vector<16x8xf32>
    %172 = vector.extract_strided_slice %166 {offsets = [0, 0], sizes = [8, 32], strides = [1, 1]} : vector<16x32xf32> to vector<8x32xf32>
    %cst_90 = arith.constant dense<0.000000e+00> : vector<16x32xf32>
    %173 = tpu.matmul %171, %172, %cst_90 {dimension_numbers = #tpu.dot_dimension_numbers<[1], [0], [0], [1], [0, 0, 1, 1], [], []>} : vector<16x8xf32>, vector<8x32xf32>, vector<16x32xf32> -> vector<16x32xf32>
    %174 = arith.addf %170, %173 : vector<16x32xf32>
    %175 = vector.extract_strided_slice %169 {offsets = [16, 0], sizes = [16, 8], strides = [1, 1]} : vector<32x8xf32> to vector<16x8xf32>
    %176 = vector.extract_strided_slice %166 {offsets = [8, 0], sizes = [8, 32], strides = [1, 1]} : vector<16x32xf32> to vector<8x32xf32>
    %cst_91 = arith.constant dense<0.000000e+00> : vector<16x32xf32>
    %177 = tpu.matmul %175, %176, %cst_91 {dimension_numbers = #tpu.dot_dimension_numbers<[1], [0], [0], [1], [0, 0, 1, 1], [], []>} : vector<16x8xf32>, vector<8x32xf32>, vector<16x32xf32> -> vector<16x32xf32>
    %178 = arith.addf %174, %177 : vector<16x32xf32>
    %179 = vector.shape_cast %168 : vector<32xf32> to vector<1x32xf32>
    %180 = vector.broadcast %179 : vector<1x32xf32> to vector<16x32xf32>
    %181 = arith.addf %178, %180 : vector<16x32xf32>
    %c0_92 = arith.constant 0 : index
    %c0_93 = arith.constant 0 : index
    %182 = vector.load %arg18[%c0_92, %c0_93] : memref<64x32xf32, #tpu.memory_space<vmem>>, vector<64x32xf32>
    %c0_94 = arith.constant 0 : index
    %c0_95 = arith.constant 0 : index
    %183 = vector.load %arg17[%c0_94, %c0_95] : memref<1x32xf32, #tpu.memory_space<vmem>>, vector<1x32xf32>
    %184 = vector.shape_cast %183 : vector<1x32xf32> to vector<32xf32>
    %cst_96 = arith.constant dense<0.000000e+00> : vector<32x32xf32>
    %185 = tpu.matmul %1, %129, %cst_96 {dimension_numbers = #tpu.dot_dimension_numbers<[1], [0], [0], [1], [0, 0, 1, 1], [], []>} : vector<32x16xf32>, vector<16x32xf32>, vector<32x32xf32> -> vector<32x32xf32>
    %cst_97 = arith.constant 0.000000e+00 : f32
    %186 = vector.broadcast %cst_97 : f32 to vector<16x32xf32>
    %187 = vector.extract_strided_slice %185 {offsets = [0, 0], sizes = [16, 32], strides = [1, 1]} : vector<32x32xf32> to vector<16x32xf32>
    %188 = vector.extract_strided_slice %182 {offsets = [0, 0], sizes = [32, 32], strides = [1, 1]} : vector<64x32xf32> to vector<32x32xf32>
    %cst_98 = arith.constant dense<0.000000e+00> : vector<16x32xf32>
    %189 = tpu.matmul %187, %188, %cst_98 {dimension_numbers = #tpu.dot_dimension_numbers<[1], [0], [0], [1], [0, 0, 1, 1], [], []>} : vector<16x32xf32>, vector<32x32xf32>, vector<16x32xf32> -> vector<16x32xf32>
    %190 = arith.addf %186, %189 : vector<16x32xf32>
    %191 = vector.extract_strided_slice %185 {offsets = [16, 0], sizes = [16, 32], strides = [1, 1]} : vector<32x32xf32> to vector<16x32xf32>
    %192 = vector.extract_strided_slice %182 {offsets = [32, 0], sizes = [32, 32], strides = [1, 1]} : vector<64x32xf32> to vector<32x32xf32>
    %cst_99 = arith.constant dense<0.000000e+00> : vector<16x32xf32>
    %193 = tpu.matmul %191, %192, %cst_99 {dimension_numbers = #tpu.dot_dimension_numbers<[1], [0], [0], [1], [0, 0, 1, 1], [], []>} : vector<16x32xf32>, vector<32x32xf32>, vector<16x32xf32> -> vector<16x32xf32>
    %194 = arith.addf %190, %193 : vector<16x32xf32>
    %195 = vector.shape_cast %184 : vector<32xf32> to vector<1x32xf32>
    %196 = vector.broadcast %195 : vector<1x32xf32> to vector<16x32xf32>
    %197 = arith.addf %194, %196 : vector<16x32xf32>
    %198 = arith.addf %181, %197 : vector<16x32xf32>
    %cst_100 = arith.constant 0.000000e+00 : f32
    %199 = vector.broadcast %cst_100 : f32 to vector<16x32xf32>
    %200 = arith.maximumf %198, %199 : vector<16x32xf32>
    %c0_101 = arith.constant 0 : index
    %c0_102 = arith.constant 0 : index
    %201 = vector.load %arg26[%c0_101, %c0_102] : memref<64x8xf32, #tpu.memory_space<vmem>>, vector<64x8xf32>
    %c0_103 = arith.constant 0 : index
    %c0_104 = arith.constant 0 : index
    %202 = vector.load %arg25[%c0_103, %c0_104] : memref<1x8xf32, #tpu.memory_space<vmem>>, vector<1x8xf32>
    %203 = vector.shape_cast %202 : vector<1x8xf32> to vector<8xf32>
    %cst_105 = arith.constant dense<0.000000e+00> : vector<32x32xf32>
    %204 = tpu.matmul %1, %200, %cst_105 {dimension_numbers = #tpu.dot_dimension_numbers<[1], [0], [0], [1], [0, 0, 1, 1], [], []>} : vector<32x16xf32>, vector<16x32xf32>, vector<32x32xf32> -> vector<32x32xf32>
    %cst_106 = arith.constant 0.000000e+00 : f32
    %205 = vector.broadcast %cst_106 : f32 to vector<16x8xf32>
    %206 = vector.extract_strided_slice %204 {offsets = [0, 0], sizes = [16, 32], strides = [1, 1]} : vector<32x32xf32> to vector<16x32xf32>
    %207 = vector.extract_strided_slice %201 {offsets = [0, 0], sizes = [32, 8], strides = [1, 1]} : vector<64x8xf32> to vector<32x8xf32>
    %cst_107 = arith.constant dense<0.000000e+00> : vector<16x8xf32>
    %208 = tpu.matmul %206, %207, %cst_107 {dimension_numbers = #tpu.dot_dimension_numbers<[1], [0], [0], [1], [0, 0, 1, 1], [], []>} : vector<16x32xf32>, vector<32x8xf32>, vector<16x8xf32> -> vector<16x8xf32>
    %209 = arith.addf %205, %208 : vector<16x8xf32>
    %210 = vector.extract_strided_slice %204 {offsets = [16, 0], sizes = [16, 32], strides = [1, 1]} : vector<32x32xf32> to vector<16x32xf32>
    %211 = vector.extract_strided_slice %201 {offsets = [32, 0], sizes = [32, 8], strides = [1, 1]} : vector<64x8xf32> to vector<32x8xf32>
    %cst_108 = arith.constant dense<0.000000e+00> : vector<16x8xf32>
    %212 = tpu.matmul %210, %211, %cst_108 {dimension_numbers = #tpu.dot_dimension_numbers<[1], [0], [0], [1], [0, 0, 1, 1], [], []>} : vector<16x32xf32>, vector<32x8xf32>, vector<16x8xf32> -> vector<16x8xf32>
    %213 = arith.addf %209, %212 : vector<16x8xf32>
    %214 = vector.shape_cast %203 : vector<8xf32> to vector<1x8xf32>
    %215 = vector.broadcast %214 : vector<1x8xf32> to vector<16x8xf32>
    %216 = arith.addf %213, %215 : vector<16x8xf32>
    %cst_109 = arith.constant 0.000000e+00 : f32
    %217 = vector.broadcast %cst_109 : f32 to vector<16x8xf32>
    %218 = arith.maximumf %216, %217 : vector<16x8xf32>
    %c0_110 = arith.constant 0 : index
    %c0_111 = arith.constant 0 : index
    %219 = vector.load %arg28[%c0_110, %c0_111] : memref<16x8xf32, #tpu.memory_space<vmem>>, vector<16x8xf32>
    %c0_112 = arith.constant 0 : index
    %c0_113 = arith.constant 0 : index
    %220 = vector.load %arg27[%c0_112, %c0_113] : memref<1x8xf32, #tpu.memory_space<vmem>>, vector<1x8xf32>
    %221 = vector.shape_cast %220 : vector<1x8xf32> to vector<8xf32>
    %cst_114 = arith.constant dense<0.000000e+00> : vector<32x8xf32>
    %222 = tpu.matmul %1, %218, %cst_114 {dimension_numbers = #tpu.dot_dimension_numbers<[1], [0], [0], [1], [0, 0, 1, 1], [], []>} : vector<32x16xf32>, vector<16x8xf32>, vector<32x8xf32> -> vector<32x8xf32>
    %cst_115 = arith.constant 0.000000e+00 : f32
    %223 = vector.broadcast %cst_115 : f32 to vector<16x8xf32>
    %224 = vector.extract_strided_slice %222 {offsets = [0, 0], sizes = [16, 8], strides = [1, 1]} : vector<32x8xf32> to vector<16x8xf32>
    %225 = vector.extract_strided_slice %219 {offsets = [0, 0], sizes = [8, 8], strides = [1, 1]} : vector<16x8xf32> to vector<8x8xf32>
    %cst_116 = arith.constant dense<0.000000e+00> : vector<16x8xf32>
    %226 = tpu.matmul %224, %225, %cst_116 {dimension_numbers = #tpu.dot_dimension_numbers<[1], [0], [0], [1], [0, 0, 1, 1], [], []>} : vector<16x8xf32>, vector<8x8xf32>, vector<16x8xf32> -> vector<16x8xf32>
    %227 = arith.addf %223, %226 : vector<16x8xf32>
    %228 = vector.extract_strided_slice %222 {offsets = [16, 0], sizes = [16, 8], strides = [1, 1]} : vector<32x8xf32> to vector<16x8xf32>
    %229 = vector.extract_strided_slice %219 {offsets = [8, 0], sizes = [8, 8], strides = [1, 1]} : vector<16x8xf32> to vector<8x8xf32>
    %cst_117 = arith.constant dense<0.000000e+00> : vector<16x8xf32>
    %230 = tpu.matmul %228, %229, %cst_117 {dimension_numbers = #tpu.dot_dimension_numbers<[1], [0], [0], [1], [0, 0, 1, 1], [], []>} : vector<16x8xf32>, vector<8x8xf32>, vector<16x8xf32> -> vector<16x8xf32>
    %231 = arith.addf %227, %230 : vector<16x8xf32>
    %232 = vector.shape_cast %221 : vector<8xf32> to vector<1x8xf32>
    %233 = vector.broadcast %232 : vector<1x8xf32> to vector<16x8xf32>
    %234 = arith.addf %231, %233 : vector<16x8xf32>
    %cst_118 = arith.constant 0.000000e+00 : f32
    %235 = vector.broadcast %cst_118 : f32 to vector<16x8xf32>
    %236 = arith.maximumf %234, %235 : vector<16x8xf32>
    %c0_119 = arith.constant 0 : index
    %c0_120 = arith.constant 0 : index
    %237 = vector.load %arg30[%c0_119, %c0_120] : memref<16x32xf32, #tpu.memory_space<vmem>>, vector<16x32xf32>
    %c0_121 = arith.constant 0 : index
    %c0_122 = arith.constant 0 : index
    %238 = vector.load %arg29[%c0_121, %c0_122] : memref<1x32xf32, #tpu.memory_space<vmem>>, vector<1x32xf32>
    %239 = vector.shape_cast %238 : vector<1x32xf32> to vector<32xf32>
    %cst_123 = arith.constant dense<0.000000e+00> : vector<32x8xf32>
    %240 = tpu.matmul %1, %236, %cst_123 {dimension_numbers = #tpu.dot_dimension_numbers<[1], [0], [0], [1], [0, 0, 1, 1], [], []>} : vector<32x16xf32>, vector<16x8xf32>, vector<32x8xf32> -> vector<32x8xf32>
    %cst_124 = arith.constant 0.000000e+00 : f32
    %241 = vector.broadcast %cst_124 : f32 to vector<16x32xf32>
    %242 = vector.extract_strided_slice %240 {offsets = [0, 0], sizes = [16, 8], strides = [1, 1]} : vector<32x8xf32> to vector<16x8xf32>
    %243 = vector.extract_strided_slice %237 {offsets = [0, 0], sizes = [8, 32], strides = [1, 1]} : vector<16x32xf32> to vector<8x32xf32>
    %cst_125 = arith.constant dense<0.000000e+00> : vector<16x32xf32>
    %244 = tpu.matmul %242, %243, %cst_125 {dimension_numbers = #tpu.dot_dimension_numbers<[1], [0], [0], [1], [0, 0, 1, 1], [], []>} : vector<16x8xf32>, vector<8x32xf32>, vector<16x32xf32> -> vector<16x32xf32>
    %245 = arith.addf %241, %244 : vector<16x32xf32>
    %246 = vector.extract_strided_slice %240 {offsets = [16, 0], sizes = [16, 8], strides = [1, 1]} : vector<32x8xf32> to vector<16x8xf32>
    %247 = vector.extract_strided_slice %237 {offsets = [8, 0], sizes = [8, 32], strides = [1, 1]} : vector<16x32xf32> to vector<8x32xf32>
    %cst_126 = arith.constant dense<0.000000e+00> : vector<16x32xf32>
    %248 = tpu.matmul %246, %247, %cst_126 {dimension_numbers = #tpu.dot_dimension_numbers<[1], [0], [0], [1], [0, 0, 1, 1], [], []>} : vector<16x8xf32>, vector<8x32xf32>, vector<16x32xf32> -> vector<16x32xf32>
    %249 = arith.addf %245, %248 : vector<16x32xf32>
    %250 = vector.shape_cast %239 : vector<32xf32> to vector<1x32xf32>
    %251 = vector.broadcast %250 : vector<1x32xf32> to vector<16x32xf32>
    %252 = arith.addf %249, %251 : vector<16x32xf32>
    %253 = arith.addf %252, %200 : vector<16x32xf32>
    %cst_127 = arith.constant 0.000000e+00 : f32
    %254 = vector.broadcast %cst_127 : f32 to vector<16x32xf32>
    %255 = arith.maximumf %253, %254 : vector<16x32xf32>
    %c0_128 = arith.constant 0 : index
    %c0_129 = arith.constant 0 : index
    %c0_130 = arith.constant 0 : index
    %256 = vector.load %arg31[%c0_128, %c0_129, %c0_130] : memref<1x16x32xf32, #tpu.memory_space<vmem>>, vector<1x16x32xf32>
    %257 = vector.shape_cast %256 : vector<1x16x32xf32> to vector<16x32xf32>
    %258 = vector.shape_cast %255 : vector<16x32xf32> to vector<1x16x32xf32>
    tpu.vector_store %arg31[%c0_128, %c0_129, %c0_130], %258 {strides = array<i32>} : memref<1x16x32xf32, #tpu.memory_space<vmem>>, vector<1x16x32xf32>,
    return
  }
  func.func @transform_0(%arg0: i32) -> (i32, i32, i32) {
    %c0_i32 = arith.constant 0 : i32
    %c0_i32_0 = arith.constant 0 : i32
    %c0_i32_1 = arith.constant 0 : i32
    return %arg0, %c0_i32, %c0_i32_0 : i32, i32, i32
  }
  func.func @transform_1(%arg0: i32) -> (i32, i32, i32) {
    %c0_i32 = arith.constant 0 : i32
    %c0_i32_0 = arith.constant 0 : i32
    %c0_i32_1 = arith.constant 0 : i32
    return %arg0, %c0_i32, %c0_i32_0 : i32, i32, i32
  }
  func.func @transform_2(%arg0: i32) -> (i32, i32) {
    %c0_i32 = arith.constant 0 : i32
    %c0_i32_0 = arith.constant 0 : i32
    %c0_i32_1 = arith.constant 0 : i32
    return %c0_i32, %c0_i32_0 : i32, i32
  }
  func.func @transform_3(%arg0: i32) -> (i32, i32) {
    %c0_i32 = arith.constant 0 : i32
    %c0_i32_0 = arith.constant 0 : i32
    %c0_i32_1 = arith.constant 0 : i32
    return %c0_i32, %c0_i32_0 : i32, i32
  }
  func.func @transform_4(%arg0: i32) -> (i32, i32) {
    %c0_i32 = arith.constant 0 : i32
    %c0_i32_0 = arith.constant 0 : i32
    %c0_i32_1 = arith.constant 0 : i32
    return %c0_i32, %c0_i32_0 : i32, i32
  }
  func.func @transform_5(%arg0: i32) -> (i32, i32) {
    %c0_i32 = arith.constant 0 : i32
    %c0_i32_0 = arith.constant 0 : i32
    %c0_i32_1 = arith.constant 0 : i32
    return %c0_i32, %c0_i32_0 : i32, i32
  }
  func.func @transform_6(%arg0: i32) -> (i32, i32) {
    %c0_i32 = arith.constant 0 : i32
    %c0_i32_0 = arith.constant 0 : i32
    %c0_i32_1 = arith.constant 0 : i32
    return %c0_i32, %c0_i32_0 : i32, i32
  }
  func.func @transform_7(%arg0: i32) -> (i32, i32) {
    %c0_i32 = arith.constant 0 : i32
    %c0_i32_0 = arith.constant 0 : i32
    %c0_i32_1 = arith.constant 0 : i32
    return %c0_i32, %c0_i32_0 : i32, i32
  }
  func.func @transform_8(%arg0: i32) -> (i32, i32) {
    %c0_i32 = arith.constant 0 : i32
    %c0_i32_0 = arith.constant 0 : i32
    %c0_i32_1 = arith.constant 0 : i32
    return %c0_i32, %c0_i32_0 : i32, i32
  }
  func.func @transform_9(%arg0: i32) -> (i32, i32) {
    %c0_i32 = arith.constant 0 : i32
    %c0_i32_0 = arith.constant 0 : i32
    %c0_i32_1 = arith.constant 0 : i32
    return %c0_i32, %c0_i32_0 : i32, i32
  }
  func.func @transform_10(%arg0: i32) -> (i32, i32) {
    %c0_i32 = arith.constant 0 : i32
    %c0_i32_0 = arith.constant 0 : i32
    %c0_i32_1 = arith.constant 0 : i32
    return %c0_i32, %c0_i32_0 : i32, i32
  }
  func.func @transform_11(%arg0: i32) -> (i32, i32) {
    %c0_i32 = arith.constant 0 : i32
    %c0_i32_0 = arith.constant 0 : i32
    %c0_i32_1 = arith.constant 0 : i32
    return %c0_i32, %c0_i32_0 : i32, i32
  }
  func.func @transform_12(%arg0: i32) -> (i32, i32) {
    %c0_i32 = arith.constant 0 : i32
    %c0_i32_0 = arith.constant 0 : i32
    %c0_i32_1 = arith.constant 0 : i32
    return %c0_i32, %c0_i32_0 : i32, i32
  }
  func.func @transform_13(%arg0: i32) -> (i32, i32) {
    %c0_i32 = arith.constant 0 : i32
    %c0_i32_0 = arith.constant 0 : i32
    %c0_i32_1 = arith.constant 0 : i32
    return %c0_i32, %c0_i32_0 : i32, i32
  }
  func.func @transform_14(%arg0: i32) -> (i32, i32) {
    %c0_i32 = arith.constant 0 : i32
    %c0_i32_0 = arith.constant 0 : i32
    %c0_i32_1 = arith.constant 0 : i32
    return %c0_i32, %c0_i32_0 : i32, i32
  }
  func.func @transform_15(%arg0: i32) -> (i32, i32) {
    %c0_i32 = arith.constant 0 : i32
    %c0_i32_0 = arith.constant 0 : i32
    %c0_i32_1 = arith.constant 0 : i32
    return %c0_i32, %c0_i32_0 : i32, i32
  }
  func.func @transform_16(%arg0: i32) -> (i32, i32) {
    %c0_i32 = arith.constant 0 : i32
    %c0_i32_0 = arith.constant 0 : i32
    %c0_i32_1 = arith.constant 0 : i32
    return %c0_i32, %c0_i32_0 : i32, i32
  }
  func.func @transform_17(%arg0: i32) -> (i32, i32) {
    %c0_i32 = arith.constant 0 : i32
    %c0_i32_0 = arith.constant 0 : i32
    %c0_i32_1 = arith.constant 0 : i32
    return %c0_i32, %c0_i32_0 : i32, i32
  }
  func.func @transform_18(%arg0: i32) -> (i32, i32) {
    %c0_i32 = arith.constant 0 : i32
    %c0_i32_0 = arith.constant 0 : i32
    %c0_i32_1 = arith.constant 0 : i32
    return %c0_i32, %c0_i32_0 : i32, i32
  }
  func.func @transform_19(%arg0: i32) -> (i32, i32) {
    %c0_i32 = arith.constant 0 : i32
    %c0_i32_0 = arith.constant 0 : i32
    %c0_i32_1 = arith.constant 0 : i32
    return %c0_i32, %c0_i32_0 : i32, i32
  }
  func.func @transform_20(%arg0: i32) -> (i32, i32) {
    %c0_i32 = arith.constant 0 : i32
    %c0_i32_0 = arith.constant 0 : i32
    %c0_i32_1 = arith.constant 0 : i32
    return %c0_i32, %c0_i32_0 : i32, i32
  }
  func.func @transform_21(%arg0: i32) -> (i32, i32) {
    %c0_i32 = arith.constant 0 : i32
    %c0_i32_0 = arith.constant 0 : i32
    %c0_i32_1 = arith.constant 0 : i32
    return %c0_i32, %c0_i32_0 : i32, i32
  }
  func.func @transform_22(%arg0: i32) -> (i32, i32) {
    %c0_i32 = arith.constant 0 : i32
    %c0_i32_0 = arith.constant 0 : i32
    %c0_i32_1 = arith.constant 0 : i32
    return %c0_i32, %c0_i32_0 : i32, i32
  }
  func.func @transform_23(%arg0: i32) -> (i32, i32) {
    %c0_i32 = arith.constant 0 : i32
    %c0_i32_0 = arith.constant 0 : i32
    %c0_i32_1 = arith.constant 0 : i32
    return %c0_i32, %c0_i32_0 : i32, i32
  }
  func.func @transform_24(%arg0: i32) -> (i32, i32) {
    %c0_i32 = arith.constant 0 : i32
    %c0_i32_0 = arith.constant 0 : i32
    %c0_i32_1 = arith.constant 0 : i32
    return %c0_i32, %c0_i32_0 : i32, i32
  }
  func.func @transform_25(%arg0: i32) -> (i32, i32) {
    %c0_i32 = arith.constant 0 : i32
    %c0_i32_0 = arith.constant 0 : i32
    %c0_i32_1 = arith.constant 0 : i32
    return %c0_i32, %c0_i32_0 : i32, i32
  }
  func.func @transform_26(%arg0: i32) -> (i32, i32) {
    %c0_i32 = arith.constant 0 : i32
    %c0_i32_0 = arith.constant 0 : i32
    %c0_i32_1 = arith.constant 0 : i32
    return %c0_i32, %c0_i32_0 : i32, i32
  }
  func.func @transform_27(%arg0: i32) -> (i32, i32) {
    %c0_i32 = arith.constant 0 : i32
    %c0_i32_0 = arith.constant 0 : i32
    %c0_i32_1 = arith.constant 0 : i32
    return %c0_i32, %c0_i32_0 : i32, i32
  }
  func.func @transform_28(%arg0: i32) -> (i32, i32) {
    %c0_i32 = arith.constant 0 : i32
    %c0_i32_0 = arith.constant 0 : i32
    %c0_i32_1 = arith.constant 0 : i32
    return %c0_i32, %c0_i32_0 : i32, i32
  }
  func.func @transform_29(%arg0: i32) -> (i32, i32) {
    %c0_i32 = arith.constant 0 : i32
    %c0_i32_0 = arith.constant 0 : i32
    %c0_i32_1 = arith.constant 0 : i32
    return %c0_i32, %c0_i32_0 : i32, i32
  }
  func.func @transform_30(%arg0: i32) -> (i32, i32, i32) {
    %c0_i32 = arith.constant 0 : i32
    %c0_i32_0 = arith.constant 0 : i32
    %c0_i32_1 = arith.constant 0 : i32
    return %arg0, %c0_i32, %c0_i32_0 : i32, i32, i32
  }
}

module attributes {stable_mosaic.version = 11 : i64} {
  func.func @kernel(%arg0: i32, %arg1: memref<2x4x16xf32, #tpu.memory_space<vmem>>, %arg2: memref<2x512xf32, #tpu.memory_space<vmem>>, %arg3: memref<1x32xf32, #tpu.memory_space<vmem>>, %arg4: memref<512x32xf32, #tpu.memory_space<vmem>>, %arg5: memref<1x16xf32, #tpu.memory_space<vmem>>, %arg6: memref<32x16xf32, #tpu.memory_space<vmem>>, %arg7: memref<1x256xf32, #tpu.memory_space<vmem>>, %arg8: memref<48x256xf32, #tpu.memory_space<vmem>>, %arg9: memref<16x128xf32, #tpu.memory_space<vmem>>, %arg10: memref<32x128xf32, #tpu.memory_space<vmem>>, %arg11: memref<1x128xf32, #tpu.memory_space<vmem>>, %arg12: memref<32x128xf32, #tpu.memory_space<vmem>>, %arg13: memref<32x128xf32, #tpu.memory_space<vmem>>, %arg14: memref<1x128xf32, #tpu.memory_space<vmem>>, %arg15: memref<2x256xf32, #tpu.memory_space<vmem>>) attributes {dimension_semantics = [#tpu.dimension_semantics<arbitrary>], iteration_bounds = array<i64: 1>, scalar_prefetch = 0 : i64, scratch_operands = 0 : i64, tpu.core_type = #tpu.core_type<tc>, window_params = [{pipeline_mode = #tpu.pipeline_mode<synchronous>, transform_indices = @transform_0, window_bounds = array<i64: 2, 4, 16>}, {pipeline_mode = #tpu.pipeline_mode<synchronous>, transform_indices = @transform_1, window_bounds = array<i64: 2, 512>}, {pipeline_mode = #tpu.pipeline_mode<synchronous>, transform_indices = @transform_2, window_bounds = array<i64: 1, 32>}, {pipeline_mode = #tpu.pipeline_mode<synchronous>, transform_indices = @transform_3, window_bounds = array<i64: 512, 32>}, {pipeline_mode = #tpu.pipeline_mode<synchronous>, transform_indices = @transform_4, window_bounds = array<i64: 1, 16>}, {pipeline_mode = #tpu.pipeline_mode<synchronous>, transform_indices = @transform_5, window_bounds = array<i64: 32, 16>}, {pipeline_mode = #tpu.pipeline_mode<synchronous>, transform_indices = @transform_6, window_bounds = array<i64: 1, 256>}, {pipeline_mode = #tpu.pipeline_mode<synchronous>, transform_indices = @transform_7, window_bounds = array<i64: 48, 256>}, {pipeline_mode = #tpu.pipeline_mode<synchronous>, transform_indices = @transform_8, window_bounds = array<i64: 16, 128>}, {pipeline_mode = #tpu.pipeline_mode<synchronous>, transform_indices = @transform_9, window_bounds = array<i64: 32, 128>}, {pipeline_mode = #tpu.pipeline_mode<synchronous>, transform_indices = @transform_10, window_bounds = array<i64: 1, 128>}, {pipeline_mode = #tpu.pipeline_mode<synchronous>, transform_indices = @transform_11, window_bounds = array<i64: 32, 128>}, {pipeline_mode = #tpu.pipeline_mode<synchronous>, transform_indices = @transform_12, window_bounds = array<i64: 32, 128>}, {pipeline_mode = #tpu.pipeline_mode<synchronous>, transform_indices = @transform_13, window_bounds = array<i64: 1, 128>}, {pipeline_mode = #tpu.pipeline_mode<synchronous>, transform_indices = @transform_14, window_bounds = array<i64: 2, 256>}]} {
    %c0 = arith.constant 0 : index
    %c0_0 = arith.constant 0 : index
    %c0_1 = arith.constant 0 : index
    %0 = vector.load %arg1[%c0, %c0_0, %c0_1] : memref<2x4x16xf32, #tpu.memory_space<vmem>>, vector<2x1x16xf32>
    %1 = vector.shape_cast %0 : vector<2x1x16xf32> to vector<2x16xf32>
    %c0_2 = arith.constant 0 : index
    %c1 = arith.constant 1 : index
    %c0_3 = arith.constant 0 : index
    %2 = vector.load %arg1[%c0_2, %c1, %c0_3] : memref<2x4x16xf32, #tpu.memory_space<vmem>>, vector<2x1x16xf32>
    %3 = vector.shape_cast %2 : vector<2x1x16xf32> to vector<2x16xf32>
    %c0_4 = arith.constant 0 : index
    %c2 = arith.constant 2 : index
    %c0_5 = arith.constant 0 : index
    %4 = vector.load %arg1[%c0_4, %c2, %c0_5] : memref<2x4x16xf32, #tpu.memory_space<vmem>>, vector<2x1x16xf32>
    %5 = vector.shape_cast %4 : vector<2x1x16xf32> to vector<2x16xf32>
    %c0_6 = arith.constant 0 : index
    %c3 = arith.constant 3 : index
    %c0_7 = arith.constant 0 : index
    %6 = vector.load %arg1[%c0_6, %c3, %c0_7] : memref<2x4x16xf32, #tpu.memory_space<vmem>>, vector<2x1x16xf32>
    %7 = vector.shape_cast %6 : vector<2x1x16xf32> to vector<2x16xf32>
    %c0_8 = arith.constant 0 : index
    %c0_9 = arith.constant 0 : index
    %8 = vector.load %arg9[%c0_8, %c0_9] : memref<16x128xf32, #tpu.memory_space<vmem>>, vector<16x128xf32>
    %c0_10 = arith.constant 0 : index
    %c0_11 = arith.constant 0 : index
    %9 = vector.load %arg10[%c0_10, %c0_11] : memref<32x128xf32, #tpu.memory_space<vmem>>, vector<32x128xf32>
    %c0_12 = arith.constant 0 : index
    %c0_13 = arith.constant 0 : index
    %10 = vector.load %arg11[%c0_12, %c0_13] : memref<1x128xf32, #tpu.memory_space<vmem>>, vector<1x128xf32>
    %11 = vector.shape_cast %10 : vector<1x128xf32> to vector<128xf32>
    %cst = arith.constant 0.000000e+00 : f32
    %12 = vector.broadcast %cst : f32 to vector<2x32xf32>
    %cst_14 = arith.constant 0.000000e+00 : f32
    %13 = vector.broadcast %cst_14 : f32 to vector<2x32xf32>
    %cst_15 = arith.constant dense<0.000000e+00> : vector<2x128xf32>
    %14 = tpu.matmul %1, %8, %cst_15 {dimension_numbers = #tpu.dot_dimension_numbers<[1], [0], [0], [1], [0, 0, 1, 1], [], []>} : vector<2x16xf32>, vector<16x128xf32>, vector<2x128xf32> -> vector<2x128xf32>
    %cst_16 = arith.constant dense<0.000000e+00> : vector<2x128xf32>
    %15 = tpu.matmul %12, %9, %cst_16 {dimension_numbers = #tpu.dot_dimension_numbers<[1], [0], [0], [1], [0, 0, 1, 1], [], []>} : vector<2x32xf32>, vector<32x128xf32>, vector<2x128xf32> -> vector<2x128xf32>
    %16 = arith.addf %14, %15 : vector<2x128xf32>
    %17 = vector.shape_cast %11 : vector<128xf32> to vector<1x128xf32>
    %18 = vector.broadcast %17 : vector<1x128xf32> to vector<2x128xf32>
    %19 = arith.addf %16, %18 : vector<2x128xf32>
    %20 = vector.extract_strided_slice %19 {offsets = [0, 0], sizes = [2, 32], strides = [1, 1]} : vector<2x128xf32> to vector<2x32xf32>
    %21 = arith.negf %20 : vector<2x32xf32>
    %22 = math.exp %21 : vector<2x32xf32>
    %cst_17 = arith.constant 1.000000e+00 : f32
    %23 = vector.broadcast %cst_17 : f32 to vector<2x32xf32>
    %24 = arith.addf %23, %22 : vector<2x32xf32>
    %25 = arith.divf %23, %24 : vector<2x32xf32>
    %26 = vector.extract_strided_slice %19 {offsets = [0, 32], sizes = [2, 32], strides = [1, 1]} : vector<2x128xf32> to vector<2x32xf32>
    %27 = arith.negf %26 : vector<2x32xf32>
    %28 = math.exp %27 : vector<2x32xf32>
    %cst_18 = arith.constant 1.000000e+00 : f32
    %29 = vector.broadcast %cst_18 : f32 to vector<2x32xf32>
    %30 = arith.addf %29, %28 : vector<2x32xf32>
    %31 = arith.divf %29, %30 : vector<2x32xf32>
    %32 = vector.extract_strided_slice %19 {offsets = [0, 64], sizes = [2, 32], strides = [1, 1]} : vector<2x128xf32> to vector<2x32xf32>
    %33 = math.tanh %32 : vector<2x32xf32>
    %34 = vector.extract_strided_slice %19 {offsets = [0, 96], sizes = [2, 32], strides = [1, 1]} : vector<2x128xf32> to vector<2x32xf32>
    %35 = arith.negf %34 : vector<2x32xf32>
    %36 = math.exp %35 : vector<2x32xf32>
    %cst_19 = arith.constant 1.000000e+00 : f32
    %37 = vector.broadcast %cst_19 : f32 to vector<2x32xf32>
    %38 = arith.addf %37, %36 : vector<2x32xf32>
    %39 = arith.divf %37, %38 : vector<2x32xf32>
    %40 = arith.mulf %31, %13 : vector<2x32xf32>
    %41 = arith.mulf %25, %33 : vector<2x32xf32>
    %42 = arith.addf %40, %41 : vector<2x32xf32>
    %43 = math.tanh %42 : vector<2x32xf32>
    %44 = arith.mulf %39, %43 : vector<2x32xf32>
    %cst_20 = arith.constant dense<0.000000e+00> : vector<2x128xf32>
    %45 = tpu.matmul %3, %8, %cst_20 {dimension_numbers = #tpu.dot_dimension_numbers<[1], [0], [0], [1], [0, 0, 1, 1], [], []>} : vector<2x16xf32>, vector<16x128xf32>, vector<2x128xf32> -> vector<2x128xf32>
    %cst_21 = arith.constant dense<0.000000e+00> : vector<2x128xf32>
    %46 = tpu.matmul %44, %9, %cst_21 {dimension_numbers = #tpu.dot_dimension_numbers<[1], [0], [0], [1], [0, 0, 1, 1], [], []>} : vector<2x32xf32>, vector<32x128xf32>, vector<2x128xf32> -> vector<2x128xf32>
    %47 = arith.addf %45, %46 : vector<2x128xf32>
    %48 = vector.shape_cast %11 : vector<128xf32> to vector<1x128xf32>
    %49 = vector.broadcast %48 : vector<1x128xf32> to vector<2x128xf32>
    %50 = arith.addf %47, %49 : vector<2x128xf32>
    %51 = vector.extract_strided_slice %50 {offsets = [0, 0], sizes = [2, 32], strides = [1, 1]} : vector<2x128xf32> to vector<2x32xf32>
    %52 = arith.negf %51 : vector<2x32xf32>
    %53 = math.exp %52 : vector<2x32xf32>
    %cst_22 = arith.constant 1.000000e+00 : f32
    %54 = vector.broadcast %cst_22 : f32 to vector<2x32xf32>
    %55 = arith.addf %54, %53 : vector<2x32xf32>
    %56 = arith.divf %54, %55 : vector<2x32xf32>
    %57 = vector.extract_strided_slice %50 {offsets = [0, 32], sizes = [2, 32], strides = [1, 1]} : vector<2x128xf32> to vector<2x32xf32>
    %58 = arith.negf %57 : vector<2x32xf32>
    %59 = math.exp %58 : vector<2x32xf32>
    %cst_23 = arith.constant 1.000000e+00 : f32
    %60 = vector.broadcast %cst_23 : f32 to vector<2x32xf32>
    %61 = arith.addf %60, %59 : vector<2x32xf32>
    %62 = arith.divf %60, %61 : vector<2x32xf32>
    %63 = vector.extract_strided_slice %50 {offsets = [0, 64], sizes = [2, 32], strides = [1, 1]} : vector<2x128xf32> to vector<2x32xf32>
    %64 = math.tanh %63 : vector<2x32xf32>
    %65 = vector.extract_strided_slice %50 {offsets = [0, 96], sizes = [2, 32], strides = [1, 1]} : vector<2x128xf32> to vector<2x32xf32>
    %66 = arith.negf %65 : vector<2x32xf32>
    %67 = math.exp %66 : vector<2x32xf32>
    %cst_24 = arith.constant 1.000000e+00 : f32
    %68 = vector.broadcast %cst_24 : f32 to vector<2x32xf32>
    %69 = arith.addf %68, %67 : vector<2x32xf32>
    %70 = arith.divf %68, %69 : vector<2x32xf32>
    %71 = arith.mulf %62, %42 : vector<2x32xf32>
    %72 = arith.mulf %56, %64 : vector<2x32xf32>
    %73 = arith.addf %71, %72 : vector<2x32xf32>
    %74 = math.tanh %73 : vector<2x32xf32>
    %75 = arith.mulf %70, %74 : vector<2x32xf32>
    %cst_25 = arith.constant dense<0.000000e+00> : vector<2x128xf32>
    %76 = tpu.matmul %5, %8, %cst_25 {dimension_numbers = #tpu.dot_dimension_numbers<[1], [0], [0], [1], [0, 0, 1, 1], [], []>} : vector<2x16xf32>, vector<16x128xf32>, vector<2x128xf32> -> vector<2x128xf32>
    %cst_26 = arith.constant dense<0.000000e+00> : vector<2x128xf32>
    %77 = tpu.matmul %75, %9, %cst_26 {dimension_numbers = #tpu.dot_dimension_numbers<[1], [0], [0], [1], [0, 0, 1, 1], [], []>} : vector<2x32xf32>, vector<32x128xf32>, vector<2x128xf32> -> vector<2x128xf32>
    %78 = arith.addf %76, %77 : vector<2x128xf32>
    %79 = vector.shape_cast %11 : vector<128xf32> to vector<1x128xf32>
    %80 = vector.broadcast %79 : vector<1x128xf32> to vector<2x128xf32>
    %81 = arith.addf %78, %80 : vector<2x128xf32>
    %82 = vector.extract_strided_slice %81 {offsets = [0, 0], sizes = [2, 32], strides = [1, 1]} : vector<2x128xf32> to vector<2x32xf32>
    %83 = arith.negf %82 : vector<2x32xf32>
    %84 = math.exp %83 : vector<2x32xf32>
    %cst_27 = arith.constant 1.000000e+00 : f32
    %85 = vector.broadcast %cst_27 : f32 to vector<2x32xf32>
    %86 = arith.addf %85, %84 : vector<2x32xf32>
    %87 = arith.divf %85, %86 : vector<2x32xf32>
    %88 = vector.extract_strided_slice %81 {offsets = [0, 32], sizes = [2, 32], strides = [1, 1]} : vector<2x128xf32> to vector<2x32xf32>
    %89 = arith.negf %88 : vector<2x32xf32>
    %90 = math.exp %89 : vector<2x32xf32>
    %cst_28 = arith.constant 1.000000e+00 : f32
    %91 = vector.broadcast %cst_28 : f32 to vector<2x32xf32>
    %92 = arith.addf %91, %90 : vector<2x32xf32>
    %93 = arith.divf %91, %92 : vector<2x32xf32>
    %94 = vector.extract_strided_slice %81 {offsets = [0, 64], sizes = [2, 32], strides = [1, 1]} : vector<2x128xf32> to vector<2x32xf32>
    %95 = math.tanh %94 : vector<2x32xf32>
    %96 = vector.extract_strided_slice %81 {offsets = [0, 96], sizes = [2, 32], strides = [1, 1]} : vector<2x128xf32> to vector<2x32xf32>
    %97 = arith.negf %96 : vector<2x32xf32>
    %98 = math.exp %97 : vector<2x32xf32>
    %cst_29 = arith.constant 1.000000e+00 : f32
    %99 = vector.broadcast %cst_29 : f32 to vector<2x32xf32>
    %100 = arith.addf %99, %98 : vector<2x32xf32>
    %101 = arith.divf %99, %100 : vector<2x32xf32>
    %102 = arith.mulf %93, %73 : vector<2x32xf32>
    %103 = arith.mulf %87, %95 : vector<2x32xf32>
    %104 = arith.addf %102, %103 : vector<2x32xf32>
    %105 = math.tanh %104 : vector<2x32xf32>
    %106 = arith.mulf %101, %105 : vector<2x32xf32>
    %cst_30 = arith.constant dense<0.000000e+00> : vector<2x128xf32>
    %107 = tpu.matmul %7, %8, %cst_30 {dimension_numbers = #tpu.dot_dimension_numbers<[1], [0], [0], [1], [0, 0, 1, 1], [], []>} : vector<2x16xf32>, vector<16x128xf32>, vector<2x128xf32> -> vector<2x128xf32>
    %cst_31 = arith.constant dense<0.000000e+00> : vector<2x128xf32>
    %108 = tpu.matmul %106, %9, %cst_31 {dimension_numbers = #tpu.dot_dimension_numbers<[1], [0], [0], [1], [0, 0, 1, 1], [], []>} : vector<2x32xf32>, vector<32x128xf32>, vector<2x128xf32> -> vector<2x128xf32>
    %109 = arith.addf %107, %108 : vector<2x128xf32>
    %110 = vector.shape_cast %11 : vector<128xf32> to vector<1x128xf32>
    %111 = vector.broadcast %110 : vector<1x128xf32> to vector<2x128xf32>
    %112 = arith.addf %109, %111 : vector<2x128xf32>
    %113 = vector.extract_strided_slice %112 {offsets = [0, 0], sizes = [2, 32], strides = [1, 1]} : vector<2x128xf32> to vector<2x32xf32>
    %114 = arith.negf %113 : vector<2x32xf32>
    %115 = math.exp %114 : vector<2x32xf32>
    %cst_32 = arith.constant 1.000000e+00 : f32
    %116 = vector.broadcast %cst_32 : f32 to vector<2x32xf32>
    %117 = arith.addf %116, %115 : vector<2x32xf32>
    %118 = arith.divf %116, %117 : vector<2x32xf32>
    %119 = vector.extract_strided_slice %112 {offsets = [0, 32], sizes = [2, 32], strides = [1, 1]} : vector<2x128xf32> to vector<2x32xf32>
    %120 = arith.negf %119 : vector<2x32xf32>
    %121 = math.exp %120 : vector<2x32xf32>
    %cst_33 = arith.constant 1.000000e+00 : f32
    %122 = vector.broadcast %cst_33 : f32 to vector<2x32xf32>
    %123 = arith.addf %122, %121 : vector<2x32xf32>
    %124 = arith.divf %122, %123 : vector<2x32xf32>
    %125 = vector.extract_strided_slice %112 {offsets = [0, 64], sizes = [2, 32], strides = [1, 1]} : vector<2x128xf32> to vector<2x32xf32>
    %126 = math.tanh %125 : vector<2x32xf32>
    %127 = vector.extract_strided_slice %112 {offsets = [0, 96], sizes = [2, 32], strides = [1, 1]} : vector<2x128xf32> to vector<2x32xf32>
    %128 = arith.negf %127 : vector<2x32xf32>
    %129 = math.exp %128 : vector<2x32xf32>
    %cst_34 = arith.constant 1.000000e+00 : f32
    %130 = vector.broadcast %cst_34 : f32 to vector<2x32xf32>
    %131 = arith.addf %130, %129 : vector<2x32xf32>
    %132 = arith.divf %130, %131 : vector<2x32xf32>
    %133 = arith.mulf %124, %104 : vector<2x32xf32>
    %134 = arith.mulf %118, %126 : vector<2x32xf32>
    %135 = arith.addf %133, %134 : vector<2x32xf32>
    %136 = math.tanh %135 : vector<2x32xf32>
    %137 = arith.mulf %132, %136 : vector<2x32xf32>
    %c0_35 = arith.constant 0 : index
    %c0_36 = arith.constant 0 : index
    %138 = vector.load %arg12[%c0_35, %c0_36] : memref<32x128xf32, #tpu.memory_space<vmem>>, vector<32x128xf32>
    %c0_37 = arith.constant 0 : index
    %c0_38 = arith.constant 0 : index
    %139 = vector.load %arg13[%c0_37, %c0_38] : memref<32x128xf32, #tpu.memory_space<vmem>>, vector<32x128xf32>
    %c0_39 = arith.constant 0 : index
    %c0_40 = arith.constant 0 : index
    %140 = vector.load %arg14[%c0_39, %c0_40] : memref<1x128xf32, #tpu.memory_space<vmem>>, vector<1x128xf32>
    %141 = vector.shape_cast %140 : vector<1x128xf32> to vector<128xf32>
    %cst_41 = arith.constant 0.000000e+00 : f32
    %142 = vector.broadcast %cst_41 : f32 to vector<2x32xf32>
    %cst_42 = arith.constant 0.000000e+00 : f32
    %143 = vector.broadcast %cst_42 : f32 to vector<2x32xf32>
    %cst_43 = arith.constant dense<0.000000e+00> : vector<2x128xf32>
    %144 = tpu.matmul %44, %138, %cst_43 {dimension_numbers = #tpu.dot_dimension_numbers<[1], [0], [0], [1], [0, 0, 1, 1], [], []>} : vector<2x32xf32>, vector<32x128xf32>, vector<2x128xf32> -> vector<2x128xf32>
    %cst_44 = arith.constant dense<0.000000e+00> : vector<2x128xf32>
    %145 = tpu.matmul %142, %139, %cst_44 {dimension_numbers = #tpu.dot_dimension_numbers<[1], [0], [0], [1], [0, 0, 1, 1], [], []>} : vector<2x32xf32>, vector<32x128xf32>, vector<2x128xf32> -> vector<2x128xf32>
    %146 = arith.addf %144, %145 : vector<2x128xf32>
    %147 = vector.shape_cast %141 : vector<128xf32> to vector<1x128xf32>
    %148 = vector.broadcast %147 : vector<1x128xf32> to vector<2x128xf32>
    %149 = arith.addf %146, %148 : vector<2x128xf32>
    %150 = vector.extract_strided_slice %149 {offsets = [0, 0], sizes = [2, 32], strides = [1, 1]} : vector<2x128xf32> to vector<2x32xf32>
    %151 = arith.negf %150 : vector<2x32xf32>
    %152 = math.exp %151 : vector<2x32xf32>
    %cst_45 = arith.constant 1.000000e+00 : f32
    %153 = vector.broadcast %cst_45 : f32 to vector<2x32xf32>
    %154 = arith.addf %153, %152 : vector<2x32xf32>
    %155 = arith.divf %153, %154 : vector<2x32xf32>
    %156 = vector.extract_strided_slice %149 {offsets = [0, 32], sizes = [2, 32], strides = [1, 1]} : vector<2x128xf32> to vector<2x32xf32>
    %157 = arith.negf %156 : vector<2x32xf32>
    %158 = math.exp %157 : vector<2x32xf32>
    %cst_46 = arith.constant 1.000000e+00 : f32
    %159 = vector.broadcast %cst_46 : f32 to vector<2x32xf32>
    %160 = arith.addf %159, %158 : vector<2x32xf32>
    %161 = arith.divf %159, %160 : vector<2x32xf32>
    %162 = vector.extract_strided_slice %149 {offsets = [0, 64], sizes = [2, 32], strides = [1, 1]} : vector<2x128xf32> to vector<2x32xf32>
    %163 = math.tanh %162 : vector<2x32xf32>
    %164 = vector.extract_strided_slice %149 {offsets = [0, 96], sizes = [2, 32], strides = [1, 1]} : vector<2x128xf32> to vector<2x32xf32>
    %165 = arith.negf %164 : vector<2x32xf32>
    %166 = math.exp %165 : vector<2x32xf32>
    %cst_47 = arith.constant 1.000000e+00 : f32
    %167 = vector.broadcast %cst_47 : f32 to vector<2x32xf32>
    %168 = arith.addf %167, %166 : vector<2x32xf32>
    %169 = arith.divf %167, %168 : vector<2x32xf32>
    %170 = arith.mulf %161, %143 : vector<2x32xf32>
    %171 = arith.mulf %155, %163 : vector<2x32xf32>
    %172 = arith.addf %170, %171 : vector<2x32xf32>
    %173 = math.tanh %172 : vector<2x32xf32>
    %174 = arith.mulf %169, %173 : vector<2x32xf32>
    %cst_48 = arith.constant dense<0.000000e+00> : vector<2x128xf32>
    %175 = tpu.matmul %75, %138, %cst_48 {dimension_numbers = #tpu.dot_dimension_numbers<[1], [0], [0], [1], [0, 0, 1, 1], [], []>} : vector<2x32xf32>, vector<32x128xf32>, vector<2x128xf32> -> vector<2x128xf32>
    %cst_49 = arith.constant dense<0.000000e+00> : vector<2x128xf32>
    %176 = tpu.matmul %174, %139, %cst_49 {dimension_numbers = #tpu.dot_dimension_numbers<[1], [0], [0], [1], [0, 0, 1, 1], [], []>} : vector<2x32xf32>, vector<32x128xf32>, vector<2x128xf32> -> vector<2x128xf32>
    %177 = arith.addf %175, %176 : vector<2x128xf32>
    %178 = vector.shape_cast %141 : vector<128xf32> to vector<1x128xf32>
    %179 = vector.broadcast %178 : vector<1x128xf32> to vector<2x128xf32>
    %180 = arith.addf %177, %179 : vector<2x128xf32>
    %181 = vector.extract_strided_slice %180 {offsets = [0, 0], sizes = [2, 32], strides = [1, 1]} : vector<2x128xf32> to vector<2x32xf32>
    %182 = arith.negf %181 : vector<2x32xf32>
    %183 = math.exp %182 : vector<2x32xf32>
    %cst_50 = arith.constant 1.000000e+00 : f32
    %184 = vector.broadcast %cst_50 : f32 to vector<2x32xf32>
    %185 = arith.addf %184, %183 : vector<2x32xf32>
    %186 = arith.divf %184, %185 : vector<2x32xf32>
    %187 = vector.extract_strided_slice %180 {offsets = [0, 32], sizes = [2, 32], strides = [1, 1]} : vector<2x128xf32> to vector<2x32xf32>
    %188 = arith.negf %187 : vector<2x32xf32>
    %189 = math.exp %188 : vector<2x32xf32>
    %cst_51 = arith.constant 1.000000e+00 : f32
    %190 = vector.broadcast %cst_51 : f32 to vector<2x32xf32>
    %191 = arith.addf %190, %189 : vector<2x32xf32>
    %192 = arith.divf %190, %191 : vector<2x32xf32>
    %193 = vector.extract_strided_slice %180 {offsets = [0, 64], sizes = [2, 32], strides = [1, 1]} : vector<2x128xf32> to vector<2x32xf32>
    %194 = math.tanh %193 : vector<2x32xf32>
    %195 = vector.extract_strided_slice %180 {offsets = [0, 96], sizes = [2, 32], strides = [1, 1]} : vector<2x128xf32> to vector<2x32xf32>
    %196 = arith.negf %195 : vector<2x32xf32>
    %197 = math.exp %196 : vector<2x32xf32>
    %cst_52 = arith.constant 1.000000e+00 : f32
    %198 = vector.broadcast %cst_52 : f32 to vector<2x32xf32>
    %199 = arith.addf %198, %197 : vector<2x32xf32>
    %200 = arith.divf %198, %199 : vector<2x32xf32>
    %201 = arith.mulf %192, %172 : vector<2x32xf32>
    %202 = arith.mulf %186, %194 : vector<2x32xf32>
    %203 = arith.addf %201, %202 : vector<2x32xf32>
    %204 = math.tanh %203 : vector<2x32xf32>
    %205 = arith.mulf %200, %204 : vector<2x32xf32>
    %cst_53 = arith.constant dense<0.000000e+00> : vector<2x128xf32>
    %206 = tpu.matmul %106, %138, %cst_53 {dimension_numbers = #tpu.dot_dimension_numbers<[1], [0], [0], [1], [0, 0, 1, 1], [], []>} : vector<2x32xf32>, vector<32x128xf32>, vector<2x128xf32> -> vector<2x128xf32>
    %cst_54 = arith.constant dense<0.000000e+00> : vector<2x128xf32>
    %207 = tpu.matmul %205, %139, %cst_54 {dimension_numbers = #tpu.dot_dimension_numbers<[1], [0], [0], [1], [0, 0, 1, 1], [], []>} : vector<2x32xf32>, vector<32x128xf32>, vector<2x128xf32> -> vector<2x128xf32>
    %208 = arith.addf %206, %207 : vector<2x128xf32>
    %209 = vector.shape_cast %141 : vector<128xf32> to vector<1x128xf32>
    %210 = vector.broadcast %209 : vector<1x128xf32> to vector<2x128xf32>
    %211 = arith.addf %208, %210 : vector<2x128xf32>
    %212 = vector.extract_strided_slice %211 {offsets = [0, 0], sizes = [2, 32], strides = [1, 1]} : vector<2x128xf32> to vector<2x32xf32>
    %213 = arith.negf %212 : vector<2x32xf32>
    %214 = math.exp %213 : vector<2x32xf32>
    %cst_55 = arith.constant 1.000000e+00 : f32
    %215 = vector.broadcast %cst_55 : f32 to vector<2x32xf32>
    %216 = arith.addf %215, %214 : vector<2x32xf32>
    %217 = arith.divf %215, %216 : vector<2x32xf32>
    %218 = vector.extract_strided_slice %211 {offsets = [0, 32], sizes = [2, 32], strides = [1, 1]} : vector<2x128xf32> to vector<2x32xf32>
    %219 = arith.negf %218 : vector<2x32xf32>
    %220 = math.exp %219 : vector<2x32xf32>
    %cst_56 = arith.constant 1.000000e+00 : f32
    %221 = vector.broadcast %cst_56 : f32 to vector<2x32xf32>
    %222 = arith.addf %221, %220 : vector<2x32xf32>
    %223 = arith.divf %221, %222 : vector<2x32xf32>
    %224 = vector.extract_strided_slice %211 {offsets = [0, 64], sizes = [2, 32], strides = [1, 1]} : vector<2x128xf32> to vector<2x32xf32>
    %225 = math.tanh %224 : vector<2x32xf32>
    %226 = vector.extract_strided_slice %211 {offsets = [0, 96], sizes = [2, 32], strides = [1, 1]} : vector<2x128xf32> to vector<2x32xf32>
    %227 = arith.negf %226 : vector<2x32xf32>
    %228 = math.exp %227 : vector<2x32xf32>
    %cst_57 = arith.constant 1.000000e+00 : f32
    %229 = vector.broadcast %cst_57 : f32 to vector<2x32xf32>
    %230 = arith.addf %229, %228 : vector<2x32xf32>
    %231 = arith.divf %229, %230 : vector<2x32xf32>
    %232 = arith.mulf %223, %203 : vector<2x32xf32>
    %233 = arith.mulf %217, %225 : vector<2x32xf32>
    %234 = arith.addf %232, %233 : vector<2x32xf32>
    %235 = math.tanh %234 : vector<2x32xf32>
    %236 = arith.mulf %231, %235 : vector<2x32xf32>
    %cst_58 = arith.constant dense<0.000000e+00> : vector<2x128xf32>
    %237 = tpu.matmul %137, %138, %cst_58 {dimension_numbers = #tpu.dot_dimension_numbers<[1], [0], [0], [1], [0, 0, 1, 1], [], []>} : vector<2x32xf32>, vector<32x128xf32>, vector<2x128xf32> -> vector<2x128xf32>
    %cst_59 = arith.constant dense<0.000000e+00> : vector<2x128xf32>
    %238 = tpu.matmul %236, %139, %cst_59 {dimension_numbers = #tpu.dot_dimension_numbers<[1], [0], [0], [1], [0, 0, 1, 1], [], []>} : vector<2x32xf32>, vector<32x128xf32>, vector<2x128xf32> -> vector<2x128xf32>
    %239 = arith.addf %237, %238 : vector<2x128xf32>
    %240 = vector.shape_cast %141 : vector<128xf32> to vector<1x128xf32>
    %241 = vector.broadcast %240 : vector<1x128xf32> to vector<2x128xf32>
    %242 = arith.addf %239, %241 : vector<2x128xf32>
    %243 = vector.extract_strided_slice %242 {offsets = [0, 0], sizes = [2, 32], strides = [1, 1]} : vector<2x128xf32> to vector<2x32xf32>
    %244 = arith.negf %243 : vector<2x32xf32>
    %245 = math.exp %244 : vector<2x32xf32>
    %cst_60 = arith.constant 1.000000e+00 : f32
    %246 = vector.broadcast %cst_60 : f32 to vector<2x32xf32>
    %247 = arith.addf %246, %245 : vector<2x32xf32>
    %248 = arith.divf %246, %247 : vector<2x32xf32>
    %249 = vector.extract_strided_slice %242 {offsets = [0, 32], sizes = [2, 32], strides = [1, 1]} : vector<2x128xf32> to vector<2x32xf32>
    %250 = arith.negf %249 : vector<2x32xf32>
    %251 = math.exp %250 : vector<2x32xf32>
    %cst_61 = arith.constant 1.000000e+00 : f32
    %252 = vector.broadcast %cst_61 : f32 to vector<2x32xf32>
    %253 = arith.addf %252, %251 : vector<2x32xf32>
    %254 = arith.divf %252, %253 : vector<2x32xf32>
    %255 = vector.extract_strided_slice %242 {offsets = [0, 64], sizes = [2, 32], strides = [1, 1]} : vector<2x128xf32> to vector<2x32xf32>
    %256 = math.tanh %255 : vector<2x32xf32>
    %257 = vector.extract_strided_slice %242 {offsets = [0, 96], sizes = [2, 32], strides = [1, 1]} : vector<2x128xf32> to vector<2x32xf32>
    %258 = arith.negf %257 : vector<2x32xf32>
    %259 = math.exp %258 : vector<2x32xf32>
    %cst_62 = arith.constant 1.000000e+00 : f32
    %260 = vector.broadcast %cst_62 : f32 to vector<2x32xf32>
    %261 = arith.addf %260, %259 : vector<2x32xf32>
    %262 = arith.divf %260, %261 : vector<2x32xf32>
    %263 = arith.mulf %254, %234 : vector<2x32xf32>
    %264 = arith.mulf %248, %256 : vector<2x32xf32>
    %265 = arith.addf %263, %264 : vector<2x32xf32>
    %266 = math.tanh %265 : vector<2x32xf32>
    %267 = arith.mulf %262, %266 : vector<2x32xf32>
    %c0_63 = arith.constant 0 : index
    %c0_64 = arith.constant 0 : index
    %268 = vector.load %arg2[%c0_63, %c0_64] : memref<2x512xf32, #tpu.memory_space<vmem>>, vector<2x512xf32>
    %c0_65 = arith.constant 0 : index
    %c0_66 = arith.constant 0 : index
    %269 = vector.load %arg4[%c0_65, %c0_66] : memref<512x32xf32, #tpu.memory_space<vmem>>, vector<512x32xf32>
    %cst_67 = arith.constant dense<0.000000e+00> : vector<2x32xf32>
    %270 = tpu.matmul %268, %269, %cst_67 {dimension_numbers = #tpu.dot_dimension_numbers<[1], [0], [0], [1], [0, 0, 1, 1], [], []>} : vector<2x512xf32>, vector<512x32xf32>, vector<2x32xf32> -> vector<2x32xf32>
    %c0_68 = arith.constant 0 : index
    %c0_69 = arith.constant 0 : index
    %271 = vector.load %arg3[%c0_68, %c0_69] : memref<1x32xf32, #tpu.memory_space<vmem>>, vector<1x32xf32>
    %272 = vector.shape_cast %271 : vector<1x32xf32> to vector<32xf32>
    %273 = vector.shape_cast %272 : vector<32xf32> to vector<1x32xf32>
    %274 = vector.broadcast %273 : vector<1x32xf32> to vector<2x32xf32>
    %275 = arith.addf %270, %274 : vector<2x32xf32>
    %cst_70 = arith.constant 0.000000e+00 : f32
    %276 = vector.broadcast %cst_70 : f32 to vector<2x32xf32>
    %277 = arith.maximumf %275, %276 : vector<2x32xf32>
    %c0_71 = arith.constant 0 : index
    %c0_72 = arith.constant 0 : index
    %278 = vector.load %arg6[%c0_71, %c0_72] : memref<32x16xf32, #tpu.memory_space<vmem>>, vector<32x16xf32>
    %cst_73 = arith.constant dense<0.000000e+00> : vector<2x16xf32>
    %279 = tpu.matmul %267, %278, %cst_73 {dimension_numbers = #tpu.dot_dimension_numbers<[1], [0], [0], [1], [0, 0, 1, 1], [], []>} : vector<2x32xf32>, vector<32x16xf32>, vector<2x16xf32> -> vector<2x16xf32>
    %c0_74 = arith.constant 0 : index
    %c0_75 = arith.constant 0 : index
    %280 = vector.load %arg5[%c0_74, %c0_75] : memref<1x16xf32, #tpu.memory_space<vmem>>, vector<1x16xf32>
    %281 = vector.shape_cast %280 : vector<1x16xf32> to vector<16xf32>
    %282 = vector.shape_cast %281 : vector<16xf32> to vector<1x16xf32>
    %283 = vector.broadcast %282 : vector<1x16xf32> to vector<2x16xf32>
    %284 = arith.addf %279, %283 : vector<2x16xf32>
    %cst_76 = arith.constant 0.000000e+00 : f32
    %285 = vector.broadcast %cst_76 : f32 to vector<2x16xf32>
    %286 = arith.maximumf %284, %285 : vector<2x16xf32>
    %c0_77 = arith.constant 0 : index
    %c0_78 = arith.constant 0 : index
    %287 = vector.load %arg8[%c0_77, %c0_78] : memref<48x256xf32, #tpu.memory_space<vmem>>, vector<48x256xf32>
    %288 = vector.extract_strided_slice %287 {offsets = [0, 0], sizes = [32, 256], strides = [1, 1]} : vector<48x256xf32> to vector<32x256xf32>
    %cst_79 = arith.constant dense<0.000000e+00> : vector<2x256xf32>
    %289 = tpu.matmul %277, %288, %cst_79 {dimension_numbers = #tpu.dot_dimension_numbers<[1], [0], [0], [1], [0, 0, 1, 1], [], []>} : vector<2x32xf32>, vector<32x256xf32>, vector<2x256xf32> -> vector<2x256xf32>
    %290 = vector.extract_strided_slice %287 {offsets = [32, 0], sizes = [16, 256], strides = [1, 1]} : vector<48x256xf32> to vector<16x256xf32>
    %cst_80 = arith.constant dense<0.000000e+00> : vector<2x256xf32>
    %291 = tpu.matmul %286, %290, %cst_80 {dimension_numbers = #tpu.dot_dimension_numbers<[1], [0], [0], [1], [0, 0, 1, 1], [], []>} : vector<2x16xf32>, vector<16x256xf32>, vector<2x256xf32> -> vector<2x256xf32>
    %292 = arith.addf %289, %291 : vector<2x256xf32>
    %c0_81 = arith.constant 0 : index
    %c0_82 = arith.constant 0 : index
    %293 = vector.load %arg7[%c0_81, %c0_82] : memref<1x256xf32, #tpu.memory_space<vmem>>, vector<1x256xf32>
    %294 = vector.shape_cast %293 : vector<1x256xf32> to vector<256xf32>
    %295 = vector.shape_cast %294 : vector<256xf32> to vector<1x256xf32>
    %296 = vector.broadcast %295 : vector<1x256xf32> to vector<2x256xf32>
    %297 = arith.addf %292, %296 : vector<2x256xf32>
    %cst_83 = arith.constant 0.000000e+00 : f32
    %298 = vector.broadcast %cst_83 : f32 to vector<2x256xf32>
    %299 = arith.maximumf %297, %298 : vector<2x256xf32>
    %c0_84 = arith.constant 0 : index
    %c0_85 = arith.constant 0 : index
    %300 = vector.load %arg15[%c0_84, %c0_85] : memref<2x256xf32, #tpu.memory_space<vmem>>, vector<2x256xf32>
    tpu.vector_store %arg15[%c0_84, %c0_85], %299 {strides = array<i32>} : memref<2x256xf32, #tpu.memory_space<vmem>>, vector<2x256xf32>,
    return
  }
  func.func @transform_0(%arg0: i32) -> (i32, i32, i32) {
    %c0_i32 = arith.constant 0 : i32
    %c0_i32_0 = arith.constant 0 : i32
    %c0_i32_1 = arith.constant 0 : i32
    %c0_i32_2 = arith.constant 0 : i32
    return %c0_i32, %c0_i32_0, %c0_i32_1 : i32, i32, i32
  }
  func.func @transform_1(%arg0: i32) -> (i32, i32) {
    %c0_i32 = arith.constant 0 : i32
    %c0_i32_0 = arith.constant 0 : i32
    %c0_i32_1 = arith.constant 0 : i32
    return %c0_i32, %c0_i32_0 : i32, i32
  }
  func.func @transform_2(%arg0: i32) -> (i32, i32) {
    %c0_i32 = arith.constant 0 : i32
    %c0_i32_0 = arith.constant 0 : i32
    %c0_i32_1 = arith.constant 0 : i32
    return %c0_i32, %c0_i32_0 : i32, i32
  }
  func.func @transform_3(%arg0: i32) -> (i32, i32) {
    %c0_i32 = arith.constant 0 : i32
    %c0_i32_0 = arith.constant 0 : i32
    %c0_i32_1 = arith.constant 0 : i32
    return %c0_i32, %c0_i32_0 : i32, i32
  }
  func.func @transform_4(%arg0: i32) -> (i32, i32) {
    %c0_i32 = arith.constant 0 : i32
    %c0_i32_0 = arith.constant 0 : i32
    %c0_i32_1 = arith.constant 0 : i32
    return %c0_i32, %c0_i32_0 : i32, i32
  }
  func.func @transform_5(%arg0: i32) -> (i32, i32) {
    %c0_i32 = arith.constant 0 : i32
    %c0_i32_0 = arith.constant 0 : i32
    %c0_i32_1 = arith.constant 0 : i32
    return %c0_i32, %c0_i32_0 : i32, i32
  }
  func.func @transform_6(%arg0: i32) -> (i32, i32) {
    %c0_i32 = arith.constant 0 : i32
    %c0_i32_0 = arith.constant 0 : i32
    %c0_i32_1 = arith.constant 0 : i32
    return %c0_i32, %c0_i32_0 : i32, i32
  }
  func.func @transform_7(%arg0: i32) -> (i32, i32) {
    %c0_i32 = arith.constant 0 : i32
    %c0_i32_0 = arith.constant 0 : i32
    %c0_i32_1 = arith.constant 0 : i32
    return %c0_i32, %c0_i32_0 : i32, i32
  }
  func.func @transform_8(%arg0: i32) -> (i32, i32) {
    %c0_i32 = arith.constant 0 : i32
    %c0_i32_0 = arith.constant 0 : i32
    %c0_i32_1 = arith.constant 0 : i32
    return %c0_i32, %c0_i32_0 : i32, i32
  }
  func.func @transform_9(%arg0: i32) -> (i32, i32) {
    %c0_i32 = arith.constant 0 : i32
    %c0_i32_0 = arith.constant 0 : i32
    %c0_i32_1 = arith.constant 0 : i32
    return %c0_i32, %c0_i32_0 : i32, i32
  }
  func.func @transform_10(%arg0: i32) -> (i32, i32) {
    %c0_i32 = arith.constant 0 : i32
    %c0_i32_0 = arith.constant 0 : i32
    %c0_i32_1 = arith.constant 0 : i32
    return %c0_i32, %c0_i32_0 : i32, i32
  }
  func.func @transform_11(%arg0: i32) -> (i32, i32) {
    %c0_i32 = arith.constant 0 : i32
    %c0_i32_0 = arith.constant 0 : i32
    %c0_i32_1 = arith.constant 0 : i32
    return %c0_i32, %c0_i32_0 : i32, i32
  }
  func.func @transform_12(%arg0: i32) -> (i32, i32) {
    %c0_i32 = arith.constant 0 : i32
    %c0_i32_0 = arith.constant 0 : i32
    %c0_i32_1 = arith.constant 0 : i32
    return %c0_i32, %c0_i32_0 : i32, i32
  }
  func.func @transform_13(%arg0: i32) -> (i32, i32) {
    %c0_i32 = arith.constant 0 : i32
    %c0_i32_0 = arith.constant 0 : i32
    %c0_i32_1 = arith.constant 0 : i32
    return %c0_i32, %c0_i32_0 : i32, i32
  }
  func.func @transform_14(%arg0: i32) -> (i32, i32) {
    %c0_i32 = arith.constant 0 : i32
    %c0_i32_0 = arith.constant 0 : i32
    %c0_i32_1 = arith.constant 0 : i32
    return %c0_i32, %c0_i32_0 : i32, i32
  }
}

module attributes {stable_mosaic.version = 11 : i64} {
  func.func @kernel(%arg0: i32, %arg1: memref<1x16x16xf32, #tpu.memory_space<vmem>>, %arg2: memref<1x32x16xf32, #tpu.memory_space<vmem>>, %arg3: memref<1x4xf32, #tpu.memory_space<vmem>>, %arg4: memref<32x4xf32, #tpu.memory_space<vmem>>, %arg5: memref<1x4xf32, #tpu.memory_space<vmem>>, %arg6: memref<8x4xf32, #tpu.memory_space<vmem>>, %arg7: memref<1x16xf32, #tpu.memory_space<vmem>>, %arg8: memref<8x16xf32, #tpu.memory_space<vmem>>, %arg9: memref<1x16xf32, #tpu.memory_space<vmem>>, %arg10: memref<32x16xf32, #tpu.memory_space<vmem>>, %arg11: memref<1x4xf32, #tpu.memory_space<vmem>>, %arg12: memref<32x4xf32, #tpu.memory_space<vmem>>, %arg13: memref<1x4xf32, #tpu.memory_space<vmem>>, %arg14: memref<8x4xf32, #tpu.memory_space<vmem>>, %arg15: memref<1x16xf32, #tpu.memory_space<vmem>>, %arg16: memref<8x16xf32, #tpu.memory_space<vmem>>, %arg17: memref<1x8xf32, #tpu.memory_space<vmem>>, %arg18: memref<16x8xf32, #tpu.memory_space<vmem>>, %arg19: memref<1x1xf32, #tpu.memory_space<vmem>>, %arg20: memref<8x1xf32, #tpu.memory_space<vmem>>, %arg21: memref<1x16x1xf32, #tpu.memory_space<vmem>>) attributes {dimension_semantics = [#tpu.dimension_semantics<parallel>], iteration_bounds = array<i64: 2>, scalar_prefetch = 0 : i64, scratch_operands = 0 : i64, tpu.core_type = #tpu.core_type<tc>, window_params = [{transform_indices = @transform_0, window_bounds = array<i64: 1, 16, 16>}, {transform_indices = @transform_1, window_bounds = array<i64: 1, 32, 16>}, {pipeline_mode = #tpu.pipeline_mode<synchronous>, transform_indices = @transform_2, window_bounds = array<i64: 1, 4>}, {pipeline_mode = #tpu.pipeline_mode<synchronous>, transform_indices = @transform_3, window_bounds = array<i64: 32, 4>}, {pipeline_mode = #tpu.pipeline_mode<synchronous>, transform_indices = @transform_4, window_bounds = array<i64: 1, 4>}, {pipeline_mode = #tpu.pipeline_mode<synchronous>, transform_indices = @transform_5, window_bounds = array<i64: 8, 4>}, {pipeline_mode = #tpu.pipeline_mode<synchronous>, transform_indices = @transform_6, window_bounds = array<i64: 1, 16>}, {pipeline_mode = #tpu.pipeline_mode<synchronous>, transform_indices = @transform_7, window_bounds = array<i64: 8, 16>}, {pipeline_mode = #tpu.pipeline_mode<synchronous>, transform_indices = @transform_8, window_bounds = array<i64: 1, 16>}, {pipeline_mode = #tpu.pipeline_mode<synchronous>, transform_indices = @transform_9, window_bounds = array<i64: 32, 16>}, {pipeline_mode = #tpu.pipeline_mode<synchronous>, transform_indices = @transform_10, window_bounds = array<i64: 1, 4>}, {pipeline_mode = #tpu.pipeline_mode<synchronous>, transform_indices = @transform_11, window_bounds = array<i64: 32, 4>}, {pipeline_mode = #tpu.pipeline_mode<synchronous>, transform_indices = @transform_12, window_bounds = array<i64: 1, 4>}, {pipeline_mode = #tpu.pipeline_mode<synchronous>, transform_indices = @transform_13, window_bounds = array<i64: 8, 4>}, {pipeline_mode = #tpu.pipeline_mode<synchronous>, transform_indices = @transform_14, window_bounds = array<i64: 1, 16>}, {pipeline_mode = #tpu.pipeline_mode<synchronous>, transform_indices = @transform_15, window_bounds = array<i64: 8, 16>}, {pipeline_mode = #tpu.pipeline_mode<synchronous>, transform_indices = @transform_16, window_bounds = array<i64: 1, 8>}, {pipeline_mode = #tpu.pipeline_mode<synchronous>, transform_indices = @transform_17, window_bounds = array<i64: 16, 8>}, {pipeline_mode = #tpu.pipeline_mode<synchronous>, transform_indices = @transform_18, window_bounds = array<i64: 1, 1>}, {pipeline_mode = #tpu.pipeline_mode<synchronous>, transform_indices = @transform_19, window_bounds = array<i64: 8, 1>}, {transform_indices = @transform_20, window_bounds = array<i64: 1, 16, 1>}]} {
    %c0 = arith.constant 0 : index
    %c0_0 = arith.constant 0 : index
    %c0_1 = arith.constant 0 : index
    %0 = vector.load %arg2[%c0, %c0_0, %c0_1] : memref<1x32x16xf32, #tpu.memory_space<vmem>>, vector<1x32x16xf32>
    %1 = vector.shape_cast %0 : vector<1x32x16xf32> to vector<32x16xf32>
    %c0_2 = arith.constant 0 : index
    %c0_3 = arith.constant 0 : index
    %c0_4 = arith.constant 0 : index
    %2 = vector.load %arg1[%c0_2, %c0_3, %c0_4] : memref<1x16x16xf32, #tpu.memory_space<vmem>>, vector<1x16x16xf32>
    %3 = vector.shape_cast %2 : vector<1x16x16xf32> to vector<16x16xf32>
    %c0_5 = arith.constant 0 : index
    %c0_6 = arith.constant 0 : index
    %4 = vector.load %arg4[%c0_5, %c0_6] : memref<32x4xf32, #tpu.memory_space<vmem>>, vector<32x4xf32>
    %c0_7 = arith.constant 0 : index
    %c0_8 = arith.constant 0 : index
    %5 = vector.load %arg3[%c0_7, %c0_8] : memref<1x4xf32, #tpu.memory_space<vmem>>, vector<1x4xf32>
    %6 = vector.shape_cast %5 : vector<1x4xf32> to vector<4xf32>
    %cst = arith.constant dense<0.000000e+00> : vector<32x16xf32>
    %7 = tpu.matmul %1, %3, %cst {dimension_numbers = #tpu.dot_dimension_numbers<[1], [0], [0], [1], [0, 0, 1, 1], [], []>} : vector<32x16xf32>, vector<16x16xf32>, vector<32x16xf32> -> vector<32x16xf32>
    %cst_9 = arith.constant 0.000000e+00 : f32
    %8 = vector.broadcast %cst_9 : f32 to vector<16x4xf32>
    %9 = vector.extract_strided_slice %7 {offsets = [0, 0], sizes = [16, 16], strides = [1, 1]} : vector<32x16xf32> to vector<16x16xf32>
    %10 = vector.extract_strided_slice %4 {offsets = [0, 0], sizes = [16, 4], strides = [1, 1]} : vector<32x4xf32> to vector<16x4xf32>
    %cst_10 = arith.constant dense<0.000000e+00> : vector<16x4xf32>
    %11 = tpu.matmul %9, %10, %cst_10 {dimension_numbers = #tpu.dot_dimension_numbers<[1], [0], [0], [1], [0, 0, 1, 1], [], []>} : vector<16x16xf32>, vector<16x4xf32>, vector<16x4xf32> -> vector<16x4xf32>
    %12 = arith.addf %8, %11 : vector<16x4xf32>
    %13 = vector.extract_strided_slice %7 {offsets = [16, 0], sizes = [16, 16], strides = [1, 1]} : vector<32x16xf32> to vector<16x16xf32>
    %14 = vector.extract_strided_slice %4 {offsets = [16, 0], sizes = [16, 4], strides = [1, 1]} : vector<32x4xf32> to vector<16x4xf32>
    %cst_11 = arith.constant dense<0.000000e+00> : vector<16x4xf32>
    %15 = tpu.matmul %13, %14, %cst_11 {dimension_numbers = #tpu.dot_dimension_numbers<[1], [0], [0], [1], [0, 0, 1, 1], [], []>} : vector<16x16xf32>, vector<16x4xf32>, vector<16x4xf32> -> vector<16x4xf32>
    %16 = arith.addf %12, %15 : vector<16x4xf32>
    %17 = vector.shape_cast %6 : vector<4xf32> to vector<1x4xf32>
    %18 = vector.broadcast %17 : vector<1x4xf32> to vector<16x4xf32>
    %19 = arith.addf %16, %18 : vector<16x4xf32>
    %cst_12 = arith.constant 0.000000e+00 : f32
    %20 = vector.broadcast %cst_12 : f32 to vector<16x4xf32>
    %21 = arith.maximumf %19, %20 : vector<16x4xf32>
    %c0_13 = arith.constant 0 : index
    %c0_14 = arith.constant 0 : index
    %22 = vector.load %arg6[%c0_13, %c0_14] : memref<8x4xf32, #tpu.memory_space<vmem>>, vector<8x4xf32>
    %c0_15 = arith.constant 0 : index
    %c0_16 = arith.constant 0 : index
    %23 = vector.load %arg5[%c0_15, %c0_16] : memref<1x4xf32, #tpu.memory_space<vmem>>, vector<1x4xf32>
    %24 = vector.shape_cast %23 : vector<1x4xf32> to vector<4xf32>
    %cst_17 = arith.constant dense<0.000000e+00> : vector<32x4xf32>
    %25 = tpu.matmul %1, %21, %cst_17 {dimension_numbers = #tpu.dot_dimension_numbers<[1], [0], [0], [1], [0, 0, 1, 1], [], []>} : vector<32x16xf32>, vector<16x4xf32>, vector<32x4xf32> -> vector<32x4xf32>
    %cst_18 = arith.constant 0.000000e+00 : f32
    %26 = vector.broadcast %cst_18 : f32 to vector<16x4xf32>
    %27 = vector.extract_strided_slice %25 {offsets = [0, 0], sizes = [16, 4], strides = [1, 1]} : vector<32x4xf32> to vector<16x4xf32>
    %28 = vector.extract_strided_slice %22 {offsets = [0, 0], sizes = [4, 4], strides = [1, 1]} : vector<8x4xf32> to vector<4x4xf32>
    %cst_19 = arith.constant dense<0.000000e+00> : vector<16x4xf32>
    %29 = tpu.matmul %27, %28, %cst_19 {dimension_numbers = #tpu.dot_dimension_numbers<[1], [0], [0], [1], [0, 0, 1, 1], [], []>} : vector<16x4xf32>, vector<4x4xf32>, vector<16x4xf32> -> vector<16x4xf32>
    %30 = arith.addf %26, %29 : vector<16x4xf32>
    %31 = vector.extract_strided_slice %25 {offsets = [16, 0], sizes = [16, 4], strides = [1, 1]} : vector<32x4xf32> to vector<16x4xf32>
    %32 = vector.extract_strided_slice %22 {offsets = [4, 0], sizes = [4, 4], strides = [1, 1]} : vector<8x4xf32> to vector<4x4xf32>
    %cst_20 = arith.constant dense<0.000000e+00> : vector<16x4xf32>
    %33 = tpu.matmul %31, %32, %cst_20 {dimension_numbers = #tpu.dot_dimension_numbers<[1], [0], [0], [1], [0, 0, 1, 1], [], []>} : vector<16x4xf32>, vector<4x4xf32>, vector<16x4xf32> -> vector<16x4xf32>
    %34 = arith.addf %30, %33 : vector<16x4xf32>
    %35 = vector.shape_cast %24 : vector<4xf32> to vector<1x4xf32>
    %36 = vector.broadcast %35 : vector<1x4xf32> to vector<16x4xf32>
    %37 = arith.addf %34, %36 : vector<16x4xf32>
    %cst_21 = arith.constant 0.000000e+00 : f32
    %38 = vector.broadcast %cst_21 : f32 to vector<16x4xf32>
    %39 = arith.maximumf %37, %38 : vector<16x4xf32>
    %c0_22 = arith.constant 0 : index
    %c0_23 = arith.constant 0 : index
    %40 = vector.load %arg8[%c0_22, %c0_23] : memref<8x16xf32, #tpu.memory_space<vmem>>, vector<8x16xf32>
    %c0_24 = arith.constant 0 : index
    %c0_25 = arith.constant 0 : index
    %41 = vector.load %arg7[%c0_24, %c0_25] : memref<1x16xf32, #tpu.memory_space<vmem>>, vector<1x16xf32>
    %42 = vector.shape_cast %41 : vector<1x16xf32> to vector<16xf32>
    %cst_26 = arith.constant dense<0.000000e+00> : vector<32x4xf32>
    %43 = tpu.matmul %1, %39, %cst_26 {dimension_numbers = #tpu.dot_dimension_numbers<[1], [0], [0], [1], [0, 0, 1, 1], [], []>} : vector<32x16xf32>, vector<16x4xf32>, vector<32x4xf32> -> vector<32x4xf32>
    %cst_27 = arith.constant 0.000000e+00 : f32
    %44 = vector.broadcast %cst_27 : f32 to vector<16x16xf32>
    %45 = vector.extract_strided_slice %43 {offsets = [0, 0], sizes = [16, 4], strides = [1, 1]} : vector<32x4xf32> to vector<16x4xf32>
    %46 = vector.extract_strided_slice %40 {offsets = [0, 0], sizes = [4, 16], strides = [1, 1]} : vector<8x16xf32> to vector<4x16xf32>
    %cst_28 = arith.constant dense<0.000000e+00> : vector<16x16xf32>
    %47 = tpu.matmul %45, %46, %cst_28 {dimension_numbers = #tpu.dot_dimension_numbers<[1], [0], [0], [1], [0, 0, 1, 1], [], []>} : vector<16x4xf32>, vector<4x16xf32>, vector<16x16xf32> -> vector<16x16xf32>
    %48 = arith.addf %44, %47 : vector<16x16xf32>
    %49 = vector.extract_strided_slice %43 {offsets = [16, 0], sizes = [16, 4], strides = [1, 1]} : vector<32x4xf32> to vector<16x4xf32>
    %50 = vector.extract_strided_slice %40 {offsets = [4, 0], sizes = [4, 16], strides = [1, 1]} : vector<8x16xf32> to vector<4x16xf32>
    %cst_29 = arith.constant dense<0.000000e+00> : vector<16x16xf32>
    %51 = tpu.matmul %49, %50, %cst_29 {dimension_numbers = #tpu.dot_dimension_numbers<[1], [0], [0], [1], [0, 0, 1, 1], [], []>} : vector<16x4xf32>, vector<4x16xf32>, vector<16x16xf32> -> vector<16x16xf32>
    %52 = arith.addf %48, %51 : vector<16x16xf32>
    %53 = vector.shape_cast %42 : vector<16xf32> to vector<1x16xf32>
    %54 = vector.broadcast %53 : vector<1x16xf32> to vector<16x16xf32>
    %55 = arith.addf %52, %54 : vector<16x16xf32>
    %c0_30 = arith.constant 0 : index
    %c0_31 = arith.constant 0 : index
    %56 = vector.load %arg10[%c0_30, %c0_31] : memref<32x16xf32, #tpu.memory_space<vmem>>, vector<32x16xf32>
    %c0_32 = arith.constant 0 : index
    %c0_33 = arith.constant 0 : index
    %57 = vector.load %arg9[%c0_32, %c0_33] : memref<1x16xf32, #tpu.memory_space<vmem>>, vector<1x16xf32>
    %58 = vector.shape_cast %57 : vector<1x16xf32> to vector<16xf32>
    %cst_34 = arith.constant dense<0.000000e+00> : vector<32x16xf32>
    %59 = tpu.matmul %1, %3, %cst_34 {dimension_numbers = #tpu.dot_dimension_numbers<[1], [0], [0], [1], [0, 0, 1, 1], [], []>} : vector<32x16xf32>, vector<16x16xf32>, vector<32x16xf32> -> vector<32x16xf32>
    %cst_35 = arith.constant 0.000000e+00 : f32
    %60 = vector.broadcast %cst_35 : f32 to vector<16x16xf32>
    %61 = vector.extract_strided_slice %59 {offsets = [0, 0], sizes = [16, 16], strides = [1, 1]} : vector<32x16xf32> to vector<16x16xf32>
    %62 = vector.extract_strided_slice %56 {offsets = [0, 0], sizes = [16, 16], strides = [1, 1]} : vector<32x16xf32> to vector<16x16xf32>
    %cst_36 = arith.constant dense<0.000000e+00> : vector<16x16xf32>
    %63 = tpu.matmul %61, %62, %cst_36 {dimension_numbers = #tpu.dot_dimension_numbers<[1], [0], [0], [1], [0, 0, 1, 1], [], []>} : vector<16x16xf32>, vector<16x16xf32>, vector<16x16xf32> -> vector<16x16xf32>
    %64 = arith.addf %60, %63 : vector<16x16xf32>
    %65 = vector.extract_strided_slice %59 {offsets = [16, 0], sizes = [16, 16], strides = [1, 1]} : vector<32x16xf32> to vector<16x16xf32>
    %66 = vector.extract_strided_slice %56 {offsets = [16, 0], sizes = [16, 16], strides = [1, 1]} : vector<32x16xf32> to vector<16x16xf32>
    %cst_37 = arith.constant dense<0.000000e+00> : vector<16x16xf32>
    %67 = tpu.matmul %65, %66, %cst_37 {dimension_numbers = #tpu.dot_dimension_numbers<[1], [0], [0], [1], [0, 0, 1, 1], [], []>} : vector<16x16xf32>, vector<16x16xf32>, vector<16x16xf32> -> vector<16x16xf32>
    %68 = arith.addf %64, %67 : vector<16x16xf32>
    %69 = vector.shape_cast %58 : vector<16xf32> to vector<1x16xf32>
    %70 = vector.broadcast %69 : vector<1x16xf32> to vector<16x16xf32>
    %71 = arith.addf %68, %70 : vector<16x16xf32>
    %72 = arith.addf %55, %71 : vector<16x16xf32>
    %cst_38 = arith.constant 0.000000e+00 : f32
    %73 = vector.broadcast %cst_38 : f32 to vector<16x16xf32>
    %74 = arith.maximumf %72, %73 : vector<16x16xf32>
    %c0_39 = arith.constant 0 : index
    %c0_40 = arith.constant 0 : index
    %75 = vector.load %arg12[%c0_39, %c0_40] : memref<32x4xf32, #tpu.memory_space<vmem>>, vector<32x4xf32>
    %c0_41 = arith.constant 0 : index
    %c0_42 = arith.constant 0 : index
    %76 = vector.load %arg11[%c0_41, %c0_42] : memref<1x4xf32, #tpu.memory_space<vmem>>, vector<1x4xf32>
    %77 = vector.shape_cast %76 : vector<1x4xf32> to vector<4xf32>
    %cst_43 = arith.constant dense<0.000000e+00> : vector<32x16xf32>
    %78 = tpu.matmul %1, %74, %cst_43 {dimension_numbers = #tpu.dot_dimension_numbers<[1], [0], [0], [1], [0, 0, 1, 1], [], []>} : vector<32x16xf32>, vector<16x16xf32>, vector<32x16xf32> -> vector<32x16xf32>
    %cst_44 = arith.constant 0.000000e+00 : f32
    %79 = vector.broadcast %cst_44 : f32 to vector<16x4xf32>
    %80 = vector.extract_strided_slice %78 {offsets = [0, 0], sizes = [16, 16], strides = [1, 1]} : vector<32x16xf32> to vector<16x16xf32>
    %81 = vector.extract_strided_slice %75 {offsets = [0, 0], sizes = [16, 4], strides = [1, 1]} : vector<32x4xf32> to vector<16x4xf32>
    %cst_45 = arith.constant dense<0.000000e+00> : vector<16x4xf32>
    %82 = tpu.matmul %80, %81, %cst_45 {dimension_numbers = #tpu.dot_dimension_numbers<[1], [0], [0], [1], [0, 0, 1, 1], [], []>} : vector<16x16xf32>, vector<16x4xf32>, vector<16x4xf32> -> vector<16x4xf32>
    %83 = arith.addf %79, %82 : vector<16x4xf32>
    %84 = vector.extract_strided_slice %78 {offsets = [16, 0], sizes = [16, 16], strides = [1, 1]} : vector<32x16xf32> to vector<16x16xf32>
    %85 = vector.extract_strided_slice %75 {offsets = [16, 0], sizes = [16, 4], strides = [1, 1]} : vector<32x4xf32> to vector<16x4xf32>
    %cst_46 = arith.constant dense<0.000000e+00> : vector<16x4xf32>
    %86 = tpu.matmul %84, %85, %cst_46 {dimension_numbers = #tpu.dot_dimension_numbers<[1], [0], [0], [1], [0, 0, 1, 1], [], []>} : vector<16x16xf32>, vector<16x4xf32>, vector<16x4xf32> -> vector<16x4xf32>
    %87 = arith.addf %83, %86 : vector<16x4xf32>
    %88 = vector.shape_cast %77 : vector<4xf32> to vector<1x4xf32>
    %89 = vector.broadcast %88 : vector<1x4xf32> to vector<16x4xf32>
    %90 = arith.addf %87, %89 : vector<16x4xf32>
    %cst_47 = arith.constant 0.000000e+00 : f32
    %91 = vector.broadcast %cst_47 : f32 to vector<16x4xf32>
    %92 = arith.maximumf %90, %91 : vector<16x4xf32>
    %c0_48 = arith.constant 0 : index
    %c0_49 = arith.constant 0 : index
    %93 = vector.load %arg14[%c0_48, %c0_49] : memref<8x4xf32, #tpu.memory_space<vmem>>, vector<8x4xf32>
    %c0_50 = arith.constant 0 : index
    %c0_51 = arith.constant 0 : index
    %94 = vector.load %arg13[%c0_50, %c0_51] : memref<1x4xf32, #tpu.memory_space<vmem>>, vector<1x4xf32>
    %95 = vector.shape_cast %94 : vector<1x4xf32> to vector<4xf32>
    %cst_52 = arith.constant dense<0.000000e+00> : vector<32x4xf32>
    %96 = tpu.matmul %1, %92, %cst_52 {dimension_numbers = #tpu.dot_dimension_numbers<[1], [0], [0], [1], [0, 0, 1, 1], [], []>} : vector<32x16xf32>, vector<16x4xf32>, vector<32x4xf32> -> vector<32x4xf32>
    %cst_53 = arith.constant 0.000000e+00 : f32
    %97 = vector.broadcast %cst_53 : f32 to vector<16x4xf32>
    %98 = vector.extract_strided_slice %96 {offsets = [0, 0], sizes = [16, 4], strides = [1, 1]} : vector<32x4xf32> to vector<16x4xf32>
    %99 = vector.extract_strided_slice %93 {offsets = [0, 0], sizes = [4, 4], strides = [1, 1]} : vector<8x4xf32> to vector<4x4xf32>
    %cst_54 = arith.constant dense<0.000000e+00> : vector<16x4xf32>
    %100 = tpu.matmul %98, %99, %cst_54 {dimension_numbers = #tpu.dot_dimension_numbers<[1], [0], [0], [1], [0, 0, 1, 1], [], []>} : vector<16x4xf32>, vector<4x4xf32>, vector<16x4xf32> -> vector<16x4xf32>
    %101 = arith.addf %97, %100 : vector<16x4xf32>
    %102 = vector.extract_strided_slice %96 {offsets = [16, 0], sizes = [16, 4], strides = [1, 1]} : vector<32x4xf32> to vector<16x4xf32>
    %103 = vector.extract_strided_slice %93 {offsets = [4, 0], sizes = [4, 4], strides = [1, 1]} : vector<8x4xf32> to vector<4x4xf32>
    %cst_55 = arith.constant dense<0.000000e+00> : vector<16x4xf32>
    %104 = tpu.matmul %102, %103, %cst_55 {dimension_numbers = #tpu.dot_dimension_numbers<[1], [0], [0], [1], [0, 0, 1, 1], [], []>} : vector<16x4xf32>, vector<4x4xf32>, vector<16x4xf32> -> vector<16x4xf32>
    %105 = arith.addf %101, %104 : vector<16x4xf32>
    %106 = vector.shape_cast %95 : vector<4xf32> to vector<1x4xf32>
    %107 = vector.broadcast %106 : vector<1x4xf32> to vector<16x4xf32>
    %108 = arith.addf %105, %107 : vector<16x4xf32>
    %cst_56 = arith.constant 0.000000e+00 : f32
    %109 = vector.broadcast %cst_56 : f32 to vector<16x4xf32>
    %110 = arith.maximumf %108, %109 : vector<16x4xf32>
    %c0_57 = arith.constant 0 : index
    %c0_58 = arith.constant 0 : index
    %111 = vector.load %arg16[%c0_57, %c0_58] : memref<8x16xf32, #tpu.memory_space<vmem>>, vector<8x16xf32>
    %c0_59 = arith.constant 0 : index
    %c0_60 = arith.constant 0 : index
    %112 = vector.load %arg15[%c0_59, %c0_60] : memref<1x16xf32, #tpu.memory_space<vmem>>, vector<1x16xf32>
    %113 = vector.shape_cast %112 : vector<1x16xf32> to vector<16xf32>
    %cst_61 = arith.constant dense<0.000000e+00> : vector<32x4xf32>
    %114 = tpu.matmul %1, %110, %cst_61 {dimension_numbers = #tpu.dot_dimension_numbers<[1], [0], [0], [1], [0, 0, 1, 1], [], []>} : vector<32x16xf32>, vector<16x4xf32>, vector<32x4xf32> -> vector<32x4xf32>
    %cst_62 = arith.constant 0.000000e+00 : f32
    %115 = vector.broadcast %cst_62 : f32 to vector<16x16xf32>
    %116 = vector.extract_strided_slice %114 {offsets = [0, 0], sizes = [16, 4], strides = [1, 1]} : vector<32x4xf32> to vector<16x4xf32>
    %117 = vector.extract_strided_slice %111 {offsets = [0, 0], sizes = [4, 16], strides = [1, 1]} : vector<8x16xf32> to vector<4x16xf32>
    %cst_63 = arith.constant dense<0.000000e+00> : vector<16x16xf32>
    %118 = tpu.matmul %116, %117, %cst_63 {dimension_numbers = #tpu.dot_dimension_numbers<[1], [0], [0], [1], [0, 0, 1, 1], [], []>} : vector<16x4xf32>, vector<4x16xf32>, vector<16x16xf32> -> vector<16x16xf32>
    %119 = arith.addf %115, %118 : vector<16x16xf32>
    %120 = vector.extract_strided_slice %114 {offsets = [16, 0], sizes = [16, 4], strides = [1, 1]} : vector<32x4xf32> to vector<16x4xf32>
    %121 = vector.extract_strided_slice %111 {offsets = [4, 0], sizes = [4, 16], strides = [1, 1]} : vector<8x16xf32> to vector<4x16xf32>
    %cst_64 = arith.constant dense<0.000000e+00> : vector<16x16xf32>
    %122 = tpu.matmul %120, %121, %cst_64 {dimension_numbers = #tpu.dot_dimension_numbers<[1], [0], [0], [1], [0, 0, 1, 1], [], []>} : vector<16x4xf32>, vector<4x16xf32>, vector<16x16xf32> -> vector<16x16xf32>
    %123 = arith.addf %119, %122 : vector<16x16xf32>
    %124 = vector.shape_cast %113 : vector<16xf32> to vector<1x16xf32>
    %125 = vector.broadcast %124 : vector<1x16xf32> to vector<16x16xf32>
    %126 = arith.addf %123, %125 : vector<16x16xf32>
    %127 = arith.addf %126, %74 : vector<16x16xf32>
    %cst_65 = arith.constant 0.000000e+00 : f32
    %128 = vector.broadcast %cst_65 : f32 to vector<16x16xf32>
    %129 = arith.maximumf %127, %128 : vector<16x16xf32>
    %c0_66 = arith.constant 0 : index
    %c0_67 = arith.constant 0 : index
    %130 = vector.load %arg18[%c0_66, %c0_67] : memref<16x8xf32, #tpu.memory_space<vmem>>, vector<16x8xf32>
    %cst_68 = arith.constant dense<0.000000e+00> : vector<16x8xf32>
    %131 = tpu.matmul %129, %130, %cst_68 {dimension_numbers = #tpu.dot_dimension_numbers<[1], [0], [0], [1], [0, 0, 1, 1], [], []>} : vector<16x16xf32>, vector<16x8xf32>, vector<16x8xf32> -> vector<16x8xf32>
    %c0_69 = arith.constant 0 : index
    %c0_70 = arith.constant 0 : index
    %132 = vector.load %arg17[%c0_69, %c0_70] : memref<1x8xf32, #tpu.memory_space<vmem>>, vector<1x8xf32>
    %133 = vector.shape_cast %132 : vector<1x8xf32> to vector<8xf32>
    %134 = vector.shape_cast %133 : vector<8xf32> to vector<1x8xf32>
    %135 = vector.broadcast %134 : vector<1x8xf32> to vector<16x8xf32>
    %136 = arith.addf %131, %135 : vector<16x8xf32>
    %cst_71 = arith.constant 0.000000e+00 : f32
    %137 = vector.broadcast %cst_71 : f32 to vector<16x8xf32>
    %138 = arith.maximumf %136, %137 : vector<16x8xf32>
    %c0_72 = arith.constant 0 : index
    %c0_73 = arith.constant 0 : index
    %139 = vector.load %arg20[%c0_72, %c0_73] : memref<8x1xf32, #tpu.memory_space<vmem>>, vector<8x1xf32>
    %cst_74 = arith.constant dense<0.000000e+00> : vector<16x1xf32>
    %140 = tpu.matmul %138, %139, %cst_74 {dimension_numbers = #tpu.dot_dimension_numbers<[1], [0], [0], [1], [0, 0, 1, 1], [], []>} : vector<16x8xf32>, vector<8x1xf32>, vector<16x1xf32> -> vector<16x1xf32>
    %c0_75 = arith.constant 0 : index
    %c0_76 = arith.constant 0 : index
    %141 = vector.load %arg19[%c0_75, %c0_76] : memref<1x1xf32, #tpu.memory_space<vmem>>, vector<1x1xf32>
    %142 = vector.shape_cast %141 : vector<1x1xf32> to vector<1xf32>
    %143 = vector.shape_cast %142 : vector<1xf32> to vector<1x1xf32>
    %144 = vector.broadcast %143 : vector<1x1xf32> to vector<16x1xf32>
    %145 = arith.addf %140, %144 : vector<16x1xf32>
    %c0_77 = arith.constant 0 : index
    %c0_78 = arith.constant 0 : index
    %c0_79 = arith.constant 0 : index
    %146 = vector.load %arg21[%c0_77, %c0_78, %c0_79] : memref<1x16x1xf32, #tpu.memory_space<vmem>>, vector<1x16x1xf32>
    %147 = vector.shape_cast %146 : vector<1x16x1xf32> to vector<16x1xf32>
    %148 = vector.shape_cast %145 : vector<16x1xf32> to vector<1x16x1xf32>
    tpu.vector_store %arg21[%c0_77, %c0_78, %c0_79], %148 {strides = array<i32>} : memref<1x16x1xf32, #tpu.memory_space<vmem>>, vector<1x16x1xf32>,
    return
  }
  func.func @transform_0(%arg0: i32) -> (i32, i32, i32) {
    %c0_i32 = arith.constant 0 : i32
    %c0_i32_0 = arith.constant 0 : i32
    %c0_i32_1 = arith.constant 0 : i32
    return %arg0, %c0_i32, %c0_i32_0 : i32, i32, i32
  }
  func.func @transform_1(%arg0: i32) -> (i32, i32, i32) {
    %c0_i32 = arith.constant 0 : i32
    %c0_i32_0 = arith.constant 0 : i32
    %c0_i32_1 = arith.constant 0 : i32
    return %arg0, %c0_i32, %c0_i32_0 : i32, i32, i32
  }
  func.func @transform_2(%arg0: i32) -> (i32, i32) {
    %c0_i32 = arith.constant 0 : i32
    %c0_i32_0 = arith.constant 0 : i32
    %c0_i32_1 = arith.constant 0 : i32
    return %c0_i32, %c0_i32_0 : i32, i32
  }
  func.func @transform_3(%arg0: i32) -> (i32, i32) {
    %c0_i32 = arith.constant 0 : i32
    %c0_i32_0 = arith.constant 0 : i32
    %c0_i32_1 = arith.constant 0 : i32
    return %c0_i32, %c0_i32_0 : i32, i32
  }
  func.func @transform_4(%arg0: i32) -> (i32, i32) {
    %c0_i32 = arith.constant 0 : i32
    %c0_i32_0 = arith.constant 0 : i32
    %c0_i32_1 = arith.constant 0 : i32
    return %c0_i32, %c0_i32_0 : i32, i32
  }
  func.func @transform_5(%arg0: i32) -> (i32, i32) {
    %c0_i32 = arith.constant 0 : i32
    %c0_i32_0 = arith.constant 0 : i32
    %c0_i32_1 = arith.constant 0 : i32
    return %c0_i32, %c0_i32_0 : i32, i32
  }
  func.func @transform_6(%arg0: i32) -> (i32, i32) {
    %c0_i32 = arith.constant 0 : i32
    %c0_i32_0 = arith.constant 0 : i32
    %c0_i32_1 = arith.constant 0 : i32
    return %c0_i32, %c0_i32_0 : i32, i32
  }
  func.func @transform_7(%arg0: i32) -> (i32, i32) {
    %c0_i32 = arith.constant 0 : i32
    %c0_i32_0 = arith.constant 0 : i32
    %c0_i32_1 = arith.constant 0 : i32
    return %c0_i32, %c0_i32_0 : i32, i32
  }
  func.func @transform_8(%arg0: i32) -> (i32, i32) {
    %c0_i32 = arith.constant 0 : i32
    %c0_i32_0 = arith.constant 0 : i32
    %c0_i32_1 = arith.constant 0 : i32
    return %c0_i32, %c0_i32_0 : i32, i32
  }
  func.func @transform_9(%arg0: i32) -> (i32, i32) {
    %c0_i32 = arith.constant 0 : i32
    %c0_i32_0 = arith.constant 0 : i32
    %c0_i32_1 = arith.constant 0 : i32
    return %c0_i32, %c0_i32_0 : i32, i32
  }
  func.func @transform_10(%arg0: i32) -> (i32, i32) {
    %c0_i32 = arith.constant 0 : i32
    %c0_i32_0 = arith.constant 0 : i32
    %c0_i32_1 = arith.constant 0 : i32
    return %c0_i32, %c0_i32_0 : i32, i32
  }
  func.func @transform_11(%arg0: i32) -> (i32, i32) {
    %c0_i32 = arith.constant 0 : i32
    %c0_i32_0 = arith.constant 0 : i32
    %c0_i32_1 = arith.constant 0 : i32
    return %c0_i32, %c0_i32_0 : i32, i32
  }
  func.func @transform_12(%arg0: i32) -> (i32, i32) {
    %c0_i32 = arith.constant 0 : i32
    %c0_i32_0 = arith.constant 0 : i32
    %c0_i32_1 = arith.constant 0 : i32
    return %c0_i32, %c0_i32_0 : i32, i32
  }
  func.func @transform_13(%arg0: i32) -> (i32, i32) {
    %c0_i32 = arith.constant 0 : i32
    %c0_i32_0 = arith.constant 0 : i32
    %c0_i32_1 = arith.constant 0 : i32
    return %c0_i32, %c0_i32_0 : i32, i32
  }
  func.func @transform_14(%arg0: i32) -> (i32, i32) {
    %c0_i32 = arith.constant 0 : i32
    %c0_i32_0 = arith.constant 0 : i32
    %c0_i32_1 = arith.constant 0 : i32
    return %c0_i32, %c0_i32_0 : i32, i32
  }
  func.func @transform_15(%arg0: i32) -> (i32, i32) {
    %c0_i32 = arith.constant 0 : i32
    %c0_i32_0 = arith.constant 0 : i32
    %c0_i32_1 = arith.constant 0 : i32
    return %c0_i32, %c0_i32_0 : i32, i32
  }
  func.func @transform_16(%arg0: i32) -> (i32, i32) {
    %c0_i32 = arith.constant 0 : i32
    %c0_i32_0 = arith.constant 0 : i32
    %c0_i32_1 = arith.constant 0 : i32
    return %c0_i32, %c0_i32_0 : i32, i32
  }
  func.func @transform_17(%arg0: i32) -> (i32, i32) {
    %c0_i32 = arith.constant 0 : i32
    %c0_i32_0 = arith.constant 0 : i32
    %c0_i32_1 = arith.constant 0 : i32
    return %c0_i32, %c0_i32_0 : i32, i32
  }
  func.func @transform_18(%arg0: i32) -> (i32, i32) {
    %c0_i32 = arith.constant 0 : i32
    %c0_i32_0 = arith.constant 0 : i32
    %c0_i32_1 = arith.constant 0 : i32
    return %c0_i32, %c0_i32_0 : i32, i32
  }
  func.func @transform_19(%arg0: i32) -> (i32, i32) {
    %c0_i32 = arith.constant 0 : i32
    %c0_i32_0 = arith.constant 0 : i32
    %c0_i32_1 = arith.constant 0 : i32
    return %c0_i32, %c0_i32_0 : i32, i32
  }
  func.func @transform_20(%arg0: i32) -> (i32, i32, i32) {
    %c0_i32 = arith.constant 0 : i32
    %c0_i32_0 = arith.constant 0 : i32
    %c0_i32_1 = arith.constant 0 : i32
    return %arg0, %c0_i32, %c0_i32_0 : i32, i32, i32
  }
}

</mosaic_0001>

<llo_original>
// kernel: residual_graph_lstm_forward.4
$region0: #{residual_graph_lstm_forward.4}
  #allocation0 [shape = 'u32[]', space=smem, size = 0x4, offset = 0x4, fixed_abs, tag = 'smem constant byte address 0x4 - core index']
  #allocation1 [shape = 'u32[144,128]{1,0:T(1,128)}', space=vmem, size = 0x12000, scoped, tag = 'internal scratch']
  %s0 = inlined_call_operand.vmem [shape: f32[2,4,16], index: 0, kind: input, shape index: {}]
  %s1 = inlined_call_operand.vmem [shape: f32[2,512], index: 1, kind: input, shape index: {}]
  %s2 = inlined_call_operand.vmem [shape: f32[1,32], index: 2, kind: input, shape index: {}]
  %s3 = inlined_call_operand.vmem [shape: f32[512,32], index: 3, kind: input, shape index: {}]
  %s4 = inlined_call_operand.vmem [shape: f32[1,16], index: 4, kind: input, shape index: {}]
  %s5 = inlined_call_operand.vmem [shape: f32[32,16], index: 5, kind: input, shape index: {}]
  %s6 = inlined_call_operand.vmem [shape: f32[1,256], index: 6, kind: input, shape index: {}]
  %s7 = inlined_call_operand.vmem [shape: f32[48,256], index: 7, kind: input, shape index: {}]
  %s8 = inlined_call_operand.vmem [shape: f32[16,128], index: 8, kind: input, shape index: {}]
  %s9 = inlined_call_operand.vmem [shape: f32[32,128], index: 9, kind: input, shape index: {}]
  %s10 = inlined_call_operand.vmem [shape: f32[1,128], index: 10, kind: input, shape index: {}]
  %s11 = inlined_call_operand.vmem [shape: f32[32,128], index: 11, kind: input, shape index: {}]
  %s12 = inlined_call_operand.vmem [shape: f32[32,128], index: 12, kind: input, shape index: {}]
  %s13 = inlined_call_operand.vmem [shape: f32[1,128], index: 13, kind: input, shape index: {}]
  %s14 = inlined_call_operand.vmem [shape: f32[2,256], index: 14, kind: output, shape index: {}]
  %s15 = sld [smem:[#allocation0]]
  $region66: #{residual_graph_lstm_forward.4} parent=0
    _
  %s17 = ssub.s32 1, %s15
  %s18 = scalar_select 0, %s17, %s15
  // Predicated region
  $region2: #{residual_graph_lstm_forward.4} parent=0 // pred_check
    _
  $region3: #{residual_graph_lstm_forward.4} parent=0 // pred_check_branch
    %20 = sbr.rel (0) target = $region5
  $region4: #{residual_graph_lstm_forward.4} parent=0 // pred_region
    _
  $region5: #{residual_graph_lstm_forward.4} parent=0 // pred_fallthru
    _
  // Predicated region
  $region6: #{residual_graph_lstm_forward.4} parent=0 // pred_check
    _
  $region7: #{residual_graph_lstm_forward.4} parent=0 // pred_check_branch
    %22 = sbr.rel (0) target = $region9
  $region8: #{residual_graph_lstm_forward.4} parent=0 // pred_region
    _
  $region9: #{residual_graph_lstm_forward.4} parent=0 // pred_fallthru
    _
  // Predicated region
  $region10: #{residual_graph_lstm_forward.4} parent=0 // pred_check
    _
  $region11: #{residual_graph_lstm_forward.4} parent=0 // pred_check_branch
    %24 = sbr.rel (0) target = $region13
  $region12: #{residual_graph_lstm_forward.4} parent=0 // pred_region
    _
  $region13: #{residual_graph_lstm_forward.4} parent=0 // pred_fallthru
    _
  // Predicated region
  $region14: #{residual_graph_lstm_forward.4} parent=0 // pred_check
    _
  $region15: #{residual_graph_lstm_forward.4} parent=0 // pred_check_branch
    %26 = sbr.rel (0) target = $region17
  $region16: #{residual_graph_lstm_forward.4} parent=0 // pred_region
    _
  $region17: #{residual_graph_lstm_forward.4} parent=0 // pred_fallthru
    _
  // Predicated region
  $region18: #{residual_graph_lstm_forward.4} parent=0 // pred_check
    _
  $region19: #{residual_graph_lstm_forward.4} parent=0 // pred_check_branch
    %28 = sbr.rel (0) target = $region21
  $region20: #{residual_graph_lstm_forward.4} parent=0 // pred_region
    _
  $region21: #{residual_graph_lstm_forward.4} parent=0 // pred_fallthru
    _
  // Predicated region
  $region22: #{residual_graph_lstm_forward.4} parent=0 // pred_check
    _
  $region23: #{residual_graph_lstm_forward.4} parent=0 // pred_check_branch
    %30 = sbr.rel (0) target = $region25
  $region24: #{residual_graph_lstm_forward.4} parent=0 // pred_region
    _
  $region25: #{residual_graph_lstm_forward.4} parent=0 // pred_fallthru
    _
  // Predicated region
  $region26: #{residual_graph_lstm_forward.4} parent=0 // pred_check
    _
  $region27: #{residual_graph_lstm_forward.4} parent=0 // pred_check_branch
    %32 = sbr.rel (0) target = $region29
  $region28: #{residual_graph_lstm_forward.4} parent=0 // pred_region
    _
  $region29: #{residual_graph_lstm_forward.4} parent=0 // pred_fallthru
    _
  // Predicated region
  $region30: #{residual_graph_lstm_forward.4} parent=0 // pred_check
    _
  $region31: #{residual_graph_lstm_forward.4} parent=0 // pred_check_branch
    %34 = sbr.rel (0) target = $region33
  $region32: #{residual_graph_lstm_forward.4} parent=0 // pred_region
    _
  $region33: #{residual_graph_lstm_forward.4} parent=0 // pred_fallthru
    _
  // Predicated region
  $region34: #{residual_graph_lstm_forward.4} parent=0 // pred_check
    _
  $region35: #{residual_graph_lstm_forward.4} parent=0 // pred_check_branch
    %36 = sbr.rel (0) target = $region37
  $region36: #{residual_graph_lstm_forward.4} parent=0 // pred_region
    _
  $region37: #{residual_graph_lstm_forward.4} parent=0 // pred_fallthru
    _
  // Predicated region
  $region38: #{residual_graph_lstm_forward.4} parent=0 // pred_check
    _
  $region39: #{residual_graph_lstm_forward.4} parent=0 // pred_check_branch
    %38 = sbr.rel (0) target = $region41
  $region40: #{residual_graph_lstm_forward.4} parent=0 // pred_region
    _
  $region41: #{residual_graph_lstm_forward.4} parent=0 // pred_fallthru
    _
  // Predicated region
  $region42: #{residual_graph_lstm_forward.4} parent=0 // pred_check
    _
  $region43: #{residual_graph_lstm_forward.4} parent=0 // pred_check_branch
    %40 = sbr.rel (0) target = $region45
  $region44: #{residual_graph_lstm_forward.4} parent=0 // pred_region
    _
  $region45: #{residual_graph_lstm_forward.4} parent=0 // pred_fallthru
    _
  // Predicated region
  $region46: #{residual_graph_lstm_forward.4} parent=0 // pred_check
    _
  $region47: #{residual_graph_lstm_forward.4} parent=0 // pred_check_branch
    %42 = sbr.rel (0) target = $region49
  $region48: #{residual_graph_lstm_forward.4} parent=0 // pred_region
    _
  $region49: #{residual_graph_lstm_forward.4} parent=0 // pred_fallthru
    _
  // Predicated region
  $region50: #{residual_graph_lstm_forward.4} parent=0 // pred_check
    _
  $region51: #{residual_graph_lstm_forward.4} parent=0 // pred_check_branch
    %44 = sbr.rel (0) target = $region53
  $region52: #{residual_graph_lstm_forward.4} parent=0 // pred_region
    _
  $region53: #{residual_graph_lstm_forward.4} parent=0 // pred_fallthru
    _
  // Predicated region
  $region54: #{residual_graph_lstm_forward.4} parent=0 // pred_check
    _
  $region55: #{residual_graph_lstm_forward.4} parent=0 // pred_check_branch
    %46 = sbr.rel (0) target = $region57
  $region56: #{residual_graph_lstm_forward.4} parent=0 // pred_region
    _
  $region57: #{residual_graph_lstm_forward.4} parent=0 // pred_fallthru
    _
  %v47 = vld [vmem:[%s0] sm:$0x1]
  %v48 = vld [vmem:[%s0 + $0x4] sm:$0x1]
  %v49 = vld [vmem:[%s0 + $0x1] sm:$0x1]
  %v50 = vld [vmem:[%s0 + $0x5] sm:$0x1]
  %v51 = vld [vmem:[%s0 + $0x2] sm:$0x1]
  %v52 = vld [vmem:[%s0 + $0x6] sm:$0x1]
  %v53 = vld [vmem:[%s0 + $0x3] sm:$0x1]
  %v54 = vld [vmem:[%s0 + $0x7] sm:$0x1]
  %v55 = vld [vmem:[%s8] sm:$0xff]
  %v56 = vld [vmem:[%s8 + $0x8] sm:$0xff]
  %v57 = vld [vmem:[%s9] sm:$0xff]
  %v58 = vld [vmem:[%s9 + $0x8] sm:$0xff]
  %v59 = vld [vmem:[%s9 + $0x10] sm:$0xff]
  %v60 = vld [vmem:[%s9 + $0x18] sm:$0xff]
  %v61 = vld [vmem:[%s10] sm:$0x1]
  %vm62 = vcmask 261120
  %v64 = vsel %vm62, 0.0, 0
  %66 = vmatprep.subr.mxu0 0.0
  %67 = vmatpush1.msra.mxu0 %v57
  %68 = vmatprep.subr.mxu0 0.0
  %69 = vmatpush1.msra.mxu0 %v58
  %70 = vmatprep.subr.mxu0 0.0
  %71 = vmatpush1.msra.mxu0 %v59
  %72 = vmatprep.subr.mxu0 0.0
  %73 = vmatpush1.msra.mxu0 %v60
  %74 = vmatprep.subr.mxu0 0.0
  %75 = vmatpush1.msra.mxu0 0.0
  %76 = vmatprep.subr.mxu0 0.0
  %77 = vmatpush1.msra.mxu0 0.0
  %78 = vmatprep.subr.mxu0 0.0
  %79 = vmatpush1.msra.mxu0 0.0
  %80 = vmatprep.subr.mxu0 0.0
  %81 = vmatpush1.msra.mxu0 0.0
  %82 = vmatprep.subr.mxu0 0.0
  %83 = vmatpush1.msra.mxu0 0.0
  %84 = vmatprep.subr.mxu0 0.0
  %85 = vmatpush1.msra.mxu0 0.0
  %86 = vmatprep.subr.mxu0 0.0
  %87 = vmatpush1.msra.mxu0 0.0
  %88 = vmatprep.subr.mxu0 0.0
  %89 = vmatpush1.msra.mxu0 0.0
  %90 = vmatprep.subr.mxu0 0.0
  %91 = vmatpush1.msra.mxu0 0.0
  %92 = vmatprep.subr.mxu0 0.0
  %93 = vmatpush1.msra.mxu0 0.0
  %94 = vmatprep.subr.mxu0 0.0
  %95 = vmatpush1.msra.mxu0 0.0
  %96 = vmatprep.subr.mxu0 0.0
  %97 = vmatpush1.msra.mxu0 0.0
  %98 = vmatprep.subr.mxu0 0.0
  %99 = vmatpush1.msra.mxu0 0.0
  %100 = vmatprep.subr.mxu0 0.0
  %101 = vmatpush1.msra.mxu0 0.0
  %102 = vmatprep.subr.mxu0 0.0
  %103 = vmatpush1.msra.mxu0 0.0
  %104 = vmatprep.subr.mxu0 0.0
  %105 = vmatpush1.msra.mxu0 0.0
  %106 = vmatprep.subr.mxu0 0.0
  %107 = vmatpush1.msra.mxu0 0.0
  %108 = vmatprep.subr.mxu0 0.0
  %109 = vmatpush1.msra.mxu0 0.0
  %110 = vmatprep.subr.mxu0 0.0
  %111 = vmatpush1.msra.mxu0 0.0
  %112 = vmatprep.subr.mxu0 0.0
  %113 = vmatpush1.msra.mxu0 0.0
  %114 = vmatprep.subr.mxu0 0.0
  %115 = vmatpush1.msra.mxu0 0.0
  %116 = vmatprep.subr.mxu0 0.0
  %117 = vmatpush1.msra.mxu0 0.0
  %118 = vmatprep.subr.mxu0 0.0
  %119 = vmatpush1.msra.mxu0 0.0
  %120 = vmatprep.subr.mxu0 0.0
  %121 = vmatpush1.msra.mxu0 0.0
  %122 = vmatprep.subr.mxu0 0.0
  %123 = vmatpush1.msra.mxu0 0.0
  %124 = vmatprep.subr.mxu0 0.0
  %125 = vmatpush1.msra.mxu0 0.0
  %126 = vmatprep.subr.mxu0 0.0
  %127 = vmatpush1.msra.mxu0 0.0
  %128 = vmatprep.subr.mxu0 0.0
  %129 = vmatpush1.msra.mxu0 0.0
  %130 = vmatprep.mubr.f32.mxu0 0.0
  %131 = vmatmul.mubr.f32.gmra.mrb[0].mxu0 %v64
  %v132 = vpop.f32.mrb[0].mxu0
  %v133 = vadd.f32 0.0, %v132
  %v134 = vpop.f32.mrb[0].mxu0
  %135 = vdwg.mxu0
  %v138 = vrot.slane %v48, 7
  %vm139 = vcmask 1041409
  %v140 = vsel %vm139, %v138, %v47
  %vm141 = vcmask 130048
  %v142 = vsel %vm141, %v140, 0
  %144 = vmatprep.subr.mxu0 0.0
  %145 = vmatpush1.msra.mxu0 %v55
  %146 = vmatprep.subr.mxu0 0.0
  %147 = vmatpush1.msra.mxu0 %v56
  %148 = vmatprep.subr.mxu0 0.0
  %149 = vmatpush1.msra.mxu0 0.0
  %150 = vmatprep.subr.mxu0 0.0
  %151 = vmatpush1.msra.mxu0 0.0
  %152 = vmatprep.subr.mxu0 0.0
  %153 = vmatpush1.msra.mxu0 0.0
  %154 = vmatprep.subr.mxu0 0.0
  %155 = vmatpush1.msra.mxu0 0.0
  %156 = vmatprep.subr.mxu0 0.0
  %157 = vmatpush1.msra.mxu0 0.0
  %158 = vmatprep.subr.mxu0 0.0
  %159 = vmatpush1.msra.mxu0 0.0
  %160 = vmatprep.subr.mxu0 0.0
  %161 = vmatpush1.msra.mxu0 0.0
  %162 = vmatprep.subr.mxu0 0.0
  %163 = vmatpush1.msra.mxu0 0.0
  %164 = vmatprep.subr.mxu0 0.0
  %165 = vmatpush1.msra.mxu0 0.0
  %166 = vmatprep.subr.mxu0 0.0
  %167 = vmatpush1.msra.mxu0 0.0
  %168 = vmatprep.subr.mxu0 0.0
  %169 = vmatpush1.msra.mxu0 0.0
  %170 = vmatprep.subr.mxu0 0.0
  %171 = vmatpush1.msra.mxu0 0.0
  %172 = vmatprep.subr.mxu0 0.0
  %173 = vmatpush1.msra.mxu0 0.0
  %174 = vmatprep.subr.mxu0 0.0
  %175 = vmatpush1.msra.mxu0 0.0
  %176 = vmatprep.subr.mxu0 0.0
  %177 = vmatpush1.msra.mxu0 0.0
  %178 = vmatprep.subr.mxu0 0.0
  %179 = vmatpush1.msra.mxu0 0.0
  %180 = vmatprep.subr.mxu0 0.0
  %181 = vmatpush1.msra.mxu0 0.0
  %182 = vmatprep.subr.mxu0 0.0
  %183 = vmatpush1.msra.mxu0 0.0
  %184 = vmatprep.subr.mxu0 0.0
  %185 = vmatpush1.msra.mxu0 0.0
  %186 = vmatprep.subr.mxu0 0.0
  %187 = vmatpush1.msra.mxu0 0.0
  %188 = vmatprep.subr.mxu0 0.0
  %189 = vmatpush1.msra.mxu0 0.0
  %190 = vmatprep.subr.mxu0 0.0
  %191 = vmatpush1.msra.mxu0 0.0
  %192 = vmatprep.subr.mxu0 0.0
  %193 = vmatpush1.msra.mxu0 0.0
  %194 = vmatprep.subr.mxu0 0.0
  %195 = vmatpush1.msra.mxu0 0.0
  %196 = vmatprep.subr.mxu0 0.0
  %197 = vmatpush1.msra.mxu0 0.0
  %198 = vmatprep.subr.mxu0 0.0
  %199 = vmatpush1.msra.mxu0 0.0
  %200 = vmatprep.subr.mxu0 0.0
  %201 = vmatpush1.msra.mxu0 0.0
  %202 = vmatprep.subr.mxu0 0.0
  %203 = vmatpush1.msra.mxu0 0.0
  %204 = vmatprep.subr.mxu0 0.0
  %205 = vmatpush1.msra.mxu0 0.0
  %206 = vmatprep.subr.mxu0 0.0
  %207 = vmatpush1.msra.mxu0 0.0
  %208 = vmatprep.mubr.f32.mxu0 0.0
  %209 = vmatmul.mubr.f32.gmra.mrb[0].mxu0 %v142
  %v210 = vpop.f32.mrb[0].mxu0
  %v211 = vadd.f32 %v133, %v210
  %v212 = vpop.f32.mrb[0].mxu0
  %213 = vdwg.mxu0
  %v215 = vlaneseq
  %v216 = vshrl.u32 %v215, 7
  %v217 = vsub.s32 0, %v216
  %v218 = vrot.slane %v61, %v217
  %v220 = vadd.f32 %v211, %v218
  %v221 = vxor.u32 %v220, 2147483648
  %v222 = vmul.f32 %v221, 1.442695
  %v223 = vpow.pop %v222
  %v224 = vadd.f32 %v223, 1.0
  %v225 = vrcp.pop %v224
  %v226 = vmul.f32 1.0, %v225
  %v227 = vtanh.pop %v220
  %v228 = vmul.f32 %v226, 0.0
  %230 = vrot.lane.b32.xlu0 %v227, 64
  %v231 = vpop.permute.xlu0 %230
  %v233 = vmul.f32 %v226, %v231
  %235 = vrot.lane.b32.xlu0 %v233, 32
  %v236 = vpop.permute.xlu0 %235
  %v238 = vadd.f32 %v228, %v236
  %v239 = vtanh.pop %v238
  %241 = vrot.lane.b32.xlu0 %v239, 64
  %v242 = vpop.permute.xlu0 %241
  %v244 = vmul.f32 %v226, %v242
  %246 = vrot.lane.b32.xlu0 %v244, 32
  %v247 = vpop.permute.xlu0 %246
  %v248 = vsel %vm62, %v247, 0
  %250 = vmatprep.subr.mxu0 0.0
  %251 = vmatpush1.msra.mxu0 %v57
  %252 = vmatprep.subr.mxu0 0.0
  %253 = vmatpush1.msra.mxu0 %v58
  %254 = vmatprep.subr.mxu0 0.0
  %255 = vmatpush1.msra.mxu0 %v59
  %256 = vmatprep.subr.mxu0 0.0
  %257 = vmatpush1.msra.mxu0 %v60
  %258 = vmatprep.subr.mxu0 0.0
  %259 = vmatpush1.msra.mxu0 0.0
  %260 = vmatprep.subr.mxu0 0.0
  %261 = vmatpush1.msra.mxu0 0.0
  %262 = vmatprep.subr.mxu0 0.0
  %263 = vmatpush1.msra.mxu0 0.0
  %264 = vmatprep.subr.mxu0 0.0
  %265 = vmatpush1.msra.mxu0 0.0
  %266 = vmatprep.subr.mxu0 0.0
  %267 = vmatpush1.msra.mxu0 0.0
  %268 = vmatprep.subr.mxu0 0.0
  %269 = vmatpush1.msra.mxu0 0.0
  %270 = vmatprep.subr.mxu0 0.0
  %271 = vmatpush1.msra.mxu0 0.0
  %272 = vmatprep.subr.mxu0 0.0
  %273 = vmatpush1.msra.mxu0 0.0
  %274 = vmatprep.subr.mxu0 0.0
  %275 = vmatpush1.msra.mxu0 0.0
  %276 = vmatprep.subr.mxu0 0.0
  %277 = vmatpush1.msra.mxu0 0.0
  %278 = vmatprep.subr.mxu0 0.0
  %279 = vmatpush1.msra.mxu0 0.0
  %280 = vmatprep.subr.mxu0 0.0
  %281 = vmatpush1.msra.mxu0 0.0
  %282 = vmatprep.subr.mxu0 0.0
  %283 = vmatpush1.msra.mxu0 0.0
  %284 = vmatprep.subr.mxu0 0.0
  %285 = vmatpush1.msra.mxu0 0.0
  %286 = vmatprep.subr.mxu0 0.0
  %287 = vmatpush1.msra.mxu0 0.0
  %288 = vmatprep.subr.mxu0 0.0
  %289 = vmatpush1.msra.mxu0 0.0
  %290 = vmatprep.subr.mxu0 0.0
  %291 = vmatpush1.msra.mxu0 0.0
  %292 = vmatprep.subr.mxu0 0.0
  %293 = vmatpush1.msra.mxu0 0.0
  %294 = vmatprep.subr.mxu0 0.0
  %295 = vmatpush1.msra.mxu0 0.0
  %296 = vmatprep.subr.mxu0 0.0
  %297 = vmatpush1.msra.mxu0 0.0
  %298 = vmatprep.subr.mxu0 0.0
  %299 = vmatpush1.msra.mxu0 0.0
  %300 = vmatprep.subr.mxu0 0.0
  %301 = vmatpush1.msra.mxu0 0.0
  %302 = vmatprep.subr.mxu0 0.0
  %303 = vmatpush1.msra.mxu0 0.0
  %304 = vmatprep.subr.mxu0 0.0
  %305 = vmatpush1.msra.mxu0 0.0
  %306 = vmatprep.subr.mxu0 0.0
  %307 = vmatpush1.msra.mxu0 0.0
  %308 = vmatprep.subr.mxu0 0.0
  %309 = vmatpush1.msra.mxu0 0.0
  %310 = vmatprep.subr.mxu0 0.0
  %311 = vmatpush1.msra.mxu0 0.0
  %312 = vmatprep.subr.mxu0 0.0
  %313 = vmatpush1.msra.mxu0 0.0
  %314 = vmatprep.mubr.f32.mxu0 0.0
  %315 = vmatmul.mubr.f32.gmra.mrb[0].mxu0 %v248
  %v316 = vpop.f32.mrb[0].mxu0
  %v317 = vadd.f32 0.0, %v316
  %v318 = vpop.f32.mrb[0].mxu0
  %319 = vdwg.mxu0
  %v322 = vrot.slane %v50, 7
  %v323 = vsel %vm139, %v322, %v49
  %v324 = vsel %vm141, %v323, 0
  %326 = vmatprep.subr.mxu0 0.0
  %327 = vmatpush1.msra.mxu0 %v55
  %328 = vmatprep.subr.mxu0 0.0
  %329 = vmatpush1.msra.mxu0 %v56
  %330 = vmatprep.subr.mxu0 0.0
  %331 = vmatpush1.msra.mxu0 0.0
  %332 = vmatprep.subr.mxu0 0.0
  %333 = vmatpush1.msra.mxu0 0.0
  %334 = vmatprep.subr.mxu0 0.0
  %335 = vmatpush1.msra.mxu0 0.0
  %336 = vmatprep.subr.mxu0 0.0
  %337 = vmatpush1.msra.mxu0 0.0
  %338 = vmatprep.subr.mxu0 0.0
  %339 = vmatpush1.msra.mxu0 0.0
  %340 = vmatprep.subr.mxu0 0.0
  %341 = vmatpush1.msra.mxu0 0.0
  %342 = vmatprep.subr.mxu0 0.0
  %343 = vmatpush1.msra.mxu0 0.0
  %344 = vmatprep.subr.mxu0 0.0
  %345 = vmatpush1.msra.mxu0 0.0
  %346 = vmatprep.subr.mxu0 0.0
  %347 = vmatpush1.msra.mxu0 0.0
  %348 = vmatprep.subr.mxu0 0.0
  %349 = vmatpush1.msra.mxu0 0.0
  %350 = vmatprep.subr.mxu0 0.0
  %351 = vmatpush1.msra.mxu0 0.0
  %352 = vmatprep.subr.mxu0 0.0
  %353 = vmatpush1.msra.mxu0 0.0
  %354 = vmatprep.subr.mxu0 0.0
  %355 = vmatpush1.msra.mxu0 0.0
  %356 = vmatprep.subr.mxu0 0.0
  %357 = vmatpush1.msra.mxu0 0.0
  %358 = vmatprep.subr.mxu0 0.0
  %359 = vmatpush1.msra.mxu0 0.0
  %360 = vmatprep.subr.mxu0 0.0
  %361 = vmatpush1.msra.mxu0 0.0
  %362 = vmatprep.subr.mxu0 0.0
  %363 = vmatpush1.msra.mxu0 0.0
  %364 = vmatprep.subr.mxu0 0.0
  %365 = vmatpush1.msra.mxu0 0.0
  %366 = vmatprep.subr.mxu0 0.0
  %367 = vmatpush1.msra.mxu0 0.0
  %368 = vmatprep.subr.mxu0 0.0
  %369 = vmatpush1.msra.mxu0 0.0
  %370 = vmatprep.subr.mxu0 0.0
  %371 = vmatpush1.msra.mxu0 0.0
  %372 = vmatprep.subr.mxu0 0.0
  %373 = vmatpush1.msra.mxu0 0.0
  %374 = vmatprep.subr.mxu0 0.0
  %375 = vmatpush1.msra.mxu0 0.0
  %376 = vmatprep.subr.mxu0 0.0
  %377 = vmatpush1.msra.mxu0 0.0
  %378 = vmatprep.subr.mxu0 0.0
  %379 = vmatpush1.msra.mxu0 0.0
  %380 = vmatprep.subr.mxu0 0.0
  %381 = vmatpush1.msra.mxu0 0.0
  %382 = vmatprep.subr.mxu0 0.0
  %383 = vmatpush1.msra.mxu0 0.0
  %384 = vmatprep.subr.mxu0 0.0
  %385 = vmatpush1.msra.mxu0 0.0
  %386 = vmatprep.subr.mxu0 0.0
  %387 = vmatpush1.msra.mxu0 0.0
  %388 = vmatprep.subr.mxu0 0.0
  %389 = vmatpush1.msra.mxu0 0.0
  %390 = vmatprep.mubr.f32.mxu0 0.0
  %391 = vmatmul.mubr.f32.gmra.mrb[0].mxu0 %v324
  %v392 = vpop.f32.mrb[0].mxu0
  %v393 = vadd.f32 %v317, %v392
  %v394 = vpop.f32.mrb[0].mxu0
  %395 = vdwg.mxu0
  %v396 = vadd.f32 %v393, %v218
  %v397 = vxor.u32 %v396, 2147483648
  %v398 = vmul.f32 %v397, 1.442695
  %v399 = vpow.pop %v398
  %v400 = vadd.f32 %v399, 1.0
  %v401 = vrcp.pop %v400
  %v402 = vmul.f32 1.0, %v401
  %v403 = vtanh.pop %v396
  %v404 = vmul.f32 %v402, %v238
  %406 = vrot.lane.b32.xlu0 %v403, 64
  %v407 = vpop.permute.xlu0 %406
  %v409 = vmul.f32 %v402, %v407
  %411 = vrot.lane.b32.xlu0 %v409, 32
  %v412 = vpop.permute.xlu0 %411
  %v414 = vadd.f32 %v404, %v412
  %v415 = vtanh.pop %v414
  %417 = vrot.lane.b32.xlu0 %v415, 64
  %v418 = vpop.permute.xlu0 %417
  %v420 = vmul.f32 %v402, %v418
  %422 = vrot.lane.b32.xlu0 %v420, 32
  %v423 = vpop.permute.xlu0 %422
  %v424 = vsel %vm62, %v423, 0
  %426 = vmatprep.subr.mxu0 0.0
  %427 = vmatpush1.msra.mxu0 %v57
  %428 = vmatprep.subr.mxu0 0.0
  %429 = vmatpush1.msra.mxu0 %v58
  %430 = vmatprep.subr.mxu0 0.0
  %431 = vmatpush1.msra.mxu0 %v59
  %432 = vmatprep.subr.mxu0 0.0
  %433 = vmatpush1.msra.mxu0 %v60
  %434 = vmatprep.subr.mxu0 0.0
  %435 = vmatpush1.msra.mxu0 0.0
  %436 = vmatprep.subr.mxu0 0.0
  %437 = vmatpush1.msra.mxu0 0.0
  %438 = vmatprep.subr.mxu0 0.0
  %439 = vmatpush1.msra.mxu0 0.0
  %440 = vmatprep.subr.mxu0 0.0
  %441 = vmatpush1.msra.mxu0 0.0
  %442 = vmatprep.subr.mxu0 0.0
  %443 = vmatpush1.msra.mxu0 0.0
  %444 = vmatprep.subr.mxu0 0.0
  %445 = vmatpush1.msra.mxu0 0.0
  %446 = vmatprep.subr.mxu0 0.0
  %447 = vmatpush1.msra.mxu0 0.0
  %448 = vmatprep.subr.mxu0 0.0
  %449 = vmatpush1.msra.mxu0 0.0
  %450 = vmatprep.subr.mxu0 0.0
  %451 = vmatpush1.msra.mxu0 0.0
  %452 = vmatprep.subr.mxu0 0.0
  %453 = vmatpush1.msra.mxu0 0.0
  %454 = vmatprep.subr.mxu0 0.0
  %455 = vmatpush1.msra.mxu0 0.0
  %456 = vmatprep.subr.mxu0 0.0
  %457 = vmatpush1.msra.mxu0 0.0
  %458 = vmatprep.subr.mxu0 0.0
  %459 = vmatpush1.msra.mxu0 0.0
  %460 = vmatprep.subr.mxu0 0.0
  %461 = vmatpush1.msra.mxu0 0.0
  %462 = vmatprep.subr.mxu0 0.0
  %463 = vmatpush1.msra.mxu0 0.0
  %464 = vmatprep.subr.mxu0 0.0
  %465 = vmatpush1.msra.mxu0 0.0
  %466 = vmatprep.subr.mxu0 0.0
  %467 = vmatpush1.msra.mxu0 0.0
  %468 = vmatprep.subr.mxu0 0.0
  %469 = vmatpush1.msra.mxu0 0.0
  %470 = vmatprep.subr.mxu0 0.0
  %471 = vmatpush1.msra.mxu0 0.0
  %472 = vmatprep.subr.mxu0 0.0
  %473 = vmatpush1.msra.mxu0 0.0
  %474 = vmatprep.subr.mxu0 0.0
  %475 = vmatpush1.msra.mxu0 0.0
  %476 = vmatprep.subr.mxu0 0.0
  %477 = vmatpush1.msra.mxu0 0.0
  %478 = vmatprep.subr.mxu0 0.0
  %479 = vmatpush1.msra.mxu0 0.0
  %480 = vmatprep.subr.mxu0 0.0
  %481 = vmatpush1.msra.mxu0 0.0
  %482 = vmatprep.subr.mxu0 0.0
  %483 = vmatpush1.msra.mxu0 0.0
  %484 = vmatprep.subr.mxu0 0.0
  %485 = vmatpush1.msra.mxu0 0.0
  %486 = vmatprep.subr.mxu0 0.0
  %487 = vmatpush1.msra.mxu0 0.0
  %488 = vmatprep.subr.mxu0 0.0
  %489 = vmatpush1.msra.mxu0 0.0
  %490 = vmatprep.mubr.f32.mxu0 0.0
  %491 = vmatmul.mubr.f32.gmra.mrb[0].mxu0 %v424
  %v492 = vpop.f32.mrb[0].mxu0
  %v493 = vadd.f32 0.0, %v492
  %v494 = vpop.f32.mrb[0].mxu0
  %495 = vdwg.mxu0
  %v498 = vrot.slane %v52, 7
  %v499 = vsel %vm139, %v498, %v51
  %v500 = vsel %vm141, %v499, 0
  %502 = vmatprep.subr.mxu0 0.0
  %503 = vmatpush1.msra.mxu0 %v55
  %504 = vmatprep.subr.mxu0 0.0
  %505 = vmatpush1.msra.mxu0 %v56
  %506 = vmatprep.subr.mxu0 0.0
  %507 = vmatpush1.msra.mxu0 0.0
  %508 = vmatprep.subr.mxu0 0.0
  %509 = vmatpush1.msra.mxu0 0.0
  %510 = vmatprep.subr.mxu0 0.0
  %511 = vmatpush1.msra.mxu0 0.0
  %512 = vmatprep.subr.mxu0 0.0
  %513 = vmatpush1.msra.mxu0 0.0
  %514 = vmatprep.subr.mxu0 0.0
  %515 = vmatpush1.msra.mxu0 0.0
  %516 = vmatprep.subr.mxu0 0.0
  %517 = vmatpush1.msra.mxu0 0.0
  %518 = vmatprep.subr.mxu0 0.0
  %519 = vmatpush1.msra.mxu0 0.0
  %520 = vmatprep.subr.mxu0 0.0
  %521 = vmatpush1.msra.mxu0 0.0
  %522 = vmatprep.subr.mxu0 0.0
  %523 = vmatpush1.msra.mxu0 0.0
  %524 = vmatprep.subr.mxu0 0.0
  %525 = vmatpush1.msra.mxu0 0.0
  %526 = vmatprep.subr.mxu0 0.0
  %527 = vmatpush1.msra.mxu0 0.0
  %528 = vmatprep.subr.mxu0 0.0
  %529 = vmatpush1.msra.mxu0 0.0
  %530 = vmatprep.subr.mxu0 0.0
  %531 = vmatpush1.msra.mxu0 0.0
  %532 = vmatprep.subr.mxu0 0.0
  %533 = vmatpush1.msra.mxu0 0.0
  %534 = vmatprep.subr.mxu0 0.0
  %535 = vmatpush1.msra.mxu0 0.0
  %536 = vmatprep.subr.mxu0 0.0
  %537 = vmatpush1.msra.mxu0 0.0
  %538 = vmatprep.subr.mxu0 0.0
  %539 = vmatpush1.msra.mxu0 0.0
  %540 = vmatprep.subr.mxu0 0.0
  %541 = vmatpush1.msra.mxu0 0.0
  %542 = vmatprep.subr.mxu0 0.0
  %543 = vmatpush1.msra.mxu0 0.0
  %544 = vmatprep.subr.mxu0 0.0
  %545 = vmatpush1.msra.mxu0 0.0
  %546 = vmatprep.subr.mxu0 0.0
  %547 = vmatpush1.msra.mxu0 0.0
  %548 = vmatprep.subr.mxu0 0.0
  %549 = vmatpush1.msra.mxu0 0.0
  %550 = vmatprep.subr.mxu0 0.0
  %551 = vmatpush1.msra.mxu0 0.0
  %552 = vmatprep.subr.mxu0 0.0
  %553 = vmatpush1.msra.mxu0 0.0
  %554 = vmatprep.subr.mxu0 0.0
  %555 = vmatpush1.msra.mxu0 0.0
  %556 = vmatprep.subr.mxu0 0.0
  %557 = vmatpush1.msra.mxu0 0.0
  %558 = vmatprep.subr.mxu0 0.0
  %559 = vmatpush1.msra.mxu0 0.0
  %560 = vmatprep.subr.mxu0 0.0
  %561 = vmatpush1.msra.mxu0 0.0
  %562 = vmatprep.subr.mxu0 0.0
  %563 = vmatpush1.msra.mxu0 0.0
  %564 = vmatprep.subr.mxu0 0.0
  %565 = vmatpush1.msra.mxu0 0.0
  %566 = vmatprep.mubr.f32.mxu0 0.0
  %567 = vmatmul.mubr.f32.gmra.mrb[0].mxu0 %v500
  %v568 = vpop.f32.mrb[0].mxu0
  %v569 = vadd.f32 %v493, %v568
  %v570 = vpop.f32.mrb[0].mxu0
  %571 = vdwg.mxu0
  %v572 = vadd.f32 %v569, %v218
  %v573 = vxor.u32 %v572, 2147483648
  %v574 = vmul.f32 %v573, 1.442695
  %v575 = vpow.pop %v574
  %v576 = vadd.f32 %v575, 1.0
  %v577 = vrcp.pop %v576
  %v578 = vmul.f32 1.0, %v577
  %v579 = vtanh.pop %v572
  %v580 = vmul.f32 %v578, %v414
  %582 = vrot.lane.b32.xlu0 %v579, 64
  %v583 = vpop.permute.xlu0 %582
  %v585 = vmul.f32 %v578, %v583
  %587 = vrot.lane.b32.xlu0 %v585, 32
  %v588 = vpop.permute.xlu0 %587
  %v590 = vadd.f32 %v580, %v588
  %v591 = vtanh.pop %v590
  %593 = vrot.lane.b32.xlu0 %v591, 64
  %v594 = vpop.permute.xlu0 %593
  %v596 = vmul.f32 %v578, %v594
  %598 = vrot.lane.b32.xlu0 %v596, 32
  %v599 = vpop.permute.xlu0 %598
  %v600 = vsel %vm62, %v599, 0
  %602 = vmatprep.subr.mxu0 0.0
  %603 = vmatpush1.msra.mxu0 %v57
  %604 = vmatprep.subr.mxu0 0.0
  %605 = vmatpush1.msra.mxu0 %v58
  %606 = vmatprep.subr.mxu0 0.0
  %607 = vmatpush1.msra.mxu0 %v59
  %608 = vmatprep.subr.mxu0 0.0
  %609 = vmatpush1.msra.mxu0 %v60
  %610 = vmatprep.subr.mxu0 0.0
  %611 = vmatpush1.msra.mxu0 0.0
  %612 = vmatprep.subr.mxu0 0.0
  %613 = vmatpush1.msra.mxu0 0.0
  %614 = vmatprep.subr.mxu0 0.0
  %615 = vmatpush1.msra.mxu0 0.0
  %616 = vmatprep.subr.mxu0 0.0
  %617 = vmatpush1.msra.mxu0 0.0
  %618 = vmatprep.subr.mxu0 0.0
  %619 = vmatpush1.msra.mxu0 0.0
  %620 = vmatprep.subr.mxu0 0.0
  %621 = vmatpush1.msra.mxu0 0.0
  %622 = vmatprep.subr.mxu0 0.0
  %623 = vmatpush1.msra.mxu0 0.0
  %624 = vmatprep.subr.mxu0 0.0
  %625 = vmatpush1.msra.mxu0 0.0
  %626 = vmatprep.subr.mxu0 0.0
  %627 = vmatpush1.msra.mxu0 0.0
  %628 = vmatprep.subr.mxu0 0.0
  %629 = vmatpush1.msra.mxu0 0.0
  %630 = vmatprep.subr.mxu0 0.0
  %631 = vmatpush1.msra.mxu0 0.0
  %632 = vmatprep.subr.mxu0 0.0
  %633 = vmatpush1.msra.mxu0 0.0
  %634 = vmatprep.subr.mxu0 0.0
  %635 = vmatpush1.msra.mxu0 0.0
  %636 = vmatprep.subr.mxu0 0.0
  %637 = vmatpush1.msra.mxu0 0.0
  %638 = vmatprep.subr.mxu0 0.0
  %639 = vmatpush1.msra.mxu0 0.0
  %640 = vmatprep.subr.mxu0 0.0
  %641 = vmatpush1.msra.mxu0 0.0
  %642 = vmatprep.subr.mxu0 0.0
  %643 = vmatpush1.msra.mxu0 0.0
  %644 = vmatprep.subr.mxu0 0.0
  %645 = vmatpush1.msra.mxu0 0.0
  %646 = vmatprep.subr.mxu0 0.0
  %647 = vmatpush1.msra.mxu0 0.0
  %648 = vmatprep.subr.mxu0 0.0
  %649 = vmatpush1.msra.mxu0 0.0
  %650 = vmatprep.subr.mxu0 0.0
  %651 = vmatpush1.msra.mxu0 0.0
  %652 = vmatprep.subr.mxu0 0.0
  %653 = vmatpush1.msra.mxu0 0.0
  %654 = vmatprep.subr.mxu0 0.0
  %655 = vmatpush1.msra.mxu0 0.0
  %656 = vmatprep.subr.mxu0 0.0
  %657 = vmatpush1.msra.mxu0 0.0
  %658 = vmatprep.subr.mxu0 0.0
  %659 = vmatpush1.msra.mxu0 0.0
  %660 = vmatprep.subr.mxu0 0.0
  %661 = vmatpush1.msra.mxu0 0.0
  %662 = vmatprep.subr.mxu0 0.0
  %663 = vmatpush1.msra.mxu0 0.0
  %664 = vmatprep.subr.mxu0 0.0
  %665 = vmatpush1.msra.mxu0 0.0
  %666 = vmatprep.mubr.f32.mxu0 0.0
  %667 = vmatmul.mubr.f32.gmra.mrb[0].mxu0 %v600
  %v668 = vpop.f32.mrb[0].mxu0
  %v669 = vadd.f32 0.0, %v668
  %v670 = vpop.f32.mrb[0].mxu0
  %671 = vdwg.mxu0
  %v674 = vrot.slane %v54, 7
  %v675 = vsel %vm139, %v674, %v53
  %v676 = vsel %vm141, %v675, 0
  %678 = vmatprep.subr.mxu0 0.0
  %679 = vmatpush1.msra.mxu0 %v55
  %680 = vmatprep.subr.mxu0 0.0
  %681 = vmatpush1.msra.mxu0 %v56
  %682 = vmatprep.subr.mxu0 0.0
  %683 = vmatpush1.msra.mxu0 0.0
  %684 = vmatprep.subr.mxu0 0.0
  %685 = vmatpush1.msra.mxu0 0.0
  %686 = vmatprep.subr.mxu0 0.0
  %687 = vmatpush1.msra.mxu0 0.0
  %688 = vmatprep.subr.mxu0 0.0
  %689 = vmatpush1.msra.mxu0 0.0
  %690 = vmatprep.subr.mxu0 0.0
  %691 = vmatpush1.msra.mxu0 0.0
  %692 = vmatprep.subr.mxu0 0.0
  %693 = vmatpush1.msra.mxu0 0.0
  %694 = vmatprep.subr.mxu0 0.0
  %695 = vmatpush1.msra.mxu0 0.0
  %696 = vmatprep.subr.mxu0 0.0
  %697 = vmatpush1.msra.mxu0 0.0
  %698 = vmatprep.subr.mxu0 0.0
  %699 = vmatpush1.msra.mxu0 0.0
  %700 = vmatprep.subr.mxu0 0.0
  %701 = vmatpush1.msra.mxu0 0.0
  %702 = vmatprep.subr.mxu0 0.0
  %703 = vmatpush1.msra.mxu0 0.0
  %704 = vmatprep.subr.mxu0 0.0
  %705 = vmatpush1.msra.mxu0 0.0
  %706 = vmatprep.subr.mxu0 0.0
  %707 = vmatpush1.msra.mxu0 0.0
  %708 = vmatprep.subr.mxu0 0.0
  %709 = vmatpush1.msra.mxu0 0.0
  %710 = vmatprep.subr.mxu0 0.0
  %711 = vmatpush1.msra.mxu0 0.0
  %712 = vmatprep.subr.mxu0 0.0
  %713 = vmatpush1.msra.mxu0 0.0
  %714 = vmatprep.subr.mxu0 0.0
  %715 = vmatpush1.msra.mxu0 0.0
  %716 = vmatprep.subr.mxu0 0.0
  %717 = vmatpush1.msra.mxu0 0.0
  %718 = vmatprep.subr.mxu0 0.0
  %719 = vmatpush1.msra.mxu0 0.0
  %720 = vmatprep.subr.mxu0 0.0
  %721 = vmatpush1.msra.mxu0 0.0
  %722 = vmatprep.subr.mxu0 0.0
  %723 = vmatpush1.msra.mxu0 0.0
  %724 = vmatprep.subr.mxu0 0.0
  %725 = vmatpush1.msra.mxu0 0.0
  %726 = vmatprep.subr.mxu0 0.0
  %727 = vmatpush1.msra.mxu0 0.0
  %728 = vmatprep.subr.mxu0 0.0
  %729 = vmatpush1.msra.mxu0 0.0
  %730 = vmatprep.subr.mxu0 0.0
  %731 = vmatpush1.msra.mxu0 0.0
  %732 = vmatprep.subr.mxu0 0.0
  %733 = vmatpush1.msra.mxu0 0.0
  %734 = vmatprep.subr.mxu0 0.0
  %735 = vmatpush1.msra.mxu0 0.0
  %736 = vmatprep.subr.mxu0 0.0
  %737 = vmatpush1.msra.mxu0 0.0
  %738 = vmatprep.subr.mxu0 0.0
  %739 = vmatpush1.msra.mxu0 0.0
  %740 = vmatprep.subr.mxu0 0.0
  %741 = vmatpush1.msra.mxu0 0.0
  %742 = vmatprep.mubr.f32.mxu0 0.0
  %743 = vmatmul.mubr.f32.gmra.mrb[0].mxu0 %v676
  %v744 = vpop.f32.mrb[0].mxu0
  %v745 = vadd.f32 %v669, %v744
  %v746 = vpop.f32.mrb[0].mxu0
  %747 = vdwg.mxu0
  %v748 = vadd.f32 %v745, %v218
  %v749 = vxor.u32 %v748, 2147483648
  %v750 = vmul.f32 %v749, 1.442695
  %v751 = vpow.pop %v750
  %v752 = vadd.f32 %v751, 1.0
  %v753 = vrcp.pop %v752
  %v754 = vmul.f32 1.0, %v753
  %v755 = vtanh.pop %v748
  %v756 = vmul.f32 %v754, %v590
  %758 = vrot.lane.b32.xlu0 %v755, 64
  %v759 = vpop.permute.xlu0 %758
  %v761 = vmul.f32 %v754, %v759
  %763 = vrot.lane.b32.xlu0 %v761, 32
  %v764 = vpop.permute.xlu0 %763
  %v766 = vadd.f32 %v756, %v764
  %v767 = vtanh.pop %v766
  %769 = vrot.lane.b32.xlu0 %v767, 64
  %v770 = vpop.permute.xlu0 %769
  %v772 = vmul.f32 %v754, %v770
  %v773 = vld [vmem:[%s11] sm:$0xff]
  %v774 = vld [vmem:[%s11 + $0x8] sm:$0xff]
  %v775 = vld [vmem:[%s11 + $0x10] sm:$0xff]
  %v776 = vld [vmem:[%s11 + $0x18] sm:$0xff]
  %v777 = vld [vmem:[%s12] sm:$0xff]
  %v778 = vld [vmem:[%s12 + $0x8] sm:$0xff]
  %v779 = vld [vmem:[%s12 + $0x10] sm:$0xff]
  %v780 = vld [vmem:[%s12 + $0x18] sm:$0xff]
  %v781 = vld [vmem:[%s13] sm:$0x1]
  %782 = vmatprep.subr.mxu0 0.0
  %783 = vmatpush1.msra.mxu0 %v777
  %784 = vmatprep.subr.mxu0 0.0
  %785 = vmatpush1.msra.mxu0 %v778
  %786 = vmatprep.subr.mxu0 0.0
  %787 = vmatpush1.msra.mxu0 %v779
  %788 = vmatprep.subr.mxu0 0.0
  %789 = vmatpush1.msra.mxu0 %v780
  %790 = vmatprep.subr.mxu0 0.0
  %791 = vmatpush1.msra.mxu0 0.0
  %792 = vmatprep.subr.mxu0 0.0
  %793 = vmatpush1.msra.mxu0 0.0
  %794 = vmatprep.subr.mxu0 0.0
  %795 = vmatpush1.msra.mxu0 0.0
  %796 = vmatprep.subr.mxu0 0.0
  %797 = vmatpush1.msra.mxu0 0.0
  %798 = vmatprep.subr.mxu0 0.0
  %799 = vmatpush1.msra.mxu0 0.0
  %800 = vmatprep.subr.mxu0 0.0
  %801 = vmatpush1.msra.mxu0 0.0
  %802 = vmatprep.subr.mxu0 0.0
  %803 = vmatpush1.msra.mxu0 0.0
  %804 = vmatprep.subr.mxu0 0.0
  %805 = vmatpush1.msra.mxu0 0.0
  %806 = vmatprep.subr.mxu0 0.0
  %807 = vmatpush1.msra.mxu0 0.0
  %808 = vmatprep.subr.mxu0 0.0
  %809 = vmatpush1.msra.mxu0 0.0
  %810 = vmatprep.subr.mxu0 0.0
  %811 = vmatpush1.msra.mxu0 0.0
  %812 = vmatprep.subr.mxu0 0.0
  %813 = vmatpush1.msra.mxu0 0.0
  %814 = vmatprep.subr.mxu0 0.0
  %815 = vmatpush1.msra.mxu0 0.0
  %816 = vmatprep.subr.mxu0 0.0
  %817 = vmatpush1.msra.mxu0 0.0
  %818 = vmatprep.subr.mxu0 0.0
  %819 = vmatpush1.msra.mxu0 0.0
  %820 = vmatprep.subr.mxu0 0.0
  %821 = vmatpush1.msra.mxu0 0.0
  %822 = vmatprep.subr.mxu0 0.0
  %823 = vmatpush1.msra.mxu0 0.0
  %824 = vmatprep.subr.mxu0 0.0
  %825 = vmatpush1.msra.mxu0 0.0
  %826 = vmatprep.subr.mxu0 0.0
  %827 = vmatpush1.msra.mxu0 0.0
  %828 = vmatprep.subr.mxu0 0.0
  %829 = vmatpush1.msra.mxu0 0.0
  %830 = vmatprep.subr.mxu0 0.0
  %831 = vmatpush1.msra.mxu0 0.0
  %832 = vmatprep.subr.mxu0 0.0
  %833 = vmatpush1.msra.mxu0 0.0
  %834 = vmatprep.subr.mxu0 0.0
  %835 = vmatpush1.msra.mxu0 0.0
  %836 = vmatprep.subr.mxu0 0.0
  %837 = vmatpush1.msra.mxu0 0.0
  %838 = vmatprep.subr.mxu0 0.0
  %839 = vmatpush1.msra.mxu0 0.0
  %840 = vmatprep.subr.mxu0 0.0
  %841 = vmatpush1.msra.mxu0 0.0
  %842 = vmatprep.subr.mxu0 0.0
  %843 = vmatpush1.msra.mxu0 0.0
  %844 = vmatprep.subr.mxu0 0.0
  %845 = vmatpush1.msra.mxu0 0.0
  %846 = vmatprep.mubr.f32.mxu0 0.0
  %847 = vmatmul.mubr.f32.gmra.mrb[0].mxu0 %v64
  %v848 = vpop.f32.mrb[0].mxu0
  %v849 = vadd.f32 0.0, %v848
  %v850 = vpop.f32.mrb[0].mxu0
  %851 = vdwg.mxu0
  %852 = vmatprep.subr.mxu0 0.0
  %853 = vmatpush1.msra.mxu0 %v773
  %854 = vmatprep.subr.mxu0 0.0
  %855 = vmatpush1.msra.mxu0 %v774
  %856 = vmatprep.subr.mxu0 0.0
  %857 = vmatpush1.msra.mxu0 %v775
  %858 = vmatprep.subr.mxu0 0.0
  %859 = vmatpush1.msra.mxu0 %v776
  %860 = vmatprep.subr.mxu0 0.0
  %861 = vmatpush1.msra.mxu0 0.0
  %862 = vmatprep.subr.mxu0 0.0
  %863 = vmatpush1.msra.mxu0 0.0
  %864 = vmatprep.subr.mxu0 0.0
  %865 = vmatpush1.msra.mxu0 0.0
  %866 = vmatprep.subr.mxu0 0.0
  %867 = vmatpush1.msra.mxu0 0.0
  %868 = vmatprep.subr.mxu0 0.0
  %869 = vmatpush1.msra.mxu0 0.0
  %870 = vmatprep.subr.mxu0 0.0
  %871 = vmatpush1.msra.mxu0 0.0
  %872 = vmatprep.subr.mxu0 0.0
  %873 = vmatpush1.msra.mxu0 0.0
  %874 = vmatprep.subr.mxu0 0.0
  %875 = vmatpush1.msra.mxu0 0.0
  %876 = vmatprep.subr.mxu0 0.0
  %877 = vmatpush1.msra.mxu0 0.0
  %878 = vmatprep.subr.mxu0 0.0
  %879 = vmatpush1.msra.mxu0 0.0
  %880 = vmatprep.subr.mxu0 0.0
  %881 = vmatpush1.msra.mxu0 0.0
  %882 = vmatprep.subr.mxu0 0.0
  %883 = vmatpush1.msra.mxu0 0.0
  %884 = vmatprep.subr.mxu0 0.0
  %885 = vmatpush1.msra.mxu0 0.0
  %886 = vmatprep.subr.mxu0 0.0
  %887 = vmatpush1.msra.mxu0 0.0
  %888 = vmatprep.subr.mxu0 0.0
  %889 = vmatpush1.msra.mxu0 0.0
  %890 = vmatprep.subr.mxu0 0.0
  %891 = vmatpush1.msra.mxu0 0.0
  %892 = vmatprep.subr.mxu0 0.0
  %893 = vmatpush1.msra.mxu0 0.0
  %894 = vmatprep.subr.mxu0 0.0
  %895 = vmatpush1.msra.mxu0 0.0
  %896 = vmatprep.subr.mxu0 0.0
  %897 = vmatpush1.msra.mxu0 0.0
  %898 = vmatprep.subr.mxu0 0.0
  %899 = vmatpush1.msra.mxu0 0.0
  %900 = vmatprep.subr.mxu0 0.0
  %901 = vmatpush1.msra.mxu0 0.0
  %902 = vmatprep.subr.mxu0 0.0
  %903 = vmatpush1.msra.mxu0 0.0
  %904 = vmatprep.subr.mxu0 0.0
  %905 = vmatpush1.msra.mxu0 0.0
  %906 = vmatprep.subr.mxu0 0.0
  %907 = vmatpush1.msra.mxu0 0.0
  %908 = vmatprep.subr.mxu0 0.0
  %909 = vmatpush1.msra.mxu0 0.0
  %910 = vmatprep.subr.mxu0 0.0
  %911 = vmatpush1.msra.mxu0 0.0
  %912 = vmatprep.subr.mxu0 0.0
  %913 = vmatpush1.msra.mxu0 0.0
  %914 = vmatprep.subr.mxu0 0.0
  %915 = vmatpush1.msra.mxu0 0.0
  %916 = vmatprep.mubr.f32.mxu0 0.0
  %917 = vmatmul.mubr.f32.gmra.mrb[0].mxu0 %v248
  %v918 = vpop.f32.mrb[0].mxu0
  %v919 = vadd.f32 %v849, %v918
  %v920 = vpop.f32.mrb[0].mxu0
  %921 = vdwg.mxu0
  %v923 = vlaneseq
  %v924 = vshrl.u32 %v923, 7
  %v925 = vsub.s32 0, %v924
  %v926 = vrot.slane %v781, %v925
  %v928 = vadd.f32 %v919, %v926
  %v929 = vxor.u32 %v928, 2147483648
  %v930 = vmul.f32 %v929, 1.442695
  %v931 = vpow.pop %v930
  %v932 = vadd.f32 %v931, 1.0
  %v933 = vrcp.pop %v932
  %v934 = vmul.f32 1.0, %v933
  %v935 = vtanh.pop %v928
  %v936 = vmul.f32 %v934, 0.0
  %938 = vrot.lane.b32.xlu0 %v935, 64
  %v939 = vpop.permute.xlu0 %938
  %v941 = vmul.f32 %v934, %v939
  %943 = vrot.lane.b32.xlu0 %v941, 32
  %v944 = vpop.permute.xlu0 %943
  %v946 = vadd.f32 %v936, %v944
  %v947 = vtanh.pop %v946
  %949 = vrot.lane.b32.xlu0 %v947, 64
  %v950 = vpop.permute.xlu0 %949
  %v952 = vmul.f32 %v934, %v950
  %954 = vrot.lane.b32.xlu0 %v952, 32
  %v955 = vpop.permute.xlu0 %954
  %v956 = vsel %vm62, %v955, 0
  %958 = vmatprep.subr.mxu0 0.0
  %959 = vmatpush1.msra.mxu0 %v777
  %960 = vmatprep.subr.mxu0 0.0
  %961 = vmatpush1.msra.mxu0 %v778
  %962 = vmatprep.subr.mxu0 0.0
  %963 = vmatpush1.msra.mxu0 %v779
  %964 = vmatprep.subr.mxu0 0.0
  %965 = vmatpush1.msra.mxu0 %v780
  %966 = vmatprep.subr.mxu0 0.0
  %967 = vmatpush1.msra.mxu0 0.0
  %968 = vmatprep.subr.mxu0 0.0
  %969 = vmatpush1.msra.mxu0 0.0
  %970 = vmatprep.subr.mxu0 0.0
  %971 = vmatpush1.msra.mxu0 0.0
  %972 = vmatprep.subr.mxu0 0.0
  %973 = vmatpush1.msra.mxu0 0.0
  %974 = vmatprep.subr.mxu0 0.0
  %975 = vmatpush1.msra.mxu0 0.0
  %976 = vmatprep.subr.mxu0 0.0
  %977 = vmatpush1.msra.mxu0 0.0
  %978 = vmatprep.subr.mxu0 0.0
  %979 = vmatpush1.msra.mxu0 0.0
  %980 = vmatprep.subr.mxu0 0.0
  %981 = vmatpush1.msra.mxu0 0.0
  %982 = vmatprep.subr.mxu0 0.0
  %983 = vmatpush1.msra.mxu0 0.0
  %984 = vmatprep.subr.mxu0 0.0
  %985 = vmatpush1.msra.mxu0 0.0
  %986 = vmatprep.subr.mxu0 0.0
  %987 = vmatpush1.msra.mxu0 0.0
  %988 = vmatprep.subr.mxu0 0.0
  %989 = vmatpush1.msra.mxu0 0.0
  %990 = vmatprep.subr.mxu0 0.0
  %991 = vmatpush1.msra.mxu0 0.0
  %992 = vmatprep.subr.mxu0 0.0
  %993 = vmatpush1.msra.mxu0 0.0
  %994 = vmatprep.subr.mxu0 0.0
  %995 = vmatpush1.msra.mxu0 0.0
  %996 = vmatprep.subr.mxu0 0.0
  %997 = vmatpush1.msra.mxu0 0.0
  %998 = vmatprep.subr.mxu0 0.0
  %999 = vmatpush1.msra.mxu0 0.0
  %1000 = vmatprep.subr.mxu0 0.0
  %1001 = vmatpush1.msra.mxu0 0.0
  %1002 = vmatprep.subr.mxu0 0.0
  %1003 = vmatpush1.msra.mxu0 0.0
  %1004 = vmatprep.subr.mxu0 0.0
  %1005 = vmatpush1.msra.mxu0 0.0
  %1006 = vmatprep.subr.mxu0 0.0
  %1007 = vmatpush1.msra.mxu0 0.0
  %1008 = vmatprep.subr.mxu0 0.0
  %1009 = vmatpush1.msra.mxu0 0.0
  %1010 = vmatprep.subr.mxu0 0.0
  %1011 = vmatpush1.msra.mxu0 0.0
  %1012 = vmatprep.subr.mxu0 0.0
  %1013 = vmatpush1.msra.mxu0 0.0
  %1014 = vmatprep.subr.mxu0 0.0
  %1015 = vmatpush1.msra.mxu0 0.0
  %1016 = vmatprep.subr.mxu0 0.0
  %1017 = vmatpush1.msra.mxu0 0.0
  %1018 = vmatprep.subr.mxu0 0.0
  %1019 = vmatpush1.msra.mxu0 0.0
  %1020 = vmatprep.subr.mxu0 0.0
  %1021 = vmatpush1.msra.mxu0 0.0
  %1022 = vmatprep.mubr.f32.mxu0 0.0
  %1023 = vmatmul.mubr.f32.gmra.mrb[0].mxu0 %v956
  %v1024 = vpop.f32.mrb[0].mxu0
  %v1025 = vadd.f32 0.0, %v1024
  %v1026 = vpop.f32.mrb[0].mxu0
  %1027 = vdwg.mxu0
  %1028 = vmatprep.subr.mxu0 0.0
  %1029 = vmatpush1.msra.mxu0 %v773
  %1030 = vmatprep.subr.mxu0 0.0
  %1031 = vmatpush1.msra.mxu0 %v774
  %1032 = vmatprep.subr.mxu0 0.0
  %1033 = vmatpush1.msra.mxu0 %v775
  %1034 = vmatprep.subr.mxu0 0.0
  %1035 = vmatpush1.msra.mxu0 %v776
  %1036 = vmatprep.subr.mxu0 0.0
  %1037 = vmatpush1.msra.mxu0 0.0
  %1038 = vmatprep.subr.mxu0 0.0
  %1039 = vmatpush1.msra.mxu0 0.0
  %1040 = vmatprep.subr.mxu0 0.0
  %1041 = vmatpush1.msra.mxu0 0.0
  %1042 = vmatprep.subr.mxu0 0.0
  %1043 = vmatpush1.msra.mxu0 0.0
  %1044 = vmatprep.subr.mxu0 0.0
  %1045 = vmatpush1.msra.mxu0 0.0
  %1046 = vmatprep.subr.mxu0 0.0
  %1047 = vmatpush1.msra.mxu0 0.0
  %1048 = vmatprep.subr.mxu0 0.0
  %1049 = vmatpush1.msra.mxu0 0.0
  %1050 = vmatprep.subr.mxu0 0.0
  %1051 = vmatpush1.msra.mxu0 0.0
  %1052 = vmatprep.subr.mxu0 0.0
  %1053 = vmatpush1.msra.mxu0 0.0
  %1054 = vmatprep.subr.mxu0 0.0
  %1055 = vmatpush1.msra.mxu0 0.0
  %1056 = vmatprep.subr.mxu0 0.0
  %1057 = vmatpush1.msra.mxu0 0.0
  %1058 = vmatprep.subr.mxu0 0.0
  %1059 = vmatpush1.msra.mxu0 0.0
  %1060 = vmatprep.subr.mxu0 0.0
  %1061 = vmatpush1.msra.mxu0 0.0
  %1062 = vmatprep.subr.mxu0 0.0
  %1063 = vmatpush1.msra.mxu0 0.0
  %1064 = vmatprep.subr.mxu0 0.0
  %1065 = vmatpush1.msra.mxu0 0.0
  %1066 = vmatprep.subr.mxu0 0.0
  %1067 = vmatpush1.msra.mxu0 0.0
  %1068 = vmatprep.subr.mxu0 0.0
  %1069 = vmatpush1.msra.mxu0 0.0
  %1070 = vmatprep.subr.mxu0 0.0
  %1071 = vmatpush1.msra.mxu0 0.0
  %1072 = vmatprep.subr.mxu0 0.0
  %1073 = vmatpush1.msra.mxu0 0.0
  %1074 = vmatprep.subr.mxu0 0.0
  %1075 = vmatpush1.msra.mxu0 0.0
  %1076 = vmatprep.subr.mxu0 0.0
  %1077 = vmatpush1.msra.mxu0 0.0
  %1078 = vmatprep.subr.mxu0 0.0
  %1079 = vmatpush1.msra.mxu0 0.0
  %1080 = vmatprep.subr.mxu0 0.0
  %1081 = vmatpush1.msra.mxu0 0.0
  %1082 = vmatprep.subr.mxu0 0.0
  %1083 = vmatpush1.msra.mxu0 0.0
  %1084 = vmatprep.subr.mxu0 0.0
  %1085 = vmatpush1.msra.mxu0 0.0
  %1086 = vmatprep.subr.mxu0 0.0
  %1087 = vmatpush1.msra.mxu0 0.0
  %1088 = vmatprep.subr.mxu0 0.0
  %1089 = vmatpush1.msra.mxu0 0.0
  %1090 = vmatprep.subr.mxu0 0.0
  %1091 = vmatpush1.msra.mxu0 0.0
  %1092 = vmatprep.mubr.f32.mxu0 0.0
  %1093 = vmatmul.mubr.f32.gmra.mrb[0].mxu0 %v424
  %v1094 = vpop.f32.mrb[0].mxu0
  %v1095 = vadd.f32 %v1025, %v1094
  %v1096 = vpop.f32.mrb[0].mxu0
  %1097 = vdwg.mxu0
  %v1098 = vadd.f32 %v1095, %v926
  %v1099 = vxor.u32 %v1098, 2147483648
  %v1100 = vmul.f32 %v1099, 1.442695
  %v1101 = vpow.pop %v1100
  %v1102 = vadd.f32 %v1101, 1.0
  %v1103 = vrcp.pop %v1102
  %v1104 = vmul.f32 1.0, %v1103
  %v1105 = vtanh.pop %v1098
  %v1106 = vmul.f32 %v1104, %v946
  %1108 = vrot.lane.b32.xlu0 %v1105, 64
  %v1109 = vpop.permute.xlu0 %1108
  %v1111 = vmul.f32 %v1104, %v1109
  %1113 = vrot.lane.b32.xlu0 %v1111, 32
  %v1114 = vpop.permute.xlu0 %1113
  %v1116 = vadd.f32 %v1106, %v1114
  %v1117 = vtanh.pop %v1116
  %1119 = vrot.lane.b32.xlu0 %v1117, 64
  %v1120 = vpop.permute.xlu0 %1119
  %v1122 = vmul.f32 %v1104, %v1120
  %1124 = vrot.lane.b32.xlu0 %v1122, 32
  %v1125 = vpop.permute.xlu0 %1124
  %v1126 = vsel %vm62, %v1125, 0
  %1128 = vmatprep.subr.mxu0 0.0
  %1129 = vmatpush1.msra.mxu0 %v777
  %1130 = vmatprep.subr.mxu0 0.0
  %1131 = vmatpush1.msra.mxu0 %v778
  %1132 = vmatprep.subr.mxu0 0.0
  %1133 = vmatpush1.msra.mxu0 %v779
  %1134 = vmatprep.subr.mxu0 0.0
  %1135 = vmatpush1.msra.mxu0 %v780
  %1136 = vmatprep.subr.mxu0 0.0
  %1137 = vmatpush1.msra.mxu0 0.0
  %1138 = vmatprep.subr.mxu0 0.0
  %1139 = vmatpush1.msra.mxu0 0.0
  %1140 = vmatprep.subr.mxu0 0.0
  %1141 = vmatpush1.msra.mxu0 0.0
  %1142 = vmatprep.subr.mxu0 0.0
  %1143 = vmatpush1.msra.mxu0 0.0
  %1144 = vmatprep.subr.mxu0 0.0
  %1145 = vmatpush1.msra.mxu0 0.0
  %1146 = vmatprep.subr.mxu0 0.0
  %1147 = vmatpush1.msra.mxu0 0.0
  %1148 = vmatprep.subr.mxu0 0.0
  %1149 = vmatpush1.msra.mxu0 0.0
  %1150 = vmatprep.subr.mxu0 0.0
  %1151 = vmatpush1.msra.mxu0 0.0
  %1152 = vmatprep.subr.mxu0 0.0
  %1153 = vmatpush1.msra.mxu0 0.0
  %1154 = vmatprep.subr.mxu0 0.0
  %1155 = vmatpush1.msra.mxu0 0.0
  %1156 = vmatprep.subr.mxu0 0.0
  %1157 = vmatpush1.msra.mxu0 0.0
  %1158 = vmatprep.subr.mxu0 0.0
  %1159 = vmatpush1.msra.mxu0 0.0
  %1160 = vmatprep.subr.mxu0 0.0
  %1161 = vmatpush1.msra.mxu0 0.0
  %1162 = vmatprep.subr.mxu0 0.0
  %1163 = vmatpush1.msra.mxu0 0.0
  %1164 = vmatprep.subr.mxu0 0.0
  %1165 = vmatpush1.msra.mxu0 0.0
  %1166 = vmatprep.subr.mxu0 0.0
  %1167 = vmatpush1.msra.mxu0 0.0
  %1168 = vmatprep.subr.mxu0 0.0
  %1169 = vmatpush1.msra.mxu0 0.0
  %1170 = vmatprep.subr.mxu0 0.0
  %1171 = vmatpush1.msra.mxu0 0.0
  %1172 = vmatprep.subr.mxu0 0.0
  %1173 = vmatpush1.msra.mxu0 0.0
  %1174 = vmatprep.subr.mxu0 0.0
  %1175 = vmatpush1.msra.mxu0 0.0
  %1176 = vmatprep.subr.mxu0 0.0
  %1177 = vmatpush1.msra.mxu0 0.0
  %1178 = vmatprep.subr.mxu0 0.0
  %1179 = vmatpush1.msra.mxu0 0.0
  %1180 = vmatprep.subr.mxu0 0.0
  %1181 = vmatpush1.msra.mxu0 0.0
  %1182 = vmatprep.subr.mxu0 0.0
  %1183 = vmatpush1.msra.mxu0 0.0
  %1184 = vmatprep.subr.mxu0 0.0
  %1185 = vmatpush1.msra.mxu0 0.0
  %1186 = vmatprep.subr.mxu0 0.0
  %1187 = vmatpush1.msra.mxu0 0.0
  %1188 = vmatprep.subr.mxu0 0.0
  %1189 = vmatpush1.msra.mxu0 0.0
  %1190 = vmatprep.subr.mxu0 0.0
  %1191 = vmatpush1.msra.mxu0 0.0
  %1192 = vmatprep.mubr.f32.mxu0 0.0
  %1193 = vmatmul.mubr.f32.gmra.mrb[0].mxu0 %v1126
  %v1194 = vpop.f32.mrb[0].mxu0
  %v1195 = vadd.f32 0.0, %v1194
  %v1196 = vpop.f32.mrb[0].mxu0
  %1197 = vdwg.mxu0
  %1198 = vmatprep.subr.mxu0 0.0
  %1199 = vmatpush1.msra.mxu0 %v773
  %1200 = vmatprep.subr.mxu0 0.0
  %1201 = vmatpush1.msra.mxu0 %v774
  %1202 = vmatprep.subr.mxu0 0.0
  %1203 = vmatpush1.msra.mxu0 %v775
  %1204 = vmatprep.subr.mxu0 0.0
  %1205 = vmatpush1.msra.mxu0 %v776
  %1206 = vmatprep.subr.mxu0 0.0
  %1207 = vmatpush1.msra.mxu0 0.0
  %1208 = vmatprep.subr.mxu0 0.0
  %1209 = vmatpush1.msra.mxu0 0.0
  %1210 = vmatprep.subr.mxu0 0.0
  %1211 = vmatpush1.msra.mxu0 0.0
  %1212 = vmatprep.subr.mxu0 0.0
  %1213 = vmatpush1.msra.mxu0 0.0
  %1214 = vmatprep.subr.mxu0 0.0
  %1215 = vmatpush1.msra.mxu0 0.0
  %1216 = vmatprep.subr.mxu0 0.0
  %1217 = vmatpush1.msra.mxu0 0.0
  %1218 = vmatprep.subr.mxu0 0.0
  %1219 = vmatpush1.msra.mxu0 0.0
  %1220 = vmatprep.subr.mxu0 0.0
  %1221 = vmatpush1.msra.mxu0 0.0
  %1222 = vmatprep.subr.mxu0 0.0
  %1223 = vmatpush1.msra.mxu0 0.0
  %1224 = vmatprep.subr.mxu0 0.0
  %1225 = vmatpush1.msra.mxu0 0.0
  %1226 = vmatprep.subr.mxu0 0.0
  %1227 = vmatpush1.msra.mxu0 0.0
  %1228 = vmatprep.subr.mxu0 0.0
  %1229 = vmatpush1.msra.mxu0 0.0
  %1230 = vmatprep.subr.mxu0 0.0
  %1231 = vmatpush1.msra.mxu0 0.0
  %1232 = vmatprep.subr.mxu0 0.0
  %1233 = vmatpush1.msra.mxu0 0.0
  %1234 = vmatprep.subr.mxu0 0.0
  %1235 = vmatpush1.msra.mxu0 0.0
  %1236 = vmatprep.subr.mxu0 0.0
  %1237 = vmatpush1.msra.mxu0 0.0
  %1238 = vmatprep.subr.mxu0 0.0
  %1239 = vmatpush1.msra.mxu0 0.0
  %1240 = vmatprep.subr.mxu0 0.0
  %1241 = vmatpush1.msra.mxu0 0.0
  %1242 = vmatprep.subr.mxu0 0.0
  %1243 = vmatpush1.msra.mxu0 0.0
  %1244 = vmatprep.subr.mxu0 0.0
  %1245 = vmatpush1.msra.mxu0 0.0
  %1246 = vmatprep.subr.mxu0 0.0
  %1247 = vmatpush1.msra.mxu0 0.0
  %1248 = vmatprep.subr.mxu0 0.0
  %1249 = vmatpush1.msra.mxu0 0.0
  %1250 = vmatprep.subr.mxu0 0.0
  %1251 = vmatpush1.msra.mxu0 0.0
  %1252 = vmatprep.subr.mxu0 0.0
  %1253 = vmatpush1.msra.mxu0 0.0
  %1254 = vmatprep.subr.mxu0 0.0
  %1255 = vmatpush1.msra.mxu0 0.0
  %1256 = vmatprep.subr.mxu0 0.0
  %1257 = vmatpush1.msra.mxu0 0.0
  %1258 = vmatprep.subr.mxu0 0.0
  %1259 = vmatpush1.msra.mxu0 0.0
  %1260 = vmatprep.subr.mxu0 0.0
  %1261 = vmatpush1.msra.mxu0 0.0
  %1262 = vmatprep.mubr.f32.mxu0 0.0
  %1263 = vmatmul.mubr.f32.gmra.mrb[0].mxu0 %v600
  %v1264 = vpop.f32.mrb[0].mxu0
  %v1265 = vadd.f32 %v1195, %v1264
  %v1266 = vpop.f32.mrb[0].mxu0
  %1267 = vdwg.mxu0
  %v1268 = vadd.f32 %v1265, %v926
  %v1269 = vxor.u32 %v1268, 2147483648
  %v1270 = vmul.f32 %v1269, 1.442695
  %v1271 = vpow.pop %v1270
  %v1272 = vadd.f32 %v1271, 1.0
  %v1273 = vrcp.pop %v1272
  %v1274 = vmul.f32 1.0, %v1273
  %v1275 = vtanh.pop %v1268
  %v1276 = vmul.f32 %v1274, %v1116
  %1278 = vrot.lane.b32.xlu0 %v1275, 64
  %v1279 = vpop.permute.xlu0 %1278
  %v1281 = vmul.f32 %v1274, %v1279
  %1283 = vrot.lane.b32.xlu0 %v1281, 32
  %v1284 = vpop.permute.xlu0 %1283
  %v1286 = vadd.f32 %v1276, %v1284
  %v1287 = vtanh.pop %v1286
  %1289 = vrot.lane.b32.xlu0 %v1287, 64
  %v1290 = vpop.permute.xlu0 %1289
  %v1292 = vmul.f32 %v1274, %v1290
  %1294 = vrot.lane.b32.xlu0 %v1292, 32
  %v1295 = vpop.permute.xlu0 %1294
  %v1296 = vsel %vm62, %v1295, 0
  %1298 = vmatprep.subr.mxu0 0.0
  %1299 = vmatpush1.msra.mxu0 %v777
  %1300 = vmatprep.subr.mxu0 0.0
  %1301 = vmatpush1.msra.mxu0 %v778
  %1302 = vmatprep.subr.mxu0 0.0
  %1303 = vmatpush1.msra.mxu0 %v779
  %1304 = vmatprep.subr.mxu0 0.0
  %1305 = vmatpush1.msra.mxu0 %v780
  %1306 = vmatprep.subr.mxu0 0.0
  %1307 = vmatpush1.msra.mxu0 0.0
  %1308 = vmatprep.subr.mxu0 0.0
  %1309 = vmatpush1.msra.mxu0 0.0
  %1310 = vmatprep.subr.mxu0 0.0
  %1311 = vmatpush1.msra.mxu0 0.0
  %1312 = vmatprep.subr.mxu0 0.0
  %1313 = vmatpush1.msra.mxu0 0.0
  %1314 = vmatprep.subr.mxu0 0.0
  %1315 = vmatpush1.msra.mxu0 0.0
  %1316 = vmatprep.subr.mxu0 0.0
  %1317 = vmatpush1.msra.mxu0 0.0
  %1318 = vmatprep.subr.mxu0 0.0
  %1319 = vmatpush1.msra.mxu0 0.0
  %1320 = vmatprep.subr.mxu0 0.0
  %1321 = vmatpush1.msra.mxu0 0.0
  %1322 = vmatprep.subr.mxu0 0.0
  %1323 = vmatpush1.msra.mxu0 0.0
  %1324 = vmatprep.subr.mxu0 0.0
  %1325 = vmatpush1.msra.mxu0 0.0
  %1326 = vmatprep.subr.mxu0 0.0
  %1327 = vmatpush1.msra.mxu0 0.0
  %1328 = vmatprep.subr.mxu0 0.0
  %1329 = vmatpush1.msra.mxu0 0.0
  %1330 = vmatprep.subr.mxu0 0.0
  %1331 = vmatpush1.msra.mxu0 0.0
  %1332 = vmatprep.subr.mxu0 0.0
  %1333 = vmatpush1.msra.mxu0 0.0
  %1334 = vmatprep.subr.mxu0 0.0
  %1335 = vmatpush1.msra.mxu0 0.0
  %1336 = vmatprep.subr.mxu0 0.0
  %1337 = vmatpush1.msra.mxu0 0.0
  %1338 = vmatprep.subr.mxu0 0.0
  %1339 = vmatpush1.msra.mxu0 0.0
  %1340 = vmatprep.subr.mxu0 0.0
  %1341 = vmatpush1.msra.mxu0 0.0
  %1342 = vmatprep.subr.mxu0 0.0
  %1343 = vmatpush1.msra.mxu0 0.0
  %1344 = vmatprep.subr.mxu0 0.0
  %1345 = vmatpush1.msra.mxu0 0.0
  %1346 = vmatprep.subr.mxu0 0.0
  %1347 = vmatpush1.msra.mxu0 0.0
  %1348 = vmatprep.subr.mxu0 0.0
  %1349 = vmatpush1.msra.mxu0 0.0
  %1350 = vmatprep.subr.mxu0 0.0
  %1351 = vmatpush1.msra.mxu0 0.0
  %1352 = vmatprep.subr.mxu0 0.0
  %1353 = vmatpush1.msra.mxu0 0.0
  %1354 = vmatprep.subr.mxu0 0.0
  %1355 = vmatpush1.msra.mxu0 0.0
  %1356 = vmatprep.subr.mxu0 0.0
  %1357 = vmatpush1.msra.mxu0 0.0
  %1358 = vmatprep.subr.mxu0 0.0
  %1359 = vmatpush1.msra.mxu0 0.0
  %1360 = vmatprep.subr.mxu0 0.0
  %1361 = vmatpush1.msra.mxu0 0.0
  %1362 = vmatprep.mubr.f32.mxu0 0.0
  %1363 = vmatmul.mubr.f32.gmra.mrb[0].mxu0 %v1296
  %v1364 = vpop.f32.mrb[0].mxu0
  %v1365 = vadd.f32 0.0, %v1364
  %v1366 = vpop.f32.mrb[0].mxu0
  %1367 = vdwg.mxu0
  %1369 = vrot.lane.b32.xlu0 %v772, 32
  %v1370 = vpop.permute.xlu0 %1369
  %v1371 = vsel %vm62, %v1370, 0
  %1373 = vmatprep.subr.mxu0 0.0
  %1374 = vmatpush1.msra.mxu0 %v773
  %1375 = vmatprep.subr.mxu0 0.0
  %1376 = vmatpush1.msra.mxu0 %v774
  %1377 = vmatprep.subr.mxu0 0.0
  %1378 = vmatpush1.msra.mxu0 %v775
  %1379 = vmatprep.subr.mxu0 0.0
  %1380 = vmatpush1.msra.mxu0 %v776
  %1381 = vmatprep.subr.mxu0 0.0
  %1382 = vmatpush1.msra.mxu0 0.0
  %1383 = vmatprep.subr.mxu0 0.0
  %1384 = vmatpush1.msra.mxu0 0.0
  %1385 = vmatprep.subr.mxu0 0.0
  %1386 = vmatpush1.msra.mxu0 0.0
  %1387 = vmatprep.subr.mxu0 0.0
  %1388 = vmatpush1.msra.mxu0 0.0
  %1389 = vmatprep.subr.mxu0 0.0
  %1390 = vmatpush1.msra.mxu0 0.0
  %1391 = vmatprep.subr.mxu0 0.0
  %1392 = vmatpush1.msra.mxu0 0.0
  %1393 = vmatprep.subr.mxu0 0.0
  %1394 = vmatpush1.msra.mxu0 0.0
  %1395 = vmatprep.subr.mxu0 0.0
  %1396 = vmatpush1.msra.mxu0 0.0
  %1397 = vmatprep.subr.mxu0 0.0
  %1398 = vmatpush1.msra.mxu0 0.0
  %1399 = vmatprep.subr.mxu0 0.0
  %1400 = vmatpush1.msra.mxu0 0.0
  %1401 = vmatprep.subr.mxu0 0.0
  %1402 = vmatpush1.msra.mxu0 0.0
  %1403 = vmatprep.subr.mxu0 0.0
  %1404 = vmatpush1.msra.mxu0 0.0
  %1405 = vmatprep.subr.mxu0 0.0
  %1406 = vmatpush1.msra.mxu0 0.0
  %1407 = vmatprep.subr.mxu0 0.0
  %1408 = vmatpush1.msra.mxu0 0.0
  %1409 = vmatprep.subr.mxu0 0.0
  %1410 = vmatpush1.msra.mxu0 0.0
  %1411 = vmatprep.subr.mxu0 0.0
  %1412 = vmatpush1.msra.mxu0 0.0
  %1413 = vmatprep.subr.mxu0 0.0
  %1414 = vmatpush1.msra.mxu0 0.0
  %1415 = vmatprep.subr.mxu0 0.0
  %1416 = vmatpush1.msra.mxu0 0.0
  %1417 = vmatprep.subr.mxu0 0.0
  %1418 = vmatpush1.msra.mxu0 0.0
  %1419 = vmatprep.subr.mxu0 0.0
  %1420 = vmatpush1.msra.mxu0 0.0
  %1421 = vmatprep.subr.mxu0 0.0
  %1422 = vmatpush1.msra.mxu0 0.0
  %1423 = vmatprep.subr.mxu0 0.0
  %1424 = vmatpush1.msra.mxu0 0.0
  %1425 = vmatprep.subr.mxu0 0.0
  %1426 = vmatpush1.msra.mxu0 0.0
  %1427 = vmatprep.subr.mxu0 0.0
  %1428 = vmatpush1.msra.mxu0 0.0
  %1429 = vmatprep.subr.mxu0 0.0
  %1430 = vmatpush1.msra.mxu0 0.0
  %1431 = vmatprep.subr.mxu0 0.0
  %1432 = vmatpush1.msra.mxu0 0.0
  %1433 = vmatprep.subr.mxu0 0.0
  %1434 = vmatpush1.msra.mxu0 0.0
  %1435 = vmatprep.subr.mxu0 0.0
  %1436 = vmatpush1.msra.mxu0 0.0
  %1437 = vmatprep.mubr.f32.mxu0 0.0
  %1438 = vmatmul.mubr.f32.gmra.mrb[0].mxu0 %v1371
  %v1439 = vpop.f32.mrb[0].mxu0
  %v1440 = vadd.f32 %v1365, %v1439
  %v1441 = vpop.f32.mrb[0].mxu0
  %1442 = vdwg.mxu0
  %v1443 = vadd.f32 %v1440, %v926
  %v1444 = vxor.u32 %v1443, 2147483648
  %v1445 = vmul.f32 %v1444, 1.442695
  %v1446 = vpow.pop %v1445
  %v1447 = vadd.f32 %v1446, 1.0
  %v1448 = vrcp.pop %v1447
  %v1449 = vmul.f32 1.0, %v1448
  %v1450 = vtanh.pop %v1443
  %v1451 = vmul.f32 %v1449, %v1286
  %1453 = vrot.lane.b32.xlu0 %v1450, 64
  %v1454 = vpop.permute.xlu0 %1453
  %v1456 = vmul.f32 %v1449, %v1454
  %1458 = vrot.lane.b32.xlu0 %v1456, 32
  %v1459 = vpop.permute.xlu0 %1458
  %v1461 = vadd.f32 %v1451, %v1459
  %v1462 = vtanh.pop %v1461
  %1464 = vrot.lane.b32.xlu0 %v1462, 64
  %v1465 = vpop.permute.xlu0 %1464
  %v1467 = vmul.f32 %v1449, %v1465
  %v1468 = vld [vmem:[%s1] sm:$0xff]
  %v1469 = vld [vmem:[%s3] sm:$0xff]
  %v1470 = vld [vmem:[%s3 + $0x8] sm:$0xff]
  %v1471 = vld [vmem:[%s3 + $0x10] sm:$0xff]
  %v1472 = vld [vmem:[%s3 + $0x18] sm:$0xff]
  %v1473 = vld [vmem:[%s3 + $0x20] sm:$0xff]
  %v1474 = vld [vmem:[%s3 + $0x28] sm:$0xff]
  %v1475 = vld [vmem:[%s3 + $0x30] sm:$0xff]
  %v1476 = vld [vmem:[%s3 + $0x38] sm:$0xff]
  %v1477 = vld [vmem:[%s3 + $0x40] sm:$0xff]
  %v1478 = vld [vmem:[%s3 + $0x48] sm:$0xff]
  %v1479 = vld [vmem:[%s3 + $0x50] sm:$0xff]
  %v1480 = vld [vmem:[%s3 + $0x58] sm:$0xff]
  %v1481 = vld [vmem:[%s3 + $0x60] sm:$0xff]
  %v1482 = vld [vmem:[%s3 + $0x68] sm:$0xff]
  %v1483 = vld [vmem:[%s3 + $0x70] sm:$0xff]
  %v1484 = vld [vmem:[%s3 + $0x78] sm:$0xff]
  %v1485 = vld [vmem:[%s3 + $0x80] sm:$0xff]
  %v1486 = vld [vmem:[%s3 + $0x88] sm:$0xff]
  %v1487 = vld [vmem:[%s3 + $0x90] sm:$0xff]
  %v1488 = vld [vmem:[%s3 + $0x98] sm:$0xff]
  %v1489 = vld [vmem:[%s3 + $0xa0] sm:$0xff]
  %v1490 = vld [vmem:[%s3 + $0xa8] sm:$0xff]
  %v1491 = vld [vmem:[%s3 + $0xb0] sm:$0xff]
  %v1492 = vld [vmem:[%s3 + $0xb8] sm:$0xff]
  %v1493 = vld [vmem:[%s3 + $0xc0] sm:$0xff]
  %v1494 = vld [vmem:[%s3 + $0xc8] sm:$0xff]
  %v1495 = vld [vmem:[%s3 + $0xd0] sm:$0xff]
  %v1496 = vld [vmem:[%s3 + $0xd8] sm:$0xff]
  %v1497 = vld [vmem:[%s3 + $0xe0] sm:$0xff]
  %v1498 = vld [vmem:[%s3 + $0xe8] sm:$0xff]
  %v1499 = vld [vmem:[%s3 + $0xf0] sm:$0xff]
  %v1500 = vld [vmem:[%s3 + $0xf8] sm:$0xff]
  %v1501 = vld [vmem:[%s3 + $0x100] sm:$0xff]
  %v1502 = vld [vmem:[%s3 + $0x108] sm:$0xff]
  %v1503 = vld [vmem:[%s3 + $0x110] sm:$0xff]
  %v1504 = vld [vmem:[%s3 + $0x118] sm:$0xff]
  %v1505 = vld [vmem:[%s3 + $0x120] sm:$0xff]
  %v1506 = vld [vmem:[%s3 + $0x128] sm:$0xff]
  %v1507 = vld [vmem:[%s3 + $0x130] sm:$0xff]
  %v1508 = vld [vmem:[%s3 + $0x138] sm:$0xff]
  %v1509 = vld [vmem:[%s3 + $0x140] sm:$0xff]
  %v1510 = vld [vmem:[%s3 + $0x148] sm:$0xff]
  %v1511 = vld [vmem:[%s3 + $0x150] sm:$0xff]
  %v1512 = vld [vmem:[%s3 + $0x158] sm:$0xff]
  %v1513 = vld [vmem:[%s3 + $0x160] sm:$0xff]
  %v1514 = vld [vmem:[%s3 + $0x168] sm:$0xff]
  %v1515 = vld [vmem:[%s3 + $0x170] sm:$0xff]
  %v1516 = vld [vmem:[%s3 + $0x178] sm:$0xff]
  %v1517 = vld [vmem:[%s3 + $0x180] sm:$0xff]
  %v1518 = vld [vmem:[%s3 + $0x188] sm:$0xff]
  %v1519 = vld [vmem:[%s3 + $0x190] sm:$0xff]
  %v1520 = vld [vmem:[%s3 + $0x198] sm:$0xff]
  %v1521 = vld [vmem:[%s3 + $0x1a0] sm:$0xff]
  %v1522 = vld [vmem:[%s3 + $0x1a8] sm:$0xff]
  %v1523 = vld [vmem:[%s3 + $0x1b0] sm:$0xff]
  %v1524 = vld [vmem:[%s3 + $0x1b8] sm:$0xff]
  %v1525 = vld [vmem:[%s3 + $0x1c0] sm:$0xff]
  %v1526 = vld [vmem:[%s3 + $0x1c8] sm:$0xff]
  %v1527 = vld [vmem:[%s3 + $0x1d0] sm:$0xff]
  %v1528 = vld [vmem:[%s3 + $0x1d8] sm:$0xff]
  %v1529 = vld [vmem:[%s3 + $0x1e0] sm:$0xff]
  %v1530 = vld [vmem:[%s3 + $0x1e8] sm:$0xff]
  %v1531 = vld [vmem:[%s3 + $0x1f0] sm:$0xff]
  %v1532 = vld [vmem:[%s3 + $0x1f8] sm:$0xff]
  %v1533 = vld [vmem:[%s2] sm:$0x1]
  %v1535 = vlaneseq
  %v1536 = vshrl.u32 %v1535, 7
  %v1537 = vsub.s32 0, %v1536
  %v1538 = vrot.slane %v1533, %v1537
  %v1541 = vcombine.high %v1468, %v1468
  %v1543 = vunpack.c.l.s4 1983009808
  %v1544 = vunpack.c.0.s8 %v1543
  %v1545 = vlaneseq
  %v1546 = vshrl.u32 %v1545, 7
  %v1547 = vsub.s32 %v1544, %v1546
  %v1548 = vrot.slane %v1468, %v1547
  %v1550 = vunpack.c.l.s4 1983009808
  %v1551 = vunpack.c.0.s8 %v1550
  %v1552 = vlaneseq
  %v1553 = vshrl.u32 %v1552, 7
  %v1554 = vsub.s32 %v1551, %v1553
  %v1555 = vrot.slane %v1541, %v1554
  %v1556 = vcombine.high %v1548, %v1548
  %v1557 = vcombine.high %v1555, %v1555
  %1562 = vmatprep.subr.mxu0 0.0
  %1563 = vmatpush1.msra.mxu0 %v1469
  %1564 = vmatprep.subr.mxu0 0.0
  %1565 = vmatpush1.msra.mxu0 %v1470
  %1566 = vmatprep.subr.mxu0 0.0
  %1567 = vmatpush1.msra.mxu0 %v1471
  %1568 = vmatprep.subr.mxu0 0.0
  %1569 = vmatpush1.msra.mxu0 %v1472
  %1570 = vmatprep.subr.mxu0 0.0
  %1571 = vmatpush1.msra.mxu0 %v1473
  %1572 = vmatprep.subr.mxu0 0.0
  %1573 = vmatpush1.msra.mxu0 %v1474
  %1574 = vmatprep.subr.mxu0 0.0
  %1575 = vmatpush1.msra.mxu0 %v1475
  %1576 = vmatprep.subr.mxu0 0.0
  %1577 = vmatpush1.msra.mxu0 %v1476
  %1578 = vmatprep.subr.mxu0 0.0
  %1579 = vmatpush1.msra.mxu0 %v1477
  %1580 = vmatprep.subr.mxu0 0.0
  %1581 = vmatpush1.msra.mxu0 %v1478
  %1582 = vmatprep.subr.mxu0 0.0
  %1583 = vmatpush1.msra.mxu0 %v1479
  %1584 = vmatprep.subr.mxu0 0.0
  %1585 = vmatpush1.msra.mxu0 %v1480
  %1586 = vmatprep.subr.mxu0 0.0
  %1587 = vmatpush1.msra.mxu0 %v1481
  %1588 = vmatprep.subr.mxu0 0.0
  %1589 = vmatpush1.msra.mxu0 %v1482
  %1590 = vmatprep.subr.mxu0 0.0
  %1591 = vmatpush1.msra.mxu0 %v1483
  %1592 = vmatprep.subr.mxu0 0.0
  %1593 = vmatpush1.msra.mxu0 %v1484
  %1594 = vmatprep.subr.mxu0 0.0
  %1595 = vmatpush1.msra.mxu0 %v1485
  %1596 = vmatprep.subr.mxu0 0.0
  %1597 = vmatpush1.msra.mxu0 %v1486
  %1598 = vmatprep.subr.mxu0 0.0
  %1599 = vmatpush1.msra.mxu0 %v1487
  %1600 = vmatprep.subr.mxu0 0.0
  %1601 = vmatpush1.msra.mxu0 %v1488
  %1602 = vmatprep.subr.mxu0 0.0
  %1603 = vmatpush1.msra.mxu0 %v1489
  %1604 = vmatprep.subr.mxu0 0.0
  %1605 = vmatpush1.msra.mxu0 %v1490
  %1606 = vmatprep.subr.mxu0 0.0
  %1607 = vmatpush1.msra.mxu0 %v1491
  %1608 = vmatprep.subr.mxu0 0.0
  %1609 = vmatpush1.msra.mxu0 %v1492
  %1610 = vmatprep.subr.mxu0 0.0
  %1611 = vmatpush1.msra.mxu0 %v1493
  %1612 = vmatprep.subr.mxu0 0.0
  %1613 = vmatpush1.msra.mxu0 %v1494
  %1614 = vmatprep.subr.mxu0 0.0
  %1615 = vmatpush1.msra.mxu0 %v1495
  %1616 = vmatprep.subr.mxu0 0.0
  %1617 = vmatpush1.msra.mxu0 %v1496
  %1618 = vmatprep.subr.mxu0 0.0
  %1619 = vmatpush1.msra.mxu0 %v1497
  %1620 = vmatprep.subr.mxu0 0.0
  %1621 = vmatpush1.msra.mxu0 %v1498
  %1622 = vmatprep.subr.mxu0 0.0
  %1623 = vmatpush1.msra.mxu0 %v1499
  %1624 = vmatprep.subr.mxu0 0.0
  %1625 = vmatpush1.msra.mxu0 %v1500
  %1626 = vmatprep.mubr.f32.mxu0 %v1556
  %1627 = vmatmul.mubr.f32.gmra.mrb[0].mxu0 %v1548
  %v1628 = vpop.f32.mrb[0].mxu0
  %v1629 = vadd.f32 %v1538, %v1628
  %v1630 = vpop.f32.mrb[0].mxu0
  %1631 = vdwg.mxu0
  %1632 = vmatprep.subr.mxu0 0.0
  %1633 = vmatpush1.msra.mxu0 %v1501
  %1634 = vmatprep.subr.mxu0 0.0
  %1635 = vmatpush1.msra.mxu0 %v1502
  %1636 = vmatprep.subr.mxu0 0.0
  %1637 = vmatpush1.msra.mxu0 %v1503
  %1638 = vmatprep.subr.mxu0 0.0
  %1639 = vmatpush1.msra.mxu0 %v1504
  %1640 = vmatprep.subr.mxu0 0.0
  %1641 = vmatpush1.msra.mxu0 %v1505
  %1642 = vmatprep.subr.mxu0 0.0
  %1643 = vmatpush1.msra.mxu0 %v1506
  %1644 = vmatprep.subr.mxu0 0.0
  %1645 = vmatpush1.msra.mxu0 %v1507
  %1646 = vmatprep.subr.mxu0 0.0
  %1647 = vmatpush1.msra.mxu0 %v1508
  %1648 = vmatprep.subr.mxu0 0.0
  %1649 = vmatpush1.msra.mxu0 %v1509
  %1650 = vmatprep.subr.mxu0 0.0
  %1651 = vmatpush1.msra.mxu0 %v1510
  %1652 = vmatprep.subr.mxu0 0.0
  %1653 = vmatpush1.msra.mxu0 %v1511
  %1654 = vmatprep.subr.mxu0 0.0
  %1655 = vmatpush1.msra.mxu0 %v1512
  %1656 = vmatprep.subr.mxu0 0.0
  %1657 = vmatpush1.msra.mxu0 %v1513
  %1658 = vmatprep.subr.mxu0 0.0
  %1659 = vmatpush1.msra.mxu0 %v1514
  %1660 = vmatprep.subr.mxu0 0.0
  %1661 = vmatpush1.msra.mxu0 %v1515
  %1662 = vmatprep.subr.mxu0 0.0
  %1663 = vmatpush1.msra.mxu0 %v1516
  %1664 = vmatprep.subr.mxu0 0.0
  %1665 = vmatpush1.msra.mxu0 %v1517
  %1666 = vmatprep.subr.mxu0 0.0
  %1667 = vmatpush1.msra.mxu0 %v1518
  %1668 = vmatprep.subr.mxu0 0.0
  %1669 = vmatpush1.msra.mxu0 %v1519
  %1670 = vmatprep.subr.mxu0 0.0
  %1671 = vmatpush1.msra.mxu0 %v1520
  %1672 = vmatprep.subr.mxu0 0.0
  %1673 = vmatpush1.msra.mxu0 %v1521
  %1674 = vmatprep.subr.mxu0 0.0
  %1675 = vmatpush1.msra.mxu0 %v1522
  %1676 = vmatprep.subr.mxu0 0.0
  %1677 = vmatpush1.msra.mxu0 %v1523
  %1678 = vmatprep.subr.mxu0 0.0
  %1679 = vmatpush1.msra.mxu0 %v1524
  %1680 = vmatprep.subr.mxu0 0.0
  %1681 = vmatpush1.msra.mxu0 %v1525
  %1682 = vmatprep.subr.mxu0 0.0
  %1683 = vmatpush1.msra.mxu0 %v1526
  %1684 = vmatprep.subr.mxu0 0.0
  %1685 = vmatpush1.msra.mxu0 %v1527
  %1686 = vmatprep.subr.mxu0 0.0
  %1687 = vmatpush1.msra.mxu0 %v1528
  %1688 = vmatprep.subr.mxu0 0.0
  %1689 = vmatpush1.msra.mxu0 %v1529
  %1690 = vmatprep.subr.mxu0 0.0
  %1691 = vmatpush1.msra.mxu0 %v1530
  %1692 = vmatprep.subr.mxu0 0.0
  %1693 = vmatpush1.msra.mxu0 %v1531
  %1694 = vmatprep.subr.mxu0 0.0
  %1695 = vmatpush1.msra.mxu0 %v1532
  %1696 = vmatprep.mubr.f32.mxu0 %v1557
  %1697 = vmatmul.mubr.f32.gmra.mrb[0].mxu0 %v1555
  %v1698 = vpop.f32.mrb[0].mxu0
  %v1699 = vadd.f32 %v1629, %v1698
  %v1700 = vpop.f32.mrb[0].mxu0
  %1701 = vdwg.mxu0
  %v1702 = vmax.f32 %v1699, 0.0
  %v1703 = vld [vmem:[%s5] sm:$0xff]
  %v1704 = vld [vmem:[%s5 + $0x8] sm:$0xff]
  %v1705 = vld [vmem:[%s5 + $0x10] sm:$0xff]
  %v1706 = vld [vmem:[%s5 + $0x18] sm:$0xff]
  %v1707 = vld [vmem:[%s4] sm:$0x1]
  %v1709 = vlaneseq
  %v1710 = vshrl.u32 %v1709, 7
  %v1711 = vsub.s32 0, %v1710
  %v1712 = vrot.slane %v1707, %v1711
  %1715 = vrot.lane.b32.xlu0 %v1467, 32
  %v1716 = vpop.permute.xlu0 %1715
  %v1717 = vsel %vm62, %v1716, 0
  %1719 = vmatprep.subr.mxu0 0.0
  %1720 = vmatpush1.msra.mxu0 %v1703
  %1721 = vmatprep.subr.mxu0 0.0
  %1722 = vmatpush1.msra.mxu0 %v1704
  %1723 = vmatprep.subr.mxu0 0.0
  %1724 = vmatpush1.msra.mxu0 %v1705
  %1725 = vmatprep.subr.mxu0 0.0
  %1726 = vmatpush1.msra.mxu0 %v1706
  %1727 = vmatprep.subr.mxu0 0.0
  %1728 = vmatpush1.msra.mxu0 0.0
  %1729 = vmatprep.subr.mxu0 0.0
  %1730 = vmatpush1.msra.mxu0 0.0
  %1731 = vmatprep.subr.mxu0 0.0
  %1732 = vmatpush1.msra.mxu0 0.0
  %1733 = vmatprep.subr.mxu0 0.0
  %1734 = vmatpush1.msra.mxu0 0.0
  %1735 = vmatprep.subr.mxu0 0.0
  %1736 = vmatpush1.msra.mxu0 0.0
  %1737 = vmatprep.subr.mxu0 0.0
  %1738 = vmatpush1.msra.mxu0 0.0
  %1739 = vmatprep.subr.mxu0 0.0
  %1740 = vmatpush1.msra.mxu0 0.0
  %1741 = vmatprep.subr.mxu0 0.0
  %1742 = vmatpush1.msra.mxu0 0.0
  %1743 = vmatprep.subr.mxu0 0.0
  %1744 = vmatpush1.msra.mxu0 0.0
  %1745 = vmatprep.subr.mxu0 0.0
  %1746 = vmatpush1.msra.mxu0 0.0
  %1747 = vmatprep.subr.mxu0 0.0
  %1748 = vmatpush1.msra.mxu0 0.0
  %1749 = vmatprep.subr.mxu0 0.0
  %1750 = vmatpush1.msra.mxu0 0.0
  %1751 = vmatprep.subr.mxu0 0.0
  %1752 = vmatpush1.msra.mxu0 0.0
  %1753 = vmatprep.subr.mxu0 0.0
  %1754 = vmatpush1.msra.mxu0 0.0
  %1755 = vmatprep.subr.mxu0 0.0
  %1756 = vmatpush1.msra.mxu0 0.0
  %1757 = vmatprep.subr.mxu0 0.0
  %1758 = vmatpush1.msra.mxu0 0.0
  %1759 = vmatprep.subr.mxu0 0.0
  %1760 = vmatpush1.msra.mxu0 0.0
  %1761 = vmatprep.subr.mxu0 0.0
  %1762 = vmatpush1.msra.mxu0 0.0
  %1763 = vmatprep.subr.mxu0 0.0
  %1764 = vmatpush1.msra.mxu0 0.0
  %1765 = vmatprep.subr.mxu0 0.0
  %1766 = vmatpush1.msra.mxu0 0.0
  %1767 = vmatprep.subr.mxu0 0.0
  %1768 = vmatpush1.msra.mxu0 0.0
  %1769 = vmatprep.subr.mxu0 0.0
  %1770 = vmatpush1.msra.mxu0 0.0
  %1771 = vmatprep.subr.mxu0 0.0
  %1772 = vmatpush1.msra.mxu0 0.0
  %1773 = vmatprep.subr.mxu0 0.0
  %1774 = vmatpush1.msra.mxu0 0.0
  %1775 = vmatprep.subr.mxu0 0.0
  %1776 = vmatpush1.msra.mxu0 0.0
  %1777 = vmatprep.subr.mxu0 0.0
  %1778 = vmatpush1.msra.mxu0 0.0
  %1779 = vmatprep.subr.mxu0 0.0
  %1780 = vmatpush1.msra.mxu0 0.0
  %1781 = vmatprep.subr.mxu0 0.0
  %1782 = vmatpush1.msra.mxu0 0.0
  %1783 = vmatprep.mubr.f32.mxu0 0.0
  %1784 = vmatmul.mubr.f32.gmra.mrb[0].mxu0 %v1717
  %v1785 = vpop.f32.mrb[0].mxu0
  %v1786 = vadd.f32 %v1712, %v1785
  %v1787 = vpop.f32.mrb[0].mxu0
  %1788 = vdwg.mxu0
  %v1789 = vmax.f32 %v1786, 0.0
  %v1790 = vld [vmem:[%s7] sm:$0xff]
  %v1791 = vld [vmem:[%s7 + $0x8] sm:$0xff]
  %v1792 = vld [vmem:[%s7 + $0x10] sm:$0xff]
  %v1793 = vld [vmem:[%s7 + $0x18] sm:$0xff]
  %v1794 = vld [vmem:[%s7 + $0x20] sm:$0xff]
  %v1795 = vld [vmem:[%s7 + $0x28] sm:$0xff]
  %v1796 = vld [vmem:[%s7 + $0x30] sm:$0xff]
  %v1797 = vld [vmem:[%s7 + $0x38] sm:$0xff]
  %v1798 = vld [vmem:[%s7 + $0x40] sm:$0xff]
  %v1799 = vld [vmem:[%s7 + $0x48] sm:$0xff]
  %v1800 = vld [vmem:[%s7 + $0x50] sm:$0xff]
  %v1801 = vld [vmem:[%s7 + $0x58] sm:$0xff]
  %v1803 = vsel %vm141, %v1789, 0
  %1805 = vmatprep.subr.mxu0 %v1799
  %1806 = vmatpush1.msra.mxu0 %v1798
  %1807 = vmatprep.subr.mxu0 %v1801
  %1808 = vmatpush1.msra.mxu0 %v1800
  %1809 = vmatprep.subr.mxu0 0.0
  %1810 = vmatpush1.msra.mxu0 0.0
  %1811 = vmatprep.subr.mxu0 0.0
  %1812 = vmatpush1.msra.mxu0 0.0
  %1813 = vmatprep.subr.mxu0 0.0
  %1814 = vmatpush1.msra.mxu0 0.0
  %1815 = vmatprep.subr.mxu0 0.0
  %1816 = vmatpush1.msra.mxu0 0.0
  %1817 = vmatprep.subr.mxu0 0.0
  %1818 = vmatpush1.msra.mxu0 0.0
  %1819 = vmatprep.subr.mxu0 0.0
  %1820 = vmatpush1.msra.mxu0 0.0
  %1821 = vmatprep.subr.mxu0 0.0
  %1822 = vmatpush1.msra.mxu0 0.0
  %1823 = vmatprep.subr.mxu0 0.0
  %1824 = vmatpush1.msra.mxu0 0.0
  %1825 = vmatprep.subr.mxu0 0.0
  %1826 = vmatpush1.msra.mxu0 0.0
  %1827 = vmatprep.subr.mxu0 0.0
  %1828 = vmatpush1.msra.mxu0 0.0
  %1829 = vmatprep.subr.mxu0 0.0
  %1830 = vmatpush1.msra.mxu0 0.0
  %1831 = vmatprep.subr.mxu0 0.0
  %1832 = vmatpush1.msra.mxu0 0.0
  %1833 = vmatprep.subr.mxu0 0.0
  %1834 = vmatpush1.msra.mxu0 0.0
  %1835 = vmatprep.subr.mxu0 0.0
  %1836 = vmatpush1.msra.mxu0 0.0
  %1837 = vmatprep.subr.mxu0 0.0
  %1838 = vmatpush1.msra.mxu0 0.0
  %1839 = vmatprep.subr.mxu0 0.0
  %1840 = vmatpush1.msra.mxu0 0.0
  %1841 = vmatprep.subr.mxu0 0.0
  %1842 = vmatpush1.msra.mxu0 0.0
  %1843 = vmatprep.subr.mxu0 0.0
  %1844 = vmatpush1.msra.mxu0 0.0
  %1845 = vmatprep.subr.mxu0 0.0
  %1846 = vmatpush1.msra.mxu0 0.0
  %1847 = vmatprep.subr.mxu0 0.0
  %1848 = vmatpush1.msra.mxu0 0.0
  %1849 = vmatprep.subr.mxu0 0.0
  %1850 = vmatpush1.msra.mxu0 0.0
  %1851 = vmatprep.subr.mxu0 0.0
  %1852 = vmatpush1.msra.mxu0 0.0
  %1853 = vmatprep.subr.mxu0 0.0
  %1854 = vmatpush1.msra.mxu0 0.0
  %1855 = vmatprep.subr.mxu0 0.0
  %1856 = vmatpush1.msra.mxu0 0.0
  %1857 = vmatprep.subr.mxu0 0.0
  %1858 = vmatpush1.msra.mxu0 0.0
  %1859 = vmatprep.subr.mxu0 0.0
  %1860 = vmatpush1.msra.mxu0 0.0
  %1861 = vmatprep.subr.mxu0 0.0
  %1862 = vmatpush1.msra.mxu0 0.0
  %1863 = vmatprep.subr.mxu0 0.0
  %1864 = vmatpush1.msra.mxu0 0.0
  %1865 = vmatprep.subr.mxu0 0.0
  %1866 = vmatpush1.msra.mxu0 0.0
  %1867 = vmatprep.subr.mxu0 0.0
  %1868 = vmatpush1.msra.mxu0 0.0
  %1869 = vmatprep.mubr.f32.mxu0 0.0
  %1870 = vmatmul.mubr.f32.gmra.mrb[0].mxu0 %v1803
  %v1871 = vpop.f32.mrb[0].mxu0
  %v1872 = vadd.f32 0.0, %v1871
  %v1873 = vpop.f32.mrb[0].mxu0
  %v1874 = vadd.f32 0.0, %v1873
  %1875 = vdwg.mxu0
  %v1877 = vsel %vm62, %v1702, 0
  %1879 = vmatprep.subr.mxu0 %v1791
  %1880 = vmatpush1.msra.mxu0 %v1790
  %1881 = vmatprep.subr.mxu0 %v1793
  %1882 = vmatpush1.msra.mxu0 %v1792
  %1883 = vmatprep.subr.mxu0 %v1795
  %1884 = vmatpush1.msra.mxu0 %v1794
  %1885 = vmatprep.subr.mxu0 %v1797
  %1886 = vmatpush1.msra.mxu0 %v1796
  %1887 = vmatprep.subr.mxu0 0.0
  %1888 = vmatpush1.msra.mxu0 0.0
  %1889 = vmatprep.subr.mxu0 0.0
  %1890 = vmatpush1.msra.mxu0 0.0
  %1891 = vmatprep.subr.mxu0 0.0
  %1892 = vmatpush1.msra.mxu0 0.0
  %1893 = vmatprep.subr.mxu0 0.0
  %1894 = vmatpush1.msra.mxu0 0.0
  %1895 = vmatprep.subr.mxu0 0.0
  %1896 = vmatpush1.msra.mxu0 0.0
  %1897 = vmatprep.subr.mxu0 0.0
  %1898 = vmatpush1.msra.mxu0 0.0
  %1899 = vmatprep.subr.mxu0 0.0
  %1900 = vmatpush1.msra.mxu0 0.0
  %1901 = vmatprep.subr.mxu0 0.0
  %1902 = vmatpush1.msra.mxu0 0.0
  %1903 = vmatprep.subr.mxu0 0.0
  %1904 = vmatpush1.msra.mxu0 0.0
  %1905 = vmatprep.subr.mxu0 0.0
  %1906 = vmatpush1.msra.mxu0 0.0
  %1907 = vmatprep.subr.mxu0 0.0
  %1908 = vmatpush1.msra.mxu0 0.0
  %1909 = vmatprep.subr.mxu0 0.0
  %1910 = vmatpush1.msra.mxu0 0.0
  %1911 = vmatprep.subr.mxu0 0.0
  %1912 = vmatpush1.msra.mxu0 0.0
  %1913 = vmatprep.subr.mxu0 0.0
  %1914 = vmatpush1.msra.mxu0 0.0
  %1915 = vmatprep.subr.mxu0 0.0
  %1916 = vmatpush1.msra.mxu0 0.0
  %1917 = vmatprep.subr.mxu0 0.0
  %1918 = vmatpush1.msra.mxu0 0.0
  %1919 = vmatprep.subr.mxu0 0.0
  %1920 = vmatpush1.msra.mxu0 0.0
  %1921 = vmatprep.subr.mxu0 0.0
  %1922 = vmatpush1.msra.mxu0 0.0
  %1923 = vmatprep.subr.mxu0 0.0
  %1924 = vmatpush1.msra.mxu0 0.0
  %1925 = vmatprep.subr.mxu0 0.0
  %1926 = vmatpush1.msra.mxu0 0.0
  %1927 = vmatprep.subr.mxu0 0.0
  %1928 = vmatpush1.msra.mxu0 0.0
  %1929 = vmatprep.subr.mxu0 0.0
  %1930 = vmatpush1.msra.mxu0 0.0
  %1931 = vmatprep.subr.mxu0 0.0
  %1932 = vmatpush1.msra.mxu0 0.0
  %1933 = vmatprep.subr.mxu0 0.0
  %1934 = vmatpush1.msra.mxu0 0.0
  %1935 = vmatprep.subr.mxu0 0.0
  %1936 = vmatpush1.msra.mxu0 0.0
  %1937 = vmatprep.subr.mxu0 0.0
  %1938 = vmatpush1.msra.mxu0 0.0
  %1939 = vmatprep.subr.mxu0 0.0
  %1940 = vmatpush1.msra.mxu0 0.0
  %1941 = vmatprep.subr.mxu0 0.0
  %1942 = vmatpush1.msra.mxu0 0.0
  %1943 = vmatprep.mubr.f32.mxu0 0.0
  %1944 = vmatmul.mubr.f32.gmra.mrb[0].mxu0 %v1877
  %v1945 = vpop.f32.mrb[0].mxu0
  %v1946 = vadd.f32 %v1872, %v1945
  %v1947 = vpop.f32.mrb[0].mxu0
  %v1948 = vadd.f32 %v1874, %v1947
  %1949 = vdwg.mxu0
  %v1950 = vld [vmem:[%s6] sm:$0x3]
  %v1952 = vlaneseq
  %v1953 = vshrl.u32 %v1952, 7
  %v1954 = vsub.s32 0, %v1953
  %v1955 = vrot.slane %v1950, %v1954
  %v1956 = vlaneseq
  %v1957 = vshrl.u32 %v1956, 7
  %v1958 = vsub.s32 1, %v1957
  %v1959 = vrot.slane %v1950, %v1958
  %v1962 = vadd.f32 %v1946, %v1955
  %v1963 = vadd.f32 %v1948, %v1959
  %v1964 = vmax.f32 %v1962, 0.0
  %v1965 = vmax.f32 %v1963, 0.0
  %v1968 = vcombine.low %v1964, %v1965
  %v1970 = vunpack.c.l.s4 1983009808
  %v1971 = vunpack.c.0.s8 %v1970
  %v1972 = vlaneseq
  %v1973 = vshrl.u32 %v1972, 7
  %v1974 = vsub.s32 %v1971, %v1973
  %v1975 = vrot.slane %v1968, %v1974
  %1977 = vst [vmem:[%s14] sm:$0xf] %v1975
  // Predicated region
  $region58: #{residual_graph_lstm_forward.4} parent=0 // pred_check
    _
  $region59: #{residual_graph_lstm_forward.4} parent=0 // pred_check_branch
    %1979 = sbr.rel (0) target = $region61
  $region60: #{residual_graph_lstm_forward.4} parent=0 // pred_region
    _
  $region61: #{residual_graph_lstm_forward.4} parent=0 // pred_fallthru
    _
  // Predicated region
  $region62: #{residual_graph_lstm_forward.4} parent=0 // pred_check
    _
  $region63: #{residual_graph_lstm_forward.4} parent=0 // pred_check_branch
    %1981 = sbr.rel (0) target = $region65
  $region64: #{residual_graph_lstm_forward.4} parent=0 // pred_region
    _
  $region65: #{residual_graph_lstm_forward.4} parent=0 // pred_fallthru
    _

// kernel: residual_graph_lstm_forward.5
$region0: #{residual_graph_lstm_forward.5}
  #allocation0 [shape = 'u32[]', space=smem, size = 0x4, offset = 0x4, fixed_abs, tag = 'smem constant byte address 0x4 - core index']
  #allocation1 [shape = 'u32[144,128]{1,0:T(1,128)}', space=vmem, size = 0x12000, scoped, tag = 'internal scratch']
  #allocation2 [shape = 'f32[1,1]{1,0:T(1,128)S(1)}', space=vmem, size = 0x200, scoped, tag = 'scoped memory for residual_graph_lstm_forward.5']
  %s0 = inlined_call_operand.vmem [shape: f32[2,16,16], index: 0, kind: input, shape index: {}]
  %s1 = inlined_call_operand.vmem [shape: f32[2,32,16], index: 1, kind: input, shape index: {}]
  %s2 = inlined_call_operand.vmem [shape: f32[1,4], index: 2, kind: input, shape index: {}]
  %s3 = inlined_call_operand.vmem [shape: f32[32,4], index: 3, kind: input, shape index: {}]
  %s4 = inlined_call_operand.vmem [shape: f32[1,4], index: 4, kind: input, shape index: {}]
  %s5 = inlined_call_operand.vmem [shape: f32[8,4], index: 5, kind: input, shape index: {}]
  %s6 = inlined_call_operand.vmem [shape: f32[1,16], index: 6, kind: input, shape index: {}]
  %s7 = inlined_call_operand.vmem [shape: f32[8,16], index: 7, kind: input, shape index: {}]
  %s8 = inlined_call_operand.vmem [shape: f32[1,16], index: 8, kind: input, shape index: {}]
  %s9 = inlined_call_operand.vmem [shape: f32[32,16], index: 9, kind: input, shape index: {}]
  %s10 = inlined_call_operand.vmem [shape: f32[1,4], index: 10, kind: input, shape index: {}]
  %s11 = inlined_call_operand.vmem [shape: f32[32,4], index: 11, kind: input, shape index: {}]
  %s12 = inlined_call_operand.vmem [shape: f32[1,4], index: 12, kind: input, shape index: {}]
  %s13 = inlined_call_operand.vmem [shape: f32[8,4], index: 13, kind: input, shape index: {}]
  %s14 = inlined_call_operand.vmem [shape: f32[1,16], index: 14, kind: input, shape index: {}]
  %s15 = inlined_call_operand.vmem [shape: f32[8,16], index: 15, kind: input, shape index: {}]
  %s16 = inlined_call_operand.vmem [shape: f32[1,8], index: 16, kind: input, shape index: {}]
  %s17 = inlined_call_operand.vmem [shape: f32[16,8], index: 17, kind: input, shape index: {}]
  %s18 = inlined_call_operand.<no memory space> [shape: f32[1,1], index: 18, kind: input, shape index: {}]
  %s19 = inlined_call_operand.vmem [shape: f32[8,1], index: 19, kind: input, shape index: {}]
  %s20 = inlined_call_operand.vmem [shape: f32[2,16,1], index: 20, kind: output, shape index: {}]
  %s21 = sld [smem:[#allocation0]]
  $region113: #{residual_graph_lstm_forward.5} parent=0
    _
  %s23 = ssub.s32 1, %s21
  %s24 = scalar_select 0, %s23, %s21
  %v25 = vstv %s18
  %26 = vst [vmem:[#allocation2] sm:$0x1] %v25
  loop: start=0, step=1, limit=4
  $region2: #{residual_graph_lstm_forward.5} parent=0 // loop_pre_header
    _
  $region3: #{residual_graph_lstm_forward.5} parent=0 // loop_header
    %s28 = sphi 0, %s32
    %p29 = scmp.ge.s32.totalorder %s28, 4
    %s38 = sphi 0, %s40
    %s41 = sphi 0, %s38
    %s42 = sphi 0, %s41
    %s58 = sphi 0, %s42
    %s64 = sphi 0, %s66
    %s67 = sphi 0, %s64
    %s68 = sphi 0, %s67
    %s84 = sphi 0, %s68
    %s88 = sphi 0, %s88
    %s90 = sphi 0, %s88
    %s91 = sphi 0, %s90
    %s105 = sphi 0, %s91
    %s109 = sphi 0, %s109
    %s111 = sphi 0, %s109
    %s112 = sphi 0, %s111
    %s126 = sphi 0, %s112
    %s130 = sphi 0, %s130
    %s132 = sphi 0, %s130
    %s133 = sphi 0, %s132
    %s147 = sphi 0, %s133
    %s151 = sphi 0, %s151
    %s153 = sphi 0, %s151
    %s154 = sphi 0, %s153
    %s168 = sphi 0, %s154
    %s172 = sphi 0, %s172
    %s174 = sphi 0, %s172
    %s175 = sphi 0, %s174
    %s189 = sphi 0, %s175
    %s193 = sphi 0, %s193
    %s195 = sphi 0, %s193
    %s196 = sphi 0, %s195
    %s210 = sphi 0, %s196
    %s214 = sphi 0, %s214
    %s216 = sphi 0, %s214
    %s217 = sphi 0, %s216
    %s231 = sphi 0, %s217
    %s235 = sphi 0, %s235
    %s237 = sphi 0, %s235
    %s238 = sphi 0, %s237
    %s252 = sphi 0, %s238
    %s256 = sphi 0, %s256
    %s258 = sphi 0, %s256
    %s259 = sphi 0, %s258
    %s273 = sphi 0, %s259
    %s277 = sphi 0, %s277
    %s279 = sphi 0, %s277
    %s280 = sphi 0, %s279
    %s294 = sphi 0, %s280
    %s298 = sphi 0, %s298
    %s300 = sphi 0, %s298
    %s301 = sphi 0, %s300
    %s315 = sphi 0, %s301
    %s319 = sphi 0, %s319
    %s321 = sphi 0, %s319
    %s322 = sphi 0, %s321
    %s336 = sphi 0, %s322
    %s340 = sphi 0, %s340
    %s342 = sphi 0, %s340
    %s343 = sphi 0, %s342
    %s357 = sphi 0, %s343
    %s361 = sphi 0, %s361
    %s363 = sphi 0, %s361
    %s364 = sphi 0, %s363
    %s378 = sphi 0, %s364
    %s382 = sphi 0, %s382
    %s384 = sphi 0, %s382
    %s385 = sphi 0, %s384
    %s399 = sphi 0, %s385
    %s403 = sphi 0, %s403
    %s405 = sphi 0, %s403
    %s406 = sphi 0, %s405
    %s420 = sphi 0, %s406
    %s424 = sphi 0, %s424
    %s426 = sphi 0, %s424
    %s427 = sphi 0, %s426
    %s441 = sphi 0, %s427
    %s445 = sphi 0, %s445
    %s447 = sphi 0, %s445
    %s448 = sphi 0, %s447
    %s462 = sphi 0, %s448
    %s468 = sphi 0, %s470
    %s471 = sphi 0, %s468
    %s472 = sphi 0, %s471
    %s488 = sphi 0, %s472
  $region4: #{residual_graph_lstm_forward.5} parent=0 // loop_header_branch
    %31 = sbr.rel (%p29) target = $region8
  $region5: #{residual_graph_lstm_forward.5} parent=0 // loop_body
    %s33 = ssub.s32 %s28, 1
    %s34 = ssub.s32 %s28, 2
    %s35 = sadd.s32 %s28, 1
    %s36 = ssub.s32 %s28, %s35
    %p37 = scmp.eq.s32.totalorder %s36, 0
    %s39 = sadd.s32 %s38, 1
    %s40 = scalar_select %p37, %s38, %s39
    %p43 = pneg %p37
    %p44 = scmp.eq.s32.totalorder %s28, 1
    %p45 = por %p43, %p44
    %p46 = scmp.ne.s32.totalorder %s38, %s41
    %p47 = scmp.eq.s32.totalorder %s28, 0
    %p48 = por %p46, %p47
    %p49 = scmp.ne.s32.totalorder %s38, %s41
    %p50 = scmp.eq.s32.totalorder %s33, 1
    %p51 = por %p49, %p50
    %p52 = scmp.ne.s32.totalorder %s41, %s42
    %p53 = scmp.eq.s32.totalorder %s33, 0
    %p54 = por %p52, %p53
    %p55 = scmp.ne.s32.totalorder %s41, %s42
    %p56 = scmp.eq.s32.totalorder %s34, 1
    %p57 = por %p55, %p56
    %p59 = scmp.ne.s32.totalorder %s42, %s58
    %p60 = scmp.eq.s32.totalorder %s34, 0
    %p61 = por %p59, %p60
    %s62 = ssub.s32 %s28, %s35
    %p63 = scmp.eq.s32.totalorder %s62, 0
    %s65 = sadd.s32 %s64, 1
    %s66 = scalar_select %p63, %s64, %s65
    %p69 = pneg %p63
    %p70 = scmp.eq.s32.totalorder %s28, 1
    %p71 = por %p69, %p70
    %p72 = scmp.ne.s32.totalorder %s64, %s67
    %p73 = scmp.eq.s32.totalorder %s28, 0
    %p74 = por %p72, %p73
    %p75 = scmp.ne.s32.totalorder %s64, %s67
    %p76 = scmp.eq.s32.totalorder %s33, 1
    %p77 = por %p75, %p76
    %p78 = scmp.ne.s32.totalorder %s67, %s68
    %p79 = scmp.eq.s32.totalorder %s33, 0
    %p80 = por %p78, %p79
    %p81 = scmp.ne.s32.totalorder %s67, %s68
    %p82 = scmp.eq.s32.totalorder %s34, 1
    %p83 = por %p81, %p82
    %p85 = scmp.ne.s32.totalorder %s68, %s84
    %p86 = scmp.eq.s32.totalorder %s34, 0
    %p87 = por %p85, %p86
    %s89 = sadd.s32 %s88, 1
    %p92 = scmp.eq.s32.totalorder %s28, 1
    %p93 = scmp.ne.s32.totalorder %s88, %s90
    %p94 = scmp.eq.s32.totalorder %s28, 0
    %p95 = por %p93, %p94
    %p96 = scmp.ne.s32.totalorder %s88, %s90
    %p97 = scmp.eq.s32.totalorder %s33, 1
    %p98 = por %p96, %p97
    %p99 = scmp.ne.s32.totalorder %s90, %s91
    %p100 = scmp.eq.s32.totalorder %s33, 0
    %p101 = por %p99, %p100
    %p102 = scmp.ne.s32.totalorder %s90, %s91
    %p103 = scmp.eq.s32.totalorder %s34, 1
    %p104 = por %p102, %p103
    %p106 = scmp.ne.s32.totalorder %s91, %s105
    %p107 = scmp.eq.s32.totalorder %s34, 0
    %p108 = por %p106, %p107
    %s110 = sadd.s32 %s109, 1
    %p113 = scmp.eq.s32.totalorder %s28, 1
    %p114 = scmp.ne.s32.totalorder %s109, %s111
    %p115 = scmp.eq.s32.totalorder %s28, 0
    %p116 = por %p114, %p115
    %p117 = scmp.ne.s32.totalorder %s109, %s111
    %p118 = scmp.eq.s32.totalorder %s33, 1
    %p119 = por %p117, %p118
    %p120 = scmp.ne.s32.totalorder %s111, %s112
    %p121 = scmp.eq.s32.totalorder %s33, 0
    %p122 = por %p120, %p121
    %p123 = scmp.ne.s32.totalorder %s111, %s112
    %p124 = scmp.eq.s32.totalorder %s34, 1
    %p125 = por %p123, %p124
    %p127 = scmp.ne.s32.totalorder %s112, %s126
    %p128 = scmp.eq.s32.totalorder %s34, 0
    %p129 = por %p127, %p128
    %s131 = sadd.s32 %s130, 1
    %p134 = scmp.eq.s32.totalorder %s28, 1
    %p135 = scmp.ne.s32.totalorder %s130, %s132
    %p136 = scmp.eq.s32.totalorder %s28, 0
    %p137 = por %p135, %p136
    %p138 = scmp.ne.s32.totalorder %s130, %s132
    %p139 = scmp.eq.s32.totalorder %s33, 1
    %p140 = por %p138, %p139
    %p141 = scmp.ne.s32.totalorder %s132, %s133
    %p142 = scmp.eq.s32.totalorder %s33, 0
    %p143 = por %p141, %p142
    %p144 = scmp.ne.s32.totalorder %s132, %s133
    %p145 = scmp.eq.s32.totalorder %s34, 1
    %p146 = por %p144, %p145
    %p148 = scmp.ne.s32.totalorder %s133, %s147
    %p149 = scmp.eq.s32.totalorder %s34, 0
    %p150 = por %p148, %p149
    %s152 = sadd.s32 %s151, 1
    %p155 = scmp.eq.s32.totalorder %s28, 1
    %p156 = scmp.ne.s32.totalorder %s151, %s153
    %p157 = scmp.eq.s32.totalorder %s28, 0
    %p158 = por %p156, %p157
    %p159 = scmp.ne.s32.totalorder %s151, %s153
    %p160 = scmp.eq.s32.totalorder %s33, 1
    %p161 = por %p159, %p160
    %p162 = scmp.ne.s32.totalorder %s153, %s154
    %p163 = scmp.eq.s32.totalorder %s33, 0
    %p164 = por %p162, %p163
    %p165 = scmp.ne.s32.totalorder %s153, %s154
    %p166 = scmp.eq.s32.totalorder %s34, 1
    %p167 = por %p165, %p166
    %p169 = scmp.ne.s32.totalorder %s154, %s168
    %p170 = scmp.eq.s32.totalorder %s34, 0
    %p171 = por %p169, %p170
    %s173 = sadd.s32 %s172, 1
    %p176 = scmp.eq.s32.totalorder %s28, 1
    %p177 = scmp.ne.s32.totalorder %s172, %s174
    %p178 = scmp.eq.s32.totalorder %s28, 0
    %p179 = por %p177, %p178
    %p180 = scmp.ne.s32.totalorder %s172, %s174
    %p181 = scmp.eq.s32.totalorder %s33, 1
    %p182 = por %p180, %p181
    %p183 = scmp.ne.s32.totalorder %s174, %s175
    %p184 = scmp.eq.s32.totalorder %s33, 0
    %p185 = por %p183, %p184
    %p186 = scmp.ne.s32.totalorder %s174, %s175
    %p187 = scmp.eq.s32.totalorder %s34, 1
    %p188 = por %p186, %p187
    %p190 = scmp.ne.s32.totalorder %s175, %s189
    %p191 = scmp.eq.s32.totalorder %s34, 0
    %p192 = por %p190, %p191
    %s194 = sadd.s32 %s193, 1
    %p197 = scmp.eq.s32.totalorder %s28, 1
    %p198 = scmp.ne.s32.totalorder %s193, %s195
    %p199 = scmp.eq.s32.totalorder %s28, 0
    %p200 = por %p198, %p199
    %p201 = scmp.ne.s32.totalorder %s193, %s195
    %p202 = scmp.eq.s32.totalorder %s33, 1
    %p203 = por %p201, %p202
    %p204 = scmp.ne.s32.totalorder %s195, %s196
    %p205 = scmp.eq.s32.totalorder %s33, 0
    %p206 = por %p204, %p205
    %p207 = scmp.ne.s32.totalorder %s195, %s196
    %p208 = scmp.eq.s32.totalorder %s34, 1
    %p209 = por %p207, %p208
    %p211 = scmp.ne.s32.totalorder %s196, %s210
    %p212 = scmp.eq.s32.totalorder %s34, 0
    %p213 = por %p211, %p212
    %s215 = sadd.s32 %s214, 1
    %p218 = scmp.eq.s32.totalorder %s28, 1
    %p219 = scmp.ne.s32.totalorder %s214, %s216
    %p220 = scmp.eq.s32.totalorder %s28, 0
    %p221 = por %p219, %p220
    %p222 = scmp.ne.s32.totalorder %s214, %s216
    %p223 = scmp.eq.s32.totalorder %s33, 1
    %p224 = por %p222, %p223
    %p225 = scmp.ne.s32.totalorder %s216, %s217
    %p226 = scmp.eq.s32.totalorder %s33, 0
    %p227 = por %p225, %p226
    %p228 = scmp.ne.s32.totalorder %s216, %s217
    %p229 = scmp.eq.s32.totalorder %s34, 1
    %p230 = por %p228, %p229
    %p232 = scmp.ne.s32.totalorder %s217, %s231
    %p233 = scmp.eq.s32.totalorder %s34, 0
    %p234 = por %p232, %p233
    %s236 = sadd.s32 %s235, 1
    %p239 = scmp.eq.s32.totalorder %s28, 1
    %p240 = scmp.ne.s32.totalorder %s235, %s237
    %p241 = scmp.eq.s32.totalorder %s28, 0
    %p242 = por %p240, %p241
    %p243 = scmp.ne.s32.totalorder %s235, %s237
    %p244 = scmp.eq.s32.totalorder %s33, 1
    %p245 = por %p243, %p244
    %p246 = scmp.ne.s32.totalorder %s237, %s238
    %p247 = scmp.eq.s32.totalorder %s33, 0
    %p248 = por %p246, %p247
    %p249 = scmp.ne.s32.totalorder %s237, %s238
    %p250 = scmp.eq.s32.totalorder %s34, 1
    %p251 = por %p249, %p250
    %p253 = scmp.ne.s32.totalorder %s238, %s252
    %p254 = scmp.eq.s32.totalorder %s34, 0
    %p255 = por %p253, %p254
    %s257 = sadd.s32 %s256, 1
    %p260 = scmp.eq.s32.totalorder %s28, 1
    %p261 = scmp.ne.s32.totalorder %s256, %s258
    %p262 = scmp.eq.s32.totalorder %s28, 0
    %p263 = por %p261, %p262
    %p264 = scmp.ne.s32.totalorder %s256, %s258
    %p265 = scmp.eq.s32.totalorder %s33, 1
    %p266 = por %p264, %p265
    %p267 = scmp.ne.s32.totalorder %s258, %s259
    %p268 = scmp.eq.s32.totalorder %s33, 0
    %p269 = por %p267, %p268
    %p270 = scmp.ne.s32.totalorder %s258, %s259
    %p271 = scmp.eq.s32.totalorder %s34, 1
    %p272 = por %p270, %p271
    %p274 = scmp.ne.s32.totalorder %s259, %s273
    %p275 = scmp.eq.s32.totalorder %s34, 0
    %p276 = por %p274, %p275
    %s278 = sadd.s32 %s277, 1
    %p281 = scmp.eq.s32.totalorder %s28, 1
    %p282 = scmp.ne.s32.totalorder %s277, %s279
    %p283 = scmp.eq.s32.totalorder %s28, 0
    %p284 = por %p282, %p283
    %p285 = scmp.ne.s32.totalorder %s277, %s279
    %p286 = scmp.eq.s32.totalorder %s33, 1
    %p287 = por %p285, %p286
    %p288 = scmp.ne.s32.totalorder %s279, %s280
    %p289 = scmp.eq.s32.totalorder %s33, 0
    %p290 = por %p288, %p289
    %p291 = scmp.ne.s32.totalorder %s279, %s280
    %p292 = scmp.eq.s32.totalorder %s34, 1
    %p293 = por %p291, %p292
    %p295 = scmp.ne.s32.totalorder %s280, %s294
    %p296 = scmp.eq.s32.totalorder %s34, 0
    %p297 = por %p295, %p296
    %s299 = sadd.s32 %s298, 1
    %p302 = scmp.eq.s32.totalorder %s28, 1
    %p303 = scmp.ne.s32.totalorder %s298, %s300
    %p304 = scmp.eq.s32.totalorder %s28, 0
    %p305 = por %p303, %p304
    %p306 = scmp.ne.s32.totalorder %s298, %s300
    %p307 = scmp.eq.s32.totalorder %s33, 1
    %p308 = por %p306, %p307
    %p309 = scmp.ne.s32.totalorder %s300, %s301
    %p310 = scmp.eq.s32.totalorder %s33, 0
    %p311 = por %p309, %p310
    %p312 = scmp.ne.s32.totalorder %s300, %s301
    %p313 = scmp.eq.s32.totalorder %s34, 1
    %p314 = por %p312, %p313
    %p316 = scmp.ne.s32.totalorder %s301, %s315
    %p317 = scmp.eq.s32.totalorder %s34, 0
    %p318 = por %p316, %p317
    %s320 = sadd.s32 %s319, 1
    %p323 = scmp.eq.s32.totalorder %s28, 1
    %p324 = scmp.ne.s32.totalorder %s319, %s321
    %p325 = scmp.eq.s32.totalorder %s28, 0
    %p326 = por %p324, %p325
    %p327 = scmp.ne.s32.totalorder %s319, %s321
    %p328 = scmp.eq.s32.totalorder %s33, 1
    %p329 = por %p327, %p328
    %p330 = scmp.ne.s32.totalorder %s321, %s322
    %p331 = scmp.eq.s32.totalorder %s33, 0
    %p332 = por %p330, %p331
    %p333 = scmp.ne.s32.totalorder %s321, %s322
    %p334 = scmp.eq.s32.totalorder %s34, 1
    %p335 = por %p333, %p334
    %p337 = scmp.ne.s32.totalorder %s322, %s336
    %p338 = scmp.eq.s32.totalorder %s34, 0
    %p339 = por %p337, %p338
    %s341 = sadd.s32 %s340, 1
    %p344 = scmp.eq.s32.totalorder %s28, 1
    %p345 = scmp.ne.s32.totalorder %s340, %s342
    %p346 = scmp.eq.s32.totalorder %s28, 0
    %p347 = por %p345, %p346
    %p348 = scmp.ne.s32.totalorder %s340, %s342
    %p349 = scmp.eq.s32.totalorder %s33, 1
    %p350 = por %p348, %p349
    %p351 = scmp.ne.s32.totalorder %s342, %s343
    %p352 = scmp.eq.s32.totalorder %s33, 0
    %p353 = por %p351, %p352
    %p354 = scmp.ne.s32.totalorder %s342, %s343
    %p355 = scmp.eq.s32.totalorder %s34, 1
    %p356 = por %p354, %p355
    %p358 = scmp.ne.s32.totalorder %s343, %s357
    %p359 = scmp.eq.s32.totalorder %s34, 0
    %p360 = por %p358, %p359
    %s362 = sadd.s32 %s361, 1
    %p365 = scmp.eq.s32.totalorder %s28, 1
    %p366 = scmp.ne.s32.totalorder %s361, %s363
    %p367 = scmp.eq.s32.totalorder %s28, 0
    %p368 = por %p366, %p367
    %p369 = scmp.ne.s32.totalorder %s361, %s363
    %p370 = scmp.eq.s32.totalorder %s33, 1
    %p371 = por %p369, %p370
    %p372 = scmp.ne.s32.totalorder %s363, %s364
    %p373 = scmp.eq.s32.totalorder %s33, 0
    %p374 = por %p372, %p373
    %p375 = scmp.ne.s32.totalorder %s363, %s364
    %p376 = scmp.eq.s32.totalorder %s34, 1
    %p377 = por %p375, %p376
    %p379 = scmp.ne.s32.totalorder %s364, %s378
    %p380 = scmp.eq.s32.totalorder %s34, 0
    %p381 = por %p379, %p380
    %s383 = sadd.s32 %s382, 1
    %p386 = scmp.eq.s32.totalorder %s28, 1
    %p387 = scmp.ne.s32.totalorder %s382, %s384
    %p388 = scmp.eq.s32.totalorder %s28, 0
    %p389 = por %p387, %p388
    %p390 = scmp.ne.s32.totalorder %s382, %s384
    %p391 = scmp.eq.s32.totalorder %s33, 1
    %p392 = por %p390, %p391
    %p393 = scmp.ne.s32.totalorder %s384, %s385
    %p394 = scmp.eq.s32.totalorder %s33, 0
    %p395 = por %p393, %p394
    %p396 = scmp.ne.s32.totalorder %s384, %s385
    %p397 = scmp.eq.s32.totalorder %s34, 1
    %p398 = por %p396, %p397
    %p400 = scmp.ne.s32.totalorder %s385, %s399
    %p401 = scmp.eq.s32.totalorder %s34, 0
    %p402 = por %p400, %p401
    %s404 = sadd.s32 %s403, 1
    %p407 = scmp.eq.s32.totalorder %s28, 1
    %p408 = scmp.ne.s32.totalorder %s403, %s405
    %p409 = scmp.eq.s32.totalorder %s28, 0
    %p410 = por %p408, %p409
    %p411 = scmp.ne.s32.totalorder %s403, %s405
    %p412 = scmp.eq.s32.totalorder %s33, 1
    %p413 = por %p411, %p412
    %p414 = scmp.ne.s32.totalorder %s405, %s406
    %p415 = scmp.eq.s32.totalorder %s33, 0
    %p416 = por %p414, %p415
    %p417 = scmp.ne.s32.totalorder %s405, %s406
    %p418 = scmp.eq.s32.totalorder %s34, 1
    %p419 = por %p417, %p418
    %p421 = scmp.ne.s32.totalorder %s406, %s420
    %p422 = scmp.eq.s32.totalorder %s34, 0
    %p423 = por %p421, %p422
    %s425 = sadd.s32 %s424, 1
    %p428 = scmp.eq.s32.totalorder %s28, 1
    %p429 = scmp.ne.s32.totalorder %s424, %s426
    %p430 = scmp.eq.s32.totalorder %s28, 0
    %p431 = por %p429, %p430
    %p432 = scmp.ne.s32.totalorder %s424, %s426
    %p433 = scmp.eq.s32.totalorder %s33, 1
    %p434 = por %p432, %p433
    %p435 = scmp.ne.s32.totalorder %s426, %s427
    %p436 = scmp.eq.s32.totalorder %s33, 0
    %p437 = por %p435, %p436
    %p438 = scmp.ne.s32.totalorder %s426, %s427
    %p439 = scmp.eq.s32.totalorder %s34, 1
    %p440 = por %p438, %p439
    %p442 = scmp.ne.s32.totalorder %s427, %s441
    %p443 = scmp.eq.s32.totalorder %s34, 0
    %p444 = por %p442, %p443
    %s446 = sadd.s32 %s445, 1
    %p449 = scmp.eq.s32.totalorder %s28, 1
    %p450 = scmp.ne.s32.totalorder %s445, %s447
    %p451 = scmp.eq.s32.totalorder %s28, 0
    %p452 = por %p450, %p451
    %p453 = scmp.ne.s32.totalorder %s445, %s447
    %p454 = scmp.eq.s32.totalorder %s33, 1
    %p455 = por %p453, %p454
    %p456 = scmp.ne.s32.totalorder %s447, %s448
    %p457 = scmp.eq.s32.totalorder %s33, 0
    %p458 = por %p456, %p457
    %p459 = scmp.ne.s32.totalorder %s447, %s448
    %p460 = scmp.eq.s32.totalorder %s34, 1
    %p461 = por %p459, %p460
    %p463 = scmp.ne.s32.totalorder %s448, %s462
    %p464 = scmp.eq.s32.totalorder %s34, 0
    %p465 = por %p463, %p464
    %s466 = ssub.s32 %s28, %s35
    %p467 = scmp.eq.s32.totalorder %s466, 0
    %s469 = sadd.s32 %s468, 1
    %s470 = scalar_select %p467, %s468, %s469
    %p473 = pneg %p467
    %p474 = scmp.eq.s32.totalorder %s28, 1
    %p475 = por %p473, %p474
    %p476 = scmp.ne.s32.totalorder %s468, %s471
    %p477 = scmp.eq.s32.totalorder %s28, 0
    %p478 = por %p476, %p477
    %p479 = scmp.ne.s32.totalorder %s468, %s471
    %p480 = scmp.eq.s32.totalorder %s33, 1
    %p481 = por %p479, %p480
    %p482 = scmp.ne.s32.totalorder %s471, %s472
    %p483 = scmp.eq.s32.totalorder %s33, 0
    %p484 = por %p482, %p483
    %p485 = scmp.ne.s32.totalorder %s471, %s472
    %p486 = scmp.eq.s32.totalorder %s34, 1
    %p487 = por %p485, %p486
    %p489 = scmp.ne.s32.totalorder %s472, %s488
    %p490 = scmp.eq.s32.totalorder %s34, 0
    %p491 = por %p489, %p490
    %p492 = scmp.le.s32.totalorder 1, %s28
    %p493 = scmp.lt.s32.totalorder %s28, 3
    %p494 = pnand %p492, %p493
    %p495 = pneg %p494
    // Predicated region
    $region9: #{residual_graph_lstm_forward.5} parent=5 // pred_check
      _
    $region10: #{residual_graph_lstm_forward.5} parent=5 // pred_check_branch
      %497 = sbr.rel (%p494) target = $region12
    $region11: #{residual_graph_lstm_forward.5} parent=5 // pred_region
      %s498 = ssub.s32 %s28, 1
      // Predicated region
      $region13: #{residual_graph_lstm_forward.5} parent=11 // pred_check
        %p499 = pneg %p101
      $region14: #{residual_graph_lstm_forward.5} parent=11 // pred_check_branch
        %501 = sbr.rel (%p499) target = $region16
      $region15: #{residual_graph_lstm_forward.5} parent=11 // pred_region
        _
      $region16: #{residual_graph_lstm_forward.5} parent=11 // pred_fallthru
        _
      // Predicated region
      $region17: #{residual_graph_lstm_forward.5} parent=11 // pred_check
        %p502 = pneg %p122
      $region18: #{residual_graph_lstm_forward.5} parent=11 // pred_check_branch
        %504 = sbr.rel (%p502) target = $region20
      $region19: #{residual_graph_lstm_forward.5} parent=11 // pred_region
        _
      $region20: #{residual_graph_lstm_forward.5} parent=11 // pred_fallthru
        _
      // Predicated region
      $region21: #{residual_graph_lstm_forward.5} parent=11 // pred_check
        %p505 = pneg %p143
      $region22: #{residual_graph_lstm_forward.5} parent=11 // pred_check_branch
        %507 = sbr.rel (%p505) target = $region24
      $region23: #{residual_graph_lstm_forward.5} parent=11 // pred_region
        _
      $region24: #{residual_graph_lstm_forward.5} parent=11 // pred_fallthru
        _
      // Predicated region
      $region25: #{residual_graph_lstm_forward.5} parent=11 // pred_check
        %p508 = pneg %p164
      $region26: #{residual_graph_lstm_forward.5} parent=11 // pred_check_branch
        %510 = sbr.rel (%p508) target = $region28
      $region27: #{residual_graph_lstm_forward.5} parent=11 // pred_region
        _
      $region28: #{residual_graph_lstm_forward.5} parent=11 // pred_fallthru
        _
      // Predicated region
      $region29: #{residual_graph_lstm_forward.5} parent=11 // pred_check
        %p511 = pneg %p185
      $region30: #{residual_graph_lstm_forward.5} parent=11 // pred_check_branch
        %513 = sbr.rel (%p511) target = $region32
      $region31: #{residual_graph_lstm_forward.5} parent=11 // pred_region
        _
      $region32: #{residual_graph_lstm_forward.5} parent=11 // pred_fallthru
        _
      // Predicated region
      $region33: #{residual_graph_lstm_forward.5} parent=11 // pred_check
        %p514 = pneg %p206
      $region34: #{residual_graph_lstm_forward.5} parent=11 // pred_check_branch
        %516 = sbr.rel (%p514) target = $region36
      $region35: #{residual_graph_lstm_forward.5} parent=11 // pred_region
        _
      $region36: #{residual_graph_lstm_forward.5} parent=11 // pred_fallthru
        _
      // Predicated region
      $region37: #{residual_graph_lstm_forward.5} parent=11 // pred_check
        %p517 = pneg %p227
      $region38: #{residual_graph_lstm_forward.5} parent=11 // pred_check_branch
        %519 = sbr.rel (%p517) target = $region40
      $region39: #{residual_graph_lstm_forward.5} parent=11 // pred_region
        _
      $region40: #{residual_graph_lstm_forward.5} parent=11 // pred_fallthru
        _
      // Predicated region
      $region41: #{residual_graph_lstm_forward.5} parent=11 // pred_check
        %p520 = pneg %p248
      $region42: #{residual_graph_lstm_forward.5} parent=11 // pred_check_branch
        %522 = sbr.rel (%p520) target = $region44
      $region43: #{residual_graph_lstm_forward.5} parent=11 // pred_region
        _
      $region44: #{residual_graph_lstm_forward.5} parent=11 // pred_fallthru
        _
      // Predicated region
      $region45: #{residual_graph_lstm_forward.5} parent=11 // pred_check
        %p523 = pneg %p269
      $region46: #{residual_graph_lstm_forward.5} parent=11 // pred_check_branch
        %525 = sbr.rel (%p523) target = $region48
      $region47: #{residual_graph_lstm_forward.5} parent=11 // pred_region
        _
      $region48: #{residual_graph_lstm_forward.5} parent=11 // pred_fallthru
        _
      // Predicated region
      $region49: #{residual_graph_lstm_forward.5} parent=11 // pred_check
        %p526 = pneg %p290
      $region50: #{residual_graph_lstm_forward.5} parent=11 // pred_check_branch
        %528 = sbr.rel (%p526) target = $region52
      $region51: #{residual_graph_lstm_forward.5} parent=11 // pred_region
        _
      $region52: #{residual_graph_lstm_forward.5} parent=11 // pred_fallthru
        _
      // Predicated region
      $region53: #{residual_graph_lstm_forward.5} parent=11 // pred_check
        %p529 = pneg %p311
      $region54: #{residual_graph_lstm_forward.5} parent=11 // pred_check_branch
        %531 = sbr.rel (%p529) target = $region56
      $region55: #{residual_graph_lstm_forward.5} parent=11 // pred_region
        _
      $region56: #{residual_graph_lstm_forward.5} parent=11 // pred_fallthru
        _
      // Predicated region
      $region57: #{residual_graph_lstm_forward.5} parent=11 // pred_check
        %p532 = pneg %p332
      $region58: #{residual_graph_lstm_forward.5} parent=11 // pred_check_branch
        %534 = sbr.rel (%p532) target = $region60
      $region59: #{residual_graph_lstm_forward.5} parent=11 // pred_region
        _
      $region60: #{residual_graph_lstm_forward.5} parent=11 // pred_fallthru
        _
      // Predicated region
      $region61: #{residual_graph_lstm_forward.5} parent=11 // pred_check
        %p535 = pneg %p353
      $region62: #{residual_graph_lstm_forward.5} parent=11 // pred_check_branch
        %537 = sbr.rel (%p535) target = $region64
      $region63: #{residual_graph_lstm_forward.5} parent=11 // pred_region
        _
      $region64: #{residual_graph_lstm_forward.5} parent=11 // pred_fallthru
        _
      // Predicated region
      $region65: #{residual_graph_lstm_forward.5} parent=11 // pred_check
        %p538 = pneg %p374
      $region66: #{residual_graph_lstm_forward.5} parent=11 // pred_check_branch
        %540 = sbr.rel (%p538) target = $region68
      $region67: #{residual_graph_lstm_forward.5} parent=11 // pred_region
        _
      $region68: #{residual_graph_lstm_forward.5} parent=11 // pred_fallthru
        _
      // Predicated region
      $region69: #{residual_graph_lstm_forward.5} parent=11 // pred_check
        %p541 = pneg %p395
      $region70: #{residual_graph_lstm_forward.5} parent=11 // pred_check_branch
        %543 = sbr.rel (%p541) target = $region72
      $region71: #{residual_graph_lstm_forward.5} parent=11 // pred_region
        _
      $region72: #{residual_graph_lstm_forward.5} parent=11 // pred_fallthru
        _
      // Predicated region
      $region73: #{residual_graph_lstm_forward.5} parent=11 // pred_check
        %p544 = pneg %p416
      $region74: #{residual_graph_lstm_forward.5} parent=11 // pred_check_branch
        %546 = sbr.rel (%p544) target = $region76
      $region75: #{residual_graph_lstm_forward.5} parent=11 // pred_region
        _
      $region76: #{residual_graph_lstm_forward.5} parent=11 // pred_fallthru
        _
      // Predicated region
      $region77: #{residual_graph_lstm_forward.5} parent=11 // pred_check
        %p547 = pneg %p437
      $region78: #{residual_graph_lstm_forward.5} parent=11 // pred_check_branch
        %549 = sbr.rel (%p547) target = $region80
      $region79: #{residual_graph_lstm_forward.5} parent=11 // pred_region
        _
      $region80: #{residual_graph_lstm_forward.5} parent=11 // pred_fallthru
        _
      // Predicated region
      $region81: #{residual_graph_lstm_forward.5} parent=11 // pred_check
        %p550 = pneg %p458
      $region82: #{residual_graph_lstm_forward.5} parent=11 // pred_check_branch
        %552 = sbr.rel (%p550) target = $region84
      $region83: #{residual_graph_lstm_forward.5} parent=11 // pred_region
        _
      $region84: #{residual_graph_lstm_forward.5} parent=11 // pred_fallthru
        _
    $region12: #{residual_graph_lstm_forward.5} parent=5 // pred_fallthru
      _
    %p553 = scmp.lt.s32.totalorder %s28, 2
    // Predicated region
    $region85: #{residual_graph_lstm_forward.5} parent=5 // pred_check
      %p554 = pneg %p553
    $region86: #{residual_graph_lstm_forward.5} parent=5 // pred_check_branch
      %556 = sbr.rel (%p554) target = $region88
    $region87: #{residual_graph_lstm_forward.5} parent=5 // pred_region
      // Predicated region
      $region89: #{residual_graph_lstm_forward.5} parent=87 // pred_check
        %p557 = pneg %p48
      $region90: #{residual_graph_lstm_forward.5} parent=87 // pred_check_branch
        %559 = sbr.rel (%p557) target = $region92
      $region91: #{residual_graph_lstm_forward.5} parent=87 // pred_region
        %p560 = scmp.lt.s32.totalorder %s28, 1
        %s561 = scalar_select %p560, %s28, 1
        %s562 = smul.addr %s561, 2
        %s563 = smul.addr %s562, 8
        %s564 = scalar_lea.vmem %s0, %s563
      $region92: #{residual_graph_lstm_forward.5} parent=87 // pred_fallthru
        _
      // Predicated region
      $region93: #{residual_graph_lstm_forward.5} parent=87 // pred_check
        %p565 = pneg %p74
      $region94: #{residual_graph_lstm_forward.5} parent=87 // pred_check_branch
        %567 = sbr.rel (%p565) target = $region96
      $region95: #{residual_graph_lstm_forward.5} parent=87 // pred_region
        %p568 = scmp.lt.s32.totalorder %s28, 1
        %s569 = scalar_select %p568, %s28, 1
        %s570 = smul.addr %s569, 4
        %s571 = smul.addr %s570, 8
        %s572 = scalar_lea.vmem %s1, %s571
      $region96: #{residual_graph_lstm_forward.5} parent=87 // pred_fallthru
        _
    $region88: #{residual_graph_lstm_forward.5} parent=5 // pred_fallthru
      _
    %p573 = scmp.le.s32.totalorder 1, %s28
    %p574 = scmp.lt.s32.totalorder %s28, 3
    %p575 = pnand %p573, %p574
    %p576 = pneg %p575
    // Predicated region
    $region97: #{residual_graph_lstm_forward.5} parent=5 // pred_check
      _
    $region98: #{residual_graph_lstm_forward.5} parent=5 // pred_check_branch
      %578 = sbr.rel (%p575) target = $region100
    $region99: #{residual_graph_lstm_forward.5} parent=5 // pred_region
      %s579 = ssub.s32 %s28, 1
      %p580 = scmp.lt.s32.totalorder %s33, 1
      %s581 = scalar_select %p580, %s33, 1
      %s582 = smul.addr %s581, 2
      %s583 = smul.addr %s582, 8
      %s584 = scalar_lea.vmem %s0, %s583
      %p585 = pneg %p54
      %p586 = pneg %p51
      %p587 = scmp.lt.s32.totalorder %s33, 1
      %s588 = scalar_select %p587, %s33, 1
      %s589 = smul.addr %s588, 4
      %s590 = smul.addr %s589, 8
      %s591 = scalar_lea.vmem %s1, %s590
      %p592 = pneg %p80
      %p593 = pneg %p77
      %p594 = pneg %p101
      %p595 = pneg %p98
      %p596 = pneg %p122
      %p597 = pneg %p119
      %p598 = pneg %p143
      %p599 = pneg %p140
      %p600 = pneg %p164
      %p601 = pneg %p161
      %p602 = pneg %p185
      %p603 = pneg %p182
      %p604 = pneg %p206
      %p605 = pneg %p203
      %p606 = pneg %p227
      %p607 = pneg %p224
      %p608 = pneg %p248
      %p609 = pneg %p245
      %p610 = pneg %p269
      %p611 = pneg %p266
      %p612 = pneg %p290
      %p613 = pneg %p287
      %p614 = pneg %p311
      %p615 = pneg %p308
      %p616 = pneg %p332
      %p617 = pneg %p329
      %p618 = pneg %p353
      %p619 = pneg %p350
      %p620 = pneg %p374
      %p621 = pneg %p371
      %p622 = pneg %p395
      %p623 = pneg %p392
      %p624 = pneg %p416
      %p625 = pneg %p413
      %p626 = pneg %p437
      %p627 = pneg %p434
      %p628 = pneg %p458
      %p629 = pneg %p455
      %p630 = pneg %p484
      %p631 = pneg %p481
      %p632 = scmp.lt.s32.totalorder %s33, 1
      %s633 = scalar_select %p632, %s33, 1
      %s634 = smul.addr %s633, 2
      %s635 = smul.addr %s634, 8
      %s636 = scalar_lea.vmem %s20, %s635
      %p637 = scmp.lt.s32.totalorder %s33, 1
      %s638 = scalar_select %p637, %s33, 1
      %s639 = smul.addr %s638, 2
      %s640 = smul.addr %s639, 8
      %s641 = scalar_lea.vmem %s0, %s640
      %p642 = scmp.lt.s32.totalorder %s33, 1
      %s643 = scalar_select %p642, %s33, 1
      %s644 = smul.addr %s643, 4
      %s645 = smul.addr %s644, 8
      %s646 = scalar_lea.vmem %s1, %s645
      %p647 = scmp.lt.s32.totalorder %s33, 1
      %s648 = scalar_select %p647, %s33, 1
      %s649 = smul.addr %s648, 2
      %s650 = smul.addr %s649, 8
      %s651 = scalar_lea.vmem %s20, %s650
      %v652 = vld [vmem:[%s646] sm:$0xff]
      %v653 = vld [vmem:[%s646 + $0x8] sm:$0xff]
      %v654 = vld [vmem:[%s646 + $0x10] sm:$0xff]
      %v655 = vld [vmem:[%s646 + $0x18] sm:$0xff]
      %v656 = vld [vmem:[%s641] sm:$0xff]
      %v657 = vld [vmem:[%s641 + $0x8] sm:$0xff]
      %v658 = vld [vmem:[%s3] sm:$0xff]
      %v659 = vld [vmem:[%s3 + $0x8] sm:$0xff]
      %v660 = vld [vmem:[%s3 + $0x10] sm:$0xff]
      %v661 = vld [vmem:[%s3 + $0x18] sm:$0xff]
      %v662 = vld [vmem:[%s2] sm:$0x1]
      %vm663 = vcmask 130048
      %v665 = vsel %vm663, %v652, 0
      %v668 = vsel %vm663, %v653, 0
      %v671 = vsel %vm663, %v654, 0
      %v674 = vsel %vm663, %v655, 0
      %676 = vmatprep.subr.mxu0 0.0
      %677 = vmatpush1.msra.mxu0 %v656
      %678 = vmatprep.subr.mxu0 0.0
      %679 = vmatpush1.msra.mxu0 %v657
      %680 = vmatprep.subr.mxu0 0.0
      %681 = vmatpush1.msra.mxu0 0.0
      %682 = vmatprep.subr.mxu0 0.0
      %683 = vmatpush1.msra.mxu0 0.0
      %684 = vmatprep.subr.mxu0 0.0
      %685 = vmatpush1.msra.mxu0 0.0
      %686 = vmatprep.subr.mxu0 0.0
      %687 = vmatpush1.msra.mxu0 0.0
      %688 = vmatprep.subr.mxu0 0.0
      %689 = vmatpush1.msra.mxu0 0.0
      %690 = vmatprep.subr.mxu0 0.0
      %691 = vmatpush1.msra.mxu0 0.0
      %692 = vmatprep.subr.mxu0 0.0
      %693 = vmatpush1.msra.mxu0 0.0
      %694 = vmatprep.subr.mxu0 0.0
      %695 = vmatpush1.msra.mxu0 0.0
      %696 = vmatprep.subr.mxu0 0.0
      %697 = vmatpush1.msra.mxu0 0.0
      %698 = vmatprep.subr.mxu0 0.0
      %699 = vmatpush1.msra.mxu0 0.0
      %700 = vmatprep.subr.mxu0 0.0
      %701 = vmatpush1.msra.mxu0 0.0
      %702 = vmatprep.subr.mxu0 0.0
      %703 = vmatpush1.msra.mxu0 0.0
      %704 = vmatprep.subr.mxu0 0.0
      %705 = vmatpush1.msra.mxu0 0.0
      %706 = vmatprep.subr.mxu0 0.0
      %707 = vmatpush1.msra.mxu0 0.0
      %708 = vmatprep.subr.mxu0 0.0
      %709 = vmatpush1.msra.mxu0 0.0
      %710 = vmatprep.subr.mxu0 0.0
      %711 = vmatpush1.msra.mxu0 0.0
      %712 = vmatprep.subr.mxu0 0.0
      %713 = vmatpush1.msra.mxu0 0.0
      %714 = vmatprep.subr.mxu0 0.0
      %715 = vmatpush1.msra.mxu0 0.0
      %716 = vmatprep.subr.mxu0 0.0
      %717 = vmatpush1.msra.mxu0 0.0
      %718 = vmatprep.subr.mxu0 0.0
      %719 = vmatpush1.msra.mxu0 0.0
      %720 = vmatprep.subr.mxu0 0.0
      %721 = vmatpush1.msra.mxu0 0.0
      %722 = vmatprep.subr.mxu0 0.0
      %723 = vmatpush1.msra.mxu0 0.0
      %724 = vmatprep.subr.mxu0 0.0
      %725 = vmatpush1.msra.mxu0 0.0
      %726 = vmatprep.subr.mxu0 0.0
      %727 = vmatpush1.msra.mxu0 0.0
      %728 = vmatprep.subr.mxu0 0.0
      %729 = vmatpush1.msra.mxu0 0.0
      %730 = vmatprep.subr.mxu0 0.0
      %731 = vmatpush1.msra.mxu0 0.0
      %732 = vmatprep.subr.mxu0 0.0
      %733 = vmatpush1.msra.mxu0 0.0
      %734 = vmatprep.subr.mxu0 0.0
      %735 = vmatpush1.msra.mxu0 0.0
      %736 = vmatprep.subr.mxu0 0.0
      %737 = vmatpush1.msra.mxu0 0.0
      %738 = vmatprep.subr.mxu0 0.0
      %739 = vmatpush1.msra.mxu0 0.0
      %740 = vmatprep.mubr.f32.mxu0 0.0
      %741 = vmatmul.mubr.f32.gmra.mrb[0].mxu0 %v665
      %v742 = vpop.f32.mrb[0].mxu0
      %v743 = vadd.f32 0.0, %v742
      %v744 = vpop.f32.mrb[0].mxu0
      %745 = vmatprep.mubr.f32.mxu0 0.0
      %746 = vmatmul.mubr.f32.gmra.mrb[0].mxu0 %v668
      %v747 = vpop.f32.mrb[0].mxu0
      %v748 = vadd.f32 0.0, %v747
      %v749 = vpop.f32.mrb[0].mxu0
      %750 = vmatprep.mubr.f32.mxu0 0.0
      %751 = vmatmul.mubr.f32.gmra.mrb[0].mxu0 %v671
      %v752 = vpop.f32.mrb[0].mxu0
      %v753 = vadd.f32 0.0, %v752
      %v754 = vpop.f32.mrb[0].mxu0
      %755 = vmatprep.mubr.f32.mxu0 0.0
      %756 = vmatmul.mubr.f32.gmra.mrb[0].mxu0 %v674
      %v757 = vpop.f32.mrb[0].mxu0
      %v758 = vadd.f32 0.0, %v757
      %v759 = vpop.f32.mrb[0].mxu0
      %760 = vdwg.mxu0
      %v762 = vsel %vm663, %v753, 0
      %v765 = vsel %vm663, %v758, 0
      %767 = vmatprep.subr.mxu0 0.0
      %768 = vmatpush1.msra.mxu0 %v660
      %769 = vmatprep.subr.mxu0 0.0
      %770 = vmatpush1.msra.mxu0 %v661
      %771 = vmatprep.subr.mxu0 0.0
      %772 = vmatpush1.msra.mxu0 0.0
      %773 = vmatprep.subr.mxu0 0.0
      %774 = vmatpush1.msra.mxu0 0.0
      %775 = vmatprep.subr.mxu0 0.0
      %776 = vmatpush1.msra.mxu0 0.0
      %777 = vmatprep.subr.mxu0 0.0
      %778 = vmatpush1.msra.mxu0 0.0
      %779 = vmatprep.subr.mxu0 0.0
      %780 = vmatpush1.msra.mxu0 0.0
      %781 = vmatprep.subr.mxu0 0.0
      %782 = vmatpush1.msra.mxu0 0.0
      %783 = vmatprep.subr.mxu0 0.0
      %784 = vmatpush1.msra.mxu0 0.0
      %785 = vmatprep.subr.mxu0 0.0
      %786 = vmatpush1.msra.mxu0 0.0
      %787 = vmatprep.subr.mxu0 0.0
      %788 = vmatpush1.msra.mxu0 0.0
      %789 = vmatprep.subr.mxu0 0.0
      %790 = vmatpush1.msra.mxu0 0.0
      %791 = vmatprep.subr.mxu0 0.0
      %792 = vmatpush1.msra.mxu0 0.0
      %793 = vmatprep.subr.mxu0 0.0
      %794 = vmatpush1.msra.mxu0 0.0
      %795 = vmatprep.subr.mxu0 0.0
      %796 = vmatpush1.msra.mxu0 0.0
      %797 = vmatprep.subr.mxu0 0.0
      %798 = vmatpush1.msra.mxu0 0.0
      %799 = vmatprep.subr.mxu0 0.0
      %800 = vmatpush1.msra.mxu0 0.0
      %801 = vmatprep.subr.mxu0 0.0
      %802 = vmatpush1.msra.mxu0 0.0
      %803 = vmatprep.subr.mxu0 0.0
      %804 = vmatpush1.msra.mxu0 0.0
      %805 = vmatprep.subr.mxu0 0.0
      %806 = vmatpush1.msra.mxu0 0.0
      %807 = vmatprep.subr.mxu0 0.0
      %808 = vmatpush1.msra.mxu0 0.0
      %809 = vmatprep.subr.mxu0 0.0
      %810 = vmatpush1.msra.mxu0 0.0
      %811 = vmatprep.subr.mxu0 0.0
      %812 = vmatpush1.msra.mxu0 0.0
      %813 = vmatprep.subr.mxu0 0.0
      %814 = vmatpush1.msra.mxu0 0.0
      %815 = vmatprep.subr.mxu0 0.0
      %816 = vmatpush1.msra.mxu0 0.0
      %817 = vmatprep.subr.mxu0 0.0
      %818 = vmatpush1.msra.mxu0 0.0
      %819 = vmatprep.subr.mxu0 0.0
      %820 = vmatpush1.msra.mxu0 0.0
      %821 = vmatprep.subr.mxu0 0.0
      %822 = vmatpush1.msra.mxu0 0.0
      %823 = vmatprep.subr.mxu0 0.0
      %824 = vmatpush1.msra.mxu0 0.0
      %825 = vmatprep.subr.mxu0 0.0
      %826 = vmatpush1.msra.mxu0 0.0
      %827 = vmatprep.subr.mxu0 0.0
      %828 = vmatpush1.msra.mxu0 0.0
      %829 = vmatprep.subr.mxu0 0.0
      %830 = vmatpush1.msra.mxu0 0.0
      %831 = vmatprep.mubr.f32.mxu0 0.0
      %832 = vmatmul.mubr.f32.gmra.mrb[0].mxu0 %v762
      %v833 = vpop.f32.mrb[0].mxu0
      %v834 = vadd.f32 0.0, %v833
      %v835 = vpop.f32.mrb[0].mxu0
      %836 = vmatprep.mubr.f32.mxu0 0.0
      %837 = vmatmul.mubr.f32.gmra.mrb[0].mxu0 %v765
      %v838 = vpop.f32.mrb[0].mxu0
      %v839 = vadd.f32 0.0, %v838
      %v840 = vpop.f32.mrb[0].mxu0
      %841 = vdwg.mxu0
      %v843 = vsel %vm663, %v743, 0
      %v846 = vsel %vm663, %v748, 0
      %848 = vmatprep.subr.mxu0 0.0
      %849 = vmatpush1.msra.mxu0 %v658
      %850 = vmatprep.subr.mxu0 0.0
      %851 = vmatpush1.msra.mxu0 %v659
      %852 = vmatprep.subr.mxu0 0.0
      %853 = vmatpush1.msra.mxu0 0.0
      %854 = vmatprep.subr.mxu0 0.0
      %855 = vmatpush1.msra.mxu0 0.0
      %856 = vmatprep.subr.mxu0 0.0
      %857 = vmatpush1.msra.mxu0 0.0
      %858 = vmatprep.subr.mxu0 0.0
      %859 = vmatpush1.msra.mxu0 0.0
      %860 = vmatprep.subr.mxu0 0.0
      %861 = vmatpush1.msra.mxu0 0.0
      %862 = vmatprep.subr.mxu0 0.0
      %863 = vmatpush1.msra.mxu0 0.0
      %864 = vmatprep.subr.mxu0 0.0
      %865 = vmatpush1.msra.mxu0 0.0
      %866 = vmatprep.subr.mxu0 0.0
      %867 = vmatpush1.msra.mxu0 0.0
      %868 = vmatprep.subr.mxu0 0.0
      %869 = vmatpush1.msra.mxu0 0.0
      %870 = vmatprep.subr.mxu0 0.0
      %871 = vmatpush1.msra.mxu0 0.0
      %872 = vmatprep.subr.mxu0 0.0
      %873 = vmatpush1.msra.mxu0 0.0
      %874 = vmatprep.subr.mxu0 0.0
      %875 = vmatpush1.msra.mxu0 0.0
      %876 = vmatprep.subr.mxu0 0.0
      %877 = vmatpush1.msra.mxu0 0.0
      %878 = vmatprep.subr.mxu0 0.0
      %879 = vmatpush1.msra.mxu0 0.0
      %880 = vmatprep.subr.mxu0 0.0
      %881 = vmatpush1.msra.mxu0 0.0
      %882 = vmatprep.subr.mxu0 0.0
      %883 = vmatpush1.msra.mxu0 0.0
      %884 = vmatprep.subr.mxu0 0.0
      %885 = vmatpush1.msra.mxu0 0.0
      %886 = vmatprep.subr.mxu0 0.0
      %887 = vmatpush1.msra.mxu0 0.0
      %888 = vmatprep.subr.mxu0 0.0
      %889 = vmatpush1.msra.mxu0 0.0
      %890 = vmatprep.subr.mxu0 0.0
      %891 = vmatpush1.msra.mxu0 0.0
      %892 = vmatprep.subr.mxu0 0.0
      %893 = vmatpush1.msra.mxu0 0.0
      %894 = vmatprep.subr.mxu0 0.0
      %895 = vmatpush1.msra.mxu0 0.0
      %896 = vmatprep.subr.mxu0 0.0
      %897 = vmatpush1.msra.mxu0 0.0
      %898 = vmatprep.subr.mxu0 0.0
      %899 = vmatpush1.msra.mxu0 0.0
      %900 = vmatprep.subr.mxu0 0.0
      %901 = vmatpush1.msra.mxu0 0.0
      %902 = vmatprep.subr.mxu0 0.0
      %903 = vmatpush1.msra.mxu0 0.0
      %904 = vmatprep.subr.mxu0 0.0
      %905 = vmatpush1.msra.mxu0 0.0
      %906 = vmatprep.subr.mxu0 0.0
      %907 = vmatpush1.msra.mxu0 0.0
      %908 = vmatprep.subr.mxu0 0.0
      %909 = vmatpush1.msra.mxu0 0.0
      %910 = vmatprep.subr.mxu0 0.0
      %911 = vmatpush1.msra.mxu0 0.0
      %912 = vmatprep.mubr.f32.mxu0 0.0
      %913 = vmatmul.mubr.f32.gmra.mrb[0].mxu0 %v843
      %v914 = vpop.f32.mrb[0].mxu0
      %v915 = vadd.f32 %v834, %v914
      %v916 = vpop.f32.mrb[0].mxu0
      %917 = vmatprep.mubr.f32.mxu0 0.0
      %918 = vmatmul.mubr.f32.gmra.mrb[0].mxu0 %v846
      %v919 = vpop.f32.mrb[0].mxu0
      %v920 = vadd.f32 %v839, %v919
      %v921 = vpop.f32.mrb[0].mxu0
      %922 = vdwg.mxu0
      %v924 = vlaneseq
      %v925 = vshrl.u32 %v924, 7
      %v926 = vsub.s32 0, %v925
      %v927 = vrot.slane %v662, %v926
      %v929 = vadd.f32 %v915, %v927
      %v930 = vadd.f32 %v920, %v927
      %v931 = vmax.f32 %v929, 0.0
      %v932 = vmax.f32 %v930, 0.0
      %v933 = vld [vmem:[%s5] sm:$0xff]
      %v934 = vld [vmem:[%s4] sm:$0x1]
      %935 = vmatprep.subr.mxu0 0.0
      %936 = vmatpush1.msra.mxu0 %v931
      %937 = vmatprep.subr.mxu0 0.0
      %938 = vmatpush1.msra.mxu0 %v932
      %939 = vmatprep.subr.mxu0 0.0
      %940 = vmatpush1.msra.mxu0 0.0
      %941 = vmatprep.subr.mxu0 0.0
      %942 = vmatpush1.msra.mxu0 0.0
      %943 = vmatprep.subr.mxu0 0.0
      %944 = vmatpush1.msra.mxu0 0.0
      %945 = vmatprep.subr.mxu0 0.0
      %946 = vmatpush1.msra.mxu0 0.0
      %947 = vmatprep.subr.mxu0 0.0
      %948 = vmatpush1.msra.mxu0 0.0
      %949 = vmatprep.subr.mxu0 0.0
      %950 = vmatpush1.msra.mxu0 0.0
      %951 = vmatprep.subr.mxu0 0.0
      %952 = vmatpush1.msra.mxu0 0.0
      %953 = vmatprep.subr.mxu0 0.0
      %954 = vmatpush1.msra.mxu0 0.0
      %955 = vmatprep.subr.mxu0 0.0
      %956 = vmatpush1.msra.mxu0 0.0
      %957 = vmatprep.subr.mxu0 0.0
      %958 = vmatpush1.msra.mxu0 0.0
      %959 = vmatprep.subr.mxu0 0.0
      %960 = vmatpush1.msra.mxu0 0.0
      %961 = vmatprep.subr.mxu0 0.0
      %962 = vmatpush1.msra.mxu0 0.0
      %963 = vmatprep.subr.mxu0 0.0
      %964 = vmatpush1.msra.mxu0 0.0
      %965 = vmatprep.subr.mxu0 0.0
      %966 = vmatpush1.msra.mxu0 0.0
      %967 = vmatprep.subr.mxu0 0.0
      %968 = vmatpush1.msra.mxu0 0.0
      %969 = vmatprep.subr.mxu0 0.0
      %970 = vmatpush1.msra.mxu0 0.0
      %971 = vmatprep.subr.mxu0 0.0
      %972 = vmatpush1.msra.mxu0 0.0
      %973 = vmatprep.subr.mxu0 0.0
      %974 = vmatpush1.msra.mxu0 0.0
      %975 = vmatprep.subr.mxu0 0.0
      %976 = vmatpush1.msra.mxu0 0.0
      %977 = vmatprep.subr.mxu0 0.0
      %978 = vmatpush1.msra.mxu0 0.0
      %979 = vmatprep.subr.mxu0 0.0
      %980 = vmatpush1.msra.mxu0 0.0
      %981 = vmatprep.subr.mxu0 0.0
      %982 = vmatpush1.msra.mxu0 0.0
      %983 = vmatprep.subr.mxu0 0.0
      %984 = vmatpush1.msra.mxu0 0.0
      %985 = vmatprep.subr.mxu0 0.0
      %986 = vmatpush1.msra.mxu0 0.0
      %987 = vmatprep.subr.mxu0 0.0
      %988 = vmatpush1.msra.mxu0 0.0
      %989 = vmatprep.subr.mxu0 0.0
      %990 = vmatpush1.msra.mxu0 0.0
      %991 = vmatprep.subr.mxu0 0.0
      %992 = vmatpush1.msra.mxu0 0.0
      %993 = vmatprep.subr.mxu0 0.0
      %994 = vmatpush1.msra.mxu0 0.0
      %995 = vmatprep.subr.mxu0 0.0
      %996 = vmatpush1.msra.mxu0 0.0
      %997 = vmatprep.subr.mxu0 0.0
      %998 = vmatpush1.msra.mxu0 0.0
      %999 = vmatprep.mubr.f32.mxu0 0.0
      %1000 = vmatmul.mubr.f32.gmra.mrb[0].mxu0 %v665
      %v1001 = vpop.f32.mrb[0].mxu0
      %v1002 = vadd.f32 0.0, %v1001
      %v1003 = vpop.f32.mrb[0].mxu0
      %1004 = vmatprep.mubr.f32.mxu0 0.0
      %1005 = vmatmul.mubr.f32.gmra.mrb[0].mxu0 %v668
      %v1006 = vpop.f32.mrb[0].mxu0
      %v1007 = vadd.f32 0.0, %v1006
      %v1008 = vpop.f32.mrb[0].mxu0
      %1009 = vmatprep.mubr.f32.mxu0 0.0
      %1010 = vmatmul.mubr.f32.gmra.mrb[0].mxu0 %v671
      %v1011 = vpop.f32.mrb[0].mxu0
      %v1012 = vadd.f32 0.0, %v1011
      %v1013 = vpop.f32.mrb[0].mxu0
      %1014 = vmatprep.mubr.f32.mxu0 0.0
      %1015 = vmatmul.mubr.f32.gmra.mrb[0].mxu0 %v674
      %v1016 = vpop.f32.mrb[0].mxu0
      %v1017 = vadd.f32 0.0, %v1016
      %v1018 = vpop.f32.mrb[0].mxu0
      %1019 = vdwg.mxu0
      %v1021 = vrot.slane %v933, 4
      %vm1022 = vcmask 31744
      %v1024 = vsel %vm1022, %v1012, 0
      %v1027 = vsel %vm1022, %v1017, 0
      %vm1029 = vcmask 1043456
      %v1030 = vsel %vm1029, %v1021, 0
      %1032 = vmatprep.subr.mxu0 0.0
      %1033 = vmatpush1.msra.mxu0 %v1030
      %1034 = vmatprep.subr.mxu0 0.0
      %1035 = vmatpush1.msra.mxu0 0.0
      %1036 = vmatprep.subr.mxu0 0.0
      %1037 = vmatpush1.msra.mxu0 0.0
      %1038 = vmatprep.subr.mxu0 0.0
      %1039 = vmatpush1.msra.mxu0 0.0
      %1040 = vmatprep.subr.mxu0 0.0
      %1041 = vmatpush1.msra.mxu0 0.0
      %1042 = vmatprep.subr.mxu0 0.0
      %1043 = vmatpush1.msra.mxu0 0.0
      %1044 = vmatprep.subr.mxu0 0.0
      %1045 = vmatpush1.msra.mxu0 0.0
      %1046 = vmatprep.subr.mxu0 0.0
      %1047 = vmatpush1.msra.mxu0 0.0
      %1048 = vmatprep.subr.mxu0 0.0
      %1049 = vmatpush1.msra.mxu0 0.0
      %1050 = vmatprep.subr.mxu0 0.0
      %1051 = vmatpush1.msra.mxu0 0.0
      %1052 = vmatprep.subr.mxu0 0.0
      %1053 = vmatpush1.msra.mxu0 0.0
      %1054 = vmatprep.subr.mxu0 0.0
      %1055 = vmatpush1.msra.mxu0 0.0
      %1056 = vmatprep.subr.mxu0 0.0
      %1057 = vmatpush1.msra.mxu0 0.0
      %1058 = vmatprep.subr.mxu0 0.0
      %1059 = vmatpush1.msra.mxu0 0.0
      %1060 = vmatprep.subr.mxu0 0.0
      %1061 = vmatpush1.msra.mxu0 0.0
      %1062 = vmatprep.subr.mxu0 0.0
      %1063 = vmatpush1.msra.mxu0 0.0
      %1064 = vmatprep.subr.mxu0 0.0
      %1065 = vmatpush1.msra.mxu0 0.0
      %1066 = vmatprep.subr.mxu0 0.0
      %1067 = vmatpush1.msra.mxu0 0.0
      %1068 = vmatprep.subr.mxu0 0.0
      %1069 = vmatpush1.msra.mxu0 0.0
      %1070 = vmatprep.subr.mxu0 0.0
      %1071 = vmatpush1.msra.mxu0 0.0
      %1072 = vmatprep.subr.mxu0 0.0
      %1073 = vmatpush1.msra.mxu0 0.0
      %1074 = vmatprep.subr.mxu0 0.0
      %1075 = vmatpush1.msra.mxu0 0.0
      %1076 = vmatprep.subr.mxu0 0.0
      %1077 = vmatpush1.msra.mxu0 0.0
      %1078 = vmatprep.subr.mxu0 0.0
      %1079 = vmatpush1.msra.mxu0 0.0
      %1080 = vmatprep.subr.mxu0 0.0
      %1081 = vmatpush1.msra.mxu0 0.0
      %1082 = vmatprep.subr.mxu0 0.0
      %1083 = vmatpush1.msra.mxu0 0.0
      %1084 = vmatprep.subr.mxu0 0.0
      %1085 = vmatpush1.msra.mxu0 0.0
      %1086 = vmatprep.subr.mxu0 0.0
      %1087 = vmatpush1.msra.mxu0 0.0
      %1088 = vmatprep.subr.mxu0 0.0
      %1089 = vmatpush1.msra.mxu0 0.0
      %1090 = vmatprep.subr.mxu0 0.0
      %1091 = vmatpush1.msra.mxu0 0.0
      %1092 = vmatprep.subr.mxu0 0.0
      %1093 = vmatpush1.msra.mxu0 0.0
      %1094 = vmatprep.subr.mxu0 0.0
      %1095 = vmatpush1.msra.mxu0 0.0
      %1096 = vmatprep.mubr.f32.mxu0 0.0
      %1097 = vmatmul.mubr.f32.gmra.mrb[0].mxu0 %v1024
      %v1098 = vpop.f32.mrb[0].mxu0
      %v1099 = vadd.f32 0.0, %v1098
      %v1100 = vpop.f32.mrb[0].mxu0
      %1101 = vmatprep.mubr.f32.mxu0 0.0
      %1102 = vmatmul.mubr.f32.gmra.mrb[0].mxu0 %v1027
      %v1103 = vpop.f32.mrb[0].mxu0
      %v1104 = vadd.f32 0.0, %v1103
      %v1105 = vpop.f32.mrb[0].mxu0
      %1106 = vdwg.mxu0
      %v1108 = vsel %vm1022, %v1002, 0
      %v1111 = vsel %vm1022, %v1007, 0
      %v1113 = vsel %vm1029, %v933, 0
      %1115 = vmatprep.subr.mxu0 0.0
      %1116 = vmatpush1.msra.mxu0 %v1113
      %1117 = vmatprep.subr.mxu0 0.0
      %1118 = vmatpush1.msra.mxu0 0.0
      %1119 = vmatprep.subr.mxu0 0.0
      %1120 = vmatpush1.msra.mxu0 0.0
      %1121 = vmatprep.subr.mxu0 0.0
      %1122 = vmatpush1.msra.mxu0 0.0
      %1123 = vmatprep.subr.mxu0 0.0
      %1124 = vmatpush1.msra.mxu0 0.0
      %1125 = vmatprep.subr.mxu0 0.0
      %1126 = vmatpush1.msra.mxu0 0.0
      %1127 = vmatprep.subr.mxu0 0.0
      %1128 = vmatpush1.msra.mxu0 0.0
      %1129 = vmatprep.subr.mxu0 0.0
      %1130 = vmatpush1.msra.mxu0 0.0
      %1131 = vmatprep.subr.mxu0 0.0
      %1132 = vmatpush1.msra.mxu0 0.0
      %1133 = vmatprep.subr.mxu0 0.0
      %1134 = vmatpush1.msra.mxu0 0.0
      %1135 = vmatprep.subr.mxu0 0.0
      %1136 = vmatpush1.msra.mxu0 0.0
      %1137 = vmatprep.subr.mxu0 0.0
      %1138 = vmatpush1.msra.mxu0 0.0
      %1139 = vmatprep.subr.mxu0 0.0
      %1140 = vmatpush1.msra.mxu0 0.0
      %1141 = vmatprep.subr.mxu0 0.0
      %1142 = vmatpush1.msra.mxu0 0.0
      %1143 = vmatprep.subr.mxu0 0.0
      %1144 = vmatpush1.msra.mxu0 0.0
      %1145 = vmatprep.subr.mxu0 0.0
      %1146 = vmatpush1.msra.mxu0 0.0
      %1147 = vmatprep.subr.mxu0 0.0
      %1148 = vmatpush1.msra.mxu0 0.0
      %1149 = vmatprep.subr.mxu0 0.0
      %1150 = vmatpush1.msra.mxu0 0.0
      %1151 = vmatprep.subr.mxu0 0.0
      %1152 = vmatpush1.msra.mxu0 0.0
      %1153 = vmatprep.subr.mxu0 0.0
      %1154 = vmatpush1.msra.mxu0 0.0
      %1155 = vmatprep.subr.mxu0 0.0
      %1156 = vmatpush1.msra.mxu0 0.0
      %1157 = vmatprep.subr.mxu0 0.0
      %1158 = vmatpush1.msra.mxu0 0.0
      %1159 = vmatprep.subr.mxu0 0.0
      %1160 = vmatpush1.msra.mxu0 0.0
      %1161 = vmatprep.subr.mxu0 0.0
      %1162 = vmatpush1.msra.mxu0 0.0
      %1163 = vmatprep.subr.mxu0 0.0
      %1164 = vmatpush1.msra.mxu0 0.0
      %1165 = vmatprep.subr.mxu0 0.0
      %1166 = vmatpush1.msra.mxu0 0.0
      %1167 = vmatprep.subr.mxu0 0.0
      %1168 = vmatpush1.msra.mxu0 0.0
      %1169 = vmatprep.subr.mxu0 0.0
      %1170 = vmatpush1.msra.mxu0 0.0
      %1171 = vmatprep.subr.mxu0 0.0
      %1172 = vmatpush1.msra.mxu0 0.0
      %1173 = vmatprep.subr.mxu0 0.0
      %1174 = vmatpush1.msra.mxu0 0.0
      %1175 = vmatprep.subr.mxu0 0.0
      %1176 = vmatpush1.msra.mxu0 0.0
      %1177 = vmatprep.subr.mxu0 0.0
      %1178 = vmatpush1.msra.mxu0 0.0
      %1179 = vmatprep.mubr.f32.mxu0 0.0
      %1180 = vmatmul.mubr.f32.gmra.mrb[0].mxu0 %v1108
      %v1181 = vpop.f32.mrb[0].mxu0
      %v1182 = vadd.f32 %v1099, %v1181
      %v1183 = vpop.f32.mrb[0].mxu0
      %1184 = vmatprep.mubr.f32.mxu0 0.0
      %1185 = vmatmul.mubr.f32.gmra.mrb[0].mxu0 %v1111
      %v1186 = vpop.f32.mrb[0].mxu0
      %v1187 = vadd.f32 %v1104, %v1186
      %v1188 = vpop.f32.mrb[0].mxu0
      %1189 = vdwg.mxu0
      %v1191 = vlaneseq
      %v1192 = vshrl.u32 %v1191, 7
      %v1193 = vsub.s32 0, %v1192
      %v1194 = vrot.slane %v934, %v1193
      %v1196 = vadd.f32 %v1182, %v1194
      %v1197 = vadd.f32 %v1187, %v1194
      %v1198 = vmax.f32 %v1196, 0.0
      %v1199 = vmax.f32 %v1197, 0.0
      %v1200 = vld [vmem:[%s7] sm:$0xff]
      %v1201 = vld [vmem:[%s6] sm:$0x1]
      %1202 = vmatprep.subr.mxu0 0.0
      %1203 = vmatpush1.msra.mxu0 %v1198
      %1204 = vmatprep.subr.mxu0 0.0
      %1205 = vmatpush1.msra.mxu0 %v1199
      %1206 = vmatprep.subr.mxu0 0.0
      %1207 = vmatpush1.msra.mxu0 0.0
      %1208 = vmatprep.subr.mxu0 0.0
      %1209 = vmatpush1.msra.mxu0 0.0
      %1210 = vmatprep.subr.mxu0 0.0
      %1211 = vmatpush1.msra.mxu0 0.0
      %1212 = vmatprep.subr.mxu0 0.0
      %1213 = vmatpush1.msra.mxu0 0.0
      %1214 = vmatprep.subr.mxu0 0.0
      %1215 = vmatpush1.msra.mxu0 0.0
      %1216 = vmatprep.subr.mxu0 0.0
      %1217 = vmatpush1.msra.mxu0 0.0
      %1218 = vmatprep.subr.mxu0 0.0
      %1219 = vmatpush1.msra.mxu0 0.0
      %1220 = vmatprep.subr.mxu0 0.0
      %1221 = vmatpush1.msra.mxu0 0.0
      %1222 = vmatprep.subr.mxu0 0.0
      %1223 = vmatpush1.msra.mxu0 0.0
      %1224 = vmatprep.subr.mxu0 0.0
      %1225 = vmatpush1.msra.mxu0 0.0
      %1226 = vmatprep.subr.mxu0 0.0
      %1227 = vmatpush1.msra.mxu0 0.0
      %1228 = vmatprep.subr.mxu0 0.0
      %1229 = vmatpush1.msra.mxu0 0.0
      %1230 = vmatprep.subr.mxu0 0.0
      %1231 = vmatpush1.msra.mxu0 0.0
      %1232 = vmatprep.subr.mxu0 0.0
      %1233 = vmatpush1.msra.mxu0 0.0
      %1234 = vmatprep.subr.mxu0 0.0
      %1235 = vmatpush1.msra.mxu0 0.0
      %1236 = vmatprep.subr.mxu0 0.0
      %1237 = vmatpush1.msra.mxu0 0.0
      %1238 = vmatprep.subr.mxu0 0.0
      %1239 = vmatpush1.msra.mxu0 0.0
      %1240 = vmatprep.subr.mxu0 0.0
      %1241 = vmatpush1.msra.mxu0 0.0
      %1242 = vmatprep.subr.mxu0 0.0
      %1243 = vmatpush1.msra.mxu0 0.0
      %1244 = vmatprep.subr.mxu0 0.0
      %1245 = vmatpush1.msra.mxu0 0.0
      %1246 = vmatprep.subr.mxu0 0.0
      %1247 = vmatpush1.msra.mxu0 0.0
      %1248 = vmatprep.subr.mxu0 0.0
      %1249 = vmatpush1.msra.mxu0 0.0
      %1250 = vmatprep.subr.mxu0 0.0
      %1251 = vmatpush1.msra.mxu0 0.0
      %1252 = vmatprep.subr.mxu0 0.0
      %1253 = vmatpush1.msra.mxu0 0.0
      %1254 = vmatprep.subr.mxu0 0.0
      %1255 = vmatpush1.msra.mxu0 0.0
      %1256 = vmatprep.subr.mxu0 0.0
      %1257 = vmatpush1.msra.mxu0 0.0
      %1258 = vmatprep.subr.mxu0 0.0
      %1259 = vmatpush1.msra.mxu0 0.0
      %1260 = vmatprep.subr.mxu0 0.0
      %1261 = vmatpush1.msra.mxu0 0.0
      %1262 = vmatprep.subr.mxu0 0.0
      %1263 = vmatpush1.msra.mxu0 0.0
      %1264 = vmatprep.subr.mxu0 0.0
      %1265 = vmatpush1.msra.mxu0 0.0
      %1266 = vmatprep.mubr.f32.mxu0 0.0
      %1267 = vmatmul.mubr.f32.gmra.mrb[0].mxu0 %v665
      %v1268 = vpop.f32.mrb[0].mxu0
      %v1269 = vadd.f32 0.0, %v1268
      %v1270 = vpop.f32.mrb[0].mxu0
      %1271 = vmatprep.mubr.f32.mxu0 0.0
      %1272 = vmatmul.mubr.f32.gmra.mrb[0].mxu0 %v668
      %v1273 = vpop.f32.mrb[0].mxu0
      %v1274 = vadd.f32 0.0, %v1273
      %v1275 = vpop.f32.mrb[0].mxu0
      %1276 = vmatprep.mubr.f32.mxu0 0.0
      %1277 = vmatmul.mubr.f32.gmra.mrb[0].mxu0 %v671
      %v1278 = vpop.f32.mrb[0].mxu0
      %v1279 = vadd.f32 0.0, %v1278
      %v1280 = vpop.f32.mrb[0].mxu0
      %1281 = vmatprep.mubr.f32.mxu0 0.0
      %1282 = vmatmul.mubr.f32.gmra.mrb[0].mxu0 %v674
      %v1283 = vpop.f32.mrb[0].mxu0
      %v1284 = vadd.f32 0.0, %v1283
      %v1285 = vpop.f32.mrb[0].mxu0
      %1286 = vdwg.mxu0
      %v1288 = vrot.slane %v1200, 4
      %v1290 = vsel %vm1022, %v1279, 0
      %v1293 = vsel %vm1022, %v1284, 0
      %v1295 = vsel %vm1029, %v1288, 0
      %1297 = vmatprep.subr.mxu0 0.0
      %1298 = vmatpush1.msra.mxu0 %v1295
      %1299 = vmatprep.subr.mxu0 0.0
      %1300 = vmatpush1.msra.mxu0 0.0
      %1301 = vmatprep.subr.mxu0 0.0
      %1302 = vmatpush1.msra.mxu0 0.0
      %1303 = vmatprep.subr.mxu0 0.0
      %1304 = vmatpush1.msra.mxu0 0.0
      %1305 = vmatprep.subr.mxu0 0.0
      %1306 = vmatpush1.msra.mxu0 0.0
      %1307 = vmatprep.subr.mxu0 0.0
      %1308 = vmatpush1.msra.mxu0 0.0
      %1309 = vmatprep.subr.mxu0 0.0
      %1310 = vmatpush1.msra.mxu0 0.0
      %1311 = vmatprep.subr.mxu0 0.0
      %1312 = vmatpush1.msra.mxu0 0.0
      %1313 = vmatprep.subr.mxu0 0.0
      %1314 = vmatpush1.msra.mxu0 0.0
      %1315 = vmatprep.subr.mxu0 0.0
      %1316 = vmatpush1.msra.mxu0 0.0
      %1317 = vmatprep.subr.mxu0 0.0
      %1318 = vmatpush1.msra.mxu0 0.0
      %1319 = vmatprep.subr.mxu0 0.0
      %1320 = vmatpush1.msra.mxu0 0.0
      %1321 = vmatprep.subr.mxu0 0.0
      %1322 = vmatpush1.msra.mxu0 0.0
      %1323 = vmatprep.subr.mxu0 0.0
      %1324 = vmatpush1.msra.mxu0 0.0
      %1325 = vmatprep.subr.mxu0 0.0
      %1326 = vmatpush1.msra.mxu0 0.0
      %1327 = vmatprep.subr.mxu0 0.0
      %1328 = vmatpush1.msra.mxu0 0.0
      %1329 = vmatprep.subr.mxu0 0.0
      %1330 = vmatpush1.msra.mxu0 0.0
      %1331 = vmatprep.subr.mxu0 0.0
      %1332 = vmatpush1.msra.mxu0 0.0
      %1333 = vmatprep.subr.mxu0 0.0
      %1334 = vmatpush1.msra.mxu0 0.0
      %1335 = vmatprep.subr.mxu0 0.0
      %1336 = vmatpush1.msra.mxu0 0.0
      %1337 = vmatprep.subr.mxu0 0.0
      %1338 = vmatpush1.msra.mxu0 0.0
      %1339 = vmatprep.subr.mxu0 0.0
      %1340 = vmatpush1.msra.mxu0 0.0
      %1341 = vmatprep.subr.mxu0 0.0
      %1342 = vmatpush1.msra.mxu0 0.0
      %1343 = vmatprep.subr.mxu0 0.0
      %1344 = vmatpush1.msra.mxu0 0.0
      %1345 = vmatprep.subr.mxu0 0.0
      %1346 = vmatpush1.msra.mxu0 0.0
      %1347 = vmatprep.subr.mxu0 0.0
      %1348 = vmatpush1.msra.mxu0 0.0
      %1349 = vmatprep.subr.mxu0 0.0
      %1350 = vmatpush1.msra.mxu0 0.0
      %1351 = vmatprep.subr.mxu0 0.0
      %1352 = vmatpush1.msra.mxu0 0.0
      %1353 = vmatprep.subr.mxu0 0.0
      %1354 = vmatpush1.msra.mxu0 0.0
      %1355 = vmatprep.subr.mxu0 0.0
      %1356 = vmatpush1.msra.mxu0 0.0
      %1357 = vmatprep.subr.mxu0 0.0
      %1358 = vmatpush1.msra.mxu0 0.0
      %1359 = vmatprep.subr.mxu0 0.0
      %1360 = vmatpush1.msra.mxu0 0.0
      %1361 = vmatprep.mubr.f32.mxu0 0.0
      %1362 = vmatmul.mubr.f32.gmra.mrb[0].mxu0 %v1290
      %v1363 = vpop.f32.mrb[0].mxu0
      %v1364 = vadd.f32 0.0, %v1363
      %v1365 = vpop.f32.mrb[0].mxu0
      %1366 = vmatprep.mubr.f32.mxu0 0.0
      %1367 = vmatmul.mubr.f32.gmra.mrb[0].mxu0 %v1293
      %v1368 = vpop.f32.mrb[0].mxu0
      %v1369 = vadd.f32 0.0, %v1368
      %v1370 = vpop.f32.mrb[0].mxu0
      %1371 = vdwg.mxu0
      %v1373 = vsel %vm1022, %v1269, 0
      %v1376 = vsel %vm1022, %v1274, 0
      %v1378 = vsel %vm1029, %v1200, 0
      %1380 = vmatprep.subr.mxu0 0.0
      %1381 = vmatpush1.msra.mxu0 %v1378
      %1382 = vmatprep.subr.mxu0 0.0
      %1383 = vmatpush1.msra.mxu0 0.0
      %1384 = vmatprep.subr.mxu0 0.0
      %1385 = vmatpush1.msra.mxu0 0.0
      %1386 = vmatprep.subr.mxu0 0.0
      %1387 = vmatpush1.msra.mxu0 0.0
      %1388 = vmatprep.subr.mxu0 0.0
      %1389 = vmatpush1.msra.mxu0 0.0
      %1390 = vmatprep.subr.mxu0 0.0
      %1391 = vmatpush1.msra.mxu0 0.0
      %1392 = vmatprep.subr.mxu0 0.0
      %1393 = vmatpush1.msra.mxu0 0.0
      %1394 = vmatprep.subr.mxu0 0.0
      %1395 = vmatpush1.msra.mxu0 0.0
      %1396 = vmatprep.subr.mxu0 0.0
      %1397 = vmatpush1.msra.mxu0 0.0
      %1398 = vmatprep.subr.mxu0 0.0
      %1399 = vmatpush1.msra.mxu0 0.0
      %1400 = vmatprep.subr.mxu0 0.0
      %1401 = vmatpush1.msra.mxu0 0.0
      %1402 = vmatprep.subr.mxu0 0.0
      %1403 = vmatpush1.msra.mxu0 0.0
      %1404 = vmatprep.subr.mxu0 0.0
      %1405 = vmatpush1.msra.mxu0 0.0
      %1406 = vmatprep.subr.mxu0 0.0
      %1407 = vmatpush1.msra.mxu0 0.0
      %1408 = vmatprep.subr.mxu0 0.0
      %1409 = vmatpush1.msra.mxu0 0.0
      %1410 = vmatprep.subr.mxu0 0.0
      %1411 = vmatpush1.msra.mxu0 0.0
      %1412 = vmatprep.subr.mxu0 0.0
      %1413 = vmatpush1.msra.mxu0 0.0
      %1414 = vmatprep.subr.mxu0 0.0
      %1415 = vmatpush1.msra.mxu0 0.0
      %1416 = vmatprep.subr.mxu0 0.0
      %1417 = vmatpush1.msra.mxu0 0.0
      %1418 = vmatprep.subr.mxu0 0.0
      %1419 = vmatpush1.msra.mxu0 0.0
      %1420 = vmatprep.subr.mxu0 0.0
      %1421 = vmatpush1.msra.mxu0 0.0
      %1422 = vmatprep.subr.mxu0 0.0
      %1423 = vmatpush1.msra.mxu0 0.0
      %1424 = vmatprep.subr.mxu0 0.0
      %1425 = vmatpush1.msra.mxu0 0.0
      %1426 = vmatprep.subr.mxu0 0.0
      %1427 = vmatpush1.msra.mxu0 0.0
      %1428 = vmatprep.subr.mxu0 0.0
      %1429 = vmatpush1.msra.mxu0 0.0
      %1430 = vmatprep.subr.mxu0 0.0
      %1431 = vmatpush1.msra.mxu0 0.0
      %1432 = vmatprep.subr.mxu0 0.0
      %1433 = vmatpush1.msra.mxu0 0.0
      %1434 = vmatprep.subr.mxu0 0.0
      %1435 = vmatpush1.msra.mxu0 0.0
      %1436 = vmatprep.subr.mxu0 0.0
      %1437 = vmatpush1.msra.mxu0 0.0
      %1438 = vmatprep.subr.mxu0 0.0
      %1439 = vmatpush1.msra.mxu0 0.0
      %1440 = vmatprep.subr.mxu0 0.0
      %1441 = vmatpush1.msra.mxu0 0.0
      %1442 = vmatprep.subr.mxu0 0.0
      %1443 = vmatpush1.msra.mxu0 0.0
      %1444 = vmatprep.mubr.f32.mxu0 0.0
      %1445 = vmatmul.mubr.f32.gmra.mrb[0].mxu0 %v1373
      %v1446 = vpop.f32.mrb[0].mxu0
      %v1447 = vadd.f32 %v1364, %v1446
      %v1448 = vpop.f32.mrb[0].mxu0
      %1449 = vmatprep.mubr.f32.mxu0 0.0
      %1450 = vmatmul.mubr.f32.gmra.mrb[0].mxu0 %v1376
      %v1451 = vpop.f32.mrb[0].mxu0
      %v1452 = vadd.f32 %v1369, %v1451
      %v1453 = vpop.f32.mrb[0].mxu0
      %1454 = vdwg.mxu0
      %v1456 = vlaneseq
      %v1457 = vshrl.u32 %v1456, 7
      %v1458 = vsub.s32 0, %v1457
      %v1459 = vrot.slane %v1201, %v1458
      %v1461 = vadd.f32 %v1447, %v1459
      %v1462 = vadd.f32 %v1452, %v1459
      %v1463 = vld [vmem:[%s9] sm:$0xff]
      %v1464 = vld [vmem:[%s9 + $0x8] sm:$0xff]
      %v1465 = vld [vmem:[%s9 + $0x10] sm:$0xff]
      %v1466 = vld [vmem:[%s9 + $0x18] sm:$0xff]
      %v1467 = vld [vmem:[%s8] sm:$0x1]
      %1468 = vmatprep.subr.mxu0 0.0
      %1469 = vmatpush1.msra.mxu0 %v1465
      %1470 = vmatprep.subr.mxu0 0.0
      %1471 = vmatpush1.msra.mxu0 %v1466
      %1472 = vmatprep.subr.mxu0 0.0
      %1473 = vmatpush1.msra.mxu0 0.0
      %1474 = vmatprep.subr.mxu0 0.0
      %1475 = vmatpush1.msra.mxu0 0.0
      %1476 = vmatprep.subr.mxu0 0.0
      %1477 = vmatpush1.msra.mxu0 0.0
      %1478 = vmatprep.subr.mxu0 0.0
      %1479 = vmatpush1.msra.mxu0 0.0
      %1480 = vmatprep.subr.mxu0 0.0
      %1481 = vmatpush1.msra.mxu0 0.0
      %1482 = vmatprep.subr.mxu0 0.0
      %1483 = vmatpush1.msra.mxu0 0.0
      %1484 = vmatprep.subr.mxu0 0.0
      %1485 = vmatpush1.msra.mxu0 0.0
      %1486 = vmatprep.subr.mxu0 0.0
      %1487 = vmatpush1.msra.mxu0 0.0
      %1488 = vmatprep.subr.mxu0 0.0
      %1489 = vmatpush1.msra.mxu0 0.0
      %1490 = vmatprep.subr.mxu0 0.0
      %1491 = vmatpush1.msra.mxu0 0.0
      %1492 = vmatprep.subr.mxu0 0.0
      %1493 = vmatpush1.msra.mxu0 0.0
      %1494 = vmatprep.subr.mxu0 0.0
      %1495 = vmatpush1.msra.mxu0 0.0
      %1496 = vmatprep.subr.mxu0 0.0
      %1497 = vmatpush1.msra.mxu0 0.0
      %1498 = vmatprep.subr.mxu0 0.0
      %1499 = vmatpush1.msra.mxu0 0.0
      %1500 = vmatprep.subr.mxu0 0.0
      %1501 = vmatpush1.msra.mxu0 0.0
      %1502 = vmatprep.subr.mxu0 0.0
      %1503 = vmatpush1.msra.mxu0 0.0
      %1504 = vmatprep.subr.mxu0 0.0
      %1505 = vmatpush1.msra.mxu0 0.0
      %1506 = vmatprep.subr.mxu0 0.0
      %1507 = vmatpush1.msra.mxu0 0.0
      %1508 = vmatprep.subr.mxu0 0.0
      %1509 = vmatpush1.msra.mxu0 0.0
      %1510 = vmatprep.subr.mxu0 0.0
      %1511 = vmatpush1.msra.mxu0 0.0
      %1512 = vmatprep.subr.mxu0 0.0
      %1513 = vmatpush1.msra.mxu0 0.0
      %1514 = vmatprep.subr.mxu0 0.0
      %1515 = vmatpush1.msra.mxu0 0.0
      %1516 = vmatprep.subr.mxu0 0.0
      %1517 = vmatpush1.msra.mxu0 0.0
      %1518 = vmatprep.subr.mxu0 0.0
      %1519 = vmatpush1.msra.mxu0 0.0
      %1520 = vmatprep.subr.mxu0 0.0
      %1521 = vmatpush1.msra.mxu0 0.0
      %1522 = vmatprep.subr.mxu0 0.0
      %1523 = vmatpush1.msra.mxu0 0.0
      %1524 = vmatprep.subr.mxu0 0.0
      %1525 = vmatpush1.msra.mxu0 0.0
      %1526 = vmatprep.subr.mxu0 0.0
      %1527 = vmatpush1.msra.mxu0 0.0
      %1528 = vmatprep.subr.mxu0 0.0
      %1529 = vmatpush1.msra.mxu0 0.0
      %1530 = vmatprep.subr.mxu0 0.0
      %1531 = vmatpush1.msra.mxu0 0.0
      %1532 = vmatprep.mubr.f32.mxu0 0.0
      %1533 = vmatmul.mubr.f32.gmra.mrb[0].mxu0 %v762
      %v1534 = vpop.f32.mrb[0].mxu0
      %v1535 = vadd.f32 0.0, %v1534
      %v1536 = vpop.f32.mrb[0].mxu0
      %1537 = vmatprep.mubr.f32.mxu0 0.0
      %1538 = vmatmul.mubr.f32.gmra.mrb[0].mxu0 %v765
      %v1539 = vpop.f32.mrb[0].mxu0
      %v1540 = vadd.f32 0.0, %v1539
      %v1541 = vpop.f32.mrb[0].mxu0
      %1542 = vdwg.mxu0
      %1543 = vmatprep.subr.mxu0 0.0
      %1544 = vmatpush1.msra.mxu0 %v1463
      %1545 = vmatprep.subr.mxu0 0.0
      %1546 = vmatpush1.msra.mxu0 %v1464
      %1547 = vmatprep.subr.mxu0 0.0
      %1548 = vmatpush1.msra.mxu0 0.0
      %1549 = vmatprep.subr.mxu0 0.0
      %1550 = vmatpush1.msra.mxu0 0.0
      %1551 = vmatprep.subr.mxu0 0.0
      %1552 = vmatpush1.msra.mxu0 0.0
      %1553 = vmatprep.subr.mxu0 0.0
      %1554 = vmatpush1.msra.mxu0 0.0
      %1555 = vmatprep.subr.mxu0 0.0
      %1556 = vmatpush1.msra.mxu0 0.0
      %1557 = vmatprep.subr.mxu0 0.0
      %1558 = vmatpush1.msra.mxu0 0.0
      %1559 = vmatprep.subr.mxu0 0.0
      %1560 = vmatpush1.msra.mxu0 0.0
      %1561 = vmatprep.subr.mxu0 0.0
      %1562 = vmatpush1.msra.mxu0 0.0
      %1563 = vmatprep.subr.mxu0 0.0
      %1564 = vmatpush1.msra.mxu0 0.0
      %1565 = vmatprep.subr.mxu0 0.0
      %1566 = vmatpush1.msra.mxu0 0.0
      %1567 = vmatprep.subr.mxu0 0.0
      %1568 = vmatpush1.msra.mxu0 0.0
      %1569 = vmatprep.subr.mxu0 0.0
      %1570 = vmatpush1.msra.mxu0 0.0
      %1571 = vmatprep.subr.mxu0 0.0
      %1572 = vmatpush1.msra.mxu0 0.0
      %1573 = vmatprep.subr.mxu0 0.0
      %1574 = vmatpush1.msra.mxu0 0.0
      %1575 = vmatprep.subr.mxu0 0.0
      %1576 = vmatpush1.msra.mxu0 0.0
      %1577 = vmatprep.subr.mxu0 0.0
      %1578 = vmatpush1.msra.mxu0 0.0
      %1579 = vmatprep.subr.mxu0 0.0
      %1580 = vmatpush1.msra.mxu0 0.0
      %1581 = vmatprep.subr.mxu0 0.0
      %1582 = vmatpush1.msra.mxu0 0.0
      %1583 = vmatprep.subr.mxu0 0.0
      %1584 = vmatpush1.msra.mxu0 0.0
      %1585 = vmatprep.subr.mxu0 0.0
      %1586 = vmatpush1.msra.mxu0 0.0
      %1587 = vmatprep.subr.mxu0 0.0
      %1588 = vmatpush1.msra.mxu0 0.0
      %1589 = vmatprep.subr.mxu0 0.0
      %1590 = vmatpush1.msra.mxu0 0.0
      %1591 = vmatprep.subr.mxu0 0.0
      %1592 = vmatpush1.msra.mxu0 0.0
      %1593 = vmatprep.subr.mxu0 0.0
      %1594 = vmatpush1.msra.mxu0 0.0
      %1595 = vmatprep.subr.mxu0 0.0
      %1596 = vmatpush1.msra.mxu0 0.0
      %1597 = vmatprep.subr.mxu0 0.0
      %1598 = vmatpush1.msra.mxu0 0.0
      %1599 = vmatprep.subr.mxu0 0.0
      %1600 = vmatpush1.msra.mxu0 0.0
      %1601 = vmatprep.subr.mxu0 0.0
      %1602 = vmatpush1.msra.mxu0 0.0
      %1603 = vmatprep.subr.mxu0 0.0
      %1604 = vmatpush1.msra.mxu0 0.0
      %1605 = vmatprep.subr.mxu0 0.0
      %1606 = vmatpush1.msra.mxu0 0.0
      %1607 = vmatprep.mubr.f32.mxu0 0.0
      %1608 = vmatmul.mubr.f32.gmra.mrb[0].mxu0 %v843
      %v1609 = vpop.f32.mrb[0].mxu0
      %v1610 = vadd.f32 %v1535, %v1609
      %v1611 = vpop.f32.mrb[0].mxu0
      %1612 = vmatprep.mubr.f32.mxu0 0.0
      %1613 = vmatmul.mubr.f32.gmra.mrb[0].mxu0 %v846
      %v1614 = vpop.f32.mrb[0].mxu0
      %v1615 = vadd.f32 %v1540, %v1614
      %v1616 = vpop.f32.mrb[0].mxu0
      %1617 = vdwg.mxu0
      %v1619 = vlaneseq
      %v1620 = vshrl.u32 %v1619, 7
      %v1621 = vsub.s32 0, %v1620
      %v1622 = vrot.slane %v1467, %v1621
      %v1624 = vadd.f32 %v1610, %v1622
      %v1625 = vadd.f32 %v1615, %v1622
      %v1626 = vadd.f32 %v1461, %v1624
      %v1627 = vadd.f32 %v1462, %v1625
      %v1628 = vmax.f32 %v1626, 0.0
      %v1629 = vmax.f32 %v1627, 0.0
      %v1630 = vld [vmem:[%s11] sm:$0xff]
      %v1631 = vld [vmem:[%s11 + $0x8] sm:$0xff]
      %v1632 = vld [vmem:[%s11 + $0x10] sm:$0xff]
      %v1633 = vld [vmem:[%s11 + $0x18] sm:$0xff]
      %v1634 = vld [vmem:[%s10] sm:$0x1]
      %1635 = vmatprep.subr.mxu0 0.0
      %1636 = vmatpush1.msra.mxu0 %v1628
      %1637 = vmatprep.subr.mxu0 0.0
      %1638 = vmatpush1.msra.mxu0 %v1629
      %1639 = vmatprep.subr.mxu0 0.0
      %1640 = vmatpush1.msra.mxu0 0.0
      %1641 = vmatprep.subr.mxu0 0.0
      %1642 = vmatpush1.msra.mxu0 0.0
      %1643 = vmatprep.subr.mxu0 0.0
      %1644 = vmatpush1.msra.mxu0 0.0
      %1645 = vmatprep.subr.mxu0 0.0
      %1646 = vmatpush1.msra.mxu0 0.0
      %1647 = vmatprep.subr.mxu0 0.0
      %1648 = vmatpush1.msra.mxu0 0.0
      %1649 = vmatprep.subr.mxu0 0.0
      %1650 = vmatpush1.msra.mxu0 0.0
      %1651 = vmatprep.subr.mxu0 0.0
      %1652 = vmatpush1.msra.mxu0 0.0
      %1653 = vmatprep.subr.mxu0 0.0
      %1654 = vmatpush1.msra.mxu0 0.0
      %1655 = vmatprep.subr.mxu0 0.0
      %1656 = vmatpush1.msra.mxu0 0.0
      %1657 = vmatprep.subr.mxu0 0.0
      %1658 = vmatpush1.msra.mxu0 0.0
      %1659 = vmatprep.subr.mxu0 0.0
      %1660 = vmatpush1.msra.mxu0 0.0
      %1661 = vmatprep.subr.mxu0 0.0
      %1662 = vmatpush1.msra.mxu0 0.0
      %1663 = vmatprep.subr.mxu0 0.0
      %1664 = vmatpush1.msra.mxu0 0.0
      %1665 = vmatprep.subr.mxu0 0.0
      %1666 = vmatpush1.msra.mxu0 0.0
      %1667 = vmatprep.subr.mxu0 0.0
      %1668 = vmatpush1.msra.mxu0 0.0
      %1669 = vmatprep.subr.mxu0 0.0
      %1670 = vmatpush1.msra.mxu0 0.0
      %1671 = vmatprep.subr.mxu0 0.0
      %1672 = vmatpush1.msra.mxu0 0.0
      %1673 = vmatprep.subr.mxu0 0.0
      %1674 = vmatpush1.msra.mxu0 0.0
      %1675 = vmatprep.subr.mxu0 0.0
      %1676 = vmatpush1.msra.mxu0 0.0
      %1677 = vmatprep.subr.mxu0 0.0
      %1678 = vmatpush1.msra.mxu0 0.0
      %1679 = vmatprep.subr.mxu0 0.0
      %1680 = vmatpush1.msra.mxu0 0.0
      %1681 = vmatprep.subr.mxu0 0.0
      %1682 = vmatpush1.msra.mxu0 0.0
      %1683 = vmatprep.subr.mxu0 0.0
      %1684 = vmatpush1.msra.mxu0 0.0
      %1685 = vmatprep.subr.mxu0 0.0
      %1686 = vmatpush1.msra.mxu0 0.0
      %1687 = vmatprep.subr.mxu0 0.0
      %1688 = vmatpush1.msra.mxu0 0.0
      %1689 = vmatprep.subr.mxu0 0.0
      %1690 = vmatpush1.msra.mxu0 0.0
      %1691 = vmatprep.subr.mxu0 0.0
      %1692 = vmatpush1.msra.mxu0 0.0
      %1693 = vmatprep.subr.mxu0 0.0
      %1694 = vmatpush1.msra.mxu0 0.0
      %1695 = vmatprep.subr.mxu0 0.0
      %1696 = vmatpush1.msra.mxu0 0.0
      %1697 = vmatprep.subr.mxu0 0.0
      %1698 = vmatpush1.msra.mxu0 0.0
      %1699 = vmatprep.mubr.f32.mxu0 0.0
      %1700 = vmatmul.mubr.f32.gmra.mrb[0].mxu0 %v665
      %v1701 = vpop.f32.mrb[0].mxu0
      %v1702 = vadd.f32 0.0, %v1701
      %v1703 = vpop.f32.mrb[0].mxu0
      %1704 = vmatprep.mubr.f32.mxu0 0.0
      %1705 = vmatmul.mubr.f32.gmra.mrb[0].mxu0 %v668
      %v1706 = vpop.f32.mrb[0].mxu0
      %v1707 = vadd.f32 0.0, %v1706
      %v1708 = vpop.f32.mrb[0].mxu0
      %1709 = vmatprep.mubr.f32.mxu0 0.0
      %1710 = vmatmul.mubr.f32.gmra.mrb[0].mxu0 %v671
      %v1711 = vpop.f32.mrb[0].mxu0
      %v1712 = vadd.f32 0.0, %v1711
      %v1713 = vpop.f32.mrb[0].mxu0
      %1714 = vmatprep.mubr.f32.mxu0 0.0
      %1715 = vmatmul.mubr.f32.gmra.mrb[0].mxu0 %v674
      %v1716 = vpop.f32.mrb[0].mxu0
      %v1717 = vadd.f32 0.0, %v1716
      %v1718 = vpop.f32.mrb[0].mxu0
      %1719 = vdwg.mxu0
      %v1721 = vsel %vm663, %v1712, 0
      %v1724 = vsel %vm663, %v1717, 0
      %1726 = vmatprep.subr.mxu0 0.0
      %1727 = vmatpush1.msra.mxu0 %v1632
      %1728 = vmatprep.subr.mxu0 0.0
      %1729 = vmatpush1.msra.mxu0 %v1633
      %1730 = vmatprep.subr.mxu0 0.0
      %1731 = vmatpush1.msra.mxu0 0.0
      %1732 = vmatprep.subr.mxu0 0.0
      %1733 = vmatpush1.msra.mxu0 0.0
      %1734 = vmatprep.subr.mxu0 0.0
      %1735 = vmatpush1.msra.mxu0 0.0
      %1736 = vmatprep.subr.mxu0 0.0
      %1737 = vmatpush1.msra.mxu0 0.0
      %1738 = vmatprep.subr.mxu0 0.0
      %1739 = vmatpush1.msra.mxu0 0.0
      %1740 = vmatprep.subr.mxu0 0.0
      %1741 = vmatpush1.msra.mxu0 0.0
      %1742 = vmatprep.subr.mxu0 0.0
      %1743 = vmatpush1.msra.mxu0 0.0
      %1744 = vmatprep.subr.mxu0 0.0
      %1745 = vmatpush1.msra.mxu0 0.0
      %1746 = vmatprep.subr.mxu0 0.0
      %1747 = vmatpush1.msra.mxu0 0.0
      %1748 = vmatprep.subr.mxu0 0.0
      %1749 = vmatpush1.msra.mxu0 0.0
      %1750 = vmatprep.subr.mxu0 0.0
      %1751 = vmatpush1.msra.mxu0 0.0
      %1752 = vmatprep.subr.mxu0 0.0
      %1753 = vmatpush1.msra.mxu0 0.0
      %1754 = vmatprep.subr.mxu0 0.0
      %1755 = vmatpush1.msra.mxu0 0.0
      %1756 = vmatprep.subr.mxu0 0.0
      %1757 = vmatpush1.msra.mxu0 0.0
      %1758 = vmatprep.subr.mxu0 0.0
      %1759 = vmatpush1.msra.mxu0 0.0
      %1760 = vmatprep.subr.mxu0 0.0
      %1761 = vmatpush1.msra.mxu0 0.0
      %1762 = vmatprep.subr.mxu0 0.0
      %1763 = vmatpush1.msra.mxu0 0.0
      %1764 = vmatprep.subr.mxu0 0.0
      %1765 = vmatpush1.msra.mxu0 0.0
      %1766 = vmatprep.subr.mxu0 0.0
      %1767 = vmatpush1.msra.mxu0 0.0
      %1768 = vmatprep.subr.mxu0 0.0
      %1769 = vmatpush1.msra.mxu0 0.0
      %1770 = vmatprep.subr.mxu0 0.0
      %1771 = vmatpush1.msra.mxu0 0.0
      %1772 = vmatprep.subr.mxu0 0.0
      %1773 = vmatpush1.msra.mxu0 0.0
      %1774 = vmatprep.subr.mxu0 0.0
      %1775 = vmatpush1.msra.mxu0 0.0
      %1776 = vmatprep.subr.mxu0 0.0
      %1777 = vmatpush1.msra.mxu0 0.0
      %1778 = vmatprep.subr.mxu0 0.0
      %1779 = vmatpush1.msra.mxu0 0.0
      %1780 = vmatprep.subr.mxu0 0.0
      %1781 = vmatpush1.msra.mxu0 0.0
      %1782 = vmatprep.subr.mxu0 0.0
      %1783 = vmatpush1.msra.mxu0 0.0
      %1784 = vmatprep.subr.mxu0 0.0
      %1785 = vmatpush1.msra.mxu0 0.0
      %1786 = vmatprep.subr.mxu0 0.0
      %1787 = vmatpush1.msra.mxu0 0.0
      %1788 = vmatprep.subr.mxu0 0.0
      %1789 = vmatpush1.msra.mxu0 0.0
      %1790 = vmatprep.mubr.f32.mxu0 0.0
      %1791 = vmatmul.mubr.f32.gmra.mrb[0].mxu0 %v1721
      %v1792 = vpop.f32.mrb[0].mxu0
      %v1793 = vadd.f32 0.0, %v1792
      %v1794 = vpop.f32.mrb[0].mxu0
      %1795 = vmatprep.mubr.f32.mxu0 0.0
      %1796 = vmatmul.mubr.f32.gmra.mrb[0].mxu0 %v1724
      %v1797 = vpop.f32.mrb[0].mxu0
      %v1798 = vadd.f32 0.0, %v1797
      %v1799 = vpop.f32.mrb[0].mxu0
      %1800 = vdwg.mxu0
      %v1802 = vsel %vm663, %v1702, 0
      %v1805 = vsel %vm663, %v1707, 0
      %1807 = vmatprep.subr.mxu0 0.0
      %1808 = vmatpush1.msra.mxu0 %v1630
      %1809 = vmatprep.subr.mxu0 0.0
      %1810 = vmatpush1.msra.mxu0 %v1631
      %1811 = vmatprep.subr.mxu0 0.0
      %1812 = vmatpush1.msra.mxu0 0.0
      %1813 = vmatprep.subr.mxu0 0.0
      %1814 = vmatpush1.msra.mxu0 0.0
      %1815 = vmatprep.subr.mxu0 0.0
      %1816 = vmatpush1.msra.mxu0 0.0
      %1817 = vmatprep.subr.mxu0 0.0
      %1818 = vmatpush1.msra.mxu0 0.0
      %1819 = vmatprep.subr.mxu0 0.0
      %1820 = vmatpush1.msra.mxu0 0.0
      %1821 = vmatprep.subr.mxu0 0.0
      %1822 = vmatpush1.msra.mxu0 0.0
      %1823 = vmatprep.subr.mxu0 0.0
      %1824 = vmatpush1.msra.mxu0 0.0
      %1825 = vmatprep.subr.mxu0 0.0
      %1826 = vmatpush1.msra.mxu0 0.0
      %1827 = vmatprep.subr.mxu0 0.0
      %1828 = vmatpush1.msra.mxu0 0.0
      %1829 = vmatprep.subr.mxu0 0.0
      %1830 = vmatpush1.msra.mxu0 0.0
      %1831 = vmatprep.subr.mxu0 0.0
      %1832 = vmatpush1.msra.mxu0 0.0
      %1833 = vmatprep.subr.mxu0 0.0
      %1834 = vmatpush1.msra.mxu0 0.0
      %1835 = vmatprep.subr.mxu0 0.0
      %1836 = vmatpush1.msra.mxu0 0.0
      %1837 = vmatprep.subr.mxu0 0.0
      %1838 = vmatpush1.msra.mxu0 0.0
      %1839 = vmatprep.subr.mxu0 0.0
      %1840 = vmatpush1.msra.mxu0 0.0
      %1841 = vmatprep.subr.mxu0 0.0
      %1842 = vmatpush1.msra.mxu0 0.0
      %1843 = vmatprep.subr.mxu0 0.0
      %1844 = vmatpush1.msra.mxu0 0.0
      %1845 = vmatprep.subr.mxu0 0.0
      %1846 = vmatpush1.msra.mxu0 0.0
      %1847 = vmatprep.subr.mxu0 0.0
      %1848 = vmatpush1.msra.mxu0 0.0
      %1849 = vmatprep.subr.mxu0 0.0
      %1850 = vmatpush1.msra.mxu0 0.0
      %1851 = vmatprep.subr.mxu0 0.0
      %1852 = vmatpush1.msra.mxu0 0.0
      %1853 = vmatprep.subr.mxu0 0.0
      %1854 = vmatpush1.msra.mxu0 0.0
      %1855 = vmatprep.subr.mxu0 0.0
      %1856 = vmatpush1.msra.mxu0 0.0
      %1857 = vmatprep.subr.mxu0 0.0
      %1858 = vmatpush1.msra.mxu0 0.0
      %1859 = vmatprep.subr.mxu0 0.0
      %1860 = vmatpush1.msra.mxu0 0.0
      %1861 = vmatprep.subr.mxu0 0.0
      %1862 = vmatpush1.msra.mxu0 0.0
      %1863 = vmatprep.subr.mxu0 0.0
      %1864 = vmatpush1.msra.mxu0 0.0
      %1865 = vmatprep.subr.mxu0 0.0
      %1866 = vmatpush1.msra.mxu0 0.0
      %1867 = vmatprep.subr.mxu0 0.0
      %1868 = vmatpush1.msra.mxu0 0.0
      %1869 = vmatprep.subr.mxu0 0.0
      %1870 = vmatpush1.msra.mxu0 0.0
      %1871 = vmatprep.mubr.f32.mxu0 0.0
      %1872 = vmatmul.mubr.f32.gmra.mrb[0].mxu0 %v1802
      %v1873 = vpop.f32.mrb[0].mxu0
      %v1874 = vadd.f32 %v1793, %v1873
      %v1875 = vpop.f32.mrb[0].mxu0
      %1876 = vmatprep.mubr.f32.mxu0 0.0
      %1877 = vmatmul.mubr.f32.gmra.mrb[0].mxu0 %v1805
      %v1878 = vpop.f32.mrb[0].mxu0
      %v1879 = vadd.f32 %v1798, %v1878
      %v1880 = vpop.f32.mrb[0].mxu0
      %1881 = vdwg.mxu0
      %v1883 = vlaneseq
      %v1884 = vshrl.u32 %v1883, 7
      %v1885 = vsub.s32 0, %v1884
      %v1886 = vrot.slane %v1634, %v1885
      %v1888 = vadd.f32 %v1874, %v1886
      %v1889 = vadd.f32 %v1879, %v1886
      %v1890 = vmax.f32 %v1888, 0.0
      %v1891 = vmax.f32 %v1889, 0.0
      %v1892 = vld [vmem:[%s13] sm:$0xff]
      %v1893 = vld [vmem:[%s12] sm:$0x1]
      %1894 = vmatprep.subr.mxu0 0.0
      %1895 = vmatpush1.msra.mxu0 %v1890
      %1896 = vmatprep.subr.mxu0 0.0
      %1897 = vmatpush1.msra.mxu0 %v1891
      %1898 = vmatprep.subr.mxu0 0.0
      %1899 = vmatpush1.msra.mxu0 0.0
      %1900 = vmatprep.subr.mxu0 0.0
      %1901 = vmatpush1.msra.mxu0 0.0
      %1902 = vmatprep.subr.mxu0 0.0
      %1903 = vmatpush1.msra.mxu0 0.0
      %1904 = vmatprep.subr.mxu0 0.0
      %1905 = vmatpush1.msra.mxu0 0.0
      %1906 = vmatprep.subr.mxu0 0.0
      %1907 = vmatpush1.msra.mxu0 0.0
      %1908 = vmatprep.subr.mxu0 0.0
      %1909 = vmatpush1.msra.mxu0 0.0
      %1910 = vmatprep.subr.mxu0 0.0
      %1911 = vmatpush1.msra.mxu0 0.0
      %1912 = vmatprep.subr.mxu0 0.0
      %1913 = vmatpush1.msra.mxu0 0.0
      %1914 = vmatprep.subr.mxu0 0.0
      %1915 = vmatpush1.msra.mxu0 0.0
      %1916 = vmatprep.subr.mxu0 0.0
      %1917 = vmatpush1.msra.mxu0 0.0
      %1918 = vmatprep.subr.mxu0 0.0
      %1919 = vmatpush1.msra.mxu0 0.0
      %1920 = vmatprep.subr.mxu0 0.0
      %1921 = vmatpush1.msra.mxu0 0.0
      %1922 = vmatprep.subr.mxu0 0.0
      %1923 = vmatpush1.msra.mxu0 0.0
      %1924 = vmatprep.subr.mxu0 0.0
      %1925 = vmatpush1.msra.mxu0 0.0
      %1926 = vmatprep.subr.mxu0 0.0
      %1927 = vmatpush1.msra.mxu0 0.0
      %1928 = vmatprep.subr.mxu0 0.0
      %1929 = vmatpush1.msra.mxu0 0.0
      %1930 = vmatprep.subr.mxu0 0.0
      %1931 = vmatpush1.msra.mxu0 0.0
      %1932 = vmatprep.subr.mxu0 0.0
      %1933 = vmatpush1.msra.mxu0 0.0
      %1934 = vmatprep.subr.mxu0 0.0
      %1935 = vmatpush1.msra.mxu0 0.0
      %1936 = vmatprep.subr.mxu0 0.0
      %1937 = vmatpush1.msra.mxu0 0.0
      %1938 = vmatprep.subr.mxu0 0.0
      %1939 = vmatpush1.msra.mxu0 0.0
      %1940 = vmatprep.subr.mxu0 0.0
      %1941 = vmatpush1.msra.mxu0 0.0
      %1942 = vmatprep.subr.mxu0 0.0
      %1943 = vmatpush1.msra.mxu0 0.0
      %1944 = vmatprep.subr.mxu0 0.0
      %1945 = vmatpush1.msra.mxu0 0.0
      %1946 = vmatprep.subr.mxu0 0.0
      %1947 = vmatpush1.msra.mxu0 0.0
      %1948 = vmatprep.subr.mxu0 0.0
      %1949 = vmatpush1.msra.mxu0 0.0
      %1950 = vmatprep.subr.mxu0 0.0
      %1951 = vmatpush1.msra.mxu0 0.0
      %1952 = vmatprep.subr.mxu0 0.0
      %1953 = vmatpush1.msra.mxu0 0.0
      %1954 = vmatprep.subr.mxu0 0.0
      %1955 = vmatpush1.msra.mxu0 0.0
      %1956 = vmatprep.subr.mxu0 0.0
      %1957 = vmatpush1.msra.mxu0 0.0
      %1958 = vmatprep.mubr.f32.mxu0 0.0
      %1959 = vmatmul.mubr.f32.gmra.mrb[0].mxu0 %v665
      %v1960 = vpop.f32.mrb[0].mxu0
      %v1961 = vadd.f32 0.0, %v1960
      %v1962 = vpop.f32.mrb[0].mxu0
      %1963 = vmatprep.mubr.f32.mxu0 0.0
      %1964 = vmatmul.mubr.f32.gmra.mrb[0].mxu0 %v668
      %v1965 = vpop.f32.mrb[0].mxu0
      %v1966 = vadd.f32 0.0, %v1965
      %v1967 = vpop.f32.mrb[0].mxu0
      %1968 = vmatprep.mubr.f32.mxu0 0.0
      %1969 = vmatmul.mubr.f32.gmra.mrb[0].mxu0 %v671
      %v1970 = vpop.f32.mrb[0].mxu0
      %v1971 = vadd.f32 0.0, %v1970
      %v1972 = vpop.f32.mrb[0].mxu0
      %1973 = vmatprep.mubr.f32.mxu0 0.0
      %1974 = vmatmul.mubr.f32.gmra.mrb[0].mxu0 %v674
      %v1975 = vpop.f32.mrb[0].mxu0
      %v1976 = vadd.f32 0.0, %v1975
      %v1977 = vpop.f32.mrb[0].mxu0
      %1978 = vdwg.mxu0
      %v1980 = vrot.slane %v1892, 4
      %v1982 = vsel %vm1022, %v1971, 0
      %v1985 = vsel %vm1022, %v1976, 0
      %v1987 = vsel %vm1029, %v1980, 0
      %1989 = vmatprep.subr.mxu0 0.0
      %1990 = vmatpush1.msra.mxu0 %v1987
      %1991 = vmatprep.subr.mxu0 0.0
      %1992 = vmatpush1.msra.mxu0 0.0
      %1993 = vmatprep.subr.mxu0 0.0
      %1994 = vmatpush1.msra.mxu0 0.0
      %1995 = vmatprep.subr.mxu0 0.0
      %1996 = vmatpush1.msra.mxu0 0.0
      %1997 = vmatprep.subr.mxu0 0.0
      %1998 = vmatpush1.msra.mxu0 0.0
      %1999 = vmatprep.subr.mxu0 0.0
      %2000 = vmatpush1.msra.mxu0 0.0
      %2001 = vmatprep.subr.mxu0 0.0
      %2002 = vmatpush1.msra.mxu0 0.0
      %2003 = vmatprep.subr.mxu0 0.0
      %2004 = vmatpush1.msra.mxu0 0.0
      %2005 = vmatprep.subr.mxu0 0.0
      %2006 = vmatpush1.msra.mxu0 0.0
      %2007 = vmatprep.subr.mxu0 0.0
      %2008 = vmatpush1.msra.mxu0 0.0
      %2009 = vmatprep.subr.mxu0 0.0
      %2010 = vmatpush1.msra.mxu0 0.0
      %2011 = vmatprep.subr.mxu0 0.0
      %2012 = vmatpush1.msra.mxu0 0.0
      %2013 = vmatprep.subr.mxu0 0.0
      %2014 = vmatpush1.msra.mxu0 0.0
      %2015 = vmatprep.subr.mxu0 0.0
      %2016 = vmatpush1.msra.mxu0 0.0
      %2017 = vmatprep.subr.mxu0 0.0
      %2018 = vmatpush1.msra.mxu0 0.0
      %2019 = vmatprep.subr.mxu0 0.0
      %2020 = vmatpush1.msra.mxu0 0.0
      %2021 = vmatprep.subr.mxu0 0.0
      %2022 = vmatpush1.msra.mxu0 0.0
      %2023 = vmatprep.subr.mxu0 0.0
      %2024 = vmatpush1.msra.mxu0 0.0
      %2025 = vmatprep.subr.mxu0 0.0
      %2026 = vmatpush1.msra.mxu0 0.0
      %2027 = vmatprep.subr.mxu0 0.0
      %2028 = vmatpush1.msra.mxu0 0.0
      %2029 = vmatprep.subr.mxu0 0.0
      %2030 = vmatpush1.msra.mxu0 0.0
      %2031 = vmatprep.subr.mxu0 0.0
      %2032 = vmatpush1.msra.mxu0 0.0
      %2033 = vmatprep.subr.mxu0 0.0
      %2034 = vmatpush1.msra.mxu0 0.0
      %2035 = vmatprep.subr.mxu0 0.0
      %2036 = vmatpush1.msra.mxu0 0.0
      %2037 = vmatprep.subr.mxu0 0.0
      %2038 = vmatpush1.msra.mxu0 0.0
      %2039 = vmatprep.subr.mxu0 0.0
      %2040 = vmatpush1.msra.mxu0 0.0
      %2041 = vmatprep.subr.mxu0 0.0
      %2042 = vmatpush1.msra.mxu0 0.0
      %2043 = vmatprep.subr.mxu0 0.0
      %2044 = vmatpush1.msra.mxu0 0.0
      %2045 = vmatprep.subr.mxu0 0.0
      %2046 = vmatpush1.msra.mxu0 0.0
      %2047 = vmatprep.subr.mxu0 0.0
      %2048 = vmatpush1.msra.mxu0 0.0
      %2049 = vmatprep.subr.mxu0 0.0
      %2050 = vmatpush1.msra.mxu0 0.0
      %2051 = vmatprep.subr.mxu0 0.0
      %2052 = vmatpush1.msra.mxu0 0.0
      %2053 = vmatprep.mubr.f32.mxu0 0.0
      %2054 = vmatmul.mubr.f32.gmra.mrb[0].mxu0 %v1982
      %v2055 = vpop.f32.mrb[0].mxu0
      %v2056 = vadd.f32 0.0, %v2055
      %v2057 = vpop.f32.mrb[0].mxu0
      %2058 = vmatprep.mubr.f32.mxu0 0.0
      %2059 = vmatmul.mubr.f32.gmra.mrb[0].mxu0 %v1985
      %v2060 = vpop.f32.mrb[0].mxu0
      %v2061 = vadd.f32 0.0, %v2060
      %v2062 = vpop.f32.mrb[0].mxu0
      %2063 = vdwg.mxu0
      %v2065 = vsel %vm1022, %v1961, 0
      %v2068 = vsel %vm1022, %v1966, 0
      %v2070 = vsel %vm1029, %v1892, 0
      %2072 = vmatprep.subr.mxu0 0.0
      %2073 = vmatpush1.msra.mxu0 %v2070
      %2074 = vmatprep.subr.mxu0 0.0
      %2075 = vmatpush1.msra.mxu0 0.0
      %2076 = vmatprep.subr.mxu0 0.0
      %2077 = vmatpush1.msra.mxu0 0.0
      %2078 = vmatprep.subr.mxu0 0.0
      %2079 = vmatpush1.msra.mxu0 0.0
      %2080 = vmatprep.subr.mxu0 0.0
      %2081 = vmatpush1.msra.mxu0 0.0
      %2082 = vmatprep.subr.mxu0 0.0
      %2083 = vmatpush1.msra.mxu0 0.0
      %2084 = vmatprep.subr.mxu0 0.0
      %2085 = vmatpush1.msra.mxu0 0.0
      %2086 = vmatprep.subr.mxu0 0.0
      %2087 = vmatpush1.msra.mxu0 0.0
      %2088 = vmatprep.subr.mxu0 0.0
      %2089 = vmatpush1.msra.mxu0 0.0
      %2090 = vmatprep.subr.mxu0 0.0
      %2091 = vmatpush1.msra.mxu0 0.0
      %2092 = vmatprep.subr.mxu0 0.0
      %2093 = vmatpush1.msra.mxu0 0.0
      %2094 = vmatprep.subr.mxu0 0.0
      %2095 = vmatpush1.msra.mxu0 0.0
      %2096 = vmatprep.subr.mxu0 0.0
      %2097 = vmatpush1.msra.mxu0 0.0
      %2098 = vmatprep.subr.mxu0 0.0
      %2099 = vmatpush1.msra.mxu0 0.0
      %2100 = vmatprep.subr.mxu0 0.0
      %2101 = vmatpush1.msra.mxu0 0.0
      %2102 = vmatprep.subr.mxu0 0.0
      %2103 = vmatpush1.msra.mxu0 0.0
      %2104 = vmatprep.subr.mxu0 0.0
      %2105 = vmatpush1.msra.mxu0 0.0
      %2106 = vmatprep.subr.mxu0 0.0
      %2107 = vmatpush1.msra.mxu0 0.0
      %2108 = vmatprep.subr.mxu0 0.0
      %2109 = vmatpush1.msra.mxu0 0.0
      %2110 = vmatprep.subr.mxu0 0.0
      %2111 = vmatpush1.msra.mxu0 0.0
      %2112 = vmatprep.subr.mxu0 0.0
      %2113 = vmatpush1.msra.mxu0 0.0
      %2114 = vmatprep.subr.mxu0 0.0
      %2115 = vmatpush1.msra.mxu0 0.0
      %2116 = vmatprep.subr.mxu0 0.0
      %2117 = vmatpush1.msra.mxu0 0.0
      %2118 = vmatprep.subr.mxu0 0.0
      %2119 = vmatpush1.msra.mxu0 0.0
      %2120 = vmatprep.subr.mxu0 0.0
      %2121 = vmatpush1.msra.mxu0 0.0
      %2122 = vmatprep.subr.mxu0 0.0
      %2123 = vmatpush1.msra.mxu0 0.0
      %2124 = vmatprep.subr.mxu0 0.0
      %2125 = vmatpush1.msra.mxu0 0.0
      %2126 = vmatprep.subr.mxu0 0.0
      %2127 = vmatpush1.msra.mxu0 0.0
      %2128 = vmatprep.subr.mxu0 0.0
      %2129 = vmatpush1.msra.mxu0 0.0
      %2130 = vmatprep.subr.mxu0 0.0
      %2131 = vmatpush1.msra.mxu0 0.0
      %2132 = vmatprep.subr.mxu0 0.0
      %2133 = vmatpush1.msra.mxu0 0.0
      %2134 = vmatprep.subr.mxu0 0.0
      %2135 = vmatpush1.msra.mxu0 0.0
      %2136 = vmatprep.mubr.f32.mxu0 0.0
      %2137 = vmatmul.mubr.f32.gmra.mrb[0].mxu0 %v2065
      %v2138 = vpop.f32.mrb[0].mxu0
      %v2139 = vadd.f32 %v2056, %v2138
      %v2140 = vpop.f32.mrb[0].mxu0
      %2141 = vmatprep.mubr.f32.mxu0 0.0
      %2142 = vmatmul.mubr.f32.gmra.mrb[0].mxu0 %v2068
      %v2143 = vpop.f32.mrb[0].mxu0
      %v2144 = vadd.f32 %v2061, %v2143
      %v2145 = vpop.f32.mrb[0].mxu0
      %2146 = vdwg.mxu0
      %v2148 = vlaneseq
      %v2149 = vshrl.u32 %v2148, 7
      %v2150 = vsub.s32 0, %v2149
      %v2151 = vrot.slane %v1893, %v2150
      %v2153 = vadd.f32 %v2139, %v2151
      %v2154 = vadd.f32 %v2144, %v2151
      %v2155 = vmax.f32 %v2153, 0.0
      %v2156 = vmax.f32 %v2154, 0.0
      %v2157 = vld [vmem:[%s15] sm:$0xff]
      %v2158 = vld [vmem:[%s14] sm:$0x1]
      %2159 = vmatprep.subr.mxu0 0.0
      %2160 = vmatpush1.msra.mxu0 %v2155
      %2161 = vmatprep.subr.mxu0 0.0
      %2162 = vmatpush1.msra.mxu0 %v2156
      %2163 = vmatprep.subr.mxu0 0.0
      %2164 = vmatpush1.msra.mxu0 0.0
      %2165 = vmatprep.subr.mxu0 0.0
      %2166 = vmatpush1.msra.mxu0 0.0
      %2167 = vmatprep.subr.mxu0 0.0
      %2168 = vmatpush1.msra.mxu0 0.0
      %2169 = vmatprep.subr.mxu0 0.0
      %2170 = vmatpush1.msra.mxu0 0.0
      %2171 = vmatprep.subr.mxu0 0.0
      %2172 = vmatpush1.msra.mxu0 0.0
      %2173 = vmatprep.subr.mxu0 0.0
      %2174 = vmatpush1.msra.mxu0 0.0
      %2175 = vmatprep.subr.mxu0 0.0
      %2176 = vmatpush1.msra.mxu0 0.0
      %2177 = vmatprep.subr.mxu0 0.0
      %2178 = vmatpush1.msra.mxu0 0.0
      %2179 = vmatprep.subr.mxu0 0.0
      %2180 = vmatpush1.msra.mxu0 0.0
      %2181 = vmatprep.subr.mxu0 0.0
      %2182 = vmatpush1.msra.mxu0 0.0
      %2183 = vmatprep.subr.mxu0 0.0
      %2184 = vmatpush1.msra.mxu0 0.0
      %2185 = vmatprep.subr.mxu0 0.0
      %2186 = vmatpush1.msra.mxu0 0.0
      %2187 = vmatprep.subr.mxu0 0.0
      %2188 = vmatpush1.msra.mxu0 0.0
      %2189 = vmatprep.subr.mxu0 0.0
      %2190 = vmatpush1.msra.mxu0 0.0
      %2191 = vmatprep.subr.mxu0 0.0
      %2192 = vmatpush1.msra.mxu0 0.0
      %2193 = vmatprep.subr.mxu0 0.0
      %2194 = vmatpush1.msra.mxu0 0.0
      %2195 = vmatprep.subr.mxu0 0.0
      %2196 = vmatpush1.msra.mxu0 0.0
      %2197 = vmatprep.subr.mxu0 0.0
      %2198 = vmatpush1.msra.mxu0 0.0
      %2199 = vmatprep.subr.mxu0 0.0
      %2200 = vmatpush1.msra.mxu0 0.0
      %2201 = vmatprep.subr.mxu0 0.0
      %2202 = vmatpush1.msra.mxu0 0.0
      %2203 = vmatprep.subr.mxu0 0.0
      %2204 = vmatpush1.msra.mxu0 0.0
      %2205 = vmatprep.subr.mxu0 0.0
      %2206 = vmatpush1.msra.mxu0 0.0
      %2207 = vmatprep.subr.mxu0 0.0
      %2208 = vmatpush1.msra.mxu0 0.0
      %2209 = vmatprep.subr.mxu0 0.0
      %2210 = vmatpush1.msra.mxu0 0.0
      %2211 = vmatprep.subr.mxu0 0.0
      %2212 = vmatpush1.msra.mxu0 0.0
      %2213 = vmatprep.subr.mxu0 0.0
      %2214 = vmatpush1.msra.mxu0 0.0
      %2215 = vmatprep.subr.mxu0 0.0
      %2216 = vmatpush1.msra.mxu0 0.0
      %2217 = vmatprep.subr.mxu0 0.0
      %2218 = vmatpush1.msra.mxu0 0.0
      %2219 = vmatprep.subr.mxu0 0.0
      %2220 = vmatpush1.msra.mxu0 0.0
      %2221 = vmatprep.subr.mxu0 0.0
      %2222 = vmatpush1.msra.mxu0 0.0
      %2223 = vmatprep.mubr.f32.mxu0 0.0
      %2224 = vmatmul.mubr.f32.gmra.mrb[0].mxu0 %v665
      %v2225 = vpop.f32.mrb[0].mxu0
      %v2226 = vadd.f32 0.0, %v2225
      %v2227 = vpop.f32.mrb[0].mxu0
      %2228 = vmatprep.mubr.f32.mxu0 0.0
      %2229 = vmatmul.mubr.f32.gmra.mrb[0].mxu0 %v668
      %v2230 = vpop.f32.mrb[0].mxu0
      %v2231 = vadd.f32 0.0, %v2230
      %v2232 = vpop.f32.mrb[0].mxu0
      %2233 = vmatprep.mubr.f32.mxu0 0.0
      %2234 = vmatmul.mubr.f32.gmra.mrb[0].mxu0 %v671
      %v2235 = vpop.f32.mrb[0].mxu0
      %v2236 = vadd.f32 0.0, %v2235
      %v2237 = vpop.f32.mrb[0].mxu0
      %2238 = vmatprep.mubr.f32.mxu0 0.0
      %2239 = vmatmul.mubr.f32.gmra.mrb[0].mxu0 %v674
      %v2240 = vpop.f32.mrb[0].mxu0
      %v2241 = vadd.f32 0.0, %v2240
      %v2242 = vpop.f32.mrb[0].mxu0
      %2243 = vdwg.mxu0
      %v2245 = vrot.slane %v2157, 4
      %v2247 = vsel %vm1022, %v2236, 0
      %v2250 = vsel %vm1022, %v2241, 0
      %v2252 = vsel %vm1029, %v2245, 0
      %2254 = vmatprep.subr.mxu0 0.0
      %2255 = vmatpush1.msra.mxu0 %v2252
      %2256 = vmatprep.subr.mxu0 0.0
      %2257 = vmatpush1.msra.mxu0 0.0
      %2258 = vmatprep.subr.mxu0 0.0
      %2259 = vmatpush1.msra.mxu0 0.0
      %2260 = vmatprep.subr.mxu0 0.0
      %2261 = vmatpush1.msra.mxu0 0.0
      %2262 = vmatprep.subr.mxu0 0.0
      %2263 = vmatpush1.msra.mxu0 0.0
      %2264 = vmatprep.subr.mxu0 0.0
      %2265 = vmatpush1.msra.mxu0 0.0
      %2266 = vmatprep.subr.mxu0 0.0
      %2267 = vmatpush1.msra.mxu0 0.0
      %2268 = vmatprep.subr.mxu0 0.0
      %2269 = vmatpush1.msra.mxu0 0.0
      %2270 = vmatprep.subr.mxu0 0.0
      %2271 = vmatpush1.msra.mxu0 0.0
      %2272 = vmatprep.subr.mxu0 0.0
      %2273 = vmatpush1.msra.mxu0 0.0
      %2274 = vmatprep.subr.mxu0 0.0
      %2275 = vmatpush1.msra.mxu0 0.0
      %2276 = vmatprep.subr.mxu0 0.0
      %2277 = vmatpush1.msra.mxu0 0.0
      %2278 = vmatprep.subr.mxu0 0.0
      %2279 = vmatpush1.msra.mxu0 0.0
      %2280 = vmatprep.subr.mxu0 0.0
      %2281 = vmatpush1.msra.mxu0 0.0
      %2282 = vmatprep.subr.mxu0 0.0
      %2283 = vmatpush1.msra.mxu0 0.0
      %2284 = vmatprep.subr.mxu0 0.0
      %2285 = vmatpush1.msra.mxu0 0.0
      %2286 = vmatprep.subr.mxu0 0.0
      %2287 = vmatpush1.msra.mxu0 0.0
      %2288 = vmatprep.subr.mxu0 0.0
      %2289 = vmatpush1.msra.mxu0 0.0
      %2290 = vmatprep.subr.mxu0 0.0
      %2291 = vmatpush1.msra.mxu0 0.0
      %2292 = vmatprep.subr.mxu0 0.0
      %2293 = vmatpush1.msra.mxu0 0.0
      %2294 = vmatprep.subr.mxu0 0.0
      %2295 = vmatpush1.msra.mxu0 0.0
      %2296 = vmatprep.subr.mxu0 0.0
      %2297 = vmatpush1.msra.mxu0 0.0
      %2298 = vmatprep.subr.mxu0 0.0
      %2299 = vmatpush1.msra.mxu0 0.0
      %2300 = vmatprep.subr.mxu0 0.0
      %2301 = vmatpush1.msra.mxu0 0.0
      %2302 = vmatprep.subr.mxu0 0.0
      %2303 = vmatpush1.msra.mxu0 0.0
      %2304 = vmatprep.subr.mxu0 0.0
      %2305 = vmatpush1.msra.mxu0 0.0
      %2306 = vmatprep.subr.mxu0 0.0
      %2307 = vmatpush1.msra.mxu0 0.0
      %2308 = vmatprep.subr.mxu0 0.0
      %2309 = vmatpush1.msra.mxu0 0.0
      %2310 = vmatprep.subr.mxu0 0.0
      %2311 = vmatpush1.msra.mxu0 0.0
      %2312 = vmatprep.subr.mxu0 0.0
      %2313 = vmatpush1.msra.mxu0 0.0
      %2314 = vmatprep.subr.mxu0 0.0
      %2315 = vmatpush1.msra.mxu0 0.0
      %2316 = vmatprep.subr.mxu0 0.0
      %2317 = vmatpush1.msra.mxu0 0.0
      %2318 = vmatprep.mubr.f32.mxu0 0.0
      %2319 = vmatmul.mubr.f32.gmra.mrb[0].mxu0 %v2247
      %v2320 = vpop.f32.mrb[0].mxu0
      %v2321 = vadd.f32 0.0, %v2320
      %v2322 = vpop.f32.mrb[0].mxu0
      %2323 = vmatprep.mubr.f32.mxu0 0.0
      %2324 = vmatmul.mubr.f32.gmra.mrb[0].mxu0 %v2250
      %v2325 = vpop.f32.mrb[0].mxu0
      %v2326 = vadd.f32 0.0, %v2325
      %v2327 = vpop.f32.mrb[0].mxu0
      %2328 = vdwg.mxu0
      %v2330 = vsel %vm1022, %v2226, 0
      %v2333 = vsel %vm1022, %v2231, 0
      %v2335 = vsel %vm1029, %v2157, 0
      %2337 = vmatprep.subr.mxu0 0.0
      %2338 = vmatpush1.msra.mxu0 %v2335
      %2339 = vmatprep.subr.mxu0 0.0
      %2340 = vmatpush1.msra.mxu0 0.0
      %2341 = vmatprep.subr.mxu0 0.0
      %2342 = vmatpush1.msra.mxu0 0.0
      %2343 = vmatprep.subr.mxu0 0.0
      %2344 = vmatpush1.msra.mxu0 0.0
      %2345 = vmatprep.subr.mxu0 0.0
      %2346 = vmatpush1.msra.mxu0 0.0
      %2347 = vmatprep.subr.mxu0 0.0
      %2348 = vmatpush1.msra.mxu0 0.0
      %2349 = vmatprep.subr.mxu0 0.0
      %2350 = vmatpush1.msra.mxu0 0.0
      %2351 = vmatprep.subr.mxu0 0.0
      %2352 = vmatpush1.msra.mxu0 0.0
      %2353 = vmatprep.subr.mxu0 0.0
      %2354 = vmatpush1.msra.mxu0 0.0
      %2355 = vmatprep.subr.mxu0 0.0
      %2356 = vmatpush1.msra.mxu0 0.0
      %2357 = vmatprep.subr.mxu0 0.0
      %2358 = vmatpush1.msra.mxu0 0.0
      %2359 = vmatprep.subr.mxu0 0.0
      %2360 = vmatpush1.msra.mxu0 0.0
      %2361 = vmatprep.subr.mxu0 0.0
      %2362 = vmatpush1.msra.mxu0 0.0
      %2363 = vmatprep.subr.mxu0 0.0
      %2364 = vmatpush1.msra.mxu0 0.0
      %2365 = vmatprep.subr.mxu0 0.0
      %2366 = vmatpush1.msra.mxu0 0.0
      %2367 = vmatprep.subr.mxu0 0.0
      %2368 = vmatpush1.msra.mxu0 0.0
      %2369 = vmatprep.subr.mxu0 0.0
      %2370 = vmatpush1.msra.mxu0 0.0
      %2371 = vmatprep.subr.mxu0 0.0
      %2372 = vmatpush1.msra.mxu0 0.0
      %2373 = vmatprep.subr.mxu0 0.0
      %2374 = vmatpush1.msra.mxu0 0.0
      %2375 = vmatprep.subr.mxu0 0.0
      %2376 = vmatpush1.msra.mxu0 0.0
      %2377 = vmatprep.subr.mxu0 0.0
      %2378 = vmatpush1.msra.mxu0 0.0
      %2379 = vmatprep.subr.mxu0 0.0
      %2380 = vmatpush1.msra.mxu0 0.0
      %2381 = vmatprep.subr.mxu0 0.0
      %2382 = vmatpush1.msra.mxu0 0.0
      %2383 = vmatprep.subr.mxu0 0.0
      %2384 = vmatpush1.msra.mxu0 0.0
      %2385 = vmatprep.subr.mxu0 0.0
      %2386 = vmatpush1.msra.mxu0 0.0
      %2387 = vmatprep.subr.mxu0 0.0
      %2388 = vmatpush1.msra.mxu0 0.0
      %2389 = vmatprep.subr.mxu0 0.0
      %2390 = vmatpush1.msra.mxu0 0.0
      %2391 = vmatprep.subr.mxu0 0.0
      %2392 = vmatpush1.msra.mxu0 0.0
      %2393 = vmatprep.subr.mxu0 0.0
      %2394 = vmatpush1.msra.mxu0 0.0
      %2395 = vmatprep.subr.mxu0 0.0
      %2396 = vmatpush1.msra.mxu0 0.0
      %2397 = vmatprep.subr.mxu0 0.0
      %2398 = vmatpush1.msra.mxu0 0.0
      %2399 = vmatprep.subr.mxu0 0.0
      %2400 = vmatpush1.msra.mxu0 0.0
      %2401 = vmatprep.mubr.f32.mxu0 0.0
      %2402 = vmatmul.mubr.f32.gmra.mrb[0].mxu0 %v2330
      %v2403 = vpop.f32.mrb[0].mxu0
      %v2404 = vadd.f32 %v2321, %v2403
      %v2405 = vpop.f32.mrb[0].mxu0
      %2406 = vmatprep.mubr.f32.mxu0 0.0
      %2407 = vmatmul.mubr.f32.gmra.mrb[0].mxu0 %v2333
      %v2408 = vpop.f32.mrb[0].mxu0
      %v2409 = vadd.f32 %v2326, %v2408
      %v2410 = vpop.f32.mrb[0].mxu0
      %2411 = vdwg.mxu0
      %v2413 = vlaneseq
      %v2414 = vshrl.u32 %v2413, 7
      %v2415 = vsub.s32 0, %v2414
      %v2416 = vrot.slane %v2158, %v2415
      %v2418 = vadd.f32 %v2404, %v2416
      %v2419 = vadd.f32 %v2409, %v2416
      %v2420 = vadd.f32 %v2418, %v1628
      %v2421 = vadd.f32 %v2419, %v1629
      %v2422 = vmax.f32 %v2420, 0.0
      %v2423 = vmax.f32 %v2421, 0.0
      %v2424 = vld [vmem:[%s17] sm:$0xff]
      %v2425 = vld [vmem:[%s17 + $0x8] sm:$0xff]
      %v2426 = vld [vmem:[%s16] sm:$0x1]
      %v2428 = vlaneseq
      %v2429 = vshrl.u32 %v2428, 7
      %v2430 = vsub.s32 0, %v2429
      %v2431 = vrot.slane %v2426, %v2430
      %v2434 = vsel %vm663, %v2422, 0
      %v2437 = vsel %vm663, %v2423, 0
      %2439 = vmatprep.subr.mxu0 0.0
      %2440 = vmatpush1.msra.mxu0 %v2424
      %2441 = vmatprep.subr.mxu0 0.0
      %2442 = vmatpush1.msra.mxu0 %v2425
      %2443 = vmatprep.subr.mxu0 0.0
      %2444 = vmatpush1.msra.mxu0 0.0
      %2445 = vmatprep.subr.mxu0 0.0
      %2446 = vmatpush1.msra.mxu0 0.0
      %2447 = vmatprep.subr.mxu0 0.0
      %2448 = vmatpush1.msra.mxu0 0.0
      %2449 = vmatprep.subr.mxu0 0.0
      %2450 = vmatpush1.msra.mxu0 0.0
      %2451 = vmatprep.subr.mxu0 0.0
      %2452 = vmatpush1.msra.mxu0 0.0
      %2453 = vmatprep.subr.mxu0 0.0
      %2454 = vmatpush1.msra.mxu0 0.0
      %2455 = vmatprep.subr.mxu0 0.0
      %2456 = vmatpush1.msra.mxu0 0.0
      %2457 = vmatprep.subr.mxu0 0.0
      %2458 = vmatpush1.msra.mxu0 0.0
      %2459 = vmatprep.subr.mxu0 0.0
      %2460 = vmatpush1.msra.mxu0 0.0
      %2461 = vmatprep.subr.mxu0 0.0
      %2462 = vmatpush1.msra.mxu0 0.0
      %2463 = vmatprep.subr.mxu0 0.0
      %2464 = vmatpush1.msra.mxu0 0.0
      %2465 = vmatprep.subr.mxu0 0.0
      %2466 = vmatpush1.msra.mxu0 0.0
      %2467 = vmatprep.subr.mxu0 0.0
      %2468 = vmatpush1.msra.mxu0 0.0
      %2469 = vmatprep.subr.mxu0 0.0
      %2470 = vmatpush1.msra.mxu0 0.0
      %2471 = vmatprep.subr.mxu0 0.0
      %2472 = vmatpush1.msra.mxu0 0.0
      %2473 = vmatprep.subr.mxu0 0.0
      %2474 = vmatpush1.msra.mxu0 0.0
      %2475 = vmatprep.subr.mxu0 0.0
      %2476 = vmatpush1.msra.mxu0 0.0
      %2477 = vmatprep.subr.mxu0 0.0
      %2478 = vmatpush1.msra.mxu0 0.0
      %2479 = vmatprep.subr.mxu0 0.0
      %2480 = vmatpush1.msra.mxu0 0.0
      %2481 = vmatprep.subr.mxu0 0.0
      %2482 = vmatpush1.msra.mxu0 0.0
      %2483 = vmatprep.subr.mxu0 0.0
      %2484 = vmatpush1.msra.mxu0 0.0
      %2485 = vmatprep.subr.mxu0 0.0
      %2486 = vmatpush1.msra.mxu0 0.0
      %2487 = vmatprep.subr.mxu0 0.0
      %2488 = vmatpush1.msra.mxu0 0.0
      %2489 = vmatprep.subr.mxu0 0.0
      %2490 = vmatpush1.msra.mxu0 0.0
      %2491 = vmatprep.subr.mxu0 0.0
      %2492 = vmatpush1.msra.mxu0 0.0
      %2493 = vmatprep.subr.mxu0 0.0
      %2494 = vmatpush1.msra.mxu0 0.0
      %2495 = vmatprep.subr.mxu0 0.0
      %2496 = vmatpush1.msra.mxu0 0.0
      %2497 = vmatprep.subr.mxu0 0.0
      %2498 = vmatpush1.msra.mxu0 0.0
      %2499 = vmatprep.subr.mxu0 0.0
      %2500 = vmatpush1.msra.mxu0 0.0
      %2501 = vmatprep.subr.mxu0 0.0
      %2502 = vmatpush1.msra.mxu0 0.0
      %2503 = vmatprep.mubr.f32.mxu0 0.0
      %2504 = vmatmul.mubr.f32.gmra.mrb[0].mxu0 %v2434
      %v2505 = vpop.f32.mrb[0].mxu0
      %v2506 = vadd.f32 %v2431, %v2505
      %v2507 = vpop.f32.mrb[0].mxu0
      %2508 = vmatprep.mubr.f32.mxu0 0.0
      %2509 = vmatmul.mubr.f32.gmra.mrb[0].mxu0 %v2437
      %v2510 = vpop.f32.mrb[0].mxu0
      %v2511 = vadd.f32 %v2431, %v2510
      %v2512 = vpop.f32.mrb[0].mxu0
      %2513 = vdwg.mxu0
      %v2514 = vmax.f32 %v2506, 0.0
      %v2515 = vmax.f32 %v2511, 0.0
      %v2516 = vld [vmem:[%s19] sm:$0xff]
      %v2517 = vld [vmem:[#allocation2] sm:$0x1]
      %v2519 = vlaneseq
      %v2520 = vshrl.u32 %v2519, 7
      %v2521 = vsub.s32 0, %v2520
      %v2522 = vrot.slane %v2517, %v2521
      %vm2524 = vcmask 64512
      %v2526 = vsel %vm2524, %v2514, 0
      %v2529 = vsel %vm2524, %v2515, 0
      %2531 = vmatprep.subr.mxu0 0.0
      %2532 = vmatpush1.msra.mxu0 %v2516
      %2533 = vmatprep.subr.mxu0 0.0
      %2534 = vmatpush1.msra.mxu0 0.0
      %2535 = vmatprep.subr.mxu0 0.0
      %2536 = vmatpush1.msra.mxu0 0.0
      %2537 = vmatprep.subr.mxu0 0.0
      %2538 = vmatpush1.msra.mxu0 0.0
      %2539 = vmatprep.subr.mxu0 0.0
      %2540 = vmatpush1.msra.mxu0 0.0
      %2541 = vmatprep.subr.mxu0 0.0
      %2542 = vmatpush1.msra.mxu0 0.0
      %2543 = vmatprep.subr.mxu0 0.0
      %2544 = vmatpush1.msra.mxu0 0.0
      %2545 = vmatprep.subr.mxu0 0.0
      %2546 = vmatpush1.msra.mxu0 0.0
      %2547 = vmatprep.subr.mxu0 0.0
      %2548 = vmatpush1.msra.mxu0 0.0
      %2549 = vmatprep.subr.mxu0 0.0
      %2550 = vmatpush1.msra.mxu0 0.0
      %2551 = vmatprep.subr.mxu0 0.0
      %2552 = vmatpush1.msra.mxu0 0.0
      %2553 = vmatprep.subr.mxu0 0.0
      %2554 = vmatpush1.msra.mxu0 0.0
      %2555 = vmatprep.subr.mxu0 0.0
      %2556 = vmatpush1.msra.mxu0 0.0
      %2557 = vmatprep.subr.mxu0 0.0
      %2558 = vmatpush1.msra.mxu0 0.0
      %2559 = vmatprep.subr.mxu0 0.0
      %2560 = vmatpush1.msra.mxu0 0.0
      %2561 = vmatprep.subr.mxu0 0.0
      %2562 = vmatpush1.msra.mxu0 0.0
      %2563 = vmatprep.subr.mxu0 0.0
      %2564 = vmatpush1.msra.mxu0 0.0
      %2565 = vmatprep.subr.mxu0 0.0
      %2566 = vmatpush1.msra.mxu0 0.0
      %2567 = vmatprep.subr.mxu0 0.0
      %2568 = vmatpush1.msra.mxu0 0.0
      %2569 = vmatprep.subr.mxu0 0.0
      %2570 = vmatpush1.msra.mxu0 0.0
      %2571 = vmatprep.subr.mxu0 0.0
      %2572 = vmatpush1.msra.mxu0 0.0
      %2573 = vmatprep.subr.mxu0 0.0
      %2574 = vmatpush1.msra.mxu0 0.0
      %2575 = vmatprep.subr.mxu0 0.0
      %2576 = vmatpush1.msra.mxu0 0.0
      %2577 = vmatprep.subr.mxu0 0.0
      %2578 = vmatpush1.msra.mxu0 0.0
      %2579 = vmatprep.subr.mxu0 0.0
      %2580 = vmatpush1.msra.mxu0 0.0
      %2581 = vmatprep.subr.mxu0 0.0
      %2582 = vmatpush1.msra.mxu0 0.0
      %2583 = vmatprep.subr.mxu0 0.0
      %2584 = vmatpush1.msra.mxu0 0.0
      %2585 = vmatprep.subr.mxu0 0.0
      %2586 = vmatpush1.msra.mxu0 0.0
      %2587 = vmatprep.subr.mxu0 0.0
      %2588 = vmatpush1.msra.mxu0 0.0
      %2589 = vmatprep.subr.mxu0 0.0
      %2590 = vmatpush1.msra.mxu0 0.0
      %2591 = vmatprep.subr.mxu0 0.0
      %2592 = vmatpush1.msra.mxu0 0.0
      %2593 = vmatprep.subr.mxu0 0.0
      %2594 = vmatpush1.msra.mxu0 0.0
      %2595 = vmatprep.mubr.f32.mxu0 0.0
      %2596 = vmatmul.mubr.f32.gmra.mrb[0].mxu0 %v2526
      %v2597 = vpop.f32.mrb[0].mxu0
      %v2598 = vadd.f32 %v2522, %v2597
      %v2599 = vpop.f32.mrb[0].mxu0
      %2600 = vmatprep.mubr.f32.mxu0 0.0
      %2601 = vmatmul.mubr.f32.gmra.mrb[0].mxu0 %v2529
      %v2602 = vpop.f32.mrb[0].mxu0
      %v2603 = vadd.f32 %v2522, %v2602
      %v2604 = vpop.f32.mrb[0].mxu0
      %2605 = vdwg.mxu0
      %vm2606 = vcmask 7168
      %2607 = vst.msk [vmem:[%s651] sm:$0xff] %vm2606, %v2598
      %2608 = vst.msk [vmem:[%s651 + $0x8] sm:$0xff] %vm2606, %v2603
      %p2609 = scmp.lt.s32.totalorder %s33, 1
      %s2610 = scalar_select %p2609, %s33, 1
      %s2611 = smul.addr %s2610, 2
      %s2612 = smul.addr %s2611, 8
      %s2613 = scalar_lea.vmem %s20, %s2612
      // Predicated region
      $region101: #{residual_graph_lstm_forward.5} parent=99 // pred_check
        %p2614 = pneg %p481
      $region102: #{residual_graph_lstm_forward.5} parent=99 // pred_check_branch
        %2616 = sbr.rel (%p2614) target = $region104
      $region103: #{residual_graph_lstm_forward.5} parent=99 // pred_region
        _
      $region104: #{residual_graph_lstm_forward.5} parent=99 // pred_fallthru
        _
    $region100: #{residual_graph_lstm_forward.5} parent=5 // pred_fallthru
      _
    %p2617 = scmp.le.s32.totalorder 2, %s28
    // Predicated region
    $region105: #{residual_graph_lstm_forward.5} parent=5 // pred_check
      %p2618 = pneg %p2617
    $region106: #{residual_graph_lstm_forward.5} parent=5 // pred_check_branch
      %2620 = sbr.rel (%p2618) target = $region108
    $region107: #{residual_graph_lstm_forward.5} parent=5 // pred_region
      %s2621 = ssub.s32 %s28, 2
      // Predicated region
      $region109: #{residual_graph_lstm_forward.5} parent=107 // pred_check
        %p2622 = pneg %p487
      $region110: #{residual_graph_lstm_forward.5} parent=107 // pred_check_branch
        %2624 = sbr.rel (%p2622) target = $region112
      $region111: #{residual_graph_lstm_forward.5} parent=107 // pred_region
        %p2625 = scmp.lt.s32.totalorder %s34, 1
        %s2626 = scalar_select %p2625, %s34, 1
        %s2627 = smul.addr %s2626, 2
        %s2628 = smul.addr %s2627, 8
        %s2629 = scalar_lea.vmem %s20, %s2628
      $region112: #{residual_graph_lstm_forward.5} parent=107 // pred_fallthru
        _
    $region108: #{residual_graph_lstm_forward.5} parent=5 // pred_fallthru
      _
  $region6: #{residual_graph_lstm_forward.5} parent=0 // loop_footer
    %s32 = sadd.s32 1, %s28
  $region7: #{residual_graph_lstm_forward.5} parent=0 // loop_footer_branch
    %27 = sbr.rel target = $region3
  $region8: #{residual_graph_lstm_forward.5} parent=0 // loop_exit
    _

// kernel: residual_graph_lstm_forward.3
$region0: #{residual_graph_lstm_forward.3}
  #allocation0 [shape = 'u32[]', space=smem, size = 0x4, offset = 0x4, fixed_abs, tag = 'smem constant byte address 0x4 - core index']
  #allocation1 [shape = 'u32[144,128]{1,0:T(1,128)}', space=vmem, size = 0x12000, scoped, tag = 'internal scratch']
  %s0 = inlined_call_operand.smem [shape: u32[31], index: -1, kind: input, shape index: {}]
  %s1 = sld [smem:[%s0]]
  %s2 = scalar_lea.smem %s0, 1
  %s3 = sld [smem:[%s2]]
  %s4 = scalar_lea.smem %s0, 2
  %s5 = sld [smem:[%s4]]
  %s6 = scalar_lea.smem %s0, 3
  %s7 = sld [smem:[%s6]]
  %s8 = scalar_lea.smem %s0, 4
  %s9 = sld [smem:[%s8]]
  %s10 = scalar_lea.smem %s0, 5
  %s11 = sld [smem:[%s10]]
  %s12 = scalar_lea.smem %s0, 6
  %s13 = sld [smem:[%s12]]
  %s14 = scalar_lea.smem %s0, 7
  %s15 = sld [smem:[%s14]]
  %s16 = scalar_lea.smem %s0, 8
  %s17 = sld [smem:[%s16]]
  %s18 = scalar_lea.smem %s0, 9
  %s19 = sld [smem:[%s18]]
  %s20 = scalar_lea.smem %s0, 10
  %s21 = sld [smem:[%s20]]
  %s22 = scalar_lea.smem %s0, 11
  %s23 = sld [smem:[%s22]]
  %s24 = scalar_lea.smem %s0, 12
  %s25 = sld [smem:[%s24]]
  %s26 = scalar_lea.smem %s0, 13
  %s27 = sld [smem:[%s26]]
  %s28 = scalar_lea.smem %s0, 14
  %s29 = sld [smem:[%s28]]
  %s30 = scalar_lea.smem %s0, 15
  %s31 = sld [smem:[%s30]]
  %s32 = scalar_lea.smem %s0, 16
  %s33 = sld [smem:[%s32]]
  %s34 = scalar_lea.smem %s0, 17
  %s35 = sld [smem:[%s34]]
  %s36 = scalar_lea.smem %s0, 18
  %s37 = sld [smem:[%s36]]
  %s38 = scalar_lea.smem %s0, 19
  %s39 = sld [smem:[%s38]]
  %s40 = scalar_lea.smem %s0, 20
  %s41 = sld [smem:[%s40]]
  %s42 = scalar_lea.smem %s0, 21
  %s43 = sld [smem:[%s42]]
  %s44 = scalar_lea.smem %s0, 22
  %s45 = sld [smem:[%s44]]
  %s46 = scalar_lea.smem %s0, 23
  %s47 = sld [smem:[%s46]]
  %s48 = scalar_lea.smem %s0, 24
  %s49 = sld [smem:[%s48]]
  %s50 = scalar_lea.smem %s0, 25
  %s51 = sld [smem:[%s50]]
  %s52 = scalar_lea.smem %s0, 26
  %s53 = sld [smem:[%s52]]
  %s54 = scalar_lea.smem %s0, 27
  %s55 = sld [smem:[%s54]]
  %s56 = scalar_lea.smem %s0, 28
  %s57 = sld [smem:[%s56]]
  %s58 = scalar_lea.smem %s0, 29
  %s59 = sld [smem:[%s58]]
  %s60 = scalar_lea.smem %s0, 30
  %s61 = sld [smem:[%s60]]
  %s62 = sld [smem:[#allocation0]]
  $region153: #{residual_graph_lstm_forward.3} parent=0
    _
  %s64 = ssub.s32 1, %s62
  %s65 = scalar_select 0, %s64, %s62
  loop: start=0, step=1, limit=4
  $region2: #{residual_graph_lstm_forward.3} parent=0 // loop_pre_header
    _
  $region3: #{residual_graph_lstm_forward.3} parent=0 // loop_header
    %s67 = sphi 0, %s71
    %p68 = scmp.ge.s32.totalorder %s67, 4
    %s77 = sphi 0, %s79
    %s80 = sphi 0, %s77
    %s81 = sphi 0, %s80
    %s97 = sphi 0, %s81
    %s103 = sphi 0, %s105
    %s106 = sphi 0, %s103
    %s107 = sphi 0, %s106
    %s123 = sphi 0, %s107
    %s127 = sphi 0, %s127
    %s129 = sphi 0, %s127
    %s130 = sphi 0, %s129
    %s144 = sphi 0, %s130
    %s148 = sphi 0, %s148
    %s150 = sphi 0, %s148
    %s151 = sphi 0, %s150
    %s165 = sphi 0, %s151
    %s169 = sphi 0, %s169
    %s171 = sphi 0, %s169
    %s172 = sphi 0, %s171
    %s186 = sphi 0, %s172
    %s190 = sphi 0, %s190
    %s192 = sphi 0, %s190
    %s193 = sphi 0, %s192
    %s207 = sphi 0, %s193
    %s211 = sphi 0, %s211
    %s213 = sphi 0, %s211
    %s214 = sphi 0, %s213
    %s228 = sphi 0, %s214
    %s232 = sphi 0, %s232
    %s234 = sphi 0, %s232
    %s235 = sphi 0, %s234
    %s249 = sphi 0, %s235
    %s253 = sphi 0, %s253
    %s255 = sphi 0, %s253
    %s256 = sphi 0, %s255
    %s270 = sphi 0, %s256
    %s274 = sphi 0, %s274
    %s276 = sphi 0, %s274
    %s277 = sphi 0, %s276
    %s291 = sphi 0, %s277
    %s295 = sphi 0, %s295
    %s297 = sphi 0, %s295
    %s298 = sphi 0, %s297
    %s312 = sphi 0, %s298
    %s316 = sphi 0, %s316
    %s318 = sphi 0, %s316
    %s319 = sphi 0, %s318
    %s333 = sphi 0, %s319
    %s337 = sphi 0, %s337
    %s339 = sphi 0, %s337
    %s340 = sphi 0, %s339
    %s354 = sphi 0, %s340
    %s358 = sphi 0, %s358
    %s360 = sphi 0, %s358
    %s361 = sphi 0, %s360
    %s375 = sphi 0, %s361
    %s379 = sphi 0, %s379
    %s381 = sphi 0, %s379
    %s382 = sphi 0, %s381
    %s396 = sphi 0, %s382
    %s400 = sphi 0, %s400
    %s402 = sphi 0, %s400
    %s403 = sphi 0, %s402
    %s417 = sphi 0, %s403
    %s421 = sphi 0, %s421
    %s423 = sphi 0, %s421
    %s424 = sphi 0, %s423
    %s438 = sphi 0, %s424
    %s442 = sphi 0, %s442
    %s444 = sphi 0, %s442
    %s445 = sphi 0, %s444
    %s459 = sphi 0, %s445
    %s463 = sphi 0, %s463
    %s465 = sphi 0, %s463
    %s466 = sphi 0, %s465
    %s480 = sphi 0, %s466
    %s484 = sphi 0, %s484
    %s486 = sphi 0, %s484
    %s487 = sphi 0, %s486
    %s501 = sphi 0, %s487
    %s505 = sphi 0, %s505
    %s507 = sphi 0, %s505
    %s508 = sphi 0, %s507
    %s522 = sphi 0, %s508
    %s526 = sphi 0, %s526
    %s528 = sphi 0, %s526
    %s529 = sphi 0, %s528
    %s543 = sphi 0, %s529
    %s547 = sphi 0, %s547
    %s549 = sphi 0, %s547
    %s550 = sphi 0, %s549
    %s564 = sphi 0, %s550
    %s568 = sphi 0, %s568
    %s570 = sphi 0, %s568
    %s571 = sphi 0, %s570
    %s585 = sphi 0, %s571
    %s589 = sphi 0, %s589
    %s591 = sphi 0, %s589
    %s592 = sphi 0, %s591
    %s606 = sphi 0, %s592
    %s610 = sphi 0, %s610
    %s612 = sphi 0, %s610
    %s613 = sphi 0, %s612
    %s627 = sphi 0, %s613
    %s631 = sphi 0, %s631
    %s633 = sphi 0, %s631
    %s634 = sphi 0, %s633
    %s648 = sphi 0, %s634
    %s652 = sphi 0, %s652
    %s654 = sphi 0, %s652
    %s655 = sphi 0, %s654
    %s669 = sphi 0, %s655
    %s673 = sphi 0, %s673
    %s675 = sphi 0, %s673
    %s676 = sphi 0, %s675
    %s690 = sphi 0, %s676
    %s694 = sphi 0, %s694
    %s696 = sphi 0, %s694
    %s697 = sphi 0, %s696
    %s711 = sphi 0, %s697
    %s717 = sphi 0, %s719
    %s720 = sphi 0, %s717
    %s721 = sphi 0, %s720
    %s737 = sphi 0, %s721
  $region4: #{residual_graph_lstm_forward.3} parent=0 // loop_header_branch
    %70 = sbr.rel (%p68) target = $region8
  $region5: #{residual_graph_lstm_forward.3} parent=0 // loop_body
    %s72 = ssub.s32 %s67, 1
    %s73 = ssub.s32 %s67, 2
    %s74 = sadd.s32 %s67, 1
    %s75 = ssub.s32 %s67, %s74
    %p76 = scmp.eq.s32.totalorder %s75, 0
    %s78 = sadd.s32 %s77, 1
    %s79 = scalar_select %p76, %s77, %s78
    %p82 = pneg %p76
    %p83 = scmp.eq.s32.totalorder %s67, 1
    %p84 = por %p82, %p83
    %p85 = scmp.ne.s32.totalorder %s77, %s80
    %p86 = scmp.eq.s32.totalorder %s67, 0
    %p87 = por %p85, %p86
    %p88 = scmp.ne.s32.totalorder %s77, %s80
    %p89 = scmp.eq.s32.totalorder %s72, 1
    %p90 = por %p88, %p89
    %p91 = scmp.ne.s32.totalorder %s80, %s81
    %p92 = scmp.eq.s32.totalorder %s72, 0
    %p93 = por %p91, %p92
    %p94 = scmp.ne.s32.totalorder %s80, %s81
    %p95 = scmp.eq.s32.totalorder %s73, 1
    %p96 = por %p94, %p95
    %p98 = scmp.ne.s32.totalorder %s81, %s97
    %p99 = scmp.eq.s32.totalorder %s73, 0
    %p100 = por %p98, %p99
    %s101 = ssub.s32 %s67, %s74
    %p102 = scmp.eq.s32.totalorder %s101, 0
    %s104 = sadd.s32 %s103, 1
    %s105 = scalar_select %p102, %s103, %s104
    %p108 = pneg %p102
    %p109 = scmp.eq.s32.totalorder %s67, 1
    %p110 = por %p108, %p109
    %p111 = scmp.ne.s32.totalorder %s103, %s106
    %p112 = scmp.eq.s32.totalorder %s67, 0
    %p113 = por %p111, %p112
    %p114 = scmp.ne.s32.totalorder %s103, %s106
    %p115 = scmp.eq.s32.totalorder %s72, 1
    %p116 = por %p114, %p115
    %p117 = scmp.ne.s32.totalorder %s106, %s107
    %p118 = scmp.eq.s32.totalorder %s72, 0
    %p119 = por %p117, %p118
    %p120 = scmp.ne.s32.totalorder %s106, %s107
    %p121 = scmp.eq.s32.totalorder %s73, 1
    %p122 = por %p120, %p121
    %p124 = scmp.ne.s32.totalorder %s107, %s123
    %p125 = scmp.eq.s32.totalorder %s73, 0
    %p126 = por %p124, %p125
    %s128 = sadd.s32 %s127, 1
    %p131 = scmp.eq.s32.totalorder %s67, 1
    %p132 = scmp.ne.s32.totalorder %s127, %s129
    %p133 = scmp.eq.s32.totalorder %s67, 0
    %p134 = por %p132, %p133
    %p135 = scmp.ne.s32.totalorder %s127, %s129
    %p136 = scmp.eq.s32.totalorder %s72, 1
    %p137 = por %p135, %p136
    %p138 = scmp.ne.s32.totalorder %s129, %s130
    %p139 = scmp.eq.s32.totalorder %s72, 0
    %p140 = por %p138, %p139
    %p141 = scmp.ne.s32.totalorder %s129, %s130
    %p142 = scmp.eq.s32.totalorder %s73, 1
    %p143 = por %p141, %p142
    %p145 = scmp.ne.s32.totalorder %s130, %s144
    %p146 = scmp.eq.s32.totalorder %s73, 0
    %p147 = por %p145, %p146
    %s149 = sadd.s32 %s148, 1
    %p152 = scmp.eq.s32.totalorder %s67, 1
    %p153 = scmp.ne.s32.totalorder %s148, %s150
    %p154 = scmp.eq.s32.totalorder %s67, 0
    %p155 = por %p153, %p154
    %p156 = scmp.ne.s32.totalorder %s148, %s150
    %p157 = scmp.eq.s32.totalorder %s72, 1
    %p158 = por %p156, %p157
    %p159 = scmp.ne.s32.totalorder %s150, %s151
    %p160 = scmp.eq.s32.totalorder %s72, 0
    %p161 = por %p159, %p160
    %p162 = scmp.ne.s32.totalorder %s150, %s151
    %p163 = scmp.eq.s32.totalorder %s73, 1
    %p164 = por %p162, %p163
    %p166 = scmp.ne.s32.totalorder %s151, %s165
    %p167 = scmp.eq.s32.totalorder %s73, 0
    %p168 = por %p166, %p167
    %s170 = sadd.s32 %s169, 1
    %p173 = scmp.eq.s32.totalorder %s67, 1
    %p174 = scmp.ne.s32.totalorder %s169, %s171
    %p175 = scmp.eq.s32.totalorder %s67, 0
    %p176 = por %p174, %p175
    %p177 = scmp.ne.s32.totalorder %s169, %s171
    %p178 = scmp.eq.s32.totalorder %s72, 1
    %p179 = por %p177, %p178
    %p180 = scmp.ne.s32.totalorder %s171, %s172
    %p181 = scmp.eq.s32.totalorder %s72, 0
    %p182 = por %p180, %p181
    %p183 = scmp.ne.s32.totalorder %s171, %s172
    %p184 = scmp.eq.s32.totalorder %s73, 1
    %p185 = por %p183, %p184
    %p187 = scmp.ne.s32.totalorder %s172, %s186
    %p188 = scmp.eq.s32.totalorder %s73, 0
    %p189 = por %p187, %p188
    %s191 = sadd.s32 %s190, 1
    %p194 = scmp.eq.s32.totalorder %s67, 1
    %p195 = scmp.ne.s32.totalorder %s190, %s192
    %p196 = scmp.eq.s32.totalorder %s67, 0
    %p197 = por %p195, %p196
    %p198 = scmp.ne.s32.totalorder %s190, %s192
    %p199 = scmp.eq.s32.totalorder %s72, 1
    %p200 = por %p198, %p199
    %p201 = scmp.ne.s32.totalorder %s192, %s193
    %p202 = scmp.eq.s32.totalorder %s72, 0
    %p203 = por %p201, %p202
    %p204 = scmp.ne.s32.totalorder %s192, %s193
    %p205 = scmp.eq.s32.totalorder %s73, 1
    %p206 = por %p204, %p205
    %p208 = scmp.ne.s32.totalorder %s193, %s207
    %p209 = scmp.eq.s32.totalorder %s73, 0
    %p210 = por %p208, %p209
    %s212 = sadd.s32 %s211, 1
    %p215 = scmp.eq.s32.totalorder %s67, 1
    %p216 = scmp.ne.s32.totalorder %s211, %s213
    %p217 = scmp.eq.s32.totalorder %s67, 0
    %p218 = por %p216, %p217
    %p219 = scmp.ne.s32.totalorder %s211, %s213
    %p220 = scmp.eq.s32.totalorder %s72, 1
    %p221 = por %p219, %p220
    %p222 = scmp.ne.s32.totalorder %s213, %s214
    %p223 = scmp.eq.s32.totalorder %s72, 0
    %p224 = por %p222, %p223
    %p225 = scmp.ne.s32.totalorder %s213, %s214
    %p226 = scmp.eq.s32.totalorder %s73, 1
    %p227 = por %p225, %p226
    %p229 = scmp.ne.s32.totalorder %s214, %s228
    %p230 = scmp.eq.s32.totalorder %s73, 0
    %p231 = por %p229, %p230
    %s233 = sadd.s32 %s232, 1
    %p236 = scmp.eq.s32.totalorder %s67, 1
    %p237 = scmp.ne.s32.totalorder %s232, %s234
    %p238 = scmp.eq.s32.totalorder %s67, 0
    %p239 = por %p237, %p238
    %p240 = scmp.ne.s32.totalorder %s232, %s234
    %p241 = scmp.eq.s32.totalorder %s72, 1
    %p242 = por %p240, %p241
    %p243 = scmp.ne.s32.totalorder %s234, %s235
    %p244 = scmp.eq.s32.totalorder %s72, 0
    %p245 = por %p243, %p244
    %p246 = scmp.ne.s32.totalorder %s234, %s235
    %p247 = scmp.eq.s32.totalorder %s73, 1
    %p248 = por %p246, %p247
    %p250 = scmp.ne.s32.totalorder %s235, %s249
    %p251 = scmp.eq.s32.totalorder %s73, 0
    %p252 = por %p250, %p251
    %s254 = sadd.s32 %s253, 1
    %p257 = scmp.eq.s32.totalorder %s67, 1
    %p258 = scmp.ne.s32.totalorder %s253, %s255
    %p259 = scmp.eq.s32.totalorder %s67, 0
    %p260 = por %p258, %p259
    %p261 = scmp.ne.s32.totalorder %s253, %s255
    %p262 = scmp.eq.s32.totalorder %s72, 1
    %p263 = por %p261, %p262
    %p264 = scmp.ne.s32.totalorder %s255, %s256
    %p265 = scmp.eq.s32.totalorder %s72, 0
    %p266 = por %p264, %p265
    %p267 = scmp.ne.s32.totalorder %s255, %s256
    %p268 = scmp.eq.s32.totalorder %s73, 1
    %p269 = por %p267, %p268
    %p271 = scmp.ne.s32.totalorder %s256, %s270
    %p272 = scmp.eq.s32.totalorder %s73, 0
    %p273 = por %p271, %p272
    %s275 = sadd.s32 %s274, 1
    %p278 = scmp.eq.s32.totalorder %s67, 1
    %p279 = scmp.ne.s32.totalorder %s274, %s276
    %p280 = scmp.eq.s32.totalorder %s67, 0
    %p281 = por %p279, %p280
    %p282 = scmp.ne.s32.totalorder %s274, %s276
    %p283 = scmp.eq.s32.totalorder %s72, 1
    %p284 = por %p282, %p283
    %p285 = scmp.ne.s32.totalorder %s276, %s277
    %p286 = scmp.eq.s32.totalorder %s72, 0
    %p287 = por %p285, %p286
    %p288 = scmp.ne.s32.totalorder %s276, %s277
    %p289 = scmp.eq.s32.totalorder %s73, 1
    %p290 = por %p288, %p289
    %p292 = scmp.ne.s32.totalorder %s277, %s291
    %p293 = scmp.eq.s32.totalorder %s73, 0
    %p294 = por %p292, %p293
    %s296 = sadd.s32 %s295, 1
    %p299 = scmp.eq.s32.totalorder %s67, 1
    %p300 = scmp.ne.s32.totalorder %s295, %s297
    %p301 = scmp.eq.s32.totalorder %s67, 0
    %p302 = por %p300, %p301
    %p303 = scmp.ne.s32.totalorder %s295, %s297
    %p304 = scmp.eq.s32.totalorder %s72, 1
    %p305 = por %p303, %p304
    %p306 = scmp.ne.s32.totalorder %s297, %s298
    %p307 = scmp.eq.s32.totalorder %s72, 0
    %p308 = por %p306, %p307
    %p309 = scmp.ne.s32.totalorder %s297, %s298
    %p310 = scmp.eq.s32.totalorder %s73, 1
    %p311 = por %p309, %p310
    %p313 = scmp.ne.s32.totalorder %s298, %s312
    %p314 = scmp.eq.s32.totalorder %s73, 0
    %p315 = por %p313, %p314
    %s317 = sadd.s32 %s316, 1
    %p320 = scmp.eq.s32.totalorder %s67, 1
    %p321 = scmp.ne.s32.totalorder %s316, %s318
    %p322 = scmp.eq.s32.totalorder %s67, 0
    %p323 = por %p321, %p322
    %p324 = scmp.ne.s32.totalorder %s316, %s318
    %p325 = scmp.eq.s32.totalorder %s72, 1
    %p326 = por %p324, %p325
    %p327 = scmp.ne.s32.totalorder %s318, %s319
    %p328 = scmp.eq.s32.totalorder %s72, 0
    %p329 = por %p327, %p328
    %p330 = scmp.ne.s32.totalorder %s318, %s319
    %p331 = scmp.eq.s32.totalorder %s73, 1
    %p332 = por %p330, %p331
    %p334 = scmp.ne.s32.totalorder %s319, %s333
    %p335 = scmp.eq.s32.totalorder %s73, 0
    %p336 = por %p334, %p335
    %s338 = sadd.s32 %s337, 1
    %p341 = scmp.eq.s32.totalorder %s67, 1
    %p342 = scmp.ne.s32.totalorder %s337, %s339
    %p343 = scmp.eq.s32.totalorder %s67, 0
    %p344 = por %p342, %p343
    %p345 = scmp.ne.s32.totalorder %s337, %s339
    %p346 = scmp.eq.s32.totalorder %s72, 1
    %p347 = por %p345, %p346
    %p348 = scmp.ne.s32.totalorder %s339, %s340
    %p349 = scmp.eq.s32.totalorder %s72, 0
    %p350 = por %p348, %p349
    %p351 = scmp.ne.s32.totalorder %s339, %s340
    %p352 = scmp.eq.s32.totalorder %s73, 1
    %p353 = por %p351, %p352
    %p355 = scmp.ne.s32.totalorder %s340, %s354
    %p356 = scmp.eq.s32.totalorder %s73, 0
    %p357 = por %p355, %p356
    %s359 = sadd.s32 %s358, 1
    %p362 = scmp.eq.s32.totalorder %s67, 1
    %p363 = scmp.ne.s32.totalorder %s358, %s360
    %p364 = scmp.eq.s32.totalorder %s67, 0
    %p365 = por %p363, %p364
    %p366 = scmp.ne.s32.totalorder %s358, %s360
    %p367 = scmp.eq.s32.totalorder %s72, 1
    %p368 = por %p366, %p367
    %p369 = scmp.ne.s32.totalorder %s360, %s361
    %p370 = scmp.eq.s32.totalorder %s72, 0
    %p371 = por %p369, %p370
    %p372 = scmp.ne.s32.totalorder %s360, %s361
    %p373 = scmp.eq.s32.totalorder %s73, 1
    %p374 = por %p372, %p373
    %p376 = scmp.ne.s32.totalorder %s361, %s375
    %p377 = scmp.eq.s32.totalorder %s73, 0
    %p378 = por %p376, %p377
    %s380 = sadd.s32 %s379, 1
    %p383 = scmp.eq.s32.totalorder %s67, 1
    %p384 = scmp.ne.s32.totalorder %s379, %s381
    %p385 = scmp.eq.s32.totalorder %s67, 0
    %p386 = por %p384, %p385
    %p387 = scmp.ne.s32.totalorder %s379, %s381
    %p388 = scmp.eq.s32.totalorder %s72, 1
    %p389 = por %p387, %p388
    %p390 = scmp.ne.s32.totalorder %s381, %s382
    %p391 = scmp.eq.s32.totalorder %s72, 0
    %p392 = por %p390, %p391
    %p393 = scmp.ne.s32.totalorder %s381, %s382
    %p394 = scmp.eq.s32.totalorder %s73, 1
    %p395 = por %p393, %p394
    %p397 = scmp.ne.s32.totalorder %s382, %s396
    %p398 = scmp.eq.s32.totalorder %s73, 0
    %p399 = por %p397, %p398
    %s401 = sadd.s32 %s400, 1
    %p404 = scmp.eq.s32.totalorder %s67, 1
    %p405 = scmp.ne.s32.totalorder %s400, %s402
    %p406 = scmp.eq.s32.totalorder %s67, 0
    %p407 = por %p405, %p406
    %p408 = scmp.ne.s32.totalorder %s400, %s402
    %p409 = scmp.eq.s32.totalorder %s72, 1
    %p410 = por %p408, %p409
    %p411 = scmp.ne.s32.totalorder %s402, %s403
    %p412 = scmp.eq.s32.totalorder %s72, 0
    %p413 = por %p411, %p412
    %p414 = scmp.ne.s32.totalorder %s402, %s403
    %p415 = scmp.eq.s32.totalorder %s73, 1
    %p416 = por %p414, %p415
    %p418 = scmp.ne.s32.totalorder %s403, %s417
    %p419 = scmp.eq.s32.totalorder %s73, 0
    %p420 = por %p418, %p419
    %s422 = sadd.s32 %s421, 1
    %p425 = scmp.eq.s32.totalorder %s67, 1
    %p426 = scmp.ne.s32.totalorder %s421, %s423
    %p427 = scmp.eq.s32.totalorder %s67, 0
    %p428 = por %p426, %p427
    %p429 = scmp.ne.s32.totalorder %s421, %s423
    %p430 = scmp.eq.s32.totalorder %s72, 1
    %p431 = por %p429, %p430
    %p432 = scmp.ne.s32.totalorder %s423, %s424
    %p433 = scmp.eq.s32.totalorder %s72, 0
    %p434 = por %p432, %p433
    %p435 = scmp.ne.s32.totalorder %s423, %s424
    %p436 = scmp.eq.s32.totalorder %s73, 1
    %p437 = por %p435, %p436
    %p439 = scmp.ne.s32.totalorder %s424, %s438
    %p440 = scmp.eq.s32.totalorder %s73, 0
    %p441 = por %p439, %p440
    %s443 = sadd.s32 %s442, 1
    %p446 = scmp.eq.s32.totalorder %s67, 1
    %p447 = scmp.ne.s32.totalorder %s442, %s444
    %p448 = scmp.eq.s32.totalorder %s67, 0
    %p449 = por %p447, %p448
    %p450 = scmp.ne.s32.totalorder %s442, %s444
    %p451 = scmp.eq.s32.totalorder %s72, 1
    %p452 = por %p450, %p451
    %p453 = scmp.ne.s32.totalorder %s444, %s445
    %p454 = scmp.eq.s32.totalorder %s72, 0
    %p455 = por %p453, %p454
    %p456 = scmp.ne.s32.totalorder %s444, %s445
    %p457 = scmp.eq.s32.totalorder %s73, 1
    %p458 = por %p456, %p457
    %p460 = scmp.ne.s32.totalorder %s445, %s459
    %p461 = scmp.eq.s32.totalorder %s73, 0
    %p462 = por %p460, %p461
    %s464 = sadd.s32 %s463, 1
    %p467 = scmp.eq.s32.totalorder %s67, 1
    %p468 = scmp.ne.s32.totalorder %s463, %s465
    %p469 = scmp.eq.s32.totalorder %s67, 0
    %p470 = por %p468, %p469
    %p471 = scmp.ne.s32.totalorder %s463, %s465
    %p472 = scmp.eq.s32.totalorder %s72, 1
    %p473 = por %p471, %p472
    %p474 = scmp.ne.s32.totalorder %s465, %s466
    %p475 = scmp.eq.s32.totalorder %s72, 0
    %p476 = por %p474, %p475
    %p477 = scmp.ne.s32.totalorder %s465, %s466
    %p478 = scmp.eq.s32.totalorder %s73, 1
    %p479 = por %p477, %p478
    %p481 = scmp.ne.s32.totalorder %s466, %s480
    %p482 = scmp.eq.s32.totalorder %s73, 0
    %p483 = por %p481, %p482
    %s485 = sadd.s32 %s484, 1
    %p488 = scmp.eq.s32.totalorder %s67, 1
    %p489 = scmp.ne.s32.totalorder %s484, %s486
    %p490 = scmp.eq.s32.totalorder %s67, 0
    %p491 = por %p489, %p490
    %p492 = scmp.ne.s32.totalorder %s484, %s486
    %p493 = scmp.eq.s32.totalorder %s72, 1
    %p494 = por %p492, %p493
    %p495 = scmp.ne.s32.totalorder %s486, %s487
    %p496 = scmp.eq.s32.totalorder %s72, 0
    %p497 = por %p495, %p496
    %p498 = scmp.ne.s32.totalorder %s486, %s487
    %p499 = scmp.eq.s32.totalorder %s73, 1
    %p500 = por %p498, %p499
    %p502 = scmp.ne.s32.totalorder %s487, %s501
    %p503 = scmp.eq.s32.totalorder %s73, 0
    %p504 = por %p502, %p503
    %s506 = sadd.s32 %s505, 1
    %p509 = scmp.eq.s32.totalorder %s67, 1
    %p510 = scmp.ne.s32.totalorder %s505, %s507
    %p511 = scmp.eq.s32.totalorder %s67, 0
    %p512 = por %p510, %p511
    %p513 = scmp.ne.s32.totalorder %s505, %s507
    %p514 = scmp.eq.s32.totalorder %s72, 1
    %p515 = por %p513, %p514
    %p516 = scmp.ne.s32.totalorder %s507, %s508
    %p517 = scmp.eq.s32.totalorder %s72, 0
    %p518 = por %p516, %p517
    %p519 = scmp.ne.s32.totalorder %s507, %s508
    %p520 = scmp.eq.s32.totalorder %s73, 1
    %p521 = por %p519, %p520
    %p523 = scmp.ne.s32.totalorder %s508, %s522
    %p524 = scmp.eq.s32.totalorder %s73, 0
    %p525 = por %p523, %p524
    %s527 = sadd.s32 %s526, 1
    %p530 = scmp.eq.s32.totalorder %s67, 1
    %p531 = scmp.ne.s32.totalorder %s526, %s528
    %p532 = scmp.eq.s32.totalorder %s67, 0
    %p533 = por %p531, %p532
    %p534 = scmp.ne.s32.totalorder %s526, %s528
    %p535 = scmp.eq.s32.totalorder %s72, 1
    %p536 = por %p534, %p535
    %p537 = scmp.ne.s32.totalorder %s528, %s529
    %p538 = scmp.eq.s32.totalorder %s72, 0
    %p539 = por %p537, %p538
    %p540 = scmp.ne.s32.totalorder %s528, %s529
    %p541 = scmp.eq.s32.totalorder %s73, 1
    %p542 = por %p540, %p541
    %p544 = scmp.ne.s32.totalorder %s529, %s543
    %p545 = scmp.eq.s32.totalorder %s73, 0
    %p546 = por %p544, %p545
    %s548 = sadd.s32 %s547, 1
    %p551 = scmp.eq.s32.totalorder %s67, 1
    %p552 = scmp.ne.s32.totalorder %s547, %s549
    %p553 = scmp.eq.s32.totalorder %s67, 0
    %p554 = por %p552, %p553
    %p555 = scmp.ne.s32.totalorder %s547, %s549
    %p556 = scmp.eq.s32.totalorder %s72, 1
    %p557 = por %p555, %p556
    %p558 = scmp.ne.s32.totalorder %s549, %s550
    %p559 = scmp.eq.s32.totalorder %s72, 0
    %p560 = por %p558, %p559
    %p561 = scmp.ne.s32.totalorder %s549, %s550
    %p562 = scmp.eq.s32.totalorder %s73, 1
    %p563 = por %p561, %p562
    %p565 = scmp.ne.s32.totalorder %s550, %s564
    %p566 = scmp.eq.s32.totalorder %s73, 0
    %p567 = por %p565, %p566
    %s569 = sadd.s32 %s568, 1
    %p572 = scmp.eq.s32.totalorder %s67, 1
    %p573 = scmp.ne.s32.totalorder %s568, %s570
    %p574 = scmp.eq.s32.totalorder %s67, 0
    %p575 = por %p573, %p574
    %p576 = scmp.ne.s32.totalorder %s568, %s570
    %p577 = scmp.eq.s32.totalorder %s72, 1
    %p578 = por %p576, %p577
    %p579 = scmp.ne.s32.totalorder %s570, %s571
    %p580 = scmp.eq.s32.totalorder %s72, 0
    %p581 = por %p579, %p580
    %p582 = scmp.ne.s32.totalorder %s570, %s571
    %p583 = scmp.eq.s32.totalorder %s73, 1
    %p584 = por %p582, %p583
    %p586 = scmp.ne.s32.totalorder %s571, %s585
    %p587 = scmp.eq.s32.totalorder %s73, 0
    %p588 = por %p586, %p587
    %s590 = sadd.s32 %s589, 1
    %p593 = scmp.eq.s32.totalorder %s67, 1
    %p594 = scmp.ne.s32.totalorder %s589, %s591
    %p595 = scmp.eq.s32.totalorder %s67, 0
    %p596 = por %p594, %p595
    %p597 = scmp.ne.s32.totalorder %s589, %s591
    %p598 = scmp.eq.s32.totalorder %s72, 1
    %p599 = por %p597, %p598
    %p600 = scmp.ne.s32.totalorder %s591, %s592
    %p601 = scmp.eq.s32.totalorder %s72, 0
    %p602 = por %p600, %p601
    %p603 = scmp.ne.s32.totalorder %s591, %s592
    %p604 = scmp.eq.s32.totalorder %s73, 1
    %p605 = por %p603, %p604
    %p607 = scmp.ne.s32.totalorder %s592, %s606
    %p608 = scmp.eq.s32.totalorder %s73, 0
    %p609 = por %p607, %p608
    %s611 = sadd.s32 %s610, 1
    %p614 = scmp.eq.s32.totalorder %s67, 1
    %p615 = scmp.ne.s32.totalorder %s610, %s612
    %p616 = scmp.eq.s32.totalorder %s67, 0
    %p617 = por %p615, %p616
    %p618 = scmp.ne.s32.totalorder %s610, %s612
    %p619 = scmp.eq.s32.totalorder %s72, 1
    %p620 = por %p618, %p619
    %p621 = scmp.ne.s32.totalorder %s612, %s613
    %p622 = scmp.eq.s32.totalorder %s72, 0
    %p623 = por %p621, %p622
    %p624 = scmp.ne.s32.totalorder %s612, %s613
    %p625 = scmp.eq.s32.totalorder %s73, 1
    %p626 = por %p624, %p625
    %p628 = scmp.ne.s32.totalorder %s613, %s627
    %p629 = scmp.eq.s32.totalorder %s73, 0
    %p630 = por %p628, %p629
    %s632 = sadd.s32 %s631, 1
    %p635 = scmp.eq.s32.totalorder %s67, 1
    %p636 = scmp.ne.s32.totalorder %s631, %s633
    %p637 = scmp.eq.s32.totalorder %s67, 0
    %p638 = por %p636, %p637
    %p639 = scmp.ne.s32.totalorder %s631, %s633
    %p640 = scmp.eq.s32.totalorder %s72, 1
    %p641 = por %p639, %p640
    %p642 = scmp.ne.s32.totalorder %s633, %s634
    %p643 = scmp.eq.s32.totalorder %s72, 0
    %p644 = por %p642, %p643
    %p645 = scmp.ne.s32.totalorder %s633, %s634
    %p646 = scmp.eq.s32.totalorder %s73, 1
    %p647 = por %p645, %p646
    %p649 = scmp.ne.s32.totalorder %s634, %s648
    %p650 = scmp.eq.s32.totalorder %s73, 0
    %p651 = por %p649, %p650
    %s653 = sadd.s32 %s652, 1
    %p656 = scmp.eq.s32.totalorder %s67, 1
    %p657 = scmp.ne.s32.totalorder %s652, %s654
    %p658 = scmp.eq.s32.totalorder %s67, 0
    %p659 = por %p657, %p658
    %p660 = scmp.ne.s32.totalorder %s652, %s654
    %p661 = scmp.eq.s32.totalorder %s72, 1
    %p662 = por %p660, %p661
    %p663 = scmp.ne.s32.totalorder %s654, %s655
    %p664 = scmp.eq.s32.totalorder %s72, 0
    %p665 = por %p663, %p664
    %p666 = scmp.ne.s32.totalorder %s654, %s655
    %p667 = scmp.eq.s32.totalorder %s73, 1
    %p668 = por %p666, %p667
    %p670 = scmp.ne.s32.totalorder %s655, %s669
    %p671 = scmp.eq.s32.totalorder %s73, 0
    %p672 = por %p670, %p671
    %s674 = sadd.s32 %s673, 1
    %p677 = scmp.eq.s32.totalorder %s67, 1
    %p678 = scmp.ne.s32.totalorder %s673, %s675
    %p679 = scmp.eq.s32.totalorder %s67, 0
    %p680 = por %p678, %p679
    %p681 = scmp.ne.s32.totalorder %s673, %s675
    %p682 = scmp.eq.s32.totalorder %s72, 1
    %p683 = por %p681, %p682
    %p684 = scmp.ne.s32.totalorder %s675, %s676
    %p685 = scmp.eq.s32.totalorder %s72, 0
    %p686 = por %p684, %p685
    %p687 = scmp.ne.s32.totalorder %s675, %s676
    %p688 = scmp.eq.s32.totalorder %s73, 1
    %p689 = por %p687, %p688
    %p691 = scmp.ne.s32.totalorder %s676, %s690
    %p692 = scmp.eq.s32.totalorder %s73, 0
    %p693 = por %p691, %p692
    %s695 = sadd.s32 %s694, 1
    %p698 = scmp.eq.s32.totalorder %s67, 1
    %p699 = scmp.ne.s32.totalorder %s694, %s696
    %p700 = scmp.eq.s32.totalorder %s67, 0
    %p701 = por %p699, %p700
    %p702 = scmp.ne.s32.totalorder %s694, %s696
    %p703 = scmp.eq.s32.totalorder %s72, 1
    %p704 = por %p702, %p703
    %p705 = scmp.ne.s32.totalorder %s696, %s697
    %p706 = scmp.eq.s32.totalorder %s72, 0
    %p707 = por %p705, %p706
    %p708 = scmp.ne.s32.totalorder %s696, %s697
    %p709 = scmp.eq.s32.totalorder %s73, 1
    %p710 = por %p708, %p709
    %p712 = scmp.ne.s32.totalorder %s697, %s711
    %p713 = scmp.eq.s32.totalorder %s73, 0
    %p714 = por %p712, %p713
    %s715 = ssub.s32 %s67, %s74
    %p716 = scmp.eq.s32.totalorder %s715, 0
    %s718 = sadd.s32 %s717, 1
    %s719 = scalar_select %p716, %s717, %s718
    %p722 = pneg %p716
    %p723 = scmp.eq.s32.totalorder %s67, 1
    %p724 = por %p722, %p723
    %p725 = scmp.ne.s32.totalorder %s717, %s720
    %p726 = scmp.eq.s32.totalorder %s67, 0
    %p727 = por %p725, %p726
    %p728 = scmp.ne.s32.totalorder %s717, %s720
    %p729 = scmp.eq.s32.totalorder %s72, 1
    %p730 = por %p728, %p729
    %p731 = scmp.ne.s32.totalorder %s720, %s721
    %p732 = scmp.eq.s32.totalorder %s72, 0
    %p733 = por %p731, %p732
    %p734 = scmp.ne.s32.totalorder %s720, %s721
    %p735 = scmp.eq.s32.totalorder %s73, 1
    %p736 = por %p734, %p735
    %p738 = scmp.ne.s32.totalorder %s721, %s737
    %p739 = scmp.eq.s32.totalorder %s73, 0
    %p740 = por %p738, %p739
    %p741 = scmp.le.s32.totalorder 1, %s67
    %p742 = scmp.lt.s32.totalorder %s67, 3
    %p743 = pnand %p741, %p742
    %p744 = pneg %p743
    // Predicated region
    $region9: #{residual_graph_lstm_forward.3} parent=5 // pred_check
      _
    $region10: #{residual_graph_lstm_forward.3} parent=5 // pred_check_branch
      %746 = sbr.rel (%p743) target = $region12
    $region11: #{residual_graph_lstm_forward.3} parent=5 // pred_region
      %s747 = ssub.s32 %s67, 1
      // Predicated region
      $region13: #{residual_graph_lstm_forward.3} parent=11 // pred_check
        %p748 = pneg %p140
      $region14: #{residual_graph_lstm_forward.3} parent=11 // pred_check_branch
        %750 = sbr.rel (%p748) target = $region16
      $region15: #{residual_graph_lstm_forward.3} parent=11 // pred_region
        _
      $region16: #{residual_graph_lstm_forward.3} parent=11 // pred_fallthru
        _
      // Predicated region
      $region17: #{residual_graph_lstm_forward.3} parent=11 // pred_check
        %p751 = pneg %p161
      $region18: #{residual_graph_lstm_forward.3} parent=11 // pred_check_branch
        %753 = sbr.rel (%p751) target = $region20
      $region19: #{residual_graph_lstm_forward.3} parent=11 // pred_region
        _
      $region20: #{residual_graph_lstm_forward.3} parent=11 // pred_fallthru
        _
      // Predicated region
      $region21: #{residual_graph_lstm_forward.3} parent=11 // pred_check
        %p754 = pneg %p182
      $region22: #{residual_graph_lstm_forward.3} parent=11 // pred_check_branch
        %756 = sbr.rel (%p754) target = $region24
      $region23: #{residual_graph_lstm_forward.3} parent=11 // pred_region
        _
      $region24: #{residual_graph_lstm_forward.3} parent=11 // pred_fallthru
        _
      // Predicated region
      $region25: #{residual_graph_lstm_forward.3} parent=11 // pred_check
        %p757 = pneg %p203
      $region26: #{residual_graph_lstm_forward.3} parent=11 // pred_check_branch
        %759 = sbr.rel (%p757) target = $region28
      $region27: #{residual_graph_lstm_forward.3} parent=11 // pred_region
        _
      $region28: #{residual_graph_lstm_forward.3} parent=11 // pred_fallthru
        _
      // Predicated region
      $region29: #{residual_graph_lstm_forward.3} parent=11 // pred_check
        %p760 = pneg %p224
      $region30: #{residual_graph_lstm_forward.3} parent=11 // pred_check_branch
        %762 = sbr.rel (%p760) target = $region32
      $region31: #{residual_graph_lstm_forward.3} parent=11 // pred_region
        _
      $region32: #{residual_graph_lstm_forward.3} parent=11 // pred_fallthru
        _
      // Predicated region
      $region33: #{residual_graph_lstm_forward.3} parent=11 // pred_check
        %p763 = pneg %p245
      $region34: #{residual_graph_lstm_forward.3} parent=11 // pred_check_branch
        %765 = sbr.rel (%p763) target = $region36
      $region35: #{residual_graph_lstm_forward.3} parent=11 // pred_region
        _
      $region36: #{residual_graph_lstm_forward.3} parent=11 // pred_fallthru
        _
      // Predicated region
      $region37: #{residual_graph_lstm_forward.3} parent=11 // pred_check
        %p766 = pneg %p266
      $region38: #{residual_graph_lstm_forward.3} parent=11 // pred_check_branch
        %768 = sbr.rel (%p766) target = $region40
      $region39: #{residual_graph_lstm_forward.3} parent=11 // pred_region
        _
      $region40: #{residual_graph_lstm_forward.3} parent=11 // pred_fallthru
        _
      // Predicated region
      $region41: #{residual_graph_lstm_forward.3} parent=11 // pred_check
        %p769 = pneg %p287
      $region42: #{residual_graph_lstm_forward.3} parent=11 // pred_check_branch
        %771 = sbr.rel (%p769) target = $region44
      $region43: #{residual_graph_lstm_forward.3} parent=11 // pred_region
        _
      $region44: #{residual_graph_lstm_forward.3} parent=11 // pred_fallthru
        _
      // Predicated region
      $region45: #{residual_graph_lstm_forward.3} parent=11 // pred_check
        %p772 = pneg %p308
      $region46: #{residual_graph_lstm_forward.3} parent=11 // pred_check_branch
        %774 = sbr.rel (%p772) target = $region48
      $region47: #{residual_graph_lstm_forward.3} parent=11 // pred_region
        _
      $region48: #{residual_graph_lstm_forward.3} parent=11 // pred_fallthru
        _
      // Predicated region
      $region49: #{residual_graph_lstm_forward.3} parent=11 // pred_check
        %p775 = pneg %p329
      $region50: #{residual_graph_lstm_forward.3} parent=11 // pred_check_branch
        %777 = sbr.rel (%p775) target = $region52
      $region51: #{residual_graph_lstm_forward.3} parent=11 // pred_region
        _
      $region52: #{residual_graph_lstm_forward.3} parent=11 // pred_fallthru
        _
      // Predicated region
      $region53: #{residual_graph_lstm_forward.3} parent=11 // pred_check
        %p778 = pneg %p350
      $region54: #{residual_graph_lstm_forward.3} parent=11 // pred_check_branch
        %780 = sbr.rel (%p778) target = $region56
      $region55: #{residual_graph_lstm_forward.3} parent=11 // pred_region
        _
      $region56: #{residual_graph_lstm_forward.3} parent=11 // pred_fallthru
        _
      // Predicated region
      $region57: #{residual_graph_lstm_forward.3} parent=11 // pred_check
        %p781 = pneg %p371
      $region58: #{residual_graph_lstm_forward.3} parent=11 // pred_check_branch
        %783 = sbr.rel (%p781) target = $region60
      $region59: #{residual_graph_lstm_forward.3} parent=11 // pred_region
        _
      $region60: #{residual_graph_lstm_forward.3} parent=11 // pred_fallthru
        _
      // Predicated region
      $region61: #{residual_graph_lstm_forward.3} parent=11 // pred_check
        %p784 = pneg %p392
      $region62: #{residual_graph_lstm_forward.3} parent=11 // pred_check_branch
        %786 = sbr.rel (%p784) target = $region64
      $region63: #{residual_graph_lstm_forward.3} parent=11 // pred_region
        _
      $region64: #{residual_graph_lstm_forward.3} parent=11 // pred_fallthru
        _
      // Predicated region
      $region65: #{residual_graph_lstm_forward.3} parent=11 // pred_check
        %p787 = pneg %p413
      $region66: #{residual_graph_lstm_forward.3} parent=11 // pred_check_branch
        %789 = sbr.rel (%p787) target = $region68
      $region67: #{residual_graph_lstm_forward.3} parent=11 // pred_region
        _
      $region68: #{residual_graph_lstm_forward.3} parent=11 // pred_fallthru
        _
      // Predicated region
      $region69: #{residual_graph_lstm_forward.3} parent=11 // pred_check
        %p790 = pneg %p434
      $region70: #{residual_graph_lstm_forward.3} parent=11 // pred_check_branch
        %792 = sbr.rel (%p790) target = $region72
      $region71: #{residual_graph_lstm_forward.3} parent=11 // pred_region
        _
      $region72: #{residual_graph_lstm_forward.3} parent=11 // pred_fallthru
        _
      // Predicated region
      $region73: #{residual_graph_lstm_forward.3} parent=11 // pred_check
        %p793 = pneg %p455
      $region74: #{residual_graph_lstm_forward.3} parent=11 // pred_check_branch
        %795 = sbr.rel (%p793) target = $region76
      $region75: #{residual_graph_lstm_forward.3} parent=11 // pred_region
        _
      $region76: #{residual_graph_lstm_forward.3} parent=11 // pred_fallthru
        _
      // Predicated region
      $region77: #{residual_graph_lstm_forward.3} parent=11 // pred_check
        %p796 = pneg %p476
      $region78: #{residual_graph_lstm_forward.3} parent=11 // pred_check_branch
        %798 = sbr.rel (%p796) target = $region80
      $region79: #{residual_graph_lstm_forward.3} parent=11 // pred_region
        _
      $region80: #{residual_graph_lstm_forward.3} parent=11 // pred_fallthru
        _
      // Predicated region
      $region81: #{residual_graph_lstm_forward.3} parent=11 // pred_check
        %p799 = pneg %p497
      $region82: #{residual_graph_lstm_forward.3} parent=11 // pred_check_branch
        %801 = sbr.rel (%p799) target = $region84
      $region83: #{residual_graph_lstm_forward.3} parent=11 // pred_region
        _
      $region84: #{residual_graph_lstm_forward.3} parent=11 // pred_fallthru
        _
      // Predicated region
      $region85: #{residual_graph_lstm_forward.3} parent=11 // pred_check
        %p802 = pneg %p518
      $region86: #{residual_graph_lstm_forward.3} parent=11 // pred_check_branch
        %804 = sbr.rel (%p802) target = $region88
      $region87: #{residual_graph_lstm_forward.3} parent=11 // pred_region
        _
      $region88: #{residual_graph_lstm_forward.3} parent=11 // pred_fallthru
        _
      // Predicated region
      $region89: #{residual_graph_lstm_forward.3} parent=11 // pred_check
        %p805 = pneg %p539
      $region90: #{residual_graph_lstm_forward.3} parent=11 // pred_check_branch
        %807 = sbr.rel (%p805) target = $region92
      $region91: #{residual_graph_lstm_forward.3} parent=11 // pred_region
        _
      $region92: #{residual_graph_lstm_forward.3} parent=11 // pred_fallthru
        _
      // Predicated region
      $region93: #{residual_graph_lstm_forward.3} parent=11 // pred_check
        %p808 = pneg %p560
      $region94: #{residual_graph_lstm_forward.3} parent=11 // pred_check_branch
        %810 = sbr.rel (%p808) target = $region96
      $region95: #{residual_graph_lstm_forward.3} parent=11 // pred_region
        _
      $region96: #{residual_graph_lstm_forward.3} parent=11 // pred_fallthru
        _
      // Predicated region
      $region97: #{residual_graph_lstm_forward.3} parent=11 // pred_check
        %p811 = pneg %p581
      $region98: #{residual_graph_lstm_forward.3} parent=11 // pred_check_branch
        %813 = sbr.rel (%p811) target = $region100
      $region99: #{residual_graph_lstm_forward.3} parent=11 // pred_region
        _
      $region100: #{residual_graph_lstm_forward.3} parent=11 // pred_fallthru
        _
      // Predicated region
      $region101: #{residual_graph_lstm_forward.3} parent=11 // pred_check
        %p814 = pneg %p602
      $region102: #{residual_graph_lstm_forward.3} parent=11 // pred_check_branch
        %816 = sbr.rel (%p814) target = $region104
      $region103: #{residual_graph_lstm_forward.3} parent=11 // pred_region
        _
      $region104: #{residual_graph_lstm_forward.3} parent=11 // pred_fallthru
        _
      // Predicated region
      $region105: #{residual_graph_lstm_forward.3} parent=11 // pred_check
        %p817 = pneg %p623
      $region106: #{residual_graph_lstm_forward.3} parent=11 // pred_check_branch
        %819 = sbr.rel (%p817) target = $region108
      $region107: #{residual_graph_lstm_forward.3} parent=11 // pred_region
        _
      $region108: #{residual_graph_lstm_forward.3} parent=11 // pred_fallthru
        _
      // Predicated region
      $region109: #{residual_graph_lstm_forward.3} parent=11 // pred_check
        %p820 = pneg %p644
      $region110: #{residual_graph_lstm_forward.3} parent=11 // pred_check_branch
        %822 = sbr.rel (%p820) target = $region112
      $region111: #{residual_graph_lstm_forward.3} parent=11 // pred_region
        _
      $region112: #{residual_graph_lstm_forward.3} parent=11 // pred_fallthru
        _
      // Predicated region
      $region113: #{residual_graph_lstm_forward.3} parent=11 // pred_check
        %p823 = pneg %p665
      $region114: #{residual_graph_lstm_forward.3} parent=11 // pred_check_branch
        %825 = sbr.rel (%p823) target = $region116
      $region115: #{residual_graph_lstm_forward.3} parent=11 // pred_region
        _
      $region116: #{residual_graph_lstm_forward.3} parent=11 // pred_fallthru
        _
      // Predicated region
      $region117: #{residual_graph_lstm_forward.3} parent=11 // pred_check
        %p826 = pneg %p686
      $region118: #{residual_graph_lstm_forward.3} parent=11 // pred_check_branch
        %828 = sbr.rel (%p826) target = $region120
      $region119: #{residual_graph_lstm_forward.3} parent=11 // pred_region
        _
      $region120: #{residual_graph_lstm_forward.3} parent=11 // pred_fallthru
        _
      // Predicated region
      $region121: #{residual_graph_lstm_forward.3} parent=11 // pred_check
        %p829 = pneg %p707
      $region122: #{residual_graph_lstm_forward.3} parent=11 // pred_check_branch
        %831 = sbr.rel (%p829) target = $region124
      $region123: #{residual_graph_lstm_forward.3} parent=11 // pred_region
        _
      $region124: #{residual_graph_lstm_forward.3} parent=11 // pred_fallthru
        _
    $region12: #{residual_graph_lstm_forward.3} parent=5 // pred_fallthru
      _
    %p832 = scmp.lt.s32.totalorder %s67, 2
    // Predicated region
    $region125: #{residual_graph_lstm_forward.3} parent=5 // pred_check
      %p833 = pneg %p832
    $region126: #{residual_graph_lstm_forward.3} parent=5 // pred_check_branch
      %835 = sbr.rel (%p833) target = $region128
    $region127: #{residual_graph_lstm_forward.3} parent=5 // pred_region
      // Predicated region
      $region129: #{residual_graph_lstm_forward.3} parent=127 // pred_check
        %p836 = pneg %p87
      $region130: #{residual_graph_lstm_forward.3} parent=127 // pred_check_branch
        %838 = sbr.rel (%p836) target = $region132
      $region131: #{residual_graph_lstm_forward.3} parent=127 // pred_region
        %p839 = scmp.lt.s32.totalorder %s67, 1
        %s840 = scalar_select %p839, %s67, 1
        %s841 = smul.addr %s840, 2
        %s842 = smul.addr %s841, 8
        %s843 = scalar_lea.vmem %s1, %s842
      $region132: #{residual_graph_lstm_forward.3} parent=127 // pred_fallthru
        _
      // Predicated region
      $region133: #{residual_graph_lstm_forward.3} parent=127 // pred_check
        %p844 = pneg %p113
      $region134: #{residual_graph_lstm_forward.3} parent=127 // pred_check_branch
        %846 = sbr.rel (%p844) target = $region136
      $region135: #{residual_graph_lstm_forward.3} parent=127 // pred_region
        %p847 = scmp.lt.s32.totalorder %s67, 1
        %s848 = scalar_select %p847, %s67, 1
        %s849 = smul.addr %s848, 4
        %s850 = smul.addr %s849, 8
        %s851 = scalar_lea.vmem %s3, %s850
      $region136: #{residual_graph_lstm_forward.3} parent=127 // pred_fallthru
        _
    $region128: #{residual_graph_lstm_forward.3} parent=5 // pred_fallthru
      _
    %p852 = scmp.le.s32.totalorder 1, %s67
    %p853 = scmp.lt.s32.totalorder %s67, 3
    %p854 = pnand %p852, %p853
    %p855 = pneg %p854
    // Predicated region
    $region137: #{residual_graph_lstm_forward.3} parent=5 // pred_check
      _
    $region138: #{residual_graph_lstm_forward.3} parent=5 // pred_check_branch
      %857 = sbr.rel (%p854) target = $region140
    $region139: #{residual_graph_lstm_forward.3} parent=5 // pred_region
      %s858 = ssub.s32 %s67, 1
      %p859 = scmp.lt.s32.totalorder %s72, 1
      %s860 = scalar_select %p859, %s72, 1
      %s861 = smul.addr %s860, 2
      %s862 = smul.addr %s861, 8
      %s863 = scalar_lea.vmem %s1, %s862
      %p864 = pneg %p93
      %p865 = pneg %p90
      %p866 = scmp.lt.s32.totalorder %s72, 1
      %s867 = scalar_select %p866, %s72, 1
      %s868 = smul.addr %s867, 4
      %s869 = smul.addr %s868, 8
      %s870 = scalar_lea.vmem %s3, %s869
      %p871 = pneg %p119
      %p872 = pneg %p116
      %p873 = pneg %p140
      %p874 = pneg %p137
      %p875 = pneg %p161
      %p876 = pneg %p158
      %p877 = pneg %p182
      %p878 = pneg %p179
      %p879 = pneg %p203
      %p880 = pneg %p200
      %p881 = pneg %p224
      %p882 = pneg %p221
      %p883 = pneg %p245
      %p884 = pneg %p242
      %p885 = pneg %p266
      %p886 = pneg %p263
      %p887 = pneg %p287
      %p888 = pneg %p284
      %p889 = pneg %p308
      %p890 = pneg %p305
      %p891 = pneg %p329
      %p892 = pneg %p326
      %p893 = pneg %p350
      %p894 = pneg %p347
      %p895 = pneg %p371
      %p896 = pneg %p368
      %p897 = pneg %p392
      %p898 = pneg %p389
      %p899 = pneg %p413
      %p900 = pneg %p410
      %p901 = pneg %p434
      %p902 = pneg %p431
      %p903 = pneg %p455
      %p904 = pneg %p452
      %p905 = pneg %p476
      %p906 = pneg %p473
      %p907 = pneg %p497
      %p908 = pneg %p494
      %p909 = pneg %p518
      %p910 = pneg %p515
      %p911 = pneg %p539
      %p912 = pneg %p536
      %p913 = pneg %p560
      %p914 = pneg %p557
      %p915 = pneg %p581
      %p916 = pneg %p578
      %p917 = pneg %p602
      %p918 = pneg %p599
      %p919 = pneg %p623
      %p920 = pneg %p620
      %p921 = pneg %p644
      %p922 = pneg %p641
      %p923 = pneg %p665
      %p924 = pneg %p662
      %p925 = pneg %p686
      %p926 = pneg %p683
      %p927 = pneg %p707
      %p928 = pneg %p704
      %p929 = pneg %p733
      %p930 = pneg %p730
      %p931 = scmp.lt.s32.totalorder %s72, 1
      %s932 = scalar_select %p931, %s72, 1
      %s933 = smul.addr %s932, 2
      %s934 = smul.addr %s933, 8
      %s935 = scalar_lea.vmem %s61, %s934
      %p936 = scmp.lt.s32.totalorder %s72, 1
      %s937 = scalar_select %p936, %s72, 1
      %s938 = smul.addr %s937, 2
      %s939 = smul.addr %s938, 8
      %s940 = scalar_lea.vmem %s1, %s939
      %p941 = scmp.lt.s32.totalorder %s72, 1
      %s942 = scalar_select %p941, %s72, 1
      %s943 = smul.addr %s942, 4
      %s944 = smul.addr %s943, 8
      %s945 = scalar_lea.vmem %s3, %s944
      %p946 = scmp.lt.s32.totalorder %s72, 1
      %s947 = scalar_select %p946, %s72, 1
      %s948 = smul.addr %s947, 2
      %s949 = smul.addr %s948, 8
      %s950 = scalar_lea.vmem %s61, %s949
      %v951 = vld [vmem:[%s945] sm:$0xff]
      %v952 = vld [vmem:[%s945 + $0x8] sm:$0xff]
      %v953 = vld [vmem:[%s945 + $0x10] sm:$0xff]
      %v954 = vld [vmem:[%s945 + $0x18] sm:$0xff]
      %v955 = vld [vmem:[%s940] sm:$0xff]
      %v956 = vld [vmem:[%s940 + $0x8] sm:$0xff]
      %v957 = vld [vmem:[%s7] sm:$0xff]
      %v958 = vld [vmem:[%s5] sm:$0x1]
      %vm959 = vcmask 130048
      %v961 = vsel %vm959, %v951, 0
      %v964 = vsel %vm959, %v952, 0
      %v967 = vsel %vm959, %v953, 0
      %v970 = vsel %vm959, %v954, 0
      %972 = vmatprep.subr.mxu0 0.0
      %973 = vmatpush1.msra.mxu0 %v955
      %974 = vmatprep.subr.mxu0 0.0
      %975 = vmatpush1.msra.mxu0 %v956
      %976 = vmatprep.subr.mxu0 0.0
      %977 = vmatpush1.msra.mxu0 0.0
      %978 = vmatprep.subr.mxu0 0.0
      %979 = vmatpush1.msra.mxu0 0.0
      %980 = vmatprep.subr.mxu0 0.0
      %981 = vmatpush1.msra.mxu0 0.0
      %982 = vmatprep.subr.mxu0 0.0
      %983 = vmatpush1.msra.mxu0 0.0
      %984 = vmatprep.subr.mxu0 0.0
      %985 = vmatpush1.msra.mxu0 0.0
      %986 = vmatprep.subr.mxu0 0.0
      %987 = vmatpush1.msra.mxu0 0.0
      %988 = vmatprep.subr.mxu0 0.0
      %989 = vmatpush1.msra.mxu0 0.0
      %990 = vmatprep.subr.mxu0 0.0
      %991 = vmatpush1.msra.mxu0 0.0
      %992 = vmatprep.subr.mxu0 0.0
      %993 = vmatpush1.msra.mxu0 0.0
      %994 = vmatprep.subr.mxu0 0.0
      %995 = vmatpush1.msra.mxu0 0.0
      %996 = vmatprep.subr.mxu0 0.0
      %997 = vmatpush1.msra.mxu0 0.0
      %998 = vmatprep.subr.mxu0 0.0
      %999 = vmatpush1.msra.mxu0 0.0
      %1000 = vmatprep.subr.mxu0 0.0
      %1001 = vmatpush1.msra.mxu0 0.0
      %1002 = vmatprep.subr.mxu0 0.0
      %1003 = vmatpush1.msra.mxu0 0.0
      %1004 = vmatprep.subr.mxu0 0.0
      %1005 = vmatpush1.msra.mxu0 0.0
      %1006 = vmatprep.subr.mxu0 0.0
      %1007 = vmatpush1.msra.mxu0 0.0
      %1008 = vmatprep.subr.mxu0 0.0
      %1009 = vmatpush1.msra.mxu0 0.0
      %1010 = vmatprep.subr.mxu0 0.0
      %1011 = vmatpush1.msra.mxu0 0.0
      %1012 = vmatprep.subr.mxu0 0.0
      %1013 = vmatpush1.msra.mxu0 0.0
      %1014 = vmatprep.subr.mxu0 0.0
      %1015 = vmatpush1.msra.mxu0 0.0
      %1016 = vmatprep.subr.mxu0 0.0
      %1017 = vmatpush1.msra.mxu0 0.0
      %1018 = vmatprep.subr.mxu0 0.0
      %1019 = vmatpush1.msra.mxu0 0.0
      %1020 = vmatprep.subr.mxu0 0.0
      %1021 = vmatpush1.msra.mxu0 0.0
      %1022 = vmatprep.subr.mxu0 0.0
      %1023 = vmatpush1.msra.mxu0 0.0
      %1024 = vmatprep.subr.mxu0 0.0
      %1025 = vmatpush1.msra.mxu0 0.0
      %1026 = vmatprep.subr.mxu0 0.0
      %1027 = vmatpush1.msra.mxu0 0.0
      %1028 = vmatprep.subr.mxu0 0.0
      %1029 = vmatpush1.msra.mxu0 0.0
      %1030 = vmatprep.subr.mxu0 0.0
      %1031 = vmatpush1.msra.mxu0 0.0
      %1032 = vmatprep.subr.mxu0 0.0
      %1033 = vmatpush1.msra.mxu0 0.0
      %1034 = vmatprep.subr.mxu0 0.0
      %1035 = vmatpush1.msra.mxu0 0.0
      %1036 = vmatprep.mubr.f32.mxu0 0.0
      %1037 = vmatmul.mubr.f32.gmra.mrb[0].mxu0 %v961
      %v1038 = vpop.f32.mrb[0].mxu0
      %v1039 = vadd.f32 0.0, %v1038
      %v1040 = vpop.f32.mrb[0].mxu0
      %1041 = vmatprep.mubr.f32.mxu0 0.0
      %1042 = vmatmul.mubr.f32.gmra.mrb[0].mxu0 %v964
      %v1043 = vpop.f32.mrb[0].mxu0
      %v1044 = vadd.f32 0.0, %v1043
      %v1045 = vpop.f32.mrb[0].mxu0
      %1046 = vmatprep.mubr.f32.mxu0 0.0
      %1047 = vmatmul.mubr.f32.gmra.mrb[0].mxu0 %v967
      %v1048 = vpop.f32.mrb[0].mxu0
      %v1049 = vadd.f32 0.0, %v1048
      %v1050 = vpop.f32.mrb[0].mxu0
      %1051 = vmatprep.mubr.f32.mxu0 0.0
      %1052 = vmatmul.mubr.f32.gmra.mrb[0].mxu0 %v970
      %v1053 = vpop.f32.mrb[0].mxu0
      %v1054 = vadd.f32 0.0, %v1053
      %v1055 = vpop.f32.mrb[0].mxu0
      %1056 = vdwg.mxu0
      %v1058 = vrot.slane %v957, 4
      %vm1059 = vcmask 31744
      %v1061 = vsel %vm1059, %v1049, 0
      %v1064 = vsel %vm1059, %v1054, 0
      %vm1066 = vcmask 1043456
      %v1067 = vsel %vm1066, %v1058, 0
      %1069 = vmatprep.subr.mxu0 0.0
      %1070 = vmatpush1.msra.mxu0 %v1067
      %1071 = vmatprep.subr.mxu0 0.0
      %1072 = vmatpush1.msra.mxu0 0.0
      %1073 = vmatprep.subr.mxu0 0.0
      %1074 = vmatpush1.msra.mxu0 0.0
      %1075 = vmatprep.subr.mxu0 0.0
      %1076 = vmatpush1.msra.mxu0 0.0
      %1077 = vmatprep.subr.mxu0 0.0
      %1078 = vmatpush1.msra.mxu0 0.0
      %1079 = vmatprep.subr.mxu0 0.0
      %1080 = vmatpush1.msra.mxu0 0.0
      %1081 = vmatprep.subr.mxu0 0.0
      %1082 = vmatpush1.msra.mxu0 0.0
      %1083 = vmatprep.subr.mxu0 0.0
      %1084 = vmatpush1.msra.mxu0 0.0
      %1085 = vmatprep.subr.mxu0 0.0
      %1086 = vmatpush1.msra.mxu0 0.0
      %1087 = vmatprep.subr.mxu0 0.0
      %1088 = vmatpush1.msra.mxu0 0.0
      %1089 = vmatprep.subr.mxu0 0.0
      %1090 = vmatpush1.msra.mxu0 0.0
      %1091 = vmatprep.subr.mxu0 0.0
      %1092 = vmatpush1.msra.mxu0 0.0
      %1093 = vmatprep.subr.mxu0 0.0
      %1094 = vmatpush1.msra.mxu0 0.0
      %1095 = vmatprep.subr.mxu0 0.0
      %1096 = vmatpush1.msra.mxu0 0.0
      %1097 = vmatprep.subr.mxu0 0.0
      %1098 = vmatpush1.msra.mxu0 0.0
      %1099 = vmatprep.subr.mxu0 0.0
      %1100 = vmatpush1.msra.mxu0 0.0
      %1101 = vmatprep.subr.mxu0 0.0
      %1102 = vmatpush1.msra.mxu0 0.0
      %1103 = vmatprep.subr.mxu0 0.0
      %1104 = vmatpush1.msra.mxu0 0.0
      %1105 = vmatprep.subr.mxu0 0.0
      %1106 = vmatpush1.msra.mxu0 0.0
      %1107 = vmatprep.subr.mxu0 0.0
      %1108 = vmatpush1.msra.mxu0 0.0
      %1109 = vmatprep.subr.mxu0 0.0
      %1110 = vmatpush1.msra.mxu0 0.0
      %1111 = vmatprep.subr.mxu0 0.0
      %1112 = vmatpush1.msra.mxu0 0.0
      %1113 = vmatprep.subr.mxu0 0.0
      %1114 = vmatpush1.msra.mxu0 0.0
      %1115 = vmatprep.subr.mxu0 0.0
      %1116 = vmatpush1.msra.mxu0 0.0
      %1117 = vmatprep.subr.mxu0 0.0
      %1118 = vmatpush1.msra.mxu0 0.0
      %1119 = vmatprep.subr.mxu0 0.0
      %1120 = vmatpush1.msra.mxu0 0.0
      %1121 = vmatprep.subr.mxu0 0.0
      %1122 = vmatpush1.msra.mxu0 0.0
      %1123 = vmatprep.subr.mxu0 0.0
      %1124 = vmatpush1.msra.mxu0 0.0
      %1125 = vmatprep.subr.mxu0 0.0
      %1126 = vmatpush1.msra.mxu0 0.0
      %1127 = vmatprep.subr.mxu0 0.0
      %1128 = vmatpush1.msra.mxu0 0.0
      %1129 = vmatprep.subr.mxu0 0.0
      %1130 = vmatpush1.msra.mxu0 0.0
      %1131 = vmatprep.subr.mxu0 0.0
      %1132 = vmatpush1.msra.mxu0 0.0
      %1133 = vmatprep.mubr.f32.mxu0 0.0
      %1134 = vmatmul.mubr.f32.gmra.mrb[0].mxu0 %v1061
      %v1135 = vpop.f32.mrb[0].mxu0
      %v1136 = vadd.f32 0.0, %v1135
      %v1137 = vpop.f32.mrb[0].mxu0
      %1138 = vmatprep.mubr.f32.mxu0 0.0
      %1139 = vmatmul.mubr.f32.gmra.mrb[0].mxu0 %v1064
      %v1140 = vpop.f32.mrb[0].mxu0
      %v1141 = vadd.f32 0.0, %v1140
      %v1142 = vpop.f32.mrb[0].mxu0
      %1143 = vdwg.mxu0
      %v1145 = vsel %vm1059, %v1039, 0
      %v1148 = vsel %vm1059, %v1044, 0
      %v1150 = vsel %vm1066, %v957, 0
      %1152 = vmatprep.subr.mxu0 0.0
      %1153 = vmatpush1.msra.mxu0 %v1150
      %1154 = vmatprep.subr.mxu0 0.0
      %1155 = vmatpush1.msra.mxu0 0.0
      %1156 = vmatprep.subr.mxu0 0.0
      %1157 = vmatpush1.msra.mxu0 0.0
      %1158 = vmatprep.subr.mxu0 0.0
      %1159 = vmatpush1.msra.mxu0 0.0
      %1160 = vmatprep.subr.mxu0 0.0
      %1161 = vmatpush1.msra.mxu0 0.0
      %1162 = vmatprep.subr.mxu0 0.0
      %1163 = vmatpush1.msra.mxu0 0.0
      %1164 = vmatprep.subr.mxu0 0.0
      %1165 = vmatpush1.msra.mxu0 0.0
      %1166 = vmatprep.subr.mxu0 0.0
      %1167 = vmatpush1.msra.mxu0 0.0
      %1168 = vmatprep.subr.mxu0 0.0
      %1169 = vmatpush1.msra.mxu0 0.0
      %1170 = vmatprep.subr.mxu0 0.0
      %1171 = vmatpush1.msra.mxu0 0.0
      %1172 = vmatprep.subr.mxu0 0.0
      %1173 = vmatpush1.msra.mxu0 0.0
      %1174 = vmatprep.subr.mxu0 0.0
      %1175 = vmatpush1.msra.mxu0 0.0
      %1176 = vmatprep.subr.mxu0 0.0
      %1177 = vmatpush1.msra.mxu0 0.0
      %1178 = vmatprep.subr.mxu0 0.0
      %1179 = vmatpush1.msra.mxu0 0.0
      %1180 = vmatprep.subr.mxu0 0.0
      %1181 = vmatpush1.msra.mxu0 0.0
      %1182 = vmatprep.subr.mxu0 0.0
      %1183 = vmatpush1.msra.mxu0 0.0
      %1184 = vmatprep.subr.mxu0 0.0
      %1185 = vmatpush1.msra.mxu0 0.0
      %1186 = vmatprep.subr.mxu0 0.0
      %1187 = vmatpush1.msra.mxu0 0.0
      %1188 = vmatprep.subr.mxu0 0.0
      %1189 = vmatpush1.msra.mxu0 0.0
      %1190 = vmatprep.subr.mxu0 0.0
      %1191 = vmatpush1.msra.mxu0 0.0
      %1192 = vmatprep.subr.mxu0 0.0
      %1193 = vmatpush1.msra.mxu0 0.0
      %1194 = vmatprep.subr.mxu0 0.0
      %1195 = vmatpush1.msra.mxu0 0.0
      %1196 = vmatprep.subr.mxu0 0.0
      %1197 = vmatpush1.msra.mxu0 0.0
      %1198 = vmatprep.subr.mxu0 0.0
      %1199 = vmatpush1.msra.mxu0 0.0
      %1200 = vmatprep.subr.mxu0 0.0
      %1201 = vmatpush1.msra.mxu0 0.0
      %1202 = vmatprep.subr.mxu0 0.0
      %1203 = vmatpush1.msra.mxu0 0.0
      %1204 = vmatprep.subr.mxu0 0.0
      %1205 = vmatpush1.msra.mxu0 0.0
      %1206 = vmatprep.subr.mxu0 0.0
      %1207 = vmatpush1.msra.mxu0 0.0
      %1208 = vmatprep.subr.mxu0 0.0
      %1209 = vmatpush1.msra.mxu0 0.0
      %1210 = vmatprep.subr.mxu0 0.0
      %1211 = vmatpush1.msra.mxu0 0.0
      %1212 = vmatprep.subr.mxu0 0.0
      %1213 = vmatpush1.msra.mxu0 0.0
      %1214 = vmatprep.subr.mxu0 0.0
      %1215 = vmatpush1.msra.mxu0 0.0
      %1216 = vmatprep.mubr.f32.mxu0 0.0
      %1217 = vmatmul.mubr.f32.gmra.mrb[0].mxu0 %v1145
      %v1218 = vpop.f32.mrb[0].mxu0
      %v1219 = vadd.f32 %v1136, %v1218
      %v1220 = vpop.f32.mrb[0].mxu0
      %1221 = vmatprep.mubr.f32.mxu0 0.0
      %1222 = vmatmul.mubr.f32.gmra.mrb[0].mxu0 %v1148
      %v1223 = vpop.f32.mrb[0].mxu0
      %v1224 = vadd.f32 %v1141, %v1223
      %v1225 = vpop.f32.mrb[0].mxu0
      %1226 = vdwg.mxu0
      %v1228 = vlaneseq
      %v1229 = vshrl.u32 %v1228, 7
      %v1230 = vsub.s32 0, %v1229
      %v1231 = vrot.slane %v958, %v1230
      %v1233 = vadd.f32 %v1219, %v1231
      %v1234 = vadd.f32 %v1224, %v1231
      %v1235 = vmax.f32 %v1233, 0.0
      %v1236 = vmax.f32 %v1234, 0.0
      %v1237 = vld [vmem:[%s11] sm:$0xff]
      %v1238 = vld [vmem:[%s11 + $0x8] sm:$0xff]
      %v1239 = vld [vmem:[%s9] sm:$0x1]
      %1240 = vmatprep.subr.mxu0 0.0
      %1241 = vmatpush1.msra.mxu0 %v1235
      %1242 = vmatprep.subr.mxu0 0.0
      %1243 = vmatpush1.msra.mxu0 %v1236
      %1244 = vmatprep.subr.mxu0 0.0
      %1245 = vmatpush1.msra.mxu0 0.0
      %1246 = vmatprep.subr.mxu0 0.0
      %1247 = vmatpush1.msra.mxu0 0.0
      %1248 = vmatprep.subr.mxu0 0.0
      %1249 = vmatpush1.msra.mxu0 0.0
      %1250 = vmatprep.subr.mxu0 0.0
      %1251 = vmatpush1.msra.mxu0 0.0
      %1252 = vmatprep.subr.mxu0 0.0
      %1253 = vmatpush1.msra.mxu0 0.0
      %1254 = vmatprep.subr.mxu0 0.0
      %1255 = vmatpush1.msra.mxu0 0.0
      %1256 = vmatprep.subr.mxu0 0.0
      %1257 = vmatpush1.msra.mxu0 0.0
      %1258 = vmatprep.subr.mxu0 0.0
      %1259 = vmatpush1.msra.mxu0 0.0
      %1260 = vmatprep.subr.mxu0 0.0
      %1261 = vmatpush1.msra.mxu0 0.0
      %1262 = vmatprep.subr.mxu0 0.0
      %1263 = vmatpush1.msra.mxu0 0.0
      %1264 = vmatprep.subr.mxu0 0.0
      %1265 = vmatpush1.msra.mxu0 0.0
      %1266 = vmatprep.subr.mxu0 0.0
      %1267 = vmatpush1.msra.mxu0 0.0
      %1268 = vmatprep.subr.mxu0 0.0
      %1269 = vmatpush1.msra.mxu0 0.0
      %1270 = vmatprep.subr.mxu0 0.0
      %1271 = vmatpush1.msra.mxu0 0.0
      %1272 = vmatprep.subr.mxu0 0.0
      %1273 = vmatpush1.msra.mxu0 0.0
      %1274 = vmatprep.subr.mxu0 0.0
      %1275 = vmatpush1.msra.mxu0 0.0
      %1276 = vmatprep.subr.mxu0 0.0
      %1277 = vmatpush1.msra.mxu0 0.0
      %1278 = vmatprep.subr.mxu0 0.0
      %1279 = vmatpush1.msra.mxu0 0.0
      %1280 = vmatprep.subr.mxu0 0.0
      %1281 = vmatpush1.msra.mxu0 0.0
      %1282 = vmatprep.subr.mxu0 0.0
      %1283 = vmatpush1.msra.mxu0 0.0
      %1284 = vmatprep.subr.mxu0 0.0
      %1285 = vmatpush1.msra.mxu0 0.0
      %1286 = vmatprep.subr.mxu0 0.0
      %1287 = vmatpush1.msra.mxu0 0.0
      %1288 = vmatprep.subr.mxu0 0.0
      %1289 = vmatpush1.msra.mxu0 0.0
      %1290 = vmatprep.subr.mxu0 0.0
      %1291 = vmatpush1.msra.mxu0 0.0
      %1292 = vmatprep.subr.mxu0 0.0
      %1293 = vmatpush1.msra.mxu0 0.0
      %1294 = vmatprep.subr.mxu0 0.0
      %1295 = vmatpush1.msra.mxu0 0.0
      %1296 = vmatprep.subr.mxu0 0.0
      %1297 = vmatpush1.msra.mxu0 0.0
      %1298 = vmatprep.subr.mxu0 0.0
      %1299 = vmatpush1.msra.mxu0 0.0
      %1300 = vmatprep.subr.mxu0 0.0
      %1301 = vmatpush1.msra.mxu0 0.0
      %1302 = vmatprep.subr.mxu0 0.0
      %1303 = vmatpush1.msra.mxu0 0.0
      %1304 = vmatprep.mubr.f32.mxu0 0.0
      %1305 = vmatmul.mubr.f32.gmra.mrb[0].mxu0 %v961
      %v1306 = vpop.f32.mrb[0].mxu0
      %v1307 = vadd.f32 0.0, %v1306
      %v1308 = vpop.f32.mrb[0].mxu0
      %1309 = vmatprep.mubr.f32.mxu0 0.0
      %1310 = vmatmul.mubr.f32.gmra.mrb[0].mxu0 %v964
      %v1311 = vpop.f32.mrb[0].mxu0
      %v1312 = vadd.f32 0.0, %v1311
      %v1313 = vpop.f32.mrb[0].mxu0
      %1314 = vmatprep.mubr.f32.mxu0 0.0
      %1315 = vmatmul.mubr.f32.gmra.mrb[0].mxu0 %v967
      %v1316 = vpop.f32.mrb[0].mxu0
      %v1317 = vadd.f32 0.0, %v1316
      %v1318 = vpop.f32.mrb[0].mxu0
      %1319 = vmatprep.mubr.f32.mxu0 0.0
      %1320 = vmatmul.mubr.f32.gmra.mrb[0].mxu0 %v970
      %v1321 = vpop.f32.mrb[0].mxu0
      %v1322 = vadd.f32 0.0, %v1321
      %v1323 = vpop.f32.mrb[0].mxu0
      %1324 = vdwg.mxu0
      %vm1325 = vcmask 64512
      %v1327 = vsel %vm1325, %v1317, 0
      %v1330 = vsel %vm1325, %v1322, 0
      %1332 = vmatprep.subr.mxu0 0.0
      %1333 = vmatpush1.msra.mxu0 %v1238
      %1334 = vmatprep.subr.mxu0 0.0
      %1335 = vmatpush1.msra.mxu0 0.0
      %1336 = vmatprep.subr.mxu0 0.0
      %1337 = vmatpush1.msra.mxu0 0.0
      %1338 = vmatprep.subr.mxu0 0.0
      %1339 = vmatpush1.msra.mxu0 0.0
      %1340 = vmatprep.subr.mxu0 0.0
      %1341 = vmatpush1.msra.mxu0 0.0
      %1342 = vmatprep.subr.mxu0 0.0
      %1343 = vmatpush1.msra.mxu0 0.0
      %1344 = vmatprep.subr.mxu0 0.0
      %1345 = vmatpush1.msra.mxu0 0.0
      %1346 = vmatprep.subr.mxu0 0.0
      %1347 = vmatpush1.msra.mxu0 0.0
      %1348 = vmatprep.subr.mxu0 0.0
      %1349 = vmatpush1.msra.mxu0 0.0
      %1350 = vmatprep.subr.mxu0 0.0
      %1351 = vmatpush1.msra.mxu0 0.0
      %1352 = vmatprep.subr.mxu0 0.0
      %1353 = vmatpush1.msra.mxu0 0.0
      %1354 = vmatprep.subr.mxu0 0.0
      %1355 = vmatpush1.msra.mxu0 0.0
      %1356 = vmatprep.subr.mxu0 0.0
      %1357 = vmatpush1.msra.mxu0 0.0
      %1358 = vmatprep.subr.mxu0 0.0
      %1359 = vmatpush1.msra.mxu0 0.0
      %1360 = vmatprep.subr.mxu0 0.0
      %1361 = vmatpush1.msra.mxu0 0.0
      %1362 = vmatprep.subr.mxu0 0.0
      %1363 = vmatpush1.msra.mxu0 0.0
      %1364 = vmatprep.subr.mxu0 0.0
      %1365 = vmatpush1.msra.mxu0 0.0
      %1366 = vmatprep.subr.mxu0 0.0
      %1367 = vmatpush1.msra.mxu0 0.0
      %1368 = vmatprep.subr.mxu0 0.0
      %1369 = vmatpush1.msra.mxu0 0.0
      %1370 = vmatprep.subr.mxu0 0.0
      %1371 = vmatpush1.msra.mxu0 0.0
      %1372 = vmatprep.subr.mxu0 0.0
      %1373 = vmatpush1.msra.mxu0 0.0
      %1374 = vmatprep.subr.mxu0 0.0
      %1375 = vmatpush1.msra.mxu0 0.0
      %1376 = vmatprep.subr.mxu0 0.0
      %1377 = vmatpush1.msra.mxu0 0.0
      %1378 = vmatprep.subr.mxu0 0.0
      %1379 = vmatpush1.msra.mxu0 0.0
      %1380 = vmatprep.subr.mxu0 0.0
      %1381 = vmatpush1.msra.mxu0 0.0
      %1382 = vmatprep.subr.mxu0 0.0
      %1383 = vmatpush1.msra.mxu0 0.0
      %1384 = vmatprep.subr.mxu0 0.0
      %1385 = vmatpush1.msra.mxu0 0.0
      %1386 = vmatprep.subr.mxu0 0.0
      %1387 = vmatpush1.msra.mxu0 0.0
      %1388 = vmatprep.subr.mxu0 0.0
      %1389 = vmatpush1.msra.mxu0 0.0
      %1390 = vmatprep.subr.mxu0 0.0
      %1391 = vmatpush1.msra.mxu0 0.0
      %1392 = vmatprep.subr.mxu0 0.0
      %1393 = vmatpush1.msra.mxu0 0.0
      %1394 = vmatprep.subr.mxu0 0.0
      %1395 = vmatpush1.msra.mxu0 0.0
      %1396 = vmatprep.mubr.f32.mxu0 0.0
      %1397 = vmatmul.mubr.f32.gmra.mrb[0].mxu0 %v1327
      %v1398 = vpop.f32.mrb[0].mxu0
      %v1399 = vadd.f32 0.0, %v1398
      %v1400 = vpop.f32.mrb[0].mxu0
      %1401 = vmatprep.mubr.f32.mxu0 0.0
      %1402 = vmatmul.mubr.f32.gmra.mrb[0].mxu0 %v1330
      %v1403 = vpop.f32.mrb[0].mxu0
      %v1404 = vadd.f32 0.0, %v1403
      %v1405 = vpop.f32.mrb[0].mxu0
      %1406 = vdwg.mxu0
      %v1408 = vsel %vm1325, %v1307, 0
      %v1411 = vsel %vm1325, %v1312, 0
      %1413 = vmatprep.subr.mxu0 0.0
      %1414 = vmatpush1.msra.mxu0 %v1237
      %1415 = vmatprep.subr.mxu0 0.0
      %1416 = vmatpush1.msra.mxu0 0.0
      %1417 = vmatprep.subr.mxu0 0.0
      %1418 = vmatpush1.msra.mxu0 0.0
      %1419 = vmatprep.subr.mxu0 0.0
      %1420 = vmatpush1.msra.mxu0 0.0
      %1421 = vmatprep.subr.mxu0 0.0
      %1422 = vmatpush1.msra.mxu0 0.0
      %1423 = vmatprep.subr.mxu0 0.0
      %1424 = vmatpush1.msra.mxu0 0.0
      %1425 = vmatprep.subr.mxu0 0.0
      %1426 = vmatpush1.msra.mxu0 0.0
      %1427 = vmatprep.subr.mxu0 0.0
      %1428 = vmatpush1.msra.mxu0 0.0
      %1429 = vmatprep.subr.mxu0 0.0
      %1430 = vmatpush1.msra.mxu0 0.0
      %1431 = vmatprep.subr.mxu0 0.0
      %1432 = vmatpush1.msra.mxu0 0.0
      %1433 = vmatprep.subr.mxu0 0.0
      %1434 = vmatpush1.msra.mxu0 0.0
      %1435 = vmatprep.subr.mxu0 0.0
      %1436 = vmatpush1.msra.mxu0 0.0
      %1437 = vmatprep.subr.mxu0 0.0
      %1438 = vmatpush1.msra.mxu0 0.0
      %1439 = vmatprep.subr.mxu0 0.0
      %1440 = vmatpush1.msra.mxu0 0.0
      %1441 = vmatprep.subr.mxu0 0.0
      %1442 = vmatpush1.msra.mxu0 0.0
      %1443 = vmatprep.subr.mxu0 0.0
      %1444 = vmatpush1.msra.mxu0 0.0
      %1445 = vmatprep.subr.mxu0 0.0
      %1446 = vmatpush1.msra.mxu0 0.0
      %1447 = vmatprep.subr.mxu0 0.0
      %1448 = vmatpush1.msra.mxu0 0.0
      %1449 = vmatprep.subr.mxu0 0.0
      %1450 = vmatpush1.msra.mxu0 0.0
      %1451 = vmatprep.subr.mxu0 0.0
      %1452 = vmatpush1.msra.mxu0 0.0
      %1453 = vmatprep.subr.mxu0 0.0
      %1454 = vmatpush1.msra.mxu0 0.0
      %1455 = vmatprep.subr.mxu0 0.0
      %1456 = vmatpush1.msra.mxu0 0.0
      %1457 = vmatprep.subr.mxu0 0.0
      %1458 = vmatpush1.msra.mxu0 0.0
      %1459 = vmatprep.subr.mxu0 0.0
      %1460 = vmatpush1.msra.mxu0 0.0
      %1461 = vmatprep.subr.mxu0 0.0
      %1462 = vmatpush1.msra.mxu0 0.0
      %1463 = vmatprep.subr.mxu0 0.0
      %1464 = vmatpush1.msra.mxu0 0.0
      %1465 = vmatprep.subr.mxu0 0.0
      %1466 = vmatpush1.msra.mxu0 0.0
      %1467 = vmatprep.subr.mxu0 0.0
      %1468 = vmatpush1.msra.mxu0 0.0
      %1469 = vmatprep.subr.mxu0 0.0
      %1470 = vmatpush1.msra.mxu0 0.0
      %1471 = vmatprep.subr.mxu0 0.0
      %1472 = vmatpush1.msra.mxu0 0.0
      %1473 = vmatprep.subr.mxu0 0.0
      %1474 = vmatpush1.msra.mxu0 0.0
      %1475 = vmatprep.subr.mxu0 0.0
      %1476 = vmatpush1.msra.mxu0 0.0
      %1477 = vmatprep.mubr.f32.mxu0 0.0
      %1478 = vmatmul.mubr.f32.gmra.mrb[0].mxu0 %v1408
      %v1479 = vpop.f32.mrb[0].mxu0
      %v1480 = vadd.f32 %v1399, %v1479
      %v1481 = vpop.f32.mrb[0].mxu0
      %1482 = vmatprep.mubr.f32.mxu0 0.0
      %1483 = vmatmul.mubr.f32.gmra.mrb[0].mxu0 %v1411
      %v1484 = vpop.f32.mrb[0].mxu0
      %v1485 = vadd.f32 %v1404, %v1484
      %v1486 = vpop.f32.mrb[0].mxu0
      %1487 = vdwg.mxu0
      %v1489 = vlaneseq
      %v1490 = vshrl.u32 %v1489, 7
      %v1491 = vsub.s32 0, %v1490
      %v1492 = vrot.slane %v1239, %v1491
      %v1494 = vadd.f32 %v1480, %v1492
      %v1495 = vadd.f32 %v1485, %v1492
      %v1496 = vmax.f32 %v1494, 0.0
      %v1497 = vmax.f32 %v1495, 0.0
      %v1498 = vld [vmem:[%s15] sm:$0xff]
      %v1499 = vld [vmem:[%s15 + $0x8] sm:$0xff]
      %v1500 = vld [vmem:[%s13] sm:$0x1]
      %1501 = vmatprep.subr.mxu0 0.0
      %1502 = vmatpush1.msra.mxu0 %v1496
      %1503 = vmatprep.subr.mxu0 0.0
      %1504 = vmatpush1.msra.mxu0 %v1497
      %1505 = vmatprep.subr.mxu0 0.0
      %1506 = vmatpush1.msra.mxu0 0.0
      %1507 = vmatprep.subr.mxu0 0.0
      %1508 = vmatpush1.msra.mxu0 0.0
      %1509 = vmatprep.subr.mxu0 0.0
      %1510 = vmatpush1.msra.mxu0 0.0
      %1511 = vmatprep.subr.mxu0 0.0
      %1512 = vmatpush1.msra.mxu0 0.0
      %1513 = vmatprep.subr.mxu0 0.0
      %1514 = vmatpush1.msra.mxu0 0.0
      %1515 = vmatprep.subr.mxu0 0.0
      %1516 = vmatpush1.msra.mxu0 0.0
      %1517 = vmatprep.subr.mxu0 0.0
      %1518 = vmatpush1.msra.mxu0 0.0
      %1519 = vmatprep.subr.mxu0 0.0
      %1520 = vmatpush1.msra.mxu0 0.0
      %1521 = vmatprep.subr.mxu0 0.0
      %1522 = vmatpush1.msra.mxu0 0.0
      %1523 = vmatprep.subr.mxu0 0.0
      %1524 = vmatpush1.msra.mxu0 0.0
      %1525 = vmatprep.subr.mxu0 0.0
      %1526 = vmatpush1.msra.mxu0 0.0
      %1527 = vmatprep.subr.mxu0 0.0
      %1528 = vmatpush1.msra.mxu0 0.0
      %1529 = vmatprep.subr.mxu0 0.0
      %1530 = vmatpush1.msra.mxu0 0.0
      %1531 = vmatprep.subr.mxu0 0.0
      %1532 = vmatpush1.msra.mxu0 0.0
      %1533 = vmatprep.subr.mxu0 0.0
      %1534 = vmatpush1.msra.mxu0 0.0
      %1535 = vmatprep.subr.mxu0 0.0
      %1536 = vmatpush1.msra.mxu0 0.0
      %1537 = vmatprep.subr.mxu0 0.0
      %1538 = vmatpush1.msra.mxu0 0.0
      %1539 = vmatprep.subr.mxu0 0.0
      %1540 = vmatpush1.msra.mxu0 0.0
      %1541 = vmatprep.subr.mxu0 0.0
      %1542 = vmatpush1.msra.mxu0 0.0
      %1543 = vmatprep.subr.mxu0 0.0
      %1544 = vmatpush1.msra.mxu0 0.0
      %1545 = vmatprep.subr.mxu0 0.0
      %1546 = vmatpush1.msra.mxu0 0.0
      %1547 = vmatprep.subr.mxu0 0.0
      %1548 = vmatpush1.msra.mxu0 0.0
      %1549 = vmatprep.subr.mxu0 0.0
      %1550 = vmatpush1.msra.mxu0 0.0
      %1551 = vmatprep.subr.mxu0 0.0
      %1552 = vmatpush1.msra.mxu0 0.0
      %1553 = vmatprep.subr.mxu0 0.0
      %1554 = vmatpush1.msra.mxu0 0.0
      %1555 = vmatprep.subr.mxu0 0.0
      %1556 = vmatpush1.msra.mxu0 0.0
      %1557 = vmatprep.subr.mxu0 0.0
      %1558 = vmatpush1.msra.mxu0 0.0
      %1559 = vmatprep.subr.mxu0 0.0
      %1560 = vmatpush1.msra.mxu0 0.0
      %1561 = vmatprep.subr.mxu0 0.0
      %1562 = vmatpush1.msra.mxu0 0.0
      %1563 = vmatprep.subr.mxu0 0.0
      %1564 = vmatpush1.msra.mxu0 0.0
      %1565 = vmatprep.mubr.f32.mxu0 0.0
      %1566 = vmatmul.mubr.f32.gmra.mrb[0].mxu0 %v961
      %v1567 = vpop.f32.mrb[0].mxu0
      %v1568 = vadd.f32 0.0, %v1567
      %v1569 = vpop.f32.mrb[0].mxu0
      %1570 = vmatprep.mubr.f32.mxu0 0.0
      %1571 = vmatmul.mubr.f32.gmra.mrb[0].mxu0 %v964
      %v1572 = vpop.f32.mrb[0].mxu0
      %v1573 = vadd.f32 0.0, %v1572
      %v1574 = vpop.f32.mrb[0].mxu0
      %1575 = vmatprep.mubr.f32.mxu0 0.0
      %1576 = vmatmul.mubr.f32.gmra.mrb[0].mxu0 %v967
      %v1577 = vpop.f32.mrb[0].mxu0
      %v1578 = vadd.f32 0.0, %v1577
      %v1579 = vpop.f32.mrb[0].mxu0
      %1580 = vmatprep.mubr.f32.mxu0 0.0
      %1581 = vmatmul.mubr.f32.gmra.mrb[0].mxu0 %v970
      %v1582 = vpop.f32.mrb[0].mxu0
      %v1583 = vadd.f32 0.0, %v1582
      %v1584 = vpop.f32.mrb[0].mxu0
      %1585 = vdwg.mxu0
      %v1587 = vsel %vm1325, %v1578, 0
      %v1590 = vsel %vm1325, %v1583, 0
      %1592 = vmatprep.subr.mxu0 0.0
      %1593 = vmatpush1.msra.mxu0 %v1499
      %1594 = vmatprep.subr.mxu0 0.0
      %1595 = vmatpush1.msra.mxu0 0.0
      %1596 = vmatprep.subr.mxu0 0.0
      %1597 = vmatpush1.msra.mxu0 0.0
      %1598 = vmatprep.subr.mxu0 0.0
      %1599 = vmatpush1.msra.mxu0 0.0
      %1600 = vmatprep.subr.mxu0 0.0
      %1601 = vmatpush1.msra.mxu0 0.0
      %1602 = vmatprep.subr.mxu0 0.0
      %1603 = vmatpush1.msra.mxu0 0.0
      %1604 = vmatprep.subr.mxu0 0.0
      %1605 = vmatpush1.msra.mxu0 0.0
      %1606 = vmatprep.subr.mxu0 0.0
      %1607 = vmatpush1.msra.mxu0 0.0
      %1608 = vmatprep.subr.mxu0 0.0
      %1609 = vmatpush1.msra.mxu0 0.0
      %1610 = vmatprep.subr.mxu0 0.0
      %1611 = vmatpush1.msra.mxu0 0.0
      %1612 = vmatprep.subr.mxu0 0.0
      %1613 = vmatpush1.msra.mxu0 0.0
      %1614 = vmatprep.subr.mxu0 0.0
      %1615 = vmatpush1.msra.mxu0 0.0
      %1616 = vmatprep.subr.mxu0 0.0
      %1617 = vmatpush1.msra.mxu0 0.0
      %1618 = vmatprep.subr.mxu0 0.0
      %1619 = vmatpush1.msra.mxu0 0.0
      %1620 = vmatprep.subr.mxu0 0.0
      %1621 = vmatpush1.msra.mxu0 0.0
      %1622 = vmatprep.subr.mxu0 0.0
      %1623 = vmatpush1.msra.mxu0 0.0
      %1624 = vmatprep.subr.mxu0 0.0
      %1625 = vmatpush1.msra.mxu0 0.0
      %1626 = vmatprep.subr.mxu0 0.0
      %1627 = vmatpush1.msra.mxu0 0.0
      %1628 = vmatprep.subr.mxu0 0.0
      %1629 = vmatpush1.msra.mxu0 0.0
      %1630 = vmatprep.subr.mxu0 0.0
      %1631 = vmatpush1.msra.mxu0 0.0
      %1632 = vmatprep.subr.mxu0 0.0
      %1633 = vmatpush1.msra.mxu0 0.0
      %1634 = vmatprep.subr.mxu0 0.0
      %1635 = vmatpush1.msra.mxu0 0.0
      %1636 = vmatprep.subr.mxu0 0.0
      %1637 = vmatpush1.msra.mxu0 0.0
      %1638 = vmatprep.subr.mxu0 0.0
      %1639 = vmatpush1.msra.mxu0 0.0
      %1640 = vmatprep.subr.mxu0 0.0
      %1641 = vmatpush1.msra.mxu0 0.0
      %1642 = vmatprep.subr.mxu0 0.0
      %1643 = vmatpush1.msra.mxu0 0.0
      %1644 = vmatprep.subr.mxu0 0.0
      %1645 = vmatpush1.msra.mxu0 0.0
      %1646 = vmatprep.subr.mxu0 0.0
      %1647 = vmatpush1.msra.mxu0 0.0
      %1648 = vmatprep.subr.mxu0 0.0
      %1649 = vmatpush1.msra.mxu0 0.0
      %1650 = vmatprep.subr.mxu0 0.0
      %1651 = vmatpush1.msra.mxu0 0.0
      %1652 = vmatprep.subr.mxu0 0.0
      %1653 = vmatpush1.msra.mxu0 0.0
      %1654 = vmatprep.subr.mxu0 0.0
      %1655 = vmatpush1.msra.mxu0 0.0
      %1656 = vmatprep.mubr.f32.mxu0 0.0
      %1657 = vmatmul.mubr.f32.gmra.mrb[0].mxu0 %v1587
      %v1658 = vpop.f32.mrb[0].mxu0
      %v1659 = vadd.f32 0.0, %v1658
      %v1660 = vpop.f32.mrb[0].mxu0
      %1661 = vmatprep.mubr.f32.mxu0 0.0
      %1662 = vmatmul.mubr.f32.gmra.mrb[0].mxu0 %v1590
      %v1663 = vpop.f32.mrb[0].mxu0
      %v1664 = vadd.f32 0.0, %v1663
      %v1665 = vpop.f32.mrb[0].mxu0
      %1666 = vdwg.mxu0
      %v1668 = vsel %vm1325, %v1568, 0
      %v1671 = vsel %vm1325, %v1573, 0
      %1673 = vmatprep.subr.mxu0 0.0
      %1674 = vmatpush1.msra.mxu0 %v1498
      %1675 = vmatprep.subr.mxu0 0.0
      %1676 = vmatpush1.msra.mxu0 0.0
      %1677 = vmatprep.subr.mxu0 0.0
      %1678 = vmatpush1.msra.mxu0 0.0
      %1679 = vmatprep.subr.mxu0 0.0
      %1680 = vmatpush1.msra.mxu0 0.0
      %1681 = vmatprep.subr.mxu0 0.0
      %1682 = vmatpush1.msra.mxu0 0.0
      %1683 = vmatprep.subr.mxu0 0.0
      %1684 = vmatpush1.msra.mxu0 0.0
      %1685 = vmatprep.subr.mxu0 0.0
      %1686 = vmatpush1.msra.mxu0 0.0
      %1687 = vmatprep.subr.mxu0 0.0
      %1688 = vmatpush1.msra.mxu0 0.0
      %1689 = vmatprep.subr.mxu0 0.0
      %1690 = vmatpush1.msra.mxu0 0.0
      %1691 = vmatprep.subr.mxu0 0.0
      %1692 = vmatpush1.msra.mxu0 0.0
      %1693 = vmatprep.subr.mxu0 0.0
      %1694 = vmatpush1.msra.mxu0 0.0
      %1695 = vmatprep.subr.mxu0 0.0
      %1696 = vmatpush1.msra.mxu0 0.0
      %1697 = vmatprep.subr.mxu0 0.0
      %1698 = vmatpush1.msra.mxu0 0.0
      %1699 = vmatprep.subr.mxu0 0.0
      %1700 = vmatpush1.msra.mxu0 0.0
      %1701 = vmatprep.subr.mxu0 0.0
      %1702 = vmatpush1.msra.mxu0 0.0
      %1703 = vmatprep.subr.mxu0 0.0
      %1704 = vmatpush1.msra.mxu0 0.0
      %1705 = vmatprep.subr.mxu0 0.0
      %1706 = vmatpush1.msra.mxu0 0.0
      %1707 = vmatprep.subr.mxu0 0.0
      %1708 = vmatpush1.msra.mxu0 0.0
      %1709 = vmatprep.subr.mxu0 0.0
      %1710 = vmatpush1.msra.mxu0 0.0
      %1711 = vmatprep.subr.mxu0 0.0
      %1712 = vmatpush1.msra.mxu0 0.0
      %1713 = vmatprep.subr.mxu0 0.0
      %1714 = vmatpush1.msra.mxu0 0.0
      %1715 = vmatprep.subr.mxu0 0.0
      %1716 = vmatpush1.msra.mxu0 0.0
      %1717 = vmatprep.subr.mxu0 0.0
      %1718 = vmatpush1.msra.mxu0 0.0
      %1719 = vmatprep.subr.mxu0 0.0
      %1720 = vmatpush1.msra.mxu0 0.0
      %1721 = vmatprep.subr.mxu0 0.0
      %1722 = vmatpush1.msra.mxu0 0.0
      %1723 = vmatprep.subr.mxu0 0.0
      %1724 = vmatpush1.msra.mxu0 0.0
      %1725 = vmatprep.subr.mxu0 0.0
      %1726 = vmatpush1.msra.mxu0 0.0
      %1727 = vmatprep.subr.mxu0 0.0
      %1728 = vmatpush1.msra.mxu0 0.0
      %1729 = vmatprep.subr.mxu0 0.0
      %1730 = vmatpush1.msra.mxu0 0.0
      %1731 = vmatprep.subr.mxu0 0.0
      %1732 = vmatpush1.msra.mxu0 0.0
      %1733 = vmatprep.subr.mxu0 0.0
      %1734 = vmatpush1.msra.mxu0 0.0
      %1735 = vmatprep.subr.mxu0 0.0
      %1736 = vmatpush1.msra.mxu0 0.0
      %1737 = vmatprep.mubr.f32.mxu0 0.0
      %1738 = vmatmul.mubr.f32.gmra.mrb[0].mxu0 %v1668
      %v1739 = vpop.f32.mrb[0].mxu0
      %v1740 = vadd.f32 %v1659, %v1739
      %v1741 = vpop.f32.mrb[0].mxu0
      %1742 = vmatprep.mubr.f32.mxu0 0.0
      %1743 = vmatmul.mubr.f32.gmra.mrb[0].mxu0 %v1671
      %v1744 = vpop.f32.mrb[0].mxu0
      %v1745 = vadd.f32 %v1664, %v1744
      %v1746 = vpop.f32.mrb[0].mxu0
      %1747 = vdwg.mxu0
      %v1749 = vlaneseq
      %v1750 = vshrl.u32 %v1749, 7
      %v1751 = vsub.s32 0, %v1750
      %v1752 = vrot.slane %v1500, %v1751
      %v1754 = vadd.f32 %v1740, %v1752
      %v1755 = vadd.f32 %v1745, %v1752
      %v1756 = vld [vmem:[%s19] sm:$0xff]
      %v1757 = vld [vmem:[%s17] sm:$0x1]
      %v1759 = vrot.slane %v1756, 4
      %v1760 = vsel %vm1066, %v1759, 0
      %1762 = vmatprep.subr.mxu0 0.0
      %1763 = vmatpush1.msra.mxu0 %v1760
      %1764 = vmatprep.subr.mxu0 0.0
      %1765 = vmatpush1.msra.mxu0 0.0
      %1766 = vmatprep.subr.mxu0 0.0
      %1767 = vmatpush1.msra.mxu0 0.0
      %1768 = vmatprep.subr.mxu0 0.0
      %1769 = vmatpush1.msra.mxu0 0.0
      %1770 = vmatprep.subr.mxu0 0.0
      %1771 = vmatpush1.msra.mxu0 0.0
      %1772 = vmatprep.subr.mxu0 0.0
      %1773 = vmatpush1.msra.mxu0 0.0
      %1774 = vmatprep.subr.mxu0 0.0
      %1775 = vmatpush1.msra.mxu0 0.0
      %1776 = vmatprep.subr.mxu0 0.0
      %1777 = vmatpush1.msra.mxu0 0.0
      %1778 = vmatprep.subr.mxu0 0.0
      %1779 = vmatpush1.msra.mxu0 0.0
      %1780 = vmatprep.subr.mxu0 0.0
      %1781 = vmatpush1.msra.mxu0 0.0
      %1782 = vmatprep.subr.mxu0 0.0
      %1783 = vmatpush1.msra.mxu0 0.0
      %1784 = vmatprep.subr.mxu0 0.0
      %1785 = vmatpush1.msra.mxu0 0.0
      %1786 = vmatprep.subr.mxu0 0.0
      %1787 = vmatpush1.msra.mxu0 0.0
      %1788 = vmatprep.subr.mxu0 0.0
      %1789 = vmatpush1.msra.mxu0 0.0
      %1790 = vmatprep.subr.mxu0 0.0
      %1791 = vmatpush1.msra.mxu0 0.0
      %1792 = vmatprep.subr.mxu0 0.0
      %1793 = vmatpush1.msra.mxu0 0.0
      %1794 = vmatprep.subr.mxu0 0.0
      %1795 = vmatpush1.msra.mxu0 0.0
      %1796 = vmatprep.subr.mxu0 0.0
      %1797 = vmatpush1.msra.mxu0 0.0
      %1798 = vmatprep.subr.mxu0 0.0
      %1799 = vmatpush1.msra.mxu0 0.0
      %1800 = vmatprep.subr.mxu0 0.0
      %1801 = vmatpush1.msra.mxu0 0.0
      %1802 = vmatprep.subr.mxu0 0.0
      %1803 = vmatpush1.msra.mxu0 0.0
      %1804 = vmatprep.subr.mxu0 0.0
      %1805 = vmatpush1.msra.mxu0 0.0
      %1806 = vmatprep.subr.mxu0 0.0
      %1807 = vmatpush1.msra.mxu0 0.0
      %1808 = vmatprep.subr.mxu0 0.0
      %1809 = vmatpush1.msra.mxu0 0.0
      %1810 = vmatprep.subr.mxu0 0.0
      %1811 = vmatpush1.msra.mxu0 0.0
      %1812 = vmatprep.subr.mxu0 0.0
      %1813 = vmatpush1.msra.mxu0 0.0
      %1814 = vmatprep.subr.mxu0 0.0
      %1815 = vmatpush1.msra.mxu0 0.0
      %1816 = vmatprep.subr.mxu0 0.0
      %1817 = vmatpush1.msra.mxu0 0.0
      %1818 = vmatprep.subr.mxu0 0.0
      %1819 = vmatpush1.msra.mxu0 0.0
      %1820 = vmatprep.subr.mxu0 0.0
      %1821 = vmatpush1.msra.mxu0 0.0
      %1822 = vmatprep.subr.mxu0 0.0
      %1823 = vmatpush1.msra.mxu0 0.0
      %1824 = vmatprep.subr.mxu0 0.0
      %1825 = vmatpush1.msra.mxu0 0.0
      %1826 = vmatprep.mubr.f32.mxu0 0.0
      %1827 = vmatmul.mubr.f32.gmra.mrb[0].mxu0 %v1061
      %v1828 = vpop.f32.mrb[0].mxu0
      %v1829 = vadd.f32 0.0, %v1828
      %v1830 = vpop.f32.mrb[0].mxu0
      %1831 = vmatprep.mubr.f32.mxu0 0.0
      %1832 = vmatmul.mubr.f32.gmra.mrb[0].mxu0 %v1064
      %v1833 = vpop.f32.mrb[0].mxu0
      %v1834 = vadd.f32 0.0, %v1833
      %v1835 = vpop.f32.mrb[0].mxu0
      %1836 = vdwg.mxu0
      %v1837 = vsel %vm1066, %v1756, 0
      %1839 = vmatprep.subr.mxu0 0.0
      %1840 = vmatpush1.msra.mxu0 %v1837
      %1841 = vmatprep.subr.mxu0 0.0
      %1842 = vmatpush1.msra.mxu0 0.0
      %1843 = vmatprep.subr.mxu0 0.0
      %1844 = vmatpush1.msra.mxu0 0.0
      %1845 = vmatprep.subr.mxu0 0.0
      %1846 = vmatpush1.msra.mxu0 0.0
      %1847 = vmatprep.subr.mxu0 0.0
      %1848 = vmatpush1.msra.mxu0 0.0
      %1849 = vmatprep.subr.mxu0 0.0
      %1850 = vmatpush1.msra.mxu0 0.0
      %1851 = vmatprep.subr.mxu0 0.0
      %1852 = vmatpush1.msra.mxu0 0.0
      %1853 = vmatprep.subr.mxu0 0.0
      %1854 = vmatpush1.msra.mxu0 0.0
      %1855 = vmatprep.subr.mxu0 0.0
      %1856 = vmatpush1.msra.mxu0 0.0
      %1857 = vmatprep.subr.mxu0 0.0
      %1858 = vmatpush1.msra.mxu0 0.0
      %1859 = vmatprep.subr.mxu0 0.0
      %1860 = vmatpush1.msra.mxu0 0.0
      %1861 = vmatprep.subr.mxu0 0.0
      %1862 = vmatpush1.msra.mxu0 0.0
      %1863 = vmatprep.subr.mxu0 0.0
      %1864 = vmatpush1.msra.mxu0 0.0
      %1865 = vmatprep.subr.mxu0 0.0
      %1866 = vmatpush1.msra.mxu0 0.0
      %1867 = vmatprep.subr.mxu0 0.0
      %1868 = vmatpush1.msra.mxu0 0.0
      %1869 = vmatprep.subr.mxu0 0.0
      %1870 = vmatpush1.msra.mxu0 0.0
      %1871 = vmatprep.subr.mxu0 0.0
      %1872 = vmatpush1.msra.mxu0 0.0
      %1873 = vmatprep.subr.mxu0 0.0
      %1874 = vmatpush1.msra.mxu0 0.0
      %1875 = vmatprep.subr.mxu0 0.0
      %1876 = vmatpush1.msra.mxu0 0.0
      %1877 = vmatprep.subr.mxu0 0.0
      %1878 = vmatpush1.msra.mxu0 0.0
      %1879 = vmatprep.subr.mxu0 0.0
      %1880 = vmatpush1.msra.mxu0 0.0
      %1881 = vmatprep.subr.mxu0 0.0
      %1882 = vmatpush1.msra.mxu0 0.0
      %1883 = vmatprep.subr.mxu0 0.0
      %1884 = vmatpush1.msra.mxu0 0.0
      %1885 = vmatprep.subr.mxu0 0.0
      %1886 = vmatpush1.msra.mxu0 0.0
      %1887 = vmatprep.subr.mxu0 0.0
      %1888 = vmatpush1.msra.mxu0 0.0
      %1889 = vmatprep.subr.mxu0 0.0
      %1890 = vmatpush1.msra.mxu0 0.0
      %1891 = vmatprep.subr.mxu0 0.0
      %1892 = vmatpush1.msra.mxu0 0.0
      %1893 = vmatprep.subr.mxu0 0.0
      %1894 = vmatpush1.msra.mxu0 0.0
      %1895 = vmatprep.subr.mxu0 0.0
      %1896 = vmatpush1.msra.mxu0 0.0
      %1897 = vmatprep.subr.mxu0 0.0
      %1898 = vmatpush1.msra.mxu0 0.0
      %1899 = vmatprep.subr.mxu0 0.0
      %1900 = vmatpush1.msra.mxu0 0.0
      %1901 = vmatprep.subr.mxu0 0.0
      %1902 = vmatpush1.msra.mxu0 0.0
      %1903 = vmatprep.mubr.f32.mxu0 0.0
      %1904 = vmatmul.mubr.f32.gmra.mrb[0].mxu0 %v1145
      %v1905 = vpop.f32.mrb[0].mxu0
      %v1906 = vadd.f32 %v1829, %v1905
      %v1907 = vpop.f32.mrb[0].mxu0
      %1908 = vmatprep.mubr.f32.mxu0 0.0
      %1909 = vmatmul.mubr.f32.gmra.mrb[0].mxu0 %v1148
      %v1910 = vpop.f32.mrb[0].mxu0
      %v1911 = vadd.f32 %v1834, %v1910
      %v1912 = vpop.f32.mrb[0].mxu0
      %1913 = vdwg.mxu0
      %v1915 = vlaneseq
      %v1916 = vshrl.u32 %v1915, 7
      %v1917 = vsub.s32 0, %v1916
      %v1918 = vrot.slane %v1757, %v1917
      %v1920 = vadd.f32 %v1906, %v1918
      %v1921 = vadd.f32 %v1911, %v1918
      %v1922 = vadd.f32 %v1754, %v1920
      %v1923 = vadd.f32 %v1755, %v1921
      %v1924 = vmax.f32 %v1922, 0.0
      %v1925 = vmax.f32 %v1923, 0.0
      %v1926 = vld [vmem:[%s39] sm:$0xff]
      %v1927 = vld [vmem:[%s39 + $0x8] sm:$0xff]
      %v1928 = vld [vmem:[%s39 + $0x10] sm:$0xff]
      %v1929 = vld [vmem:[%s39 + $0x18] sm:$0xff]
      %v1930 = vld [vmem:[%s39 + $0x20] sm:$0xff]
      %v1931 = vld [vmem:[%s39 + $0x28] sm:$0xff]
      %v1932 = vld [vmem:[%s39 + $0x30] sm:$0xff]
      %v1933 = vld [vmem:[%s39 + $0x38] sm:$0xff]
      %v1934 = vld [vmem:[%s37] sm:$0x1]
      %1935 = vmatprep.subr.mxu0 0.0
      %1936 = vmatpush1.msra.mxu0 %v1924
      %1937 = vmatprep.subr.mxu0 0.0
      %1938 = vmatpush1.msra.mxu0 %v1925
      %1939 = vmatprep.subr.mxu0 0.0
      %1940 = vmatpush1.msra.mxu0 0.0
      %1941 = vmatprep.subr.mxu0 0.0
      %1942 = vmatpush1.msra.mxu0 0.0
      %1943 = vmatprep.subr.mxu0 0.0
      %1944 = vmatpush1.msra.mxu0 0.0
      %1945 = vmatprep.subr.mxu0 0.0
      %1946 = vmatpush1.msra.mxu0 0.0
      %1947 = vmatprep.subr.mxu0 0.0
      %1948 = vmatpush1.msra.mxu0 0.0
      %1949 = vmatprep.subr.mxu0 0.0
      %1950 = vmatpush1.msra.mxu0 0.0
      %1951 = vmatprep.subr.mxu0 0.0
      %1952 = vmatpush1.msra.mxu0 0.0
      %1953 = vmatprep.subr.mxu0 0.0
      %1954 = vmatpush1.msra.mxu0 0.0
      %1955 = vmatprep.subr.mxu0 0.0
      %1956 = vmatpush1.msra.mxu0 0.0
      %1957 = vmatprep.subr.mxu0 0.0
      %1958 = vmatpush1.msra.mxu0 0.0
      %1959 = vmatprep.subr.mxu0 0.0
      %1960 = vmatpush1.msra.mxu0 0.0
      %1961 = vmatprep.subr.mxu0 0.0
      %1962 = vmatpush1.msra.mxu0 0.0
      %1963 = vmatprep.subr.mxu0 0.0
      %1964 = vmatpush1.msra.mxu0 0.0
      %1965 = vmatprep.subr.mxu0 0.0
      %1966 = vmatpush1.msra.mxu0 0.0
      %1967 = vmatprep.subr.mxu0 0.0
      %1968 = vmatpush1.msra.mxu0 0.0
      %1969 = vmatprep.subr.mxu0 0.0
      %1970 = vmatpush1.msra.mxu0 0.0
      %1971 = vmatprep.subr.mxu0 0.0
      %1972 = vmatpush1.msra.mxu0 0.0
      %1973 = vmatprep.subr.mxu0 0.0
      %1974 = vmatpush1.msra.mxu0 0.0
      %1975 = vmatprep.subr.mxu0 0.0
      %1976 = vmatpush1.msra.mxu0 0.0
      %1977 = vmatprep.subr.mxu0 0.0
      %1978 = vmatpush1.msra.mxu0 0.0
      %1979 = vmatprep.subr.mxu0 0.0
      %1980 = vmatpush1.msra.mxu0 0.0
      %1981 = vmatprep.subr.mxu0 0.0
      %1982 = vmatpush1.msra.mxu0 0.0
      %1983 = vmatprep.subr.mxu0 0.0
      %1984 = vmatpush1.msra.mxu0 0.0
      %1985 = vmatprep.subr.mxu0 0.0
      %1986 = vmatpush1.msra.mxu0 0.0
      %1987 = vmatprep.subr.mxu0 0.0
      %1988 = vmatpush1.msra.mxu0 0.0
      %1989 = vmatprep.subr.mxu0 0.0
      %1990 = vmatpush1.msra.mxu0 0.0
      %1991 = vmatprep.subr.mxu0 0.0
      %1992 = vmatpush1.msra.mxu0 0.0
      %1993 = vmatprep.subr.mxu0 0.0
      %1994 = vmatpush1.msra.mxu0 0.0
      %1995 = vmatprep.subr.mxu0 0.0
      %1996 = vmatpush1.msra.mxu0 0.0
      %1997 = vmatprep.subr.mxu0 0.0
      %1998 = vmatpush1.msra.mxu0 0.0
      %1999 = vmatprep.mubr.f32.mxu0 0.0
      %2000 = vmatmul.mubr.f32.gmra.mrb[0].mxu0 %v961
      %v2001 = vpop.f32.mrb[0].mxu0
      %v2002 = vadd.f32 0.0, %v2001
      %v2003 = vpop.f32.mrb[0].mxu0
      %2004 = vmatprep.mubr.f32.mxu0 0.0
      %2005 = vmatmul.mubr.f32.gmra.mrb[0].mxu0 %v964
      %v2006 = vpop.f32.mrb[0].mxu0
      %v2007 = vadd.f32 0.0, %v2006
      %v2008 = vpop.f32.mrb[0].mxu0
      %2009 = vmatprep.mubr.f32.mxu0 0.0
      %2010 = vmatmul.mubr.f32.gmra.mrb[0].mxu0 %v967
      %v2011 = vpop.f32.mrb[0].mxu0
      %v2012 = vadd.f32 0.0, %v2011
      %v2013 = vpop.f32.mrb[0].mxu0
      %2014 = vmatprep.mubr.f32.mxu0 0.0
      %2015 = vmatmul.mubr.f32.gmra.mrb[0].mxu0 %v970
      %v2016 = vpop.f32.mrb[0].mxu0
      %v2017 = vadd.f32 0.0, %v2016
      %v2018 = vpop.f32.mrb[0].mxu0
      %2019 = vdwg.mxu0
      %vm2020 = vcmask 261120
      %v2022 = vsel %vm2020, %v2012, 0
      %v2025 = vsel %vm2020, %v2017, 0
      %2027 = vmatprep.subr.mxu0 0.0
      %2028 = vmatpush1.msra.mxu0 %v1930
      %2029 = vmatprep.subr.mxu0 0.0
      %2030 = vmatpush1.msra.mxu0 %v1931
      %2031 = vmatprep.subr.mxu0 0.0
      %2032 = vmatpush1.msra.mxu0 %v1932
      %2033 = vmatprep.subr.mxu0 0.0
      %2034 = vmatpush1.msra.mxu0 %v1933
      %2035 = vmatprep.subr.mxu0 0.0
      %2036 = vmatpush1.msra.mxu0 0.0
      %2037 = vmatprep.subr.mxu0 0.0
      %2038 = vmatpush1.msra.mxu0 0.0
      %2039 = vmatprep.subr.mxu0 0.0
      %2040 = vmatpush1.msra.mxu0 0.0
      %2041 = vmatprep.subr.mxu0 0.0
      %2042 = vmatpush1.msra.mxu0 0.0
      %2043 = vmatprep.subr.mxu0 0.0
      %2044 = vmatpush1.msra.mxu0 0.0
      %2045 = vmatprep.subr.mxu0 0.0
      %2046 = vmatpush1.msra.mxu0 0.0
      %2047 = vmatprep.subr.mxu0 0.0
      %2048 = vmatpush1.msra.mxu0 0.0
      %2049 = vmatprep.subr.mxu0 0.0
      %2050 = vmatpush1.msra.mxu0 0.0
      %2051 = vmatprep.subr.mxu0 0.0
      %2052 = vmatpush1.msra.mxu0 0.0
      %2053 = vmatprep.subr.mxu0 0.0
      %2054 = vmatpush1.msra.mxu0 0.0
      %2055 = vmatprep.subr.mxu0 0.0
      %2056 = vmatpush1.msra.mxu0 0.0
      %2057 = vmatprep.subr.mxu0 0.0
      %2058 = vmatpush1.msra.mxu0 0.0
      %2059 = vmatprep.subr.mxu0 0.0
      %2060 = vmatpush1.msra.mxu0 0.0
      %2061 = vmatprep.subr.mxu0 0.0
      %2062 = vmatpush1.msra.mxu0 0.0
      %2063 = vmatprep.subr.mxu0 0.0
      %2064 = vmatpush1.msra.mxu0 0.0
      %2065 = vmatprep.subr.mxu0 0.0
      %2066 = vmatpush1.msra.mxu0 0.0
      %2067 = vmatprep.subr.mxu0 0.0
      %2068 = vmatpush1.msra.mxu0 0.0
      %2069 = vmatprep.subr.mxu0 0.0
      %2070 = vmatpush1.msra.mxu0 0.0
      %2071 = vmatprep.subr.mxu0 0.0
      %2072 = vmatpush1.msra.mxu0 0.0
      %2073 = vmatprep.subr.mxu0 0.0
      %2074 = vmatpush1.msra.mxu0 0.0
      %2075 = vmatprep.subr.mxu0 0.0
      %2076 = vmatpush1.msra.mxu0 0.0
      %2077 = vmatprep.subr.mxu0 0.0
      %2078 = vmatpush1.msra.mxu0 0.0
      %2079 = vmatprep.subr.mxu0 0.0
      %2080 = vmatpush1.msra.mxu0 0.0
      %2081 = vmatprep.subr.mxu0 0.0
      %2082 = vmatpush1.msra.mxu0 0.0
      %2083 = vmatprep.subr.mxu0 0.0
      %2084 = vmatpush1.msra.mxu0 0.0
      %2085 = vmatprep.subr.mxu0 0.0
      %2086 = vmatpush1.msra.mxu0 0.0
      %2087 = vmatprep.subr.mxu0 0.0
      %2088 = vmatpush1.msra.mxu0 0.0
      %2089 = vmatprep.subr.mxu0 0.0
      %2090 = vmatpush1.msra.mxu0 0.0
      %2091 = vmatprep.mubr.f32.mxu0 0.0
      %2092 = vmatmul.mubr.f32.gmra.mrb[0].mxu0 %v2022
      %v2093 = vpop.f32.mrb[0].mxu0
      %v2094 = vadd.f32 0.0, %v2093
      %v2095 = vpop.f32.mrb[0].mxu0
      %2096 = vmatprep.mubr.f32.mxu0 0.0
      %2097 = vmatmul.mubr.f32.gmra.mrb[0].mxu0 %v2025
      %v2098 = vpop.f32.mrb[0].mxu0
      %v2099 = vadd.f32 0.0, %v2098
      %v2100 = vpop.f32.mrb[0].mxu0
      %2101 = vdwg.mxu0
      %v2103 = vsel %vm2020, %v2002, 0
      %v2106 = vsel %vm2020, %v2007, 0
      %2108 = vmatprep.subr.mxu0 0.0
      %2109 = vmatpush1.msra.mxu0 %v1926
      %2110 = vmatprep.subr.mxu0 0.0
      %2111 = vmatpush1.msra.mxu0 %v1927
      %2112 = vmatprep.subr.mxu0 0.0
      %2113 = vmatpush1.msra.mxu0 %v1928
      %2114 = vmatprep.subr.mxu0 0.0
      %2115 = vmatpush1.msra.mxu0 %v1929
      %2116 = vmatprep.subr.mxu0 0.0
      %2117 = vmatpush1.msra.mxu0 0.0
      %2118 = vmatprep.subr.mxu0 0.0
      %2119 = vmatpush1.msra.mxu0 0.0
      %2120 = vmatprep.subr.mxu0 0.0
      %2121 = vmatpush1.msra.mxu0 0.0
      %2122 = vmatprep.subr.mxu0 0.0
      %2123 = vmatpush1.msra.mxu0 0.0
      %2124 = vmatprep.subr.mxu0 0.0
      %2125 = vmatpush1.msra.mxu0 0.0
      %2126 = vmatprep.subr.mxu0 0.0
      %2127 = vmatpush1.msra.mxu0 0.0
      %2128 = vmatprep.subr.mxu0 0.0
      %2129 = vmatpush1.msra.mxu0 0.0
      %2130 = vmatprep.subr.mxu0 0.0
      %2131 = vmatpush1.msra.mxu0 0.0
      %2132 = vmatprep.subr.mxu0 0.0
      %2133 = vmatpush1.msra.mxu0 0.0
      %2134 = vmatprep.subr.mxu0 0.0
      %2135 = vmatpush1.msra.mxu0 0.0
      %2136 = vmatprep.subr.mxu0 0.0
      %2137 = vmatpush1.msra.mxu0 0.0
      %2138 = vmatprep.subr.mxu0 0.0
      %2139 = vmatpush1.msra.mxu0 0.0
      %2140 = vmatprep.subr.mxu0 0.0
      %2141 = vmatpush1.msra.mxu0 0.0
      %2142 = vmatprep.subr.mxu0 0.0
      %2143 = vmatpush1.msra.mxu0 0.0
      %2144 = vmatprep.subr.mxu0 0.0
      %2145 = vmatpush1.msra.mxu0 0.0
      %2146 = vmatprep.subr.mxu0 0.0
      %2147 = vmatpush1.msra.mxu0 0.0
      %2148 = vmatprep.subr.mxu0 0.0
      %2149 = vmatpush1.msra.mxu0 0.0
      %2150 = vmatprep.subr.mxu0 0.0
      %2151 = vmatpush1.msra.mxu0 0.0
      %2152 = vmatprep.subr.mxu0 0.0
      %2153 = vmatpush1.msra.mxu0 0.0
      %2154 = vmatprep.subr.mxu0 0.0
      %2155 = vmatpush1.msra.mxu0 0.0
      %2156 = vmatprep.subr.mxu0 0.0
      %2157 = vmatpush1.msra.mxu0 0.0
      %2158 = vmatprep.subr.mxu0 0.0
      %2159 = vmatpush1.msra.mxu0 0.0
      %2160 = vmatprep.subr.mxu0 0.0
      %2161 = vmatpush1.msra.mxu0 0.0
      %2162 = vmatprep.subr.mxu0 0.0
      %2163 = vmatpush1.msra.mxu0 0.0
      %2164 = vmatprep.subr.mxu0 0.0
      %2165 = vmatpush1.msra.mxu0 0.0
      %2166 = vmatprep.subr.mxu0 0.0
      %2167 = vmatpush1.msra.mxu0 0.0
      %2168 = vmatprep.subr.mxu0 0.0
      %2169 = vmatpush1.msra.mxu0 0.0
      %2170 = vmatprep.subr.mxu0 0.0
      %2171 = vmatpush1.msra.mxu0 0.0
      %2172 = vmatprep.mubr.f32.mxu0 0.0
      %2173 = vmatmul.mubr.f32.gmra.mrb[0].mxu0 %v2103
      %v2174 = vpop.f32.mrb[0].mxu0
      %v2175 = vadd.f32 %v2094, %v2174
      %v2176 = vpop.f32.mrb[0].mxu0
      %2177 = vmatprep.mubr.f32.mxu0 0.0
      %2178 = vmatmul.mubr.f32.gmra.mrb[0].mxu0 %v2106
      %v2179 = vpop.f32.mrb[0].mxu0
      %v2180 = vadd.f32 %v2099, %v2179
      %v2181 = vpop.f32.mrb[0].mxu0
      %2182 = vdwg.mxu0
      %v2184 = vlaneseq
      %v2185 = vshrl.u32 %v2184, 7
      %v2186 = vsub.s32 0, %v2185
      %v2187 = vrot.slane %v1934, %v2186
      %v2189 = vadd.f32 %v2175, %v2187
      %v2190 = vadd.f32 %v2180, %v2187
      %v2191 = vmax.f32 %v2189, 0.0
      %v2192 = vmax.f32 %v2190, 0.0
      %v2193 = vld [vmem:[%s43] sm:$0xff]
      %v2194 = vld [vmem:[%s43 + $0x8] sm:$0xff]
      %v2195 = vld [vmem:[%s41] sm:$0x1]
      %2196 = vmatprep.subr.mxu0 0.0
      %2197 = vmatpush1.msra.mxu0 %v2191
      %2198 = vmatprep.subr.mxu0 0.0
      %2199 = vmatpush1.msra.mxu0 %v2192
      %2200 = vmatprep.subr.mxu0 0.0
      %2201 = vmatpush1.msra.mxu0 0.0
      %2202 = vmatprep.subr.mxu0 0.0
      %2203 = vmatpush1.msra.mxu0 0.0
      %2204 = vmatprep.subr.mxu0 0.0
      %2205 = vmatpush1.msra.mxu0 0.0
      %2206 = vmatprep.subr.mxu0 0.0
      %2207 = vmatpush1.msra.mxu0 0.0
      %2208 = vmatprep.subr.mxu0 0.0
      %2209 = vmatpush1.msra.mxu0 0.0
      %2210 = vmatprep.subr.mxu0 0.0
      %2211 = vmatpush1.msra.mxu0 0.0
      %2212 = vmatprep.subr.mxu0 0.0
      %2213 = vmatpush1.msra.mxu0 0.0
      %2214 = vmatprep.subr.mxu0 0.0
      %2215 = vmatpush1.msra.mxu0 0.0
      %2216 = vmatprep.subr.mxu0 0.0
      %2217 = vmatpush1.msra.mxu0 0.0
      %2218 = vmatprep.subr.mxu0 0.0
      %2219 = vmatpush1.msra.mxu0 0.0
      %2220 = vmatprep.subr.mxu0 0.0
      %2221 = vmatpush1.msra.mxu0 0.0
      %2222 = vmatprep.subr.mxu0 0.0
      %2223 = vmatpush1.msra.mxu0 0.0
      %2224 = vmatprep.subr.mxu0 0.0
      %2225 = vmatpush1.msra.mxu0 0.0
      %2226 = vmatprep.subr.mxu0 0.0
      %2227 = vmatpush1.msra.mxu0 0.0
      %2228 = vmatprep.subr.mxu0 0.0
      %2229 = vmatpush1.msra.mxu0 0.0
      %2230 = vmatprep.subr.mxu0 0.0
      %2231 = vmatpush1.msra.mxu0 0.0
      %2232 = vmatprep.subr.mxu0 0.0
      %2233 = vmatpush1.msra.mxu0 0.0
      %2234 = vmatprep.subr.mxu0 0.0
      %2235 = vmatpush1.msra.mxu0 0.0
      %2236 = vmatprep.subr.mxu0 0.0
      %2237 = vmatpush1.msra.mxu0 0.0
      %2238 = vmatprep.subr.mxu0 0.0
      %2239 = vmatpush1.msra.mxu0 0.0
      %2240 = vmatprep.subr.mxu0 0.0
      %2241 = vmatpush1.msra.mxu0 0.0
      %2242 = vmatprep.subr.mxu0 0.0
      %2243 = vmatpush1.msra.mxu0 0.0
      %2244 = vmatprep.subr.mxu0 0.0
      %2245 = vmatpush1.msra.mxu0 0.0
      %2246 = vmatprep.subr.mxu0 0.0
      %2247 = vmatpush1.msra.mxu0 0.0
      %2248 = vmatprep.subr.mxu0 0.0
      %2249 = vmatpush1.msra.mxu0 0.0
      %2250 = vmatprep.subr.mxu0 0.0
      %2251 = vmatpush1.msra.mxu0 0.0
      %2252 = vmatprep.subr.mxu0 0.0
      %2253 = vmatpush1.msra.mxu0 0.0
      %2254 = vmatprep.subr.mxu0 0.0
      %2255 = vmatpush1.msra.mxu0 0.0
      %2256 = vmatprep.subr.mxu0 0.0
      %2257 = vmatpush1.msra.mxu0 0.0
      %2258 = vmatprep.subr.mxu0 0.0
      %2259 = vmatpush1.msra.mxu0 0.0
      %2260 = vmatprep.mubr.f32.mxu0 0.0
      %2261 = vmatmul.mubr.f32.gmra.mrb[0].mxu0 %v961
      %v2262 = vpop.f32.mrb[0].mxu0
      %v2263 = vadd.f32 0.0, %v2262
      %v2264 = vpop.f32.mrb[0].mxu0
      %2265 = vmatprep.mubr.f32.mxu0 0.0
      %2266 = vmatmul.mubr.f32.gmra.mrb[0].mxu0 %v964
      %v2267 = vpop.f32.mrb[0].mxu0
      %v2268 = vadd.f32 0.0, %v2267
      %v2269 = vpop.f32.mrb[0].mxu0
      %2270 = vmatprep.mubr.f32.mxu0 0.0
      %2271 = vmatmul.mubr.f32.gmra.mrb[0].mxu0 %v967
      %v2272 = vpop.f32.mrb[0].mxu0
      %v2273 = vadd.f32 0.0, %v2272
      %v2274 = vpop.f32.mrb[0].mxu0
      %2275 = vmatprep.mubr.f32.mxu0 0.0
      %2276 = vmatmul.mubr.f32.gmra.mrb[0].mxu0 %v970
      %v2277 = vpop.f32.mrb[0].mxu0
      %v2278 = vadd.f32 0.0, %v2277
      %v2279 = vpop.f32.mrb[0].mxu0
      %2280 = vdwg.mxu0
      %v2282 = vsel %vm1325, %v2273, 0
      %v2285 = vsel %vm1325, %v2278, 0
      %2287 = vmatprep.subr.mxu0 0.0
      %2288 = vmatpush1.msra.mxu0 %v2194
      %2289 = vmatprep.subr.mxu0 0.0
      %2290 = vmatpush1.msra.mxu0 0.0
      %2291 = vmatprep.subr.mxu0 0.0
      %2292 = vmatpush1.msra.mxu0 0.0
      %2293 = vmatprep.subr.mxu0 0.0
      %2294 = vmatpush1.msra.mxu0 0.0
      %2295 = vmatprep.subr.mxu0 0.0
      %2296 = vmatpush1.msra.mxu0 0.0
      %2297 = vmatprep.subr.mxu0 0.0
      %2298 = vmatpush1.msra.mxu0 0.0
      %2299 = vmatprep.subr.mxu0 0.0
      %2300 = vmatpush1.msra.mxu0 0.0
      %2301 = vmatprep.subr.mxu0 0.0
      %2302 = vmatpush1.msra.mxu0 0.0
      %2303 = vmatprep.subr.mxu0 0.0
      %2304 = vmatpush1.msra.mxu0 0.0
      %2305 = vmatprep.subr.mxu0 0.0
      %2306 = vmatpush1.msra.mxu0 0.0
      %2307 = vmatprep.subr.mxu0 0.0
      %2308 = vmatpush1.msra.mxu0 0.0
      %2309 = vmatprep.subr.mxu0 0.0
      %2310 = vmatpush1.msra.mxu0 0.0
      %2311 = vmatprep.subr.mxu0 0.0
      %2312 = vmatpush1.msra.mxu0 0.0
      %2313 = vmatprep.subr.mxu0 0.0
      %2314 = vmatpush1.msra.mxu0 0.0
      %2315 = vmatprep.subr.mxu0 0.0
      %2316 = vmatpush1.msra.mxu0 0.0
      %2317 = vmatprep.subr.mxu0 0.0
      %2318 = vmatpush1.msra.mxu0 0.0
      %2319 = vmatprep.subr.mxu0 0.0
      %2320 = vmatpush1.msra.mxu0 0.0
      %2321 = vmatprep.subr.mxu0 0.0
      %2322 = vmatpush1.msra.mxu0 0.0
      %2323 = vmatprep.subr.mxu0 0.0
      %2324 = vmatpush1.msra.mxu0 0.0
      %2325 = vmatprep.subr.mxu0 0.0
      %2326 = vmatpush1.msra.mxu0 0.0
      %2327 = vmatprep.subr.mxu0 0.0
      %2328 = vmatpush1.msra.mxu0 0.0
      %2329 = vmatprep.subr.mxu0 0.0
      %2330 = vmatpush1.msra.mxu0 0.0
      %2331 = vmatprep.subr.mxu0 0.0
      %2332 = vmatpush1.msra.mxu0 0.0
      %2333 = vmatprep.subr.mxu0 0.0
      %2334 = vmatpush1.msra.mxu0 0.0
      %2335 = vmatprep.subr.mxu0 0.0
      %2336 = vmatpush1.msra.mxu0 0.0
      %2337 = vmatprep.subr.mxu0 0.0
      %2338 = vmatpush1.msra.mxu0 0.0
      %2339 = vmatprep.subr.mxu0 0.0
      %2340 = vmatpush1.msra.mxu0 0.0
      %2341 = vmatprep.subr.mxu0 0.0
      %2342 = vmatpush1.msra.mxu0 0.0
      %2343 = vmatprep.subr.mxu0 0.0
      %2344 = vmatpush1.msra.mxu0 0.0
      %2345 = vmatprep.subr.mxu0 0.0
      %2346 = vmatpush1.msra.mxu0 0.0
      %2347 = vmatprep.subr.mxu0 0.0
      %2348 = vmatpush1.msra.mxu0 0.0
      %2349 = vmatprep.subr.mxu0 0.0
      %2350 = vmatpush1.msra.mxu0 0.0
      %2351 = vmatprep.mubr.f32.mxu0 0.0
      %2352 = vmatmul.mubr.f32.gmra.mrb[0].mxu0 %v2282
      %v2353 = vpop.f32.mrb[0].mxu0
      %v2354 = vadd.f32 0.0, %v2353
      %v2355 = vpop.f32.mrb[0].mxu0
      %2356 = vmatprep.mubr.f32.mxu0 0.0
      %2357 = vmatmul.mubr.f32.gmra.mrb[0].mxu0 %v2285
      %v2358 = vpop.f32.mrb[0].mxu0
      %v2359 = vadd.f32 0.0, %v2358
      %v2360 = vpop.f32.mrb[0].mxu0
      %2361 = vdwg.mxu0
      %v2363 = vsel %vm1325, %v2263, 0
      %v2366 = vsel %vm1325, %v2268, 0
      %2368 = vmatprep.subr.mxu0 0.0
      %2369 = vmatpush1.msra.mxu0 %v2193
      %2370 = vmatprep.subr.mxu0 0.0
      %2371 = vmatpush1.msra.mxu0 0.0
      %2372 = vmatprep.subr.mxu0 0.0
      %2373 = vmatpush1.msra.mxu0 0.0
      %2374 = vmatprep.subr.mxu0 0.0
      %2375 = vmatpush1.msra.mxu0 0.0
      %2376 = vmatprep.subr.mxu0 0.0
      %2377 = vmatpush1.msra.mxu0 0.0
      %2378 = vmatprep.subr.mxu0 0.0
      %2379 = vmatpush1.msra.mxu0 0.0
      %2380 = vmatprep.subr.mxu0 0.0
      %2381 = vmatpush1.msra.mxu0 0.0
      %2382 = vmatprep.subr.mxu0 0.0
      %2383 = vmatpush1.msra.mxu0 0.0
      %2384 = vmatprep.subr.mxu0 0.0
      %2385 = vmatpush1.msra.mxu0 0.0
      %2386 = vmatprep.subr.mxu0 0.0
      %2387 = vmatpush1.msra.mxu0 0.0
      %2388 = vmatprep.subr.mxu0 0.0
      %2389 = vmatpush1.msra.mxu0 0.0
      %2390 = vmatprep.subr.mxu0 0.0
      %2391 = vmatpush1.msra.mxu0 0.0
      %2392 = vmatprep.subr.mxu0 0.0
      %2393 = vmatpush1.msra.mxu0 0.0
      %2394 = vmatprep.subr.mxu0 0.0
      %2395 = vmatpush1.msra.mxu0 0.0
      %2396 = vmatprep.subr.mxu0 0.0
      %2397 = vmatpush1.msra.mxu0 0.0
      %2398 = vmatprep.subr.mxu0 0.0
      %2399 = vmatpush1.msra.mxu0 0.0
      %2400 = vmatprep.subr.mxu0 0.0
      %2401 = vmatpush1.msra.mxu0 0.0
      %2402 = vmatprep.subr.mxu0 0.0
      %2403 = vmatpush1.msra.mxu0 0.0
      %2404 = vmatprep.subr.mxu0 0.0
      %2405 = vmatpush1.msra.mxu0 0.0
      %2406 = vmatprep.subr.mxu0 0.0
      %2407 = vmatpush1.msra.mxu0 0.0
      %2408 = vmatprep.subr.mxu0 0.0
      %2409 = vmatpush1.msra.mxu0 0.0
      %2410 = vmatprep.subr.mxu0 0.0
      %2411 = vmatpush1.msra.mxu0 0.0
      %2412 = vmatprep.subr.mxu0 0.0
      %2413 = vmatpush1.msra.mxu0 0.0
      %2414 = vmatprep.subr.mxu0 0.0
      %2415 = vmatpush1.msra.mxu0 0.0
      %2416 = vmatprep.subr.mxu0 0.0
      %2417 = vmatpush1.msra.mxu0 0.0
      %2418 = vmatprep.subr.mxu0 0.0
      %2419 = vmatpush1.msra.mxu0 0.0
      %2420 = vmatprep.subr.mxu0 0.0
      %2421 = vmatpush1.msra.mxu0 0.0
      %2422 = vmatprep.subr.mxu0 0.0
      %2423 = vmatpush1.msra.mxu0 0.0
      %2424 = vmatprep.subr.mxu0 0.0
      %2425 = vmatpush1.msra.mxu0 0.0
      %2426 = vmatprep.subr.mxu0 0.0
      %2427 = vmatpush1.msra.mxu0 0.0
      %2428 = vmatprep.subr.mxu0 0.0
      %2429 = vmatpush1.msra.mxu0 0.0
      %2430 = vmatprep.subr.mxu0 0.0
      %2431 = vmatpush1.msra.mxu0 0.0
      %2432 = vmatprep.mubr.f32.mxu0 0.0
      %2433 = vmatmul.mubr.f32.gmra.mrb[0].mxu0 %v2363
      %v2434 = vpop.f32.mrb[0].mxu0
      %v2435 = vadd.f32 %v2354, %v2434
      %v2436 = vpop.f32.mrb[0].mxu0
      %2437 = vmatprep.mubr.f32.mxu0 0.0
      %2438 = vmatmul.mubr.f32.gmra.mrb[0].mxu0 %v2366
      %v2439 = vpop.f32.mrb[0].mxu0
      %v2440 = vadd.f32 %v2359, %v2439
      %v2441 = vpop.f32.mrb[0].mxu0
      %2442 = vdwg.mxu0
      %v2444 = vlaneseq
      %v2445 = vshrl.u32 %v2444, 7
      %v2446 = vsub.s32 0, %v2445
      %v2447 = vrot.slane %v2195, %v2446
      %v2449 = vadd.f32 %v2435, %v2447
      %v2450 = vadd.f32 %v2440, %v2447
      %v2451 = vmax.f32 %v2449, 0.0
      %v2452 = vmax.f32 %v2450, 0.0
      %v2453 = vld [vmem:[%s47] sm:$0xff]
      %v2454 = vld [vmem:[%s47 + $0x8] sm:$0xff]
      %v2455 = vld [vmem:[%s45] sm:$0x1]
      %2456 = vmatprep.subr.mxu0 0.0
      %2457 = vmatpush1.msra.mxu0 %v2451
      %2458 = vmatprep.subr.mxu0 0.0
      %2459 = vmatpush1.msra.mxu0 %v2452
      %2460 = vmatprep.subr.mxu0 0.0
      %2461 = vmatpush1.msra.mxu0 0.0
      %2462 = vmatprep.subr.mxu0 0.0
      %2463 = vmatpush1.msra.mxu0 0.0
      %2464 = vmatprep.subr.mxu0 0.0
      %2465 = vmatpush1.msra.mxu0 0.0
      %2466 = vmatprep.subr.mxu0 0.0
      %2467 = vmatpush1.msra.mxu0 0.0
      %2468 = vmatprep.subr.mxu0 0.0
      %2469 = vmatpush1.msra.mxu0 0.0
      %2470 = vmatprep.subr.mxu0 0.0
      %2471 = vmatpush1.msra.mxu0 0.0
      %2472 = vmatprep.subr.mxu0 0.0
      %2473 = vmatpush1.msra.mxu0 0.0
      %2474 = vmatprep.subr.mxu0 0.0
      %2475 = vmatpush1.msra.mxu0 0.0
      %2476 = vmatprep.subr.mxu0 0.0
      %2477 = vmatpush1.msra.mxu0 0.0
      %2478 = vmatprep.subr.mxu0 0.0
      %2479 = vmatpush1.msra.mxu0 0.0
      %2480 = vmatprep.subr.mxu0 0.0
      %2481 = vmatpush1.msra.mxu0 0.0
      %2482 = vmatprep.subr.mxu0 0.0
      %2483 = vmatpush1.msra.mxu0 0.0
      %2484 = vmatprep.subr.mxu0 0.0
      %2485 = vmatpush1.msra.mxu0 0.0
      %2486 = vmatprep.subr.mxu0 0.0
      %2487 = vmatpush1.msra.mxu0 0.0
      %2488 = vmatprep.subr.mxu0 0.0
      %2489 = vmatpush1.msra.mxu0 0.0
      %2490 = vmatprep.subr.mxu0 0.0
      %2491 = vmatpush1.msra.mxu0 0.0
      %2492 = vmatprep.subr.mxu0 0.0
      %2493 = vmatpush1.msra.mxu0 0.0
      %2494 = vmatprep.subr.mxu0 0.0
      %2495 = vmatpush1.msra.mxu0 0.0
      %2496 = vmatprep.subr.mxu0 0.0
      %2497 = vmatpush1.msra.mxu0 0.0
      %2498 = vmatprep.subr.mxu0 0.0
      %2499 = vmatpush1.msra.mxu0 0.0
      %2500 = vmatprep.subr.mxu0 0.0
      %2501 = vmatpush1.msra.mxu0 0.0
      %2502 = vmatprep.subr.mxu0 0.0
      %2503 = vmatpush1.msra.mxu0 0.0
      %2504 = vmatprep.subr.mxu0 0.0
      %2505 = vmatpush1.msra.mxu0 0.0
      %2506 = vmatprep.subr.mxu0 0.0
      %2507 = vmatpush1.msra.mxu0 0.0
      %2508 = vmatprep.subr.mxu0 0.0
      %2509 = vmatpush1.msra.mxu0 0.0
      %2510 = vmatprep.subr.mxu0 0.0
      %2511 = vmatpush1.msra.mxu0 0.0
      %2512 = vmatprep.subr.mxu0 0.0
      %2513 = vmatpush1.msra.mxu0 0.0
      %2514 = vmatprep.subr.mxu0 0.0
      %2515 = vmatpush1.msra.mxu0 0.0
      %2516 = vmatprep.subr.mxu0 0.0
      %2517 = vmatpush1.msra.mxu0 0.0
      %2518 = vmatprep.subr.mxu0 0.0
      %2519 = vmatpush1.msra.mxu0 0.0
      %2520 = vmatprep.mubr.f32.mxu0 0.0
      %2521 = vmatmul.mubr.f32.gmra.mrb[0].mxu0 %v961
      %v2522 = vpop.f32.mrb[0].mxu0
      %v2523 = vadd.f32 0.0, %v2522
      %v2524 = vpop.f32.mrb[0].mxu0
      %2525 = vmatprep.mubr.f32.mxu0 0.0
      %2526 = vmatmul.mubr.f32.gmra.mrb[0].mxu0 %v964
      %v2527 = vpop.f32.mrb[0].mxu0
      %v2528 = vadd.f32 0.0, %v2527
      %v2529 = vpop.f32.mrb[0].mxu0
      %2530 = vmatprep.mubr.f32.mxu0 0.0
      %2531 = vmatmul.mubr.f32.gmra.mrb[0].mxu0 %v967
      %v2532 = vpop.f32.mrb[0].mxu0
      %v2533 = vadd.f32 0.0, %v2532
      %v2534 = vpop.f32.mrb[0].mxu0
      %2535 = vmatprep.mubr.f32.mxu0 0.0
      %2536 = vmatmul.mubr.f32.gmra.mrb[0].mxu0 %v970
      %v2537 = vpop.f32.mrb[0].mxu0
      %v2538 = vadd.f32 0.0, %v2537
      %v2539 = vpop.f32.mrb[0].mxu0
      %2540 = vdwg.mxu0
      %v2542 = vsel %vm1325, %v2533, 0
      %v2545 = vsel %vm1325, %v2538, 0
      %2547 = vmatprep.subr.mxu0 0.0
      %2548 = vmatpush1.msra.mxu0 %v2454
      %2549 = vmatprep.subr.mxu0 0.0
      %2550 = vmatpush1.msra.mxu0 0.0
      %2551 = vmatprep.subr.mxu0 0.0
      %2552 = vmatpush1.msra.mxu0 0.0
      %2553 = vmatprep.subr.mxu0 0.0
      %2554 = vmatpush1.msra.mxu0 0.0
      %2555 = vmatprep.subr.mxu0 0.0
      %2556 = vmatpush1.msra.mxu0 0.0
      %2557 = vmatprep.subr.mxu0 0.0
      %2558 = vmatpush1.msra.mxu0 0.0
      %2559 = vmatprep.subr.mxu0 0.0
      %2560 = vmatpush1.msra.mxu0 0.0
      %2561 = vmatprep.subr.mxu0 0.0
      %2562 = vmatpush1.msra.mxu0 0.0
      %2563 = vmatprep.subr.mxu0 0.0
      %2564 = vmatpush1.msra.mxu0 0.0
      %2565 = vmatprep.subr.mxu0 0.0
      %2566 = vmatpush1.msra.mxu0 0.0
      %2567 = vmatprep.subr.mxu0 0.0
      %2568 = vmatpush1.msra.mxu0 0.0
      %2569 = vmatprep.subr.mxu0 0.0
      %2570 = vmatpush1.msra.mxu0 0.0
      %2571 = vmatprep.subr.mxu0 0.0
      %2572 = vmatpush1.msra.mxu0 0.0
      %2573 = vmatprep.subr.mxu0 0.0
      %2574 = vmatpush1.msra.mxu0 0.0
      %2575 = vmatprep.subr.mxu0 0.0
      %2576 = vmatpush1.msra.mxu0 0.0
      %2577 = vmatprep.subr.mxu0 0.0
      %2578 = vmatpush1.msra.mxu0 0.0
      %2579 = vmatprep.subr.mxu0 0.0
      %2580 = vmatpush1.msra.mxu0 0.0
      %2581 = vmatprep.subr.mxu0 0.0
      %2582 = vmatpush1.msra.mxu0 0.0
      %2583 = vmatprep.subr.mxu0 0.0
      %2584 = vmatpush1.msra.mxu0 0.0
      %2585 = vmatprep.subr.mxu0 0.0
      %2586 = vmatpush1.msra.mxu0 0.0
      %2587 = vmatprep.subr.mxu0 0.0
      %2588 = vmatpush1.msra.mxu0 0.0
      %2589 = vmatprep.subr.mxu0 0.0
      %2590 = vmatpush1.msra.mxu0 0.0
      %2591 = vmatprep.subr.mxu0 0.0
      %2592 = vmatpush1.msra.mxu0 0.0
      %2593 = vmatprep.subr.mxu0 0.0
      %2594 = vmatpush1.msra.mxu0 0.0
      %2595 = vmatprep.subr.mxu0 0.0
      %2596 = vmatpush1.msra.mxu0 0.0
      %2597 = vmatprep.subr.mxu0 0.0
      %2598 = vmatpush1.msra.mxu0 0.0
      %2599 = vmatprep.subr.mxu0 0.0
      %2600 = vmatpush1.msra.mxu0 0.0
      %2601 = vmatprep.subr.mxu0 0.0
      %2602 = vmatpush1.msra.mxu0 0.0
      %2603 = vmatprep.subr.mxu0 0.0
      %2604 = vmatpush1.msra.mxu0 0.0
      %2605 = vmatprep.subr.mxu0 0.0
      %2606 = vmatpush1.msra.mxu0 0.0
      %2607 = vmatprep.subr.mxu0 0.0
      %2608 = vmatpush1.msra.mxu0 0.0
      %2609 = vmatprep.subr.mxu0 0.0
      %2610 = vmatpush1.msra.mxu0 0.0
      %2611 = vmatprep.mubr.f32.mxu0 0.0
      %2612 = vmatmul.mubr.f32.gmra.mrb[0].mxu0 %v2542
      %v2613 = vpop.f32.mrb[0].mxu0
      %v2614 = vadd.f32 0.0, %v2613
      %v2615 = vpop.f32.mrb[0].mxu0
      %2616 = vmatprep.mubr.f32.mxu0 0.0
      %2617 = vmatmul.mubr.f32.gmra.mrb[0].mxu0 %v2545
      %v2618 = vpop.f32.mrb[0].mxu0
      %v2619 = vadd.f32 0.0, %v2618
      %v2620 = vpop.f32.mrb[0].mxu0
      %2621 = vdwg.mxu0
      %v2623 = vsel %vm1325, %v2523, 0
      %v2626 = vsel %vm1325, %v2528, 0
      %2628 = vmatprep.subr.mxu0 0.0
      %2629 = vmatpush1.msra.mxu0 %v2453
      %2630 = vmatprep.subr.mxu0 0.0
      %2631 = vmatpush1.msra.mxu0 0.0
      %2632 = vmatprep.subr.mxu0 0.0
      %2633 = vmatpush1.msra.mxu0 0.0
      %2634 = vmatprep.subr.mxu0 0.0
      %2635 = vmatpush1.msra.mxu0 0.0
      %2636 = vmatprep.subr.mxu0 0.0
      %2637 = vmatpush1.msra.mxu0 0.0
      %2638 = vmatprep.subr.mxu0 0.0
      %2639 = vmatpush1.msra.mxu0 0.0
      %2640 = vmatprep.subr.mxu0 0.0
      %2641 = vmatpush1.msra.mxu0 0.0
      %2642 = vmatprep.subr.mxu0 0.0
      %2643 = vmatpush1.msra.mxu0 0.0
      %2644 = vmatprep.subr.mxu0 0.0
      %2645 = vmatpush1.msra.mxu0 0.0
      %2646 = vmatprep.subr.mxu0 0.0
      %2647 = vmatpush1.msra.mxu0 0.0
      %2648 = vmatprep.subr.mxu0 0.0
      %2649 = vmatpush1.msra.mxu0 0.0
      %2650 = vmatprep.subr.mxu0 0.0
      %2651 = vmatpush1.msra.mxu0 0.0
      %2652 = vmatprep.subr.mxu0 0.0
      %2653 = vmatpush1.msra.mxu0 0.0
      %2654 = vmatprep.subr.mxu0 0.0
      %2655 = vmatpush1.msra.mxu0 0.0
      %2656 = vmatprep.subr.mxu0 0.0
      %2657 = vmatpush1.msra.mxu0 0.0
      %2658 = vmatprep.subr.mxu0 0.0
      %2659 = vmatpush1.msra.mxu0 0.0
      %2660 = vmatprep.subr.mxu0 0.0
      %2661 = vmatpush1.msra.mxu0 0.0
      %2662 = vmatprep.subr.mxu0 0.0
      %2663 = vmatpush1.msra.mxu0 0.0
      %2664 = vmatprep.subr.mxu0 0.0
      %2665 = vmatpush1.msra.mxu0 0.0
      %2666 = vmatprep.subr.mxu0 0.0
      %2667 = vmatpush1.msra.mxu0 0.0
      %2668 = vmatprep.subr.mxu0 0.0
      %2669 = vmatpush1.msra.mxu0 0.0
      %2670 = vmatprep.subr.mxu0 0.0
      %2671 = vmatpush1.msra.mxu0 0.0
      %2672 = vmatprep.subr.mxu0 0.0
      %2673 = vmatpush1.msra.mxu0 0.0
      %2674 = vmatprep.subr.mxu0 0.0
      %2675 = vmatpush1.msra.mxu0 0.0
      %2676 = vmatprep.subr.mxu0 0.0
      %2677 = vmatpush1.msra.mxu0 0.0
      %2678 = vmatprep.subr.mxu0 0.0
      %2679 = vmatpush1.msra.mxu0 0.0
      %2680 = vmatprep.subr.mxu0 0.0
      %2681 = vmatpush1.msra.mxu0 0.0
      %2682 = vmatprep.subr.mxu0 0.0
      %2683 = vmatpush1.msra.mxu0 0.0
      %2684 = vmatprep.subr.mxu0 0.0
      %2685 = vmatpush1.msra.mxu0 0.0
      %2686 = vmatprep.subr.mxu0 0.0
      %2687 = vmatpush1.msra.mxu0 0.0
      %2688 = vmatprep.subr.mxu0 0.0
      %2689 = vmatpush1.msra.mxu0 0.0
      %2690 = vmatprep.subr.mxu0 0.0
      %2691 = vmatpush1.msra.mxu0 0.0
      %2692 = vmatprep.mubr.f32.mxu0 0.0
      %2693 = vmatmul.mubr.f32.gmra.mrb[0].mxu0 %v2623
      %v2694 = vpop.f32.mrb[0].mxu0
      %v2695 = vadd.f32 %v2614, %v2694
      %v2696 = vpop.f32.mrb[0].mxu0
      %2697 = vmatprep.mubr.f32.mxu0 0.0
      %2698 = vmatmul.mubr.f32.gmra.mrb[0].mxu0 %v2626
      %v2699 = vpop.f32.mrb[0].mxu0
      %v2700 = vadd.f32 %v2619, %v2699
      %v2701 = vpop.f32.mrb[0].mxu0
      %2702 = vdwg.mxu0
      %v2704 = vlaneseq
      %v2705 = vshrl.u32 %v2704, 7
      %v2706 = vsub.s32 0, %v2705
      %v2707 = vrot.slane %v2455, %v2706
      %v2709 = vadd.f32 %v2695, %v2707
      %v2710 = vadd.f32 %v2700, %v2707
      %v2711 = vadd.f32 %v2709, %v1924
      %v2712 = vadd.f32 %v2710, %v1925
      %v2713 = vmax.f32 %v2711, 0.0
      %v2714 = vmax.f32 %v2712, 0.0
      %v2715 = vld [vmem:[%s23] sm:$0xff]
      %v2716 = vld [vmem:[%s23 + $0x8] sm:$0xff]
      %v2717 = vld [vmem:[%s23 + $0x10] sm:$0xff]
      %v2718 = vld [vmem:[%s23 + $0x18] sm:$0xff]
      %v2719 = vld [vmem:[%s23 + $0x20] sm:$0xff]
      %v2720 = vld [vmem:[%s23 + $0x28] sm:$0xff]
      %v2721 = vld [vmem:[%s23 + $0x30] sm:$0xff]
      %v2722 = vld [vmem:[%s23 + $0x38] sm:$0xff]
      %v2723 = vld [vmem:[%s21] sm:$0x1]
      %2724 = vmatprep.subr.mxu0 0.0
      %2725 = vmatpush1.msra.mxu0 %v2713
      %2726 = vmatprep.subr.mxu0 0.0
      %2727 = vmatpush1.msra.mxu0 %v2714
      %2728 = vmatprep.subr.mxu0 0.0
      %2729 = vmatpush1.msra.mxu0 0.0
      %2730 = vmatprep.subr.mxu0 0.0
      %2731 = vmatpush1.msra.mxu0 0.0
      %2732 = vmatprep.subr.mxu0 0.0
      %2733 = vmatpush1.msra.mxu0 0.0
      %2734 = vmatprep.subr.mxu0 0.0
      %2735 = vmatpush1.msra.mxu0 0.0
      %2736 = vmatprep.subr.mxu0 0.0
      %2737 = vmatpush1.msra.mxu0 0.0
      %2738 = vmatprep.subr.mxu0 0.0
      %2739 = vmatpush1.msra.mxu0 0.0
      %2740 = vmatprep.subr.mxu0 0.0
      %2741 = vmatpush1.msra.mxu0 0.0
      %2742 = vmatprep.subr.mxu0 0.0
      %2743 = vmatpush1.msra.mxu0 0.0
      %2744 = vmatprep.subr.mxu0 0.0
      %2745 = vmatpush1.msra.mxu0 0.0
      %2746 = vmatprep.subr.mxu0 0.0
      %2747 = vmatpush1.msra.mxu0 0.0
      %2748 = vmatprep.subr.mxu0 0.0
      %2749 = vmatpush1.msra.mxu0 0.0
      %2750 = vmatprep.subr.mxu0 0.0
      %2751 = vmatpush1.msra.mxu0 0.0
      %2752 = vmatprep.subr.mxu0 0.0
      %2753 = vmatpush1.msra.mxu0 0.0
      %2754 = vmatprep.subr.mxu0 0.0
      %2755 = vmatpush1.msra.mxu0 0.0
      %2756 = vmatprep.subr.mxu0 0.0
      %2757 = vmatpush1.msra.mxu0 0.0
      %2758 = vmatprep.subr.mxu0 0.0
      %2759 = vmatpush1.msra.mxu0 0.0
      %2760 = vmatprep.subr.mxu0 0.0
      %2761 = vmatpush1.msra.mxu0 0.0
      %2762 = vmatprep.subr.mxu0 0.0
      %2763 = vmatpush1.msra.mxu0 0.0
      %2764 = vmatprep.subr.mxu0 0.0
      %2765 = vmatpush1.msra.mxu0 0.0
      %2766 = vmatprep.subr.mxu0 0.0
      %2767 = vmatpush1.msra.mxu0 0.0
      %2768 = vmatprep.subr.mxu0 0.0
      %2769 = vmatpush1.msra.mxu0 0.0
      %2770 = vmatprep.subr.mxu0 0.0
      %2771 = vmatpush1.msra.mxu0 0.0
      %2772 = vmatprep.subr.mxu0 0.0
      %2773 = vmatpush1.msra.mxu0 0.0
      %2774 = vmatprep.subr.mxu0 0.0
      %2775 = vmatpush1.msra.mxu0 0.0
      %2776 = vmatprep.subr.mxu0 0.0
      %2777 = vmatpush1.msra.mxu0 0.0
      %2778 = vmatprep.subr.mxu0 0.0
      %2779 = vmatpush1.msra.mxu0 0.0
      %2780 = vmatprep.subr.mxu0 0.0
      %2781 = vmatpush1.msra.mxu0 0.0
      %2782 = vmatprep.subr.mxu0 0.0
      %2783 = vmatpush1.msra.mxu0 0.0
      %2784 = vmatprep.subr.mxu0 0.0
      %2785 = vmatpush1.msra.mxu0 0.0
      %2786 = vmatprep.subr.mxu0 0.0
      %2787 = vmatpush1.msra.mxu0 0.0
      %2788 = vmatprep.mubr.f32.mxu0 0.0
      %2789 = vmatmul.mubr.f32.gmra.mrb[0].mxu0 %v961
      %v2790 = vpop.f32.mrb[0].mxu0
      %v2791 = vadd.f32 0.0, %v2790
      %v2792 = vpop.f32.mrb[0].mxu0
      %2793 = vmatprep.mubr.f32.mxu0 0.0
      %2794 = vmatmul.mubr.f32.gmra.mrb[0].mxu0 %v964
      %v2795 = vpop.f32.mrb[0].mxu0
      %v2796 = vadd.f32 0.0, %v2795
      %v2797 = vpop.f32.mrb[0].mxu0
      %2798 = vmatprep.mubr.f32.mxu0 0.0
      %2799 = vmatmul.mubr.f32.gmra.mrb[0].mxu0 %v967
      %v2800 = vpop.f32.mrb[0].mxu0
      %v2801 = vadd.f32 0.0, %v2800
      %v2802 = vpop.f32.mrb[0].mxu0
      %2803 = vmatprep.mubr.f32.mxu0 0.0
      %2804 = vmatmul.mubr.f32.gmra.mrb[0].mxu0 %v970
      %v2805 = vpop.f32.mrb[0].mxu0
      %v2806 = vadd.f32 0.0, %v2805
      %v2807 = vpop.f32.mrb[0].mxu0
      %2808 = vdwg.mxu0
      %v2810 = vsel %vm2020, %v2801, 0
      %v2813 = vsel %vm2020, %v2806, 0
      %2815 = vmatprep.subr.mxu0 0.0
      %2816 = vmatpush1.msra.mxu0 %v2719
      %2817 = vmatprep.subr.mxu0 0.0
      %2818 = vmatpush1.msra.mxu0 %v2720
      %2819 = vmatprep.subr.mxu0 0.0
      %2820 = vmatpush1.msra.mxu0 %v2721
      %2821 = vmatprep.subr.mxu0 0.0
      %2822 = vmatpush1.msra.mxu0 %v2722
      %2823 = vmatprep.subr.mxu0 0.0
      %2824 = vmatpush1.msra.mxu0 0.0
      %2825 = vmatprep.subr.mxu0 0.0
      %2826 = vmatpush1.msra.mxu0 0.0
      %2827 = vmatprep.subr.mxu0 0.0
      %2828 = vmatpush1.msra.mxu0 0.0
      %2829 = vmatprep.subr.mxu0 0.0
      %2830 = vmatpush1.msra.mxu0 0.0
      %2831 = vmatprep.subr.mxu0 0.0
      %2832 = vmatpush1.msra.mxu0 0.0
      %2833 = vmatprep.subr.mxu0 0.0
      %2834 = vmatpush1.msra.mxu0 0.0
      %2835 = vmatprep.subr.mxu0 0.0
      %2836 = vmatpush1.msra.mxu0 0.0
      %2837 = vmatprep.subr.mxu0 0.0
      %2838 = vmatpush1.msra.mxu0 0.0
      %2839 = vmatprep.subr.mxu0 0.0
      %2840 = vmatpush1.msra.mxu0 0.0
      %2841 = vmatprep.subr.mxu0 0.0
      %2842 = vmatpush1.msra.mxu0 0.0
      %2843 = vmatprep.subr.mxu0 0.0
      %2844 = vmatpush1.msra.mxu0 0.0
      %2845 = vmatprep.subr.mxu0 0.0
      %2846 = vmatpush1.msra.mxu0 0.0
      %2847 = vmatprep.subr.mxu0 0.0
      %2848 = vmatpush1.msra.mxu0 0.0
      %2849 = vmatprep.subr.mxu0 0.0
      %2850 = vmatpush1.msra.mxu0 0.0
      %2851 = vmatprep.subr.mxu0 0.0
      %2852 = vmatpush1.msra.mxu0 0.0
      %2853 = vmatprep.subr.mxu0 0.0
      %2854 = vmatpush1.msra.mxu0 0.0
      %2855 = vmatprep.subr.mxu0 0.0
      %2856 = vmatpush1.msra.mxu0 0.0
      %2857 = vmatprep.subr.mxu0 0.0
      %2858 = vmatpush1.msra.mxu0 0.0
      %2859 = vmatprep.subr.mxu0 0.0
      %2860 = vmatpush1.msra.mxu0 0.0
      %2861 = vmatprep.subr.mxu0 0.0
      %2862 = vmatpush1.msra.mxu0 0.0
      %2863 = vmatprep.subr.mxu0 0.0
      %2864 = vmatpush1.msra.mxu0 0.0
      %2865 = vmatprep.subr.mxu0 0.0
      %2866 = vmatpush1.msra.mxu0 0.0
      %2867 = vmatprep.subr.mxu0 0.0
      %2868 = vmatpush1.msra.mxu0 0.0
      %2869 = vmatprep.subr.mxu0 0.0
      %2870 = vmatpush1.msra.mxu0 0.0
      %2871 = vmatprep.subr.mxu0 0.0
      %2872 = vmatpush1.msra.mxu0 0.0
      %2873 = vmatprep.subr.mxu0 0.0
      %2874 = vmatpush1.msra.mxu0 0.0
      %2875 = vmatprep.subr.mxu0 0.0
      %2876 = vmatpush1.msra.mxu0 0.0
      %2877 = vmatprep.subr.mxu0 0.0
      %2878 = vmatpush1.msra.mxu0 0.0
      %2879 = vmatprep.mubr.f32.mxu0 0.0
      %2880 = vmatmul.mubr.f32.gmra.mrb[0].mxu0 %v2810
      %v2881 = vpop.f32.mrb[0].mxu0
      %v2882 = vadd.f32 0.0, %v2881
      %v2883 = vpop.f32.mrb[0].mxu0
      %2884 = vmatprep.mubr.f32.mxu0 0.0
      %2885 = vmatmul.mubr.f32.gmra.mrb[0].mxu0 %v2813
      %v2886 = vpop.f32.mrb[0].mxu0
      %v2887 = vadd.f32 0.0, %v2886
      %v2888 = vpop.f32.mrb[0].mxu0
      %2889 = vdwg.mxu0
      %v2891 = vsel %vm2020, %v2791, 0
      %v2894 = vsel %vm2020, %v2796, 0
      %2896 = vmatprep.subr.mxu0 0.0
      %2897 = vmatpush1.msra.mxu0 %v2715
      %2898 = vmatprep.subr.mxu0 0.0
      %2899 = vmatpush1.msra.mxu0 %v2716
      %2900 = vmatprep.subr.mxu0 0.0
      %2901 = vmatpush1.msra.mxu0 %v2717
      %2902 = vmatprep.subr.mxu0 0.0
      %2903 = vmatpush1.msra.mxu0 %v2718
      %2904 = vmatprep.subr.mxu0 0.0
      %2905 = vmatpush1.msra.mxu0 0.0
      %2906 = vmatprep.subr.mxu0 0.0
      %2907 = vmatpush1.msra.mxu0 0.0
      %2908 = vmatprep.subr.mxu0 0.0
      %2909 = vmatpush1.msra.mxu0 0.0
      %2910 = vmatprep.subr.mxu0 0.0
      %2911 = vmatpush1.msra.mxu0 0.0
      %2912 = vmatprep.subr.mxu0 0.0
      %2913 = vmatpush1.msra.mxu0 0.0
      %2914 = vmatprep.subr.mxu0 0.0
      %2915 = vmatpush1.msra.mxu0 0.0
      %2916 = vmatprep.subr.mxu0 0.0
      %2917 = vmatpush1.msra.mxu0 0.0
      %2918 = vmatprep.subr.mxu0 0.0
      %2919 = vmatpush1.msra.mxu0 0.0
      %2920 = vmatprep.subr.mxu0 0.0
      %2921 = vmatpush1.msra.mxu0 0.0
      %2922 = vmatprep.subr.mxu0 0.0
      %2923 = vmatpush1.msra.mxu0 0.0
      %2924 = vmatprep.subr.mxu0 0.0
      %2925 = vmatpush1.msra.mxu0 0.0
      %2926 = vmatprep.subr.mxu0 0.0
      %2927 = vmatpush1.msra.mxu0 0.0
      %2928 = vmatprep.subr.mxu0 0.0
      %2929 = vmatpush1.msra.mxu0 0.0
      %2930 = vmatprep.subr.mxu0 0.0
      %2931 = vmatpush1.msra.mxu0 0.0
      %2932 = vmatprep.subr.mxu0 0.0
      %2933 = vmatpush1.msra.mxu0 0.0
      %2934 = vmatprep.subr.mxu0 0.0
      %2935 = vmatpush1.msra.mxu0 0.0
      %2936 = vmatprep.subr.mxu0 0.0
      %2937 = vmatpush1.msra.mxu0 0.0
      %2938 = vmatprep.subr.mxu0 0.0
      %2939 = vmatpush1.msra.mxu0 0.0
      %2940 = vmatprep.subr.mxu0 0.0
      %2941 = vmatpush1.msra.mxu0 0.0
      %2942 = vmatprep.subr.mxu0 0.0
      %2943 = vmatpush1.msra.mxu0 0.0
      %2944 = vmatprep.subr.mxu0 0.0
      %2945 = vmatpush1.msra.mxu0 0.0
      %2946 = vmatprep.subr.mxu0 0.0
      %2947 = vmatpush1.msra.mxu0 0.0
      %2948 = vmatprep.subr.mxu0 0.0
      %2949 = vmatpush1.msra.mxu0 0.0
      %2950 = vmatprep.subr.mxu0 0.0
      %2951 = vmatpush1.msra.mxu0 0.0
      %2952 = vmatprep.subr.mxu0 0.0
      %2953 = vmatpush1.msra.mxu0 0.0
      %2954 = vmatprep.subr.mxu0 0.0
      %2955 = vmatpush1.msra.mxu0 0.0
      %2956 = vmatprep.subr.mxu0 0.0
      %2957 = vmatpush1.msra.mxu0 0.0
      %2958 = vmatprep.subr.mxu0 0.0
      %2959 = vmatpush1.msra.mxu0 0.0
      %2960 = vmatprep.mubr.f32.mxu0 0.0
      %2961 = vmatmul.mubr.f32.gmra.mrb[0].mxu0 %v2891
      %v2962 = vpop.f32.mrb[0].mxu0
      %v2963 = vadd.f32 %v2882, %v2962
      %v2964 = vpop.f32.mrb[0].mxu0
      %2965 = vmatprep.mubr.f32.mxu0 0.0
      %2966 = vmatmul.mubr.f32.gmra.mrb[0].mxu0 %v2894
      %v2967 = vpop.f32.mrb[0].mxu0
      %v2968 = vadd.f32 %v2887, %v2967
      %v2969 = vpop.f32.mrb[0].mxu0
      %2970 = vdwg.mxu0
      %v2972 = vlaneseq
      %v2973 = vshrl.u32 %v2972, 7
      %v2974 = vsub.s32 0, %v2973
      %v2975 = vrot.slane %v2723, %v2974
      %v2977 = vadd.f32 %v2963, %v2975
      %v2978 = vadd.f32 %v2968, %v2975
      %v2979 = vmax.f32 %v2977, 0.0
      %v2980 = vmax.f32 %v2978, 0.0
      %v2981 = vld [vmem:[%s27] sm:$0xff]
      %v2982 = vld [vmem:[%s27 + $0x8] sm:$0xff]
      %v2983 = vld [vmem:[%s25] sm:$0x1]
      %2984 = vmatprep.subr.mxu0 0.0
      %2985 = vmatpush1.msra.mxu0 %v2979
      %2986 = vmatprep.subr.mxu0 0.0
      %2987 = vmatpush1.msra.mxu0 %v2980
      %2988 = vmatprep.subr.mxu0 0.0
      %2989 = vmatpush1.msra.mxu0 0.0
      %2990 = vmatprep.subr.mxu0 0.0
      %2991 = vmatpush1.msra.mxu0 0.0
      %2992 = vmatprep.subr.mxu0 0.0
      %2993 = vmatpush1.msra.mxu0 0.0
      %2994 = vmatprep.subr.mxu0 0.0
      %2995 = vmatpush1.msra.mxu0 0.0
      %2996 = vmatprep.subr.mxu0 0.0
      %2997 = vmatpush1.msra.mxu0 0.0
      %2998 = vmatprep.subr.mxu0 0.0
      %2999 = vmatpush1.msra.mxu0 0.0
      %3000 = vmatprep.subr.mxu0 0.0
      %3001 = vmatpush1.msra.mxu0 0.0
      %3002 = vmatprep.subr.mxu0 0.0
      %3003 = vmatpush1.msra.mxu0 0.0
      %3004 = vmatprep.subr.mxu0 0.0
      %3005 = vmatpush1.msra.mxu0 0.0
      %3006 = vmatprep.subr.mxu0 0.0
      %3007 = vmatpush1.msra.mxu0 0.0
      %3008 = vmatprep.subr.mxu0 0.0
      %3009 = vmatpush1.msra.mxu0 0.0
      %3010 = vmatprep.subr.mxu0 0.0
      %3011 = vmatpush1.msra.mxu0 0.0
      %3012 = vmatprep.subr.mxu0 0.0
      %3013 = vmatpush1.msra.mxu0 0.0
      %3014 = vmatprep.subr.mxu0 0.0
      %3015 = vmatpush1.msra.mxu0 0.0
      %3016 = vmatprep.subr.mxu0 0.0
      %3017 = vmatpush1.msra.mxu0 0.0
      %3018 = vmatprep.subr.mxu0 0.0
      %3019 = vmatpush1.msra.mxu0 0.0
      %3020 = vmatprep.subr.mxu0 0.0
      %3021 = vmatpush1.msra.mxu0 0.0
      %3022 = vmatprep.subr.mxu0 0.0
      %3023 = vmatpush1.msra.mxu0 0.0
      %3024 = vmatprep.subr.mxu0 0.0
      %3025 = vmatpush1.msra.mxu0 0.0
      %3026 = vmatprep.subr.mxu0 0.0
      %3027 = vmatpush1.msra.mxu0 0.0
      %3028 = vmatprep.subr.mxu0 0.0
      %3029 = vmatpush1.msra.mxu0 0.0
      %3030 = vmatprep.subr.mxu0 0.0
      %3031 = vmatpush1.msra.mxu0 0.0
      %3032 = vmatprep.subr.mxu0 0.0
      %3033 = vmatpush1.msra.mxu0 0.0
      %3034 = vmatprep.subr.mxu0 0.0
      %3035 = vmatpush1.msra.mxu0 0.0
      %3036 = vmatprep.subr.mxu0 0.0
      %3037 = vmatpush1.msra.mxu0 0.0
      %3038 = vmatprep.subr.mxu0 0.0
      %3039 = vmatpush1.msra.mxu0 0.0
      %3040 = vmatprep.subr.mxu0 0.0
      %3041 = vmatpush1.msra.mxu0 0.0
      %3042 = vmatprep.subr.mxu0 0.0
      %3043 = vmatpush1.msra.mxu0 0.0
      %3044 = vmatprep.subr.mxu0 0.0
      %3045 = vmatpush1.msra.mxu0 0.0
      %3046 = vmatprep.subr.mxu0 0.0
      %3047 = vmatpush1.msra.mxu0 0.0
      %3048 = vmatprep.mubr.f32.mxu0 0.0
      %3049 = vmatmul.mubr.f32.gmra.mrb[0].mxu0 %v961
      %v3050 = vpop.f32.mrb[0].mxu0
      %v3051 = vadd.f32 0.0, %v3050
      %v3052 = vpop.f32.mrb[0].mxu0
      %3053 = vmatprep.mubr.f32.mxu0 0.0
      %3054 = vmatmul.mubr.f32.gmra.mrb[0].mxu0 %v964
      %v3055 = vpop.f32.mrb[0].mxu0
      %v3056 = vadd.f32 0.0, %v3055
      %v3057 = vpop.f32.mrb[0].mxu0
      %3058 = vmatprep.mubr.f32.mxu0 0.0
      %3059 = vmatmul.mubr.f32.gmra.mrb[0].mxu0 %v967
      %v3060 = vpop.f32.mrb[0].mxu0
      %v3061 = vadd.f32 0.0, %v3060
      %v3062 = vpop.f32.mrb[0].mxu0
      %3063 = vmatprep.mubr.f32.mxu0 0.0
      %3064 = vmatmul.mubr.f32.gmra.mrb[0].mxu0 %v970
      %v3065 = vpop.f32.mrb[0].mxu0
      %v3066 = vadd.f32 0.0, %v3065
      %v3067 = vpop.f32.mrb[0].mxu0
      %3068 = vdwg.mxu0
      %v3070 = vsel %vm1325, %v3061, 0
      %v3073 = vsel %vm1325, %v3066, 0
      %3075 = vmatprep.subr.mxu0 0.0
      %3076 = vmatpush1.msra.mxu0 %v2982
      %3077 = vmatprep.subr.mxu0 0.0
      %3078 = vmatpush1.msra.mxu0 0.0
      %3079 = vmatprep.subr.mxu0 0.0
      %3080 = vmatpush1.msra.mxu0 0.0
      %3081 = vmatprep.subr.mxu0 0.0
      %3082 = vmatpush1.msra.mxu0 0.0
      %3083 = vmatprep.subr.mxu0 0.0
      %3084 = vmatpush1.msra.mxu0 0.0
      %3085 = vmatprep.subr.mxu0 0.0
      %3086 = vmatpush1.msra.mxu0 0.0
      %3087 = vmatprep.subr.mxu0 0.0
      %3088 = vmatpush1.msra.mxu0 0.0
      %3089 = vmatprep.subr.mxu0 0.0
      %3090 = vmatpush1.msra.mxu0 0.0
      %3091 = vmatprep.subr.mxu0 0.0
      %3092 = vmatpush1.msra.mxu0 0.0
      %3093 = vmatprep.subr.mxu0 0.0
      %3094 = vmatpush1.msra.mxu0 0.0
      %3095 = vmatprep.subr.mxu0 0.0
      %3096 = vmatpush1.msra.mxu0 0.0
      %3097 = vmatprep.subr.mxu0 0.0
      %3098 = vmatpush1.msra.mxu0 0.0
      %3099 = vmatprep.subr.mxu0 0.0
      %3100 = vmatpush1.msra.mxu0 0.0
      %3101 = vmatprep.subr.mxu0 0.0
      %3102 = vmatpush1.msra.mxu0 0.0
      %3103 = vmatprep.subr.mxu0 0.0
      %3104 = vmatpush1.msra.mxu0 0.0
      %3105 = vmatprep.subr.mxu0 0.0
      %3106 = vmatpush1.msra.mxu0 0.0
      %3107 = vmatprep.subr.mxu0 0.0
      %3108 = vmatpush1.msra.mxu0 0.0
      %3109 = vmatprep.subr.mxu0 0.0
      %3110 = vmatpush1.msra.mxu0 0.0
      %3111 = vmatprep.subr.mxu0 0.0
      %3112 = vmatpush1.msra.mxu0 0.0
      %3113 = vmatprep.subr.mxu0 0.0
      %3114 = vmatpush1.msra.mxu0 0.0
      %3115 = vmatprep.subr.mxu0 0.0
      %3116 = vmatpush1.msra.mxu0 0.0
      %3117 = vmatprep.subr.mxu0 0.0
      %3118 = vmatpush1.msra.mxu0 0.0
      %3119 = vmatprep.subr.mxu0 0.0
      %3120 = vmatpush1.msra.mxu0 0.0
      %3121 = vmatprep.subr.mxu0 0.0
      %3122 = vmatpush1.msra.mxu0 0.0
      %3123 = vmatprep.subr.mxu0 0.0
      %3124 = vmatpush1.msra.mxu0 0.0
      %3125 = vmatprep.subr.mxu0 0.0
      %3126 = vmatpush1.msra.mxu0 0.0
      %3127 = vmatprep.subr.mxu0 0.0
      %3128 = vmatpush1.msra.mxu0 0.0
      %3129 = vmatprep.subr.mxu0 0.0
      %3130 = vmatpush1.msra.mxu0 0.0
      %3131 = vmatprep.subr.mxu0 0.0
      %3132 = vmatpush1.msra.mxu0 0.0
      %3133 = vmatprep.subr.mxu0 0.0
      %3134 = vmatpush1.msra.mxu0 0.0
      %3135 = vmatprep.subr.mxu0 0.0
      %3136 = vmatpush1.msra.mxu0 0.0
      %3137 = vmatprep.subr.mxu0 0.0
      %3138 = vmatpush1.msra.mxu0 0.0
      %3139 = vmatprep.mubr.f32.mxu0 0.0
      %3140 = vmatmul.mubr.f32.gmra.mrb[0].mxu0 %v3070
      %v3141 = vpop.f32.mrb[0].mxu0
      %v3142 = vadd.f32 0.0, %v3141
      %v3143 = vpop.f32.mrb[0].mxu0
      %3144 = vmatprep.mubr.f32.mxu0 0.0
      %3145 = vmatmul.mubr.f32.gmra.mrb[0].mxu0 %v3073
      %v3146 = vpop.f32.mrb[0].mxu0
      %v3147 = vadd.f32 0.0, %v3146
      %v3148 = vpop.f32.mrb[0].mxu0
      %3149 = vdwg.mxu0
      %v3151 = vsel %vm1325, %v3051, 0
      %v3154 = vsel %vm1325, %v3056, 0
      %3156 = vmatprep.subr.mxu0 0.0
      %3157 = vmatpush1.msra.mxu0 %v2981
      %3158 = vmatprep.subr.mxu0 0.0
      %3159 = vmatpush1.msra.mxu0 0.0
      %3160 = vmatprep.subr.mxu0 0.0
      %3161 = vmatpush1.msra.mxu0 0.0
      %3162 = vmatprep.subr.mxu0 0.0
      %3163 = vmatpush1.msra.mxu0 0.0
      %3164 = vmatprep.subr.mxu0 0.0
      %3165 = vmatpush1.msra.mxu0 0.0
      %3166 = vmatprep.subr.mxu0 0.0
      %3167 = vmatpush1.msra.mxu0 0.0
      %3168 = vmatprep.subr.mxu0 0.0
      %3169 = vmatpush1.msra.mxu0 0.0
      %3170 = vmatprep.subr.mxu0 0.0
      %3171 = vmatpush1.msra.mxu0 0.0
      %3172 = vmatprep.subr.mxu0 0.0
      %3173 = vmatpush1.msra.mxu0 0.0
      %3174 = vmatprep.subr.mxu0 0.0
      %3175 = vmatpush1.msra.mxu0 0.0
      %3176 = vmatprep.subr.mxu0 0.0
      %3177 = vmatpush1.msra.mxu0 0.0
      %3178 = vmatprep.subr.mxu0 0.0
      %3179 = vmatpush1.msra.mxu0 0.0
      %3180 = vmatprep.subr.mxu0 0.0
      %3181 = vmatpush1.msra.mxu0 0.0
      %3182 = vmatprep.subr.mxu0 0.0
      %3183 = vmatpush1.msra.mxu0 0.0
      %3184 = vmatprep.subr.mxu0 0.0
      %3185 = vmatpush1.msra.mxu0 0.0
      %3186 = vmatprep.subr.mxu0 0.0
      %3187 = vmatpush1.msra.mxu0 0.0
      %3188 = vmatprep.subr.mxu0 0.0
      %3189 = vmatpush1.msra.mxu0 0.0
      %3190 = vmatprep.subr.mxu0 0.0
      %3191 = vmatpush1.msra.mxu0 0.0
      %3192 = vmatprep.subr.mxu0 0.0
      %3193 = vmatpush1.msra.mxu0 0.0
      %3194 = vmatprep.subr.mxu0 0.0
      %3195 = vmatpush1.msra.mxu0 0.0
      %3196 = vmatprep.subr.mxu0 0.0
      %3197 = vmatpush1.msra.mxu0 0.0
      %3198 = vmatprep.subr.mxu0 0.0
      %3199 = vmatpush1.msra.mxu0 0.0
      %3200 = vmatprep.subr.mxu0 0.0
      %3201 = vmatpush1.msra.mxu0 0.0
      %3202 = vmatprep.subr.mxu0 0.0
      %3203 = vmatpush1.msra.mxu0 0.0
      %3204 = vmatprep.subr.mxu0 0.0
      %3205 = vmatpush1.msra.mxu0 0.0
      %3206 = vmatprep.subr.mxu0 0.0
      %3207 = vmatpush1.msra.mxu0 0.0
      %3208 = vmatprep.subr.mxu0 0.0
      %3209 = vmatpush1.msra.mxu0 0.0
      %3210 = vmatprep.subr.mxu0 0.0
      %3211 = vmatpush1.msra.mxu0 0.0
      %3212 = vmatprep.subr.mxu0 0.0
      %3213 = vmatpush1.msra.mxu0 0.0
      %3214 = vmatprep.subr.mxu0 0.0
      %3215 = vmatpush1.msra.mxu0 0.0
      %3216 = vmatprep.subr.mxu0 0.0
      %3217 = vmatpush1.msra.mxu0 0.0
      %3218 = vmatprep.subr.mxu0 0.0
      %3219 = vmatpush1.msra.mxu0 0.0
      %3220 = vmatprep.mubr.f32.mxu0 0.0
      %3221 = vmatmul.mubr.f32.gmra.mrb[0].mxu0 %v3151
      %v3222 = vpop.f32.mrb[0].mxu0
      %v3223 = vadd.f32 %v3142, %v3222
      %v3224 = vpop.f32.mrb[0].mxu0
      %3225 = vmatprep.mubr.f32.mxu0 0.0
      %3226 = vmatmul.mubr.f32.gmra.mrb[0].mxu0 %v3154
      %v3227 = vpop.f32.mrb[0].mxu0
      %v3228 = vadd.f32 %v3147, %v3227
      %v3229 = vpop.f32.mrb[0].mxu0
      %3230 = vdwg.mxu0
      %v3232 = vlaneseq
      %v3233 = vshrl.u32 %v3232, 7
      %v3234 = vsub.s32 0, %v3233
      %v3235 = vrot.slane %v2983, %v3234
      %v3237 = vadd.f32 %v3223, %v3235
      %v3238 = vadd.f32 %v3228, %v3235
      %v3239 = vmax.f32 %v3237, 0.0
      %v3240 = vmax.f32 %v3238, 0.0
      %v3241 = vld [vmem:[%s31] sm:$0xff]
      %v3242 = vld [vmem:[%s31 + $0x8] sm:$0xff]
      %v3243 = vld [vmem:[%s29] sm:$0x1]
      %3244 = vmatprep.subr.mxu0 0.0
      %3245 = vmatpush1.msra.mxu0 %v3239
      %3246 = vmatprep.subr.mxu0 0.0
      %3247 = vmatpush1.msra.mxu0 %v3240
      %3248 = vmatprep.subr.mxu0 0.0
      %3249 = vmatpush1.msra.mxu0 0.0
      %3250 = vmatprep.subr.mxu0 0.0
      %3251 = vmatpush1.msra.mxu0 0.0
      %3252 = vmatprep.subr.mxu0 0.0
      %3253 = vmatpush1.msra.mxu0 0.0
      %3254 = vmatprep.subr.mxu0 0.0
      %3255 = vmatpush1.msra.mxu0 0.0
      %3256 = vmatprep.subr.mxu0 0.0
      %3257 = vmatpush1.msra.mxu0 0.0
      %3258 = vmatprep.subr.mxu0 0.0
      %3259 = vmatpush1.msra.mxu0 0.0
      %3260 = vmatprep.subr.mxu0 0.0
      %3261 = vmatpush1.msra.mxu0 0.0
      %3262 = vmatprep.subr.mxu0 0.0
      %3263 = vmatpush1.msra.mxu0 0.0
      %3264 = vmatprep.subr.mxu0 0.0
      %3265 = vmatpush1.msra.mxu0 0.0
      %3266 = vmatprep.subr.mxu0 0.0
      %3267 = vmatpush1.msra.mxu0 0.0
      %3268 = vmatprep.subr.mxu0 0.0
      %3269 = vmatpush1.msra.mxu0 0.0
      %3270 = vmatprep.subr.mxu0 0.0
      %3271 = vmatpush1.msra.mxu0 0.0
      %3272 = vmatprep.subr.mxu0 0.0
      %3273 = vmatpush1.msra.mxu0 0.0
      %3274 = vmatprep.subr.mxu0 0.0
      %3275 = vmatpush1.msra.mxu0 0.0
      %3276 = vmatprep.subr.mxu0 0.0
      %3277 = vmatpush1.msra.mxu0 0.0
      %3278 = vmatprep.subr.mxu0 0.0
      %3279 = vmatpush1.msra.mxu0 0.0
      %3280 = vmatprep.subr.mxu0 0.0
      %3281 = vmatpush1.msra.mxu0 0.0
      %3282 = vmatprep.subr.mxu0 0.0
      %3283 = vmatpush1.msra.mxu0 0.0
      %3284 = vmatprep.subr.mxu0 0.0
      %3285 = vmatpush1.msra.mxu0 0.0
      %3286 = vmatprep.subr.mxu0 0.0
      %3287 = vmatpush1.msra.mxu0 0.0
      %3288 = vmatprep.subr.mxu0 0.0
      %3289 = vmatpush1.msra.mxu0 0.0
      %3290 = vmatprep.subr.mxu0 0.0
      %3291 = vmatpush1.msra.mxu0 0.0
      %3292 = vmatprep.subr.mxu0 0.0
      %3293 = vmatpush1.msra.mxu0 0.0
      %3294 = vmatprep.subr.mxu0 0.0
      %3295 = vmatpush1.msra.mxu0 0.0
      %3296 = vmatprep.subr.mxu0 0.0
      %3297 = vmatpush1.msra.mxu0 0.0
      %3298 = vmatprep.subr.mxu0 0.0
      %3299 = vmatpush1.msra.mxu0 0.0
      %3300 = vmatprep.subr.mxu0 0.0
      %3301 = vmatpush1.msra.mxu0 0.0
      %3302 = vmatprep.subr.mxu0 0.0
      %3303 = vmatpush1.msra.mxu0 0.0
      %3304 = vmatprep.subr.mxu0 0.0
      %3305 = vmatpush1.msra.mxu0 0.0
      %3306 = vmatprep.subr.mxu0 0.0
      %3307 = vmatpush1.msra.mxu0 0.0
      %3308 = vmatprep.mubr.f32.mxu0 0.0
      %3309 = vmatmul.mubr.f32.gmra.mrb[0].mxu0 %v961
      %v3310 = vpop.f32.mrb[0].mxu0
      %v3311 = vadd.f32 0.0, %v3310
      %v3312 = vpop.f32.mrb[0].mxu0
      %3313 = vmatprep.mubr.f32.mxu0 0.0
      %3314 = vmatmul.mubr.f32.gmra.mrb[0].mxu0 %v964
      %v3315 = vpop.f32.mrb[0].mxu0
      %v3316 = vadd.f32 0.0, %v3315
      %v3317 = vpop.f32.mrb[0].mxu0
      %3318 = vmatprep.mubr.f32.mxu0 0.0
      %3319 = vmatmul.mubr.f32.gmra.mrb[0].mxu0 %v967
      %v3320 = vpop.f32.mrb[0].mxu0
      %v3321 = vadd.f32 0.0, %v3320
      %v3322 = vpop.f32.mrb[0].mxu0
      %3323 = vmatprep.mubr.f32.mxu0 0.0
      %3324 = vmatmul.mubr.f32.gmra.mrb[0].mxu0 %v970
      %v3325 = vpop.f32.mrb[0].mxu0
      %v3326 = vadd.f32 0.0, %v3325
      %v3327 = vpop.f32.mrb[0].mxu0
      %3328 = vdwg.mxu0
      %v3330 = vsel %vm1325, %v3321, 0
      %v3333 = vsel %vm1325, %v3326, 0
      %3335 = vmatprep.subr.mxu0 0.0
      %3336 = vmatpush1.msra.mxu0 %v3242
      %3337 = vmatprep.subr.mxu0 0.0
      %3338 = vmatpush1.msra.mxu0 0.0
      %3339 = vmatprep.subr.mxu0 0.0
      %3340 = vmatpush1.msra.mxu0 0.0
      %3341 = vmatprep.subr.mxu0 0.0
      %3342 = vmatpush1.msra.mxu0 0.0
      %3343 = vmatprep.subr.mxu0 0.0
      %3344 = vmatpush1.msra.mxu0 0.0
      %3345 = vmatprep.subr.mxu0 0.0
      %3346 = vmatpush1.msra.mxu0 0.0
      %3347 = vmatprep.subr.mxu0 0.0
      %3348 = vmatpush1.msra.mxu0 0.0
      %3349 = vmatprep.subr.mxu0 0.0
      %3350 = vmatpush1.msra.mxu0 0.0
      %3351 = vmatprep.subr.mxu0 0.0
      %3352 = vmatpush1.msra.mxu0 0.0
      %3353 = vmatprep.subr.mxu0 0.0
      %3354 = vmatpush1.msra.mxu0 0.0
      %3355 = vmatprep.subr.mxu0 0.0
      %3356 = vmatpush1.msra.mxu0 0.0
      %3357 = vmatprep.subr.mxu0 0.0
      %3358 = vmatpush1.msra.mxu0 0.0
      %3359 = vmatprep.subr.mxu0 0.0
      %3360 = vmatpush1.msra.mxu0 0.0
      %3361 = vmatprep.subr.mxu0 0.0
      %3362 = vmatpush1.msra.mxu0 0.0
      %3363 = vmatprep.subr.mxu0 0.0
      %3364 = vmatpush1.msra.mxu0 0.0
      %3365 = vmatprep.subr.mxu0 0.0
      %3366 = vmatpush1.msra.mxu0 0.0
      %3367 = vmatprep.subr.mxu0 0.0
      %3368 = vmatpush1.msra.mxu0 0.0
      %3369 = vmatprep.subr.mxu0 0.0
      %3370 = vmatpush1.msra.mxu0 0.0
      %3371 = vmatprep.subr.mxu0 0.0
      %3372 = vmatpush1.msra.mxu0 0.0
      %3373 = vmatprep.subr.mxu0 0.0
      %3374 = vmatpush1.msra.mxu0 0.0
      %3375 = vmatprep.subr.mxu0 0.0
      %3376 = vmatpush1.msra.mxu0 0.0
      %3377 = vmatprep.subr.mxu0 0.0
      %3378 = vmatpush1.msra.mxu0 0.0
      %3379 = vmatprep.subr.mxu0 0.0
      %3380 = vmatpush1.msra.mxu0 0.0
      %3381 = vmatprep.subr.mxu0 0.0
      %3382 = vmatpush1.msra.mxu0 0.0
      %3383 = vmatprep.subr.mxu0 0.0
      %3384 = vmatpush1.msra.mxu0 0.0
      %3385 = vmatprep.subr.mxu0 0.0
      %3386 = vmatpush1.msra.mxu0 0.0
      %3387 = vmatprep.subr.mxu0 0.0
      %3388 = vmatpush1.msra.mxu0 0.0
      %3389 = vmatprep.subr.mxu0 0.0
      %3390 = vmatpush1.msra.mxu0 0.0
      %3391 = vmatprep.subr.mxu0 0.0
      %3392 = vmatpush1.msra.mxu0 0.0
      %3393 = vmatprep.subr.mxu0 0.0
      %3394 = vmatpush1.msra.mxu0 0.0
      %3395 = vmatprep.subr.mxu0 0.0
      %3396 = vmatpush1.msra.mxu0 0.0
      %3397 = vmatprep.subr.mxu0 0.0
      %3398 = vmatpush1.msra.mxu0 0.0
      %3399 = vmatprep.mubr.f32.mxu0 0.0
      %3400 = vmatmul.mubr.f32.gmra.mrb[0].mxu0 %v3330
      %v3401 = vpop.f32.mrb[0].mxu0
      %v3402 = vadd.f32 0.0, %v3401
      %v3403 = vpop.f32.mrb[0].mxu0
      %3404 = vmatprep.mubr.f32.mxu0 0.0
      %3405 = vmatmul.mubr.f32.gmra.mrb[0].mxu0 %v3333
      %v3406 = vpop.f32.mrb[0].mxu0
      %v3407 = vadd.f32 0.0, %v3406
      %v3408 = vpop.f32.mrb[0].mxu0
      %3409 = vdwg.mxu0
      %v3411 = vsel %vm1325, %v3311, 0
      %v3414 = vsel %vm1325, %v3316, 0
      %3416 = vmatprep.subr.mxu0 0.0
      %3417 = vmatpush1.msra.mxu0 %v3241
      %3418 = vmatprep.subr.mxu0 0.0
      %3419 = vmatpush1.msra.mxu0 0.0
      %3420 = vmatprep.subr.mxu0 0.0
      %3421 = vmatpush1.msra.mxu0 0.0
      %3422 = vmatprep.subr.mxu0 0.0
      %3423 = vmatpush1.msra.mxu0 0.0
      %3424 = vmatprep.subr.mxu0 0.0
      %3425 = vmatpush1.msra.mxu0 0.0
      %3426 = vmatprep.subr.mxu0 0.0
      %3427 = vmatpush1.msra.mxu0 0.0
      %3428 = vmatprep.subr.mxu0 0.0
      %3429 = vmatpush1.msra.mxu0 0.0
      %3430 = vmatprep.subr.mxu0 0.0
      %3431 = vmatpush1.msra.mxu0 0.0
      %3432 = vmatprep.subr.mxu0 0.0
      %3433 = vmatpush1.msra.mxu0 0.0
      %3434 = vmatprep.subr.mxu0 0.0
      %3435 = vmatpush1.msra.mxu0 0.0
      %3436 = vmatprep.subr.mxu0 0.0
      %3437 = vmatpush1.msra.mxu0 0.0
      %3438 = vmatprep.subr.mxu0 0.0
      %3439 = vmatpush1.msra.mxu0 0.0
      %3440 = vmatprep.subr.mxu0 0.0
      %3441 = vmatpush1.msra.mxu0 0.0
      %3442 = vmatprep.subr.mxu0 0.0
      %3443 = vmatpush1.msra.mxu0 0.0
      %3444 = vmatprep.subr.mxu0 0.0
      %3445 = vmatpush1.msra.mxu0 0.0
      %3446 = vmatprep.subr.mxu0 0.0
      %3447 = vmatpush1.msra.mxu0 0.0
      %3448 = vmatprep.subr.mxu0 0.0
      %3449 = vmatpush1.msra.mxu0 0.0
      %3450 = vmatprep.subr.mxu0 0.0
      %3451 = vmatpush1.msra.mxu0 0.0
      %3452 = vmatprep.subr.mxu0 0.0
      %3453 = vmatpush1.msra.mxu0 0.0
      %3454 = vmatprep.subr.mxu0 0.0
      %3455 = vmatpush1.msra.mxu0 0.0
      %3456 = vmatprep.subr.mxu0 0.0
      %3457 = vmatpush1.msra.mxu0 0.0
      %3458 = vmatprep.subr.mxu0 0.0
      %3459 = vmatpush1.msra.mxu0 0.0
      %3460 = vmatprep.subr.mxu0 0.0
      %3461 = vmatpush1.msra.mxu0 0.0
      %3462 = vmatprep.subr.mxu0 0.0
      %3463 = vmatpush1.msra.mxu0 0.0
      %3464 = vmatprep.subr.mxu0 0.0
      %3465 = vmatpush1.msra.mxu0 0.0
      %3466 = vmatprep.subr.mxu0 0.0
      %3467 = vmatpush1.msra.mxu0 0.0
      %3468 = vmatprep.subr.mxu0 0.0
      %3469 = vmatpush1.msra.mxu0 0.0
      %3470 = vmatprep.subr.mxu0 0.0
      %3471 = vmatpush1.msra.mxu0 0.0
      %3472 = vmatprep.subr.mxu0 0.0
      %3473 = vmatpush1.msra.mxu0 0.0
      %3474 = vmatprep.subr.mxu0 0.0
      %3475 = vmatpush1.msra.mxu0 0.0
      %3476 = vmatprep.subr.mxu0 0.0
      %3477 = vmatpush1.msra.mxu0 0.0
      %3478 = vmatprep.subr.mxu0 0.0
      %3479 = vmatpush1.msra.mxu0 0.0
      %3480 = vmatprep.mubr.f32.mxu0 0.0
      %3481 = vmatmul.mubr.f32.gmra.mrb[0].mxu0 %v3411
      %v3482 = vpop.f32.mrb[0].mxu0
      %v3483 = vadd.f32 %v3402, %v3482
      %v3484 = vpop.f32.mrb[0].mxu0
      %3485 = vmatprep.mubr.f32.mxu0 0.0
      %3486 = vmatmul.mubr.f32.gmra.mrb[0].mxu0 %v3414
      %v3487 = vpop.f32.mrb[0].mxu0
      %v3488 = vadd.f32 %v3407, %v3487
      %v3489 = vpop.f32.mrb[0].mxu0
      %3490 = vdwg.mxu0
      %v3492 = vlaneseq
      %v3493 = vshrl.u32 %v3492, 7
      %v3494 = vsub.s32 0, %v3493
      %v3495 = vrot.slane %v3243, %v3494
      %v3497 = vadd.f32 %v3483, %v3495
      %v3498 = vadd.f32 %v3488, %v3495
      %v3499 = vld [vmem:[%s35] sm:$0xff]
      %v3500 = vld [vmem:[%s35 + $0x8] sm:$0xff]
      %v3501 = vld [vmem:[%s35 + $0x10] sm:$0xff]
      %v3502 = vld [vmem:[%s35 + $0x18] sm:$0xff]
      %v3503 = vld [vmem:[%s35 + $0x20] sm:$0xff]
      %v3504 = vld [vmem:[%s35 + $0x28] sm:$0xff]
      %v3505 = vld [vmem:[%s35 + $0x30] sm:$0xff]
      %v3506 = vld [vmem:[%s35 + $0x38] sm:$0xff]
      %v3507 = vld [vmem:[%s33] sm:$0x1]
      %3508 = vmatprep.subr.mxu0 0.0
      %3509 = vmatpush1.msra.mxu0 %v3503
      %3510 = vmatprep.subr.mxu0 0.0
      %3511 = vmatpush1.msra.mxu0 %v3504
      %3512 = vmatprep.subr.mxu0 0.0
      %3513 = vmatpush1.msra.mxu0 %v3505
      %3514 = vmatprep.subr.mxu0 0.0
      %3515 = vmatpush1.msra.mxu0 %v3506
      %3516 = vmatprep.subr.mxu0 0.0
      %3517 = vmatpush1.msra.mxu0 0.0
      %3518 = vmatprep.subr.mxu0 0.0
      %3519 = vmatpush1.msra.mxu0 0.0
      %3520 = vmatprep.subr.mxu0 0.0
      %3521 = vmatpush1.msra.mxu0 0.0
      %3522 = vmatprep.subr.mxu0 0.0
      %3523 = vmatpush1.msra.mxu0 0.0
      %3524 = vmatprep.subr.mxu0 0.0
      %3525 = vmatpush1.msra.mxu0 0.0
      %3526 = vmatprep.subr.mxu0 0.0
      %3527 = vmatpush1.msra.mxu0 0.0
      %3528 = vmatprep.subr.mxu0 0.0
      %3529 = vmatpush1.msra.mxu0 0.0
      %3530 = vmatprep.subr.mxu0 0.0
      %3531 = vmatpush1.msra.mxu0 0.0
      %3532 = vmatprep.subr.mxu0 0.0
      %3533 = vmatpush1.msra.mxu0 0.0
      %3534 = vmatprep.subr.mxu0 0.0
      %3535 = vmatpush1.msra.mxu0 0.0
      %3536 = vmatprep.subr.mxu0 0.0
      %3537 = vmatpush1.msra.mxu0 0.0
      %3538 = vmatprep.subr.mxu0 0.0
      %3539 = vmatpush1.msra.mxu0 0.0
      %3540 = vmatprep.subr.mxu0 0.0
      %3541 = vmatpush1.msra.mxu0 0.0
      %3542 = vmatprep.subr.mxu0 0.0
      %3543 = vmatpush1.msra.mxu0 0.0
      %3544 = vmatprep.subr.mxu0 0.0
      %3545 = vmatpush1.msra.mxu0 0.0
      %3546 = vmatprep.subr.mxu0 0.0
      %3547 = vmatpush1.msra.mxu0 0.0
      %3548 = vmatprep.subr.mxu0 0.0
      %3549 = vmatpush1.msra.mxu0 0.0
      %3550 = vmatprep.subr.mxu0 0.0
      %3551 = vmatpush1.msra.mxu0 0.0
      %3552 = vmatprep.subr.mxu0 0.0
      %3553 = vmatpush1.msra.mxu0 0.0
      %3554 = vmatprep.subr.mxu0 0.0
      %3555 = vmatpush1.msra.mxu0 0.0
      %3556 = vmatprep.subr.mxu0 0.0
      %3557 = vmatpush1.msra.mxu0 0.0
      %3558 = vmatprep.subr.mxu0 0.0
      %3559 = vmatpush1.msra.mxu0 0.0
      %3560 = vmatprep.subr.mxu0 0.0
      %3561 = vmatpush1.msra.mxu0 0.0
      %3562 = vmatprep.subr.mxu0 0.0
      %3563 = vmatpush1.msra.mxu0 0.0
      %3564 = vmatprep.subr.mxu0 0.0
      %3565 = vmatpush1.msra.mxu0 0.0
      %3566 = vmatprep.subr.mxu0 0.0
      %3567 = vmatpush1.msra.mxu0 0.0
      %3568 = vmatprep.subr.mxu0 0.0
      %3569 = vmatpush1.msra.mxu0 0.0
      %3570 = vmatprep.subr.mxu0 0.0
      %3571 = vmatpush1.msra.mxu0 0.0
      %3572 = vmatprep.mubr.f32.mxu0 0.0
      %3573 = vmatmul.mubr.f32.gmra.mrb[0].mxu0 %v2810
      %v3574 = vpop.f32.mrb[0].mxu0
      %v3575 = vadd.f32 0.0, %v3574
      %v3576 = vpop.f32.mrb[0].mxu0
      %3577 = vmatprep.mubr.f32.mxu0 0.0
      %3578 = vmatmul.mubr.f32.gmra.mrb[0].mxu0 %v2813
      %v3579 = vpop.f32.mrb[0].mxu0
      %v3580 = vadd.f32 0.0, %v3579
      %v3581 = vpop.f32.mrb[0].mxu0
      %3582 = vdwg.mxu0
      %3583 = vmatprep.subr.mxu0 0.0
      %3584 = vmatpush1.msra.mxu0 %v3499
      %3585 = vmatprep.subr.mxu0 0.0
      %3586 = vmatpush1.msra.mxu0 %v3500
      %3587 = vmatprep.subr.mxu0 0.0
      %3588 = vmatpush1.msra.mxu0 %v3501
      %3589 = vmatprep.subr.mxu0 0.0
      %3590 = vmatpush1.msra.mxu0 %v3502
      %3591 = vmatprep.subr.mxu0 0.0
      %3592 = vmatpush1.msra.mxu0 0.0
      %3593 = vmatprep.subr.mxu0 0.0
      %3594 = vmatpush1.msra.mxu0 0.0
      %3595 = vmatprep.subr.mxu0 0.0
      %3596 = vmatpush1.msra.mxu0 0.0
      %3597 = vmatprep.subr.mxu0 0.0
      %3598 = vmatpush1.msra.mxu0 0.0
      %3599 = vmatprep.subr.mxu0 0.0
      %3600 = vmatpush1.msra.mxu0 0.0
      %3601 = vmatprep.subr.mxu0 0.0
      %3602 = vmatpush1.msra.mxu0 0.0
      %3603 = vmatprep.subr.mxu0 0.0
      %3604 = vmatpush1.msra.mxu0 0.0
      %3605 = vmatprep.subr.mxu0 0.0
      %3606 = vmatpush1.msra.mxu0 0.0
      %3607 = vmatprep.subr.mxu0 0.0
      %3608 = vmatpush1.msra.mxu0 0.0
      %3609 = vmatprep.subr.mxu0 0.0
      %3610 = vmatpush1.msra.mxu0 0.0
      %3611 = vmatprep.subr.mxu0 0.0
      %3612 = vmatpush1.msra.mxu0 0.0
      %3613 = vmatprep.subr.mxu0 0.0
      %3614 = vmatpush1.msra.mxu0 0.0
      %3615 = vmatprep.subr.mxu0 0.0
      %3616 = vmatpush1.msra.mxu0 0.0
      %3617 = vmatprep.subr.mxu0 0.0
      %3618 = vmatpush1.msra.mxu0 0.0
      %3619 = vmatprep.subr.mxu0 0.0
      %3620 = vmatpush1.msra.mxu0 0.0
      %3621 = vmatprep.subr.mxu0 0.0
      %3622 = vmatpush1.msra.mxu0 0.0
      %3623 = vmatprep.subr.mxu0 0.0
      %3624 = vmatpush1.msra.mxu0 0.0
      %3625 = vmatprep.subr.mxu0 0.0
      %3626 = vmatpush1.msra.mxu0 0.0
      %3627 = vmatprep.subr.mxu0 0.0
      %3628 = vmatpush1.msra.mxu0 0.0
      %3629 = vmatprep.subr.mxu0 0.0
      %3630 = vmatpush1.msra.mxu0 0.0
      %3631 = vmatprep.subr.mxu0 0.0
      %3632 = vmatpush1.msra.mxu0 0.0
      %3633 = vmatprep.subr.mxu0 0.0
      %3634 = vmatpush1.msra.mxu0 0.0
      %3635 = vmatprep.subr.mxu0 0.0
      %3636 = vmatpush1.msra.mxu0 0.0
      %3637 = vmatprep.subr.mxu0 0.0
      %3638 = vmatpush1.msra.mxu0 0.0
      %3639 = vmatprep.subr.mxu0 0.0
      %3640 = vmatpush1.msra.mxu0 0.0
      %3641 = vmatprep.subr.mxu0 0.0
      %3642 = vmatpush1.msra.mxu0 0.0
      %3643 = vmatprep.subr.mxu0 0.0
      %3644 = vmatpush1.msra.mxu0 0.0
      %3645 = vmatprep.subr.mxu0 0.0
      %3646 = vmatpush1.msra.mxu0 0.0
      %3647 = vmatprep.mubr.f32.mxu0 0.0
      %3648 = vmatmul.mubr.f32.gmra.mrb[0].mxu0 %v2891
      %v3649 = vpop.f32.mrb[0].mxu0
      %v3650 = vadd.f32 %v3575, %v3649
      %v3651 = vpop.f32.mrb[0].mxu0
      %3652 = vmatprep.mubr.f32.mxu0 0.0
      %3653 = vmatmul.mubr.f32.gmra.mrb[0].mxu0 %v2894
      %v3654 = vpop.f32.mrb[0].mxu0
      %v3655 = vadd.f32 %v3580, %v3654
      %v3656 = vpop.f32.mrb[0].mxu0
      %3657 = vdwg.mxu0
      %v3659 = vlaneseq
      %v3660 = vshrl.u32 %v3659, 7
      %v3661 = vsub.s32 0, %v3660
      %v3662 = vrot.slane %v3507, %v3661
      %v3664 = vadd.f32 %v3650, %v3662
      %v3665 = vadd.f32 %v3655, %v3662
      %v3666 = vadd.f32 %v3497, %v3664
      %v3667 = vadd.f32 %v3498, %v3665
      %v3668 = vmax.f32 %v3666, 0.0
      %v3669 = vmax.f32 %v3667, 0.0
      %v3670 = vld [vmem:[%s51] sm:$0xff]
      %v3671 = vld [vmem:[%s51 + $0x8] sm:$0xff]
      %v3672 = vld [vmem:[%s51 + $0x10] sm:$0xff]
      %v3673 = vld [vmem:[%s51 + $0x18] sm:$0xff]
      %v3674 = vld [vmem:[%s51 + $0x20] sm:$0xff]
      %v3675 = vld [vmem:[%s51 + $0x28] sm:$0xff]
      %v3676 = vld [vmem:[%s51 + $0x30] sm:$0xff]
      %v3677 = vld [vmem:[%s51 + $0x38] sm:$0xff]
      %v3678 = vld [vmem:[%s49] sm:$0x1]
      %3679 = vmatprep.subr.mxu0 0.0
      %3680 = vmatpush1.msra.mxu0 %v3668
      %3681 = vmatprep.subr.mxu0 0.0
      %3682 = vmatpush1.msra.mxu0 %v3669
      %3683 = vmatprep.subr.mxu0 0.0
      %3684 = vmatpush1.msra.mxu0 0.0
      %3685 = vmatprep.subr.mxu0 0.0
      %3686 = vmatpush1.msra.mxu0 0.0
      %3687 = vmatprep.subr.mxu0 0.0
      %3688 = vmatpush1.msra.mxu0 0.0
      %3689 = vmatprep.subr.mxu0 0.0
      %3690 = vmatpush1.msra.mxu0 0.0
      %3691 = vmatprep.subr.mxu0 0.0
      %3692 = vmatpush1.msra.mxu0 0.0
      %3693 = vmatprep.subr.mxu0 0.0
      %3694 = vmatpush1.msra.mxu0 0.0
      %3695 = vmatprep.subr.mxu0 0.0
      %3696 = vmatpush1.msra.mxu0 0.0
      %3697 = vmatprep.subr.mxu0 0.0
      %3698 = vmatpush1.msra.mxu0 0.0
      %3699 = vmatprep.subr.mxu0 0.0
      %3700 = vmatpush1.msra.mxu0 0.0
      %3701 = vmatprep.subr.mxu0 0.0
      %3702 = vmatpush1.msra.mxu0 0.0
      %3703 = vmatprep.subr.mxu0 0.0
      %3704 = vmatpush1.msra.mxu0 0.0
      %3705 = vmatprep.subr.mxu0 0.0
      %3706 = vmatpush1.msra.mxu0 0.0
      %3707 = vmatprep.subr.mxu0 0.0
      %3708 = vmatpush1.msra.mxu0 0.0
      %3709 = vmatprep.subr.mxu0 0.0
      %3710 = vmatpush1.msra.mxu0 0.0
      %3711 = vmatprep.subr.mxu0 0.0
      %3712 = vmatpush1.msra.mxu0 0.0
      %3713 = vmatprep.subr.mxu0 0.0
      %3714 = vmatpush1.msra.mxu0 0.0
      %3715 = vmatprep.subr.mxu0 0.0
      %3716 = vmatpush1.msra.mxu0 0.0
      %3717 = vmatprep.subr.mxu0 0.0
      %3718 = vmatpush1.msra.mxu0 0.0
      %3719 = vmatprep.subr.mxu0 0.0
      %3720 = vmatpush1.msra.mxu0 0.0
      %3721 = vmatprep.subr.mxu0 0.0
      %3722 = vmatpush1.msra.mxu0 0.0
      %3723 = vmatprep.subr.mxu0 0.0
      %3724 = vmatpush1.msra.mxu0 0.0
      %3725 = vmatprep.subr.mxu0 0.0
      %3726 = vmatpush1.msra.mxu0 0.0
      %3727 = vmatprep.subr.mxu0 0.0
      %3728 = vmatpush1.msra.mxu0 0.0
      %3729 = vmatprep.subr.mxu0 0.0
      %3730 = vmatpush1.msra.mxu0 0.0
      %3731 = vmatprep.subr.mxu0 0.0
      %3732 = vmatpush1.msra.mxu0 0.0
      %3733 = vmatprep.subr.mxu0 0.0
      %3734 = vmatpush1.msra.mxu0 0.0
      %3735 = vmatprep.subr.mxu0 0.0
      %3736 = vmatpush1.msra.mxu0 0.0
      %3737 = vmatprep.subr.mxu0 0.0
      %3738 = vmatpush1.msra.mxu0 0.0
      %3739 = vmatprep.subr.mxu0 0.0
      %3740 = vmatpush1.msra.mxu0 0.0
      %3741 = vmatprep.subr.mxu0 0.0
      %3742 = vmatpush1.msra.mxu0 0.0
      %3743 = vmatprep.mubr.f32.mxu0 0.0
      %3744 = vmatmul.mubr.f32.gmra.mrb[0].mxu0 %v961
      %v3745 = vpop.f32.mrb[0].mxu0
      %v3746 = vadd.f32 0.0, %v3745
      %v3747 = vpop.f32.mrb[0].mxu0
      %3748 = vmatprep.mubr.f32.mxu0 0.0
      %3749 = vmatmul.mubr.f32.gmra.mrb[0].mxu0 %v964
      %v3750 = vpop.f32.mrb[0].mxu0
      %v3751 = vadd.f32 0.0, %v3750
      %v3752 = vpop.f32.mrb[0].mxu0
      %3753 = vmatprep.mubr.f32.mxu0 0.0
      %3754 = vmatmul.mubr.f32.gmra.mrb[0].mxu0 %v967
      %v3755 = vpop.f32.mrb[0].mxu0
      %v3756 = vadd.f32 0.0, %v3755
      %v3757 = vpop.f32.mrb[0].mxu0
      %3758 = vmatprep.mubr.f32.mxu0 0.0
      %3759 = vmatmul.mubr.f32.gmra.mrb[0].mxu0 %v970
      %v3760 = vpop.f32.mrb[0].mxu0
      %v3761 = vadd.f32 0.0, %v3760
      %v3762 = vpop.f32.mrb[0].mxu0
      %3763 = vdwg.mxu0
      %v3765 = vsel %vm2020, %v3756, 0
      %v3768 = vsel %vm2020, %v3761, 0
      %3770 = vmatprep.subr.mxu0 0.0
      %3771 = vmatpush1.msra.mxu0 %v3674
      %3772 = vmatprep.subr.mxu0 0.0
      %3773 = vmatpush1.msra.mxu0 %v3675
      %3774 = vmatprep.subr.mxu0 0.0
      %3775 = vmatpush1.msra.mxu0 %v3676
      %3776 = vmatprep.subr.mxu0 0.0
      %3777 = vmatpush1.msra.mxu0 %v3677
      %3778 = vmatprep.subr.mxu0 0.0
      %3779 = vmatpush1.msra.mxu0 0.0
      %3780 = vmatprep.subr.mxu0 0.0
      %3781 = vmatpush1.msra.mxu0 0.0
      %3782 = vmatprep.subr.mxu0 0.0
      %3783 = vmatpush1.msra.mxu0 0.0
      %3784 = vmatprep.subr.mxu0 0.0
      %3785 = vmatpush1.msra.mxu0 0.0
      %3786 = vmatprep.subr.mxu0 0.0
      %3787 = vmatpush1.msra.mxu0 0.0
      %3788 = vmatprep.subr.mxu0 0.0
      %3789 = vmatpush1.msra.mxu0 0.0
      %3790 = vmatprep.subr.mxu0 0.0
      %3791 = vmatpush1.msra.mxu0 0.0
      %3792 = vmatprep.subr.mxu0 0.0
      %3793 = vmatpush1.msra.mxu0 0.0
      %3794 = vmatprep.subr.mxu0 0.0
      %3795 = vmatpush1.msra.mxu0 0.0
      %3796 = vmatprep.subr.mxu0 0.0
      %3797 = vmatpush1.msra.mxu0 0.0
      %3798 = vmatprep.subr.mxu0 0.0
      %3799 = vmatpush1.msra.mxu0 0.0
      %3800 = vmatprep.subr.mxu0 0.0
      %3801 = vmatpush1.msra.mxu0 0.0
      %3802 = vmatprep.subr.mxu0 0.0
      %3803 = vmatpush1.msra.mxu0 0.0
      %3804 = vmatprep.subr.mxu0 0.0
      %3805 = vmatpush1.msra.mxu0 0.0
      %3806 = vmatprep.subr.mxu0 0.0
      %3807 = vmatpush1.msra.mxu0 0.0
      %3808 = vmatprep.subr.mxu0 0.0
      %3809 = vmatpush1.msra.mxu0 0.0
      %3810 = vmatprep.subr.mxu0 0.0
      %3811 = vmatpush1.msra.mxu0 0.0
      %3812 = vmatprep.subr.mxu0 0.0
      %3813 = vmatpush1.msra.mxu0 0.0
      %3814 = vmatprep.subr.mxu0 0.0
      %3815 = vmatpush1.msra.mxu0 0.0
      %3816 = vmatprep.subr.mxu0 0.0
      %3817 = vmatpush1.msra.mxu0 0.0
      %3818 = vmatprep.subr.mxu0 0.0
      %3819 = vmatpush1.msra.mxu0 0.0
      %3820 = vmatprep.subr.mxu0 0.0
      %3821 = vmatpush1.msra.mxu0 0.0
      %3822 = vmatprep.subr.mxu0 0.0
      %3823 = vmatpush1.msra.mxu0 0.0
      %3824 = vmatprep.subr.mxu0 0.0
      %3825 = vmatpush1.msra.mxu0 0.0
      %3826 = vmatprep.subr.mxu0 0.0
      %3827 = vmatpush1.msra.mxu0 0.0
      %3828 = vmatprep.subr.mxu0 0.0
      %3829 = vmatpush1.msra.mxu0 0.0
      %3830 = vmatprep.subr.mxu0 0.0
      %3831 = vmatpush1.msra.mxu0 0.0
      %3832 = vmatprep.subr.mxu0 0.0
      %3833 = vmatpush1.msra.mxu0 0.0
      %3834 = vmatprep.mubr.f32.mxu0 0.0
      %3835 = vmatmul.mubr.f32.gmra.mrb[0].mxu0 %v3765
      %v3836 = vpop.f32.mrb[0].mxu0
      %v3837 = vadd.f32 0.0, %v3836
      %v3838 = vpop.f32.mrb[0].mxu0
      %3839 = vmatprep.mubr.f32.mxu0 0.0
      %3840 = vmatmul.mubr.f32.gmra.mrb[0].mxu0 %v3768
      %v3841 = vpop.f32.mrb[0].mxu0
      %v3842 = vadd.f32 0.0, %v3841
      %v3843 = vpop.f32.mrb[0].mxu0
      %3844 = vdwg.mxu0
      %v3846 = vsel %vm2020, %v3746, 0
      %v3849 = vsel %vm2020, %v3751, 0
      %3851 = vmatprep.subr.mxu0 0.0
      %3852 = vmatpush1.msra.mxu0 %v3670
      %3853 = vmatprep.subr.mxu0 0.0
      %3854 = vmatpush1.msra.mxu0 %v3671
      %3855 = vmatprep.subr.mxu0 0.0
      %3856 = vmatpush1.msra.mxu0 %v3672
      %3857 = vmatprep.subr.mxu0 0.0
      %3858 = vmatpush1.msra.mxu0 %v3673
      %3859 = vmatprep.subr.mxu0 0.0
      %3860 = vmatpush1.msra.mxu0 0.0
      %3861 = vmatprep.subr.mxu0 0.0
      %3862 = vmatpush1.msra.mxu0 0.0
      %3863 = vmatprep.subr.mxu0 0.0
      %3864 = vmatpush1.msra.mxu0 0.0
      %3865 = vmatprep.subr.mxu0 0.0
      %3866 = vmatpush1.msra.mxu0 0.0
      %3867 = vmatprep.subr.mxu0 0.0
      %3868 = vmatpush1.msra.mxu0 0.0
      %3869 = vmatprep.subr.mxu0 0.0
      %3870 = vmatpush1.msra.mxu0 0.0
      %3871 = vmatprep.subr.mxu0 0.0
      %3872 = vmatpush1.msra.mxu0 0.0
      %3873 = vmatprep.subr.mxu0 0.0
      %3874 = vmatpush1.msra.mxu0 0.0
      %3875 = vmatprep.subr.mxu0 0.0
      %3876 = vmatpush1.msra.mxu0 0.0
      %3877 = vmatprep.subr.mxu0 0.0
      %3878 = vmatpush1.msra.mxu0 0.0
      %3879 = vmatprep.subr.mxu0 0.0
      %3880 = vmatpush1.msra.mxu0 0.0
      %3881 = vmatprep.subr.mxu0 0.0
      %3882 = vmatpush1.msra.mxu0 0.0
      %3883 = vmatprep.subr.mxu0 0.0
      %3884 = vmatpush1.msra.mxu0 0.0
      %3885 = vmatprep.subr.mxu0 0.0
      %3886 = vmatpush1.msra.mxu0 0.0
      %3887 = vmatprep.subr.mxu0 0.0
      %3888 = vmatpush1.msra.mxu0 0.0
      %3889 = vmatprep.subr.mxu0 0.0
      %3890 = vmatpush1.msra.mxu0 0.0
      %3891 = vmatprep.subr.mxu0 0.0
      %3892 = vmatpush1.msra.mxu0 0.0
      %3893 = vmatprep.subr.mxu0 0.0
      %3894 = vmatpush1.msra.mxu0 0.0
      %3895 = vmatprep.subr.mxu0 0.0
      %3896 = vmatpush1.msra.mxu0 0.0
      %3897 = vmatprep.subr.mxu0 0.0
      %3898 = vmatpush1.msra.mxu0 0.0
      %3899 = vmatprep.subr.mxu0 0.0
      %3900 = vmatpush1.msra.mxu0 0.0
      %3901 = vmatprep.subr.mxu0 0.0
      %3902 = vmatpush1.msra.mxu0 0.0
      %3903 = vmatprep.subr.mxu0 0.0
      %3904 = vmatpush1.msra.mxu0 0.0
      %3905 = vmatprep.subr.mxu0 0.0
      %3906 = vmatpush1.msra.mxu0 0.0
      %3907 = vmatprep.subr.mxu0 0.0
      %3908 = vmatpush1.msra.mxu0 0.0
      %3909 = vmatprep.subr.mxu0 0.0
      %3910 = vmatpush1.msra.mxu0 0.0
      %3911 = vmatprep.subr.mxu0 0.0
      %3912 = vmatpush1.msra.mxu0 0.0
      %3913 = vmatprep.subr.mxu0 0.0
      %3914 = vmatpush1.msra.mxu0 0.0
      %3915 = vmatprep.mubr.f32.mxu0 0.0
      %3916 = vmatmul.mubr.f32.gmra.mrb[0].mxu0 %v3846
      %v3917 = vpop.f32.mrb[0].mxu0
      %v3918 = vadd.f32 %v3837, %v3917
      %v3919 = vpop.f32.mrb[0].mxu0
      %3920 = vmatprep.mubr.f32.mxu0 0.0
      %3921 = vmatmul.mubr.f32.gmra.mrb[0].mxu0 %v3849
      %v3922 = vpop.f32.mrb[0].mxu0
      %v3923 = vadd.f32 %v3842, %v3922
      %v3924 = vpop.f32.mrb[0].mxu0
      %3925 = vdwg.mxu0
      %v3927 = vlaneseq
      %v3928 = vshrl.u32 %v3927, 7
      %v3929 = vsub.s32 0, %v3928
      %v3930 = vrot.slane %v3678, %v3929
      %v3932 = vadd.f32 %v3918, %v3930
      %v3933 = vadd.f32 %v3923, %v3930
      %v3934 = vmax.f32 %v3932, 0.0
      %v3935 = vmax.f32 %v3933, 0.0
      %v3936 = vld [vmem:[%s55] sm:$0xff]
      %v3937 = vld [vmem:[%s55 + $0x8] sm:$0xff]
      %v3938 = vld [vmem:[%s53] sm:$0x1]
      %3939 = vmatprep.subr.mxu0 0.0
      %3940 = vmatpush1.msra.mxu0 %v3934
      %3941 = vmatprep.subr.mxu0 0.0
      %3942 = vmatpush1.msra.mxu0 %v3935
      %3943 = vmatprep.subr.mxu0 0.0
      %3944 = vmatpush1.msra.mxu0 0.0
      %3945 = vmatprep.subr.mxu0 0.0
      %3946 = vmatpush1.msra.mxu0 0.0
      %3947 = vmatprep.subr.mxu0 0.0
      %3948 = vmatpush1.msra.mxu0 0.0
      %3949 = vmatprep.subr.mxu0 0.0
      %3950 = vmatpush1.msra.mxu0 0.0
      %3951 = vmatprep.subr.mxu0 0.0
      %3952 = vmatpush1.msra.mxu0 0.0
      %3953 = vmatprep.subr.mxu0 0.0
      %3954 = vmatpush1.msra.mxu0 0.0
      %3955 = vmatprep.subr.mxu0 0.0
      %3956 = vmatpush1.msra.mxu0 0.0
      %3957 = vmatprep.subr.mxu0 0.0
      %3958 = vmatpush1.msra.mxu0 0.0
      %3959 = vmatprep.subr.mxu0 0.0
      %3960 = vmatpush1.msra.mxu0 0.0
      %3961 = vmatprep.subr.mxu0 0.0
      %3962 = vmatpush1.msra.mxu0 0.0
      %3963 = vmatprep.subr.mxu0 0.0
      %3964 = vmatpush1.msra.mxu0 0.0
      %3965 = vmatprep.subr.mxu0 0.0
      %3966 = vmatpush1.msra.mxu0 0.0
      %3967 = vmatprep.subr.mxu0 0.0
      %3968 = vmatpush1.msra.mxu0 0.0
      %3969 = vmatprep.subr.mxu0 0.0
      %3970 = vmatpush1.msra.mxu0 0.0
      %3971 = vmatprep.subr.mxu0 0.0
      %3972 = vmatpush1.msra.mxu0 0.0
      %3973 = vmatprep.subr.mxu0 0.0
      %3974 = vmatpush1.msra.mxu0 0.0
      %3975 = vmatprep.subr.mxu0 0.0
      %3976 = vmatpush1.msra.mxu0 0.0
      %3977 = vmatprep.subr.mxu0 0.0
      %3978 = vmatpush1.msra.mxu0 0.0
      %3979 = vmatprep.subr.mxu0 0.0
      %3980 = vmatpush1.msra.mxu0 0.0
      %3981 = vmatprep.subr.mxu0 0.0
      %3982 = vmatpush1.msra.mxu0 0.0
      %3983 = vmatprep.subr.mxu0 0.0
      %3984 = vmatpush1.msra.mxu0 0.0
      %3985 = vmatprep.subr.mxu0 0.0
      %3986 = vmatpush1.msra.mxu0 0.0
      %3987 = vmatprep.subr.mxu0 0.0
      %3988 = vmatpush1.msra.mxu0 0.0
      %3989 = vmatprep.subr.mxu0 0.0
      %3990 = vmatpush1.msra.mxu0 0.0
      %3991 = vmatprep.subr.mxu0 0.0
      %3992 = vmatpush1.msra.mxu0 0.0
      %3993 = vmatprep.subr.mxu0 0.0
      %3994 = vmatpush1.msra.mxu0 0.0
      %3995 = vmatprep.subr.mxu0 0.0
      %3996 = vmatpush1.msra.mxu0 0.0
      %3997 = vmatprep.subr.mxu0 0.0
      %3998 = vmatpush1.msra.mxu0 0.0
      %3999 = vmatprep.subr.mxu0 0.0
      %4000 = vmatpush1.msra.mxu0 0.0
      %4001 = vmatprep.subr.mxu0 0.0
      %4002 = vmatpush1.msra.mxu0 0.0
      %4003 = vmatprep.mubr.f32.mxu0 0.0
      %4004 = vmatmul.mubr.f32.gmra.mrb[0].mxu0 %v961
      %v4005 = vpop.f32.mrb[0].mxu0
      %v4006 = vadd.f32 0.0, %v4005
      %v4007 = vpop.f32.mrb[0].mxu0
      %4008 = vmatprep.mubr.f32.mxu0 0.0
      %4009 = vmatmul.mubr.f32.gmra.mrb[0].mxu0 %v964
      %v4010 = vpop.f32.mrb[0].mxu0
      %v4011 = vadd.f32 0.0, %v4010
      %v4012 = vpop.f32.mrb[0].mxu0
      %4013 = vmatprep.mubr.f32.mxu0 0.0
      %4014 = vmatmul.mubr.f32.gmra.mrb[0].mxu0 %v967
      %v4015 = vpop.f32.mrb[0].mxu0
      %v4016 = vadd.f32 0.0, %v4015
      %v4017 = vpop.f32.mrb[0].mxu0
      %4018 = vmatprep.mubr.f32.mxu0 0.0
      %4019 = vmatmul.mubr.f32.gmra.mrb[0].mxu0 %v970
      %v4020 = vpop.f32.mrb[0].mxu0
      %v4021 = vadd.f32 0.0, %v4020
      %v4022 = vpop.f32.mrb[0].mxu0
      %4023 = vdwg.mxu0
      %v4025 = vsel %vm1325, %v4016, 0
      %v4028 = vsel %vm1325, %v4021, 0
      %4030 = vmatprep.subr.mxu0 0.0
      %4031 = vmatpush1.msra.mxu0 %v3937
      %4032 = vmatprep.subr.mxu0 0.0
      %4033 = vmatpush1.msra.mxu0 0.0
      %4034 = vmatprep.subr.mxu0 0.0
      %4035 = vmatpush1.msra.mxu0 0.0
      %4036 = vmatprep.subr.mxu0 0.0
      %4037 = vmatpush1.msra.mxu0 0.0
      %4038 = vmatprep.subr.mxu0 0.0
      %4039 = vmatpush1.msra.mxu0 0.0
      %4040 = vmatprep.subr.mxu0 0.0
      %4041 = vmatpush1.msra.mxu0 0.0
      %4042 = vmatprep.subr.mxu0 0.0
      %4043 = vmatpush1.msra.mxu0 0.0
      %4044 = vmatprep.subr.mxu0 0.0
      %4045 = vmatpush1.msra.mxu0 0.0
      %4046 = vmatprep.subr.mxu0 0.0
      %4047 = vmatpush1.msra.mxu0 0.0
      %4048 = vmatprep.subr.mxu0 0.0
      %4049 = vmatpush1.msra.mxu0 0.0
      %4050 = vmatprep.subr.mxu0 0.0
      %4051 = vmatpush1.msra.mxu0 0.0
      %4052 = vmatprep.subr.mxu0 0.0
      %4053 = vmatpush1.msra.mxu0 0.0
      %4054 = vmatprep.subr.mxu0 0.0
      %4055 = vmatpush1.msra.mxu0 0.0
      %4056 = vmatprep.subr.mxu0 0.0
      %4057 = vmatpush1.msra.mxu0 0.0
      %4058 = vmatprep.subr.mxu0 0.0
      %4059 = vmatpush1.msra.mxu0 0.0
      %4060 = vmatprep.subr.mxu0 0.0
      %4061 = vmatpush1.msra.mxu0 0.0
      %4062 = vmatprep.subr.mxu0 0.0
      %4063 = vmatpush1.msra.mxu0 0.0
      %4064 = vmatprep.subr.mxu0 0.0
      %4065 = vmatpush1.msra.mxu0 0.0
      %4066 = vmatprep.subr.mxu0 0.0
      %4067 = vmatpush1.msra.mxu0 0.0
      %4068 = vmatprep.subr.mxu0 0.0
      %4069 = vmatpush1.msra.mxu0 0.0
      %4070 = vmatprep.subr.mxu0 0.0
      %4071 = vmatpush1.msra.mxu0 0.0
      %4072 = vmatprep.subr.mxu0 0.0
      %4073 = vmatpush1.msra.mxu0 0.0
      %4074 = vmatprep.subr.mxu0 0.0
      %4075 = vmatpush1.msra.mxu0 0.0
      %4076 = vmatprep.subr.mxu0 0.0
      %4077 = vmatpush1.msra.mxu0 0.0
      %4078 = vmatprep.subr.mxu0 0.0
      %4079 = vmatpush1.msra.mxu0 0.0
      %4080 = vmatprep.subr.mxu0 0.0
      %4081 = vmatpush1.msra.mxu0 0.0
      %4082 = vmatprep.subr.mxu0 0.0
      %4083 = vmatpush1.msra.mxu0 0.0
      %4084 = vmatprep.subr.mxu0 0.0
      %4085 = vmatpush1.msra.mxu0 0.0
      %4086 = vmatprep.subr.mxu0 0.0
      %4087 = vmatpush1.msra.mxu0 0.0
      %4088 = vmatprep.subr.mxu0 0.0
      %4089 = vmatpush1.msra.mxu0 0.0
      %4090 = vmatprep.subr.mxu0 0.0
      %4091 = vmatpush1.msra.mxu0 0.0
      %4092 = vmatprep.subr.mxu0 0.0
      %4093 = vmatpush1.msra.mxu0 0.0
      %4094 = vmatprep.mubr.f32.mxu0 0.0
      %4095 = vmatmul.mubr.f32.gmra.mrb[0].mxu0 %v4025
      %v4096 = vpop.f32.mrb[0].mxu0
      %v4097 = vadd.f32 0.0, %v4096
      %v4098 = vpop.f32.mrb[0].mxu0
      %4099 = vmatprep.mubr.f32.mxu0 0.0
      %4100 = vmatmul.mubr.f32.gmra.mrb[0].mxu0 %v4028
      %v4101 = vpop.f32.mrb[0].mxu0
      %v4102 = vadd.f32 0.0, %v4101
      %v4103 = vpop.f32.mrb[0].mxu0
      %4104 = vdwg.mxu0
      %v4106 = vsel %vm1325, %v4006, 0
      %v4109 = vsel %vm1325, %v4011, 0
      %4111 = vmatprep.subr.mxu0 0.0
      %4112 = vmatpush1.msra.mxu0 %v3936
      %4113 = vmatprep.subr.mxu0 0.0
      %4114 = vmatpush1.msra.mxu0 0.0
      %4115 = vmatprep.subr.mxu0 0.0
      %4116 = vmatpush1.msra.mxu0 0.0
      %4117 = vmatprep.subr.mxu0 0.0
      %4118 = vmatpush1.msra.mxu0 0.0
      %4119 = vmatprep.subr.mxu0 0.0
      %4120 = vmatpush1.msra.mxu0 0.0
      %4121 = vmatprep.subr.mxu0 0.0
      %4122 = vmatpush1.msra.mxu0 0.0
      %4123 = vmatprep.subr.mxu0 0.0
      %4124 = vmatpush1.msra.mxu0 0.0
      %4125 = vmatprep.subr.mxu0 0.0
      %4126 = vmatpush1.msra.mxu0 0.0
      %4127 = vmatprep.subr.mxu0 0.0
      %4128 = vmatpush1.msra.mxu0 0.0
      %4129 = vmatprep.subr.mxu0 0.0
      %4130 = vmatpush1.msra.mxu0 0.0
      %4131 = vmatprep.subr.mxu0 0.0
      %4132 = vmatpush1.msra.mxu0 0.0
      %4133 = vmatprep.subr.mxu0 0.0
      %4134 = vmatpush1.msra.mxu0 0.0
      %4135 = vmatprep.subr.mxu0 0.0
      %4136 = vmatpush1.msra.mxu0 0.0
      %4137 = vmatprep.subr.mxu0 0.0
      %4138 = vmatpush1.msra.mxu0 0.0
      %4139 = vmatprep.subr.mxu0 0.0
      %4140 = vmatpush1.msra.mxu0 0.0
      %4141 = vmatprep.subr.mxu0 0.0
      %4142 = vmatpush1.msra.mxu0 0.0
      %4143 = vmatprep.subr.mxu0 0.0
      %4144 = vmatpush1.msra.mxu0 0.0
      %4145 = vmatprep.subr.mxu0 0.0
      %4146 = vmatpush1.msra.mxu0 0.0
      %4147 = vmatprep.subr.mxu0 0.0
      %4148 = vmatpush1.msra.mxu0 0.0
      %4149 = vmatprep.subr.mxu0 0.0
      %4150 = vmatpush1.msra.mxu0 0.0
      %4151 = vmatprep.subr.mxu0 0.0
      %4152 = vmatpush1.msra.mxu0 0.0
      %4153 = vmatprep.subr.mxu0 0.0
      %4154 = vmatpush1.msra.mxu0 0.0
      %4155 = vmatprep.subr.mxu0 0.0
      %4156 = vmatpush1.msra.mxu0 0.0
      %4157 = vmatprep.subr.mxu0 0.0
      %4158 = vmatpush1.msra.mxu0 0.0
      %4159 = vmatprep.subr.mxu0 0.0
      %4160 = vmatpush1.msra.mxu0 0.0
      %4161 = vmatprep.subr.mxu0 0.0
      %4162 = vmatpush1.msra.mxu0 0.0
      %4163 = vmatprep.subr.mxu0 0.0
      %4164 = vmatpush1.msra.mxu0 0.0
      %4165 = vmatprep.subr.mxu0 0.0
      %4166 = vmatpush1.msra.mxu0 0.0
      %4167 = vmatprep.subr.mxu0 0.0
      %4168 = vmatpush1.msra.mxu0 0.0
      %4169 = vmatprep.subr.mxu0 0.0
      %4170 = vmatpush1.msra.mxu0 0.0
      %4171 = vmatprep.subr.mxu0 0.0
      %4172 = vmatpush1.msra.mxu0 0.0
      %4173 = vmatprep.subr.mxu0 0.0
      %4174 = vmatpush1.msra.mxu0 0.0
      %4175 = vmatprep.mubr.f32.mxu0 0.0
      %4176 = vmatmul.mubr.f32.gmra.mrb[0].mxu0 %v4106
      %v4177 = vpop.f32.mrb[0].mxu0
      %v4178 = vadd.f32 %v4097, %v4177
      %v4179 = vpop.f32.mrb[0].mxu0
      %4180 = vmatprep.mubr.f32.mxu0 0.0
      %4181 = vmatmul.mubr.f32.gmra.mrb[0].mxu0 %v4109
      %v4182 = vpop.f32.mrb[0].mxu0
      %v4183 = vadd.f32 %v4102, %v4182
      %v4184 = vpop.f32.mrb[0].mxu0
      %4185 = vdwg.mxu0
      %v4187 = vlaneseq
      %v4188 = vshrl.u32 %v4187, 7
      %v4189 = vsub.s32 0, %v4188
      %v4190 = vrot.slane %v3938, %v4189
      %v4192 = vadd.f32 %v4178, %v4190
      %v4193 = vadd.f32 %v4183, %v4190
      %v4194 = vmax.f32 %v4192, 0.0
      %v4195 = vmax.f32 %v4193, 0.0
      %v4196 = vld [vmem:[%s59] sm:$0xff]
      %v4197 = vld [vmem:[%s59 + $0x8] sm:$0xff]
      %v4198 = vld [vmem:[%s57] sm:$0x1]
      %4199 = vmatprep.subr.mxu0 0.0
      %4200 = vmatpush1.msra.mxu0 %v4194
      %4201 = vmatprep.subr.mxu0 0.0
      %4202 = vmatpush1.msra.mxu0 %v4195
      %4203 = vmatprep.subr.mxu0 0.0
      %4204 = vmatpush1.msra.mxu0 0.0
      %4205 = vmatprep.subr.mxu0 0.0
      %4206 = vmatpush1.msra.mxu0 0.0
      %4207 = vmatprep.subr.mxu0 0.0
      %4208 = vmatpush1.msra.mxu0 0.0
      %4209 = vmatprep.subr.mxu0 0.0
      %4210 = vmatpush1.msra.mxu0 0.0
      %4211 = vmatprep.subr.mxu0 0.0
      %4212 = vmatpush1.msra.mxu0 0.0
      %4213 = vmatprep.subr.mxu0 0.0
      %4214 = vmatpush1.msra.mxu0 0.0
      %4215 = vmatprep.subr.mxu0 0.0
      %4216 = vmatpush1.msra.mxu0 0.0
      %4217 = vmatprep.subr.mxu0 0.0
      %4218 = vmatpush1.msra.mxu0 0.0
      %4219 = vmatprep.subr.mxu0 0.0
      %4220 = vmatpush1.msra.mxu0 0.0
      %4221 = vmatprep.subr.mxu0 0.0
      %4222 = vmatpush1.msra.mxu0 0.0
      %4223 = vmatprep.subr.mxu0 0.0
      %4224 = vmatpush1.msra.mxu0 0.0
      %4225 = vmatprep.subr.mxu0 0.0
      %4226 = vmatpush1.msra.mxu0 0.0
      %4227 = vmatprep.subr.mxu0 0.0
      %4228 = vmatpush1.msra.mxu0 0.0
      %4229 = vmatprep.subr.mxu0 0.0
      %4230 = vmatpush1.msra.mxu0 0.0
      %4231 = vmatprep.subr.mxu0 0.0
      %4232 = vmatpush1.msra.mxu0 0.0
      %4233 = vmatprep.subr.mxu0 0.0
      %4234 = vmatpush1.msra.mxu0 0.0
      %4235 = vmatprep.subr.mxu0 0.0
      %4236 = vmatpush1.msra.mxu0 0.0
      %4237 = vmatprep.subr.mxu0 0.0
      %4238 = vmatpush1.msra.mxu0 0.0
      %4239 = vmatprep.subr.mxu0 0.0
      %4240 = vmatpush1.msra.mxu0 0.0
      %4241 = vmatprep.subr.mxu0 0.0
      %4242 = vmatpush1.msra.mxu0 0.0
      %4243 = vmatprep.subr.mxu0 0.0
      %4244 = vmatpush1.msra.mxu0 0.0
      %4245 = vmatprep.subr.mxu0 0.0
      %4246 = vmatpush1.msra.mxu0 0.0
      %4247 = vmatprep.subr.mxu0 0.0
      %4248 = vmatpush1.msra.mxu0 0.0
      %4249 = vmatprep.subr.mxu0 0.0
      %4250 = vmatpush1.msra.mxu0 0.0
      %4251 = vmatprep.subr.mxu0 0.0
      %4252 = vmatpush1.msra.mxu0 0.0
      %4253 = vmatprep.subr.mxu0 0.0
      %4254 = vmatpush1.msra.mxu0 0.0
      %4255 = vmatprep.subr.mxu0 0.0
      %4256 = vmatpush1.msra.mxu0 0.0
      %4257 = vmatprep.subr.mxu0 0.0
      %4258 = vmatpush1.msra.mxu0 0.0
      %4259 = vmatprep.subr.mxu0 0.0
      %4260 = vmatpush1.msra.mxu0 0.0
      %4261 = vmatprep.subr.mxu0 0.0
      %4262 = vmatpush1.msra.mxu0 0.0
      %4263 = vmatprep.mubr.f32.mxu0 0.0
      %4264 = vmatmul.mubr.f32.gmra.mrb[0].mxu0 %v961
      %v4265 = vpop.f32.mrb[0].mxu0
      %v4266 = vadd.f32 0.0, %v4265
      %v4267 = vpop.f32.mrb[0].mxu0
      %4268 = vmatprep.mubr.f32.mxu0 0.0
      %4269 = vmatmul.mubr.f32.gmra.mrb[0].mxu0 %v964
      %v4270 = vpop.f32.mrb[0].mxu0
      %v4271 = vadd.f32 0.0, %v4270
      %v4272 = vpop.f32.mrb[0].mxu0
      %4273 = vmatprep.mubr.f32.mxu0 0.0
      %4274 = vmatmul.mubr.f32.gmra.mrb[0].mxu0 %v967
      %v4275 = vpop.f32.mrb[0].mxu0
      %v4276 = vadd.f32 0.0, %v4275
      %v4277 = vpop.f32.mrb[0].mxu0
      %4278 = vmatprep.mubr.f32.mxu0 0.0
      %4279 = vmatmul.mubr.f32.gmra.mrb[0].mxu0 %v970
      %v4280 = vpop.f32.mrb[0].mxu0
      %v4281 = vadd.f32 0.0, %v4280
      %v4282 = vpop.f32.mrb[0].mxu0
      %4283 = vdwg.mxu0
      %v4285 = vsel %vm1325, %v4276, 0
      %v4288 = vsel %vm1325, %v4281, 0
      %4290 = vmatprep.subr.mxu0 0.0
      %4291 = vmatpush1.msra.mxu0 %v4197
      %4292 = vmatprep.subr.mxu0 0.0
      %4293 = vmatpush1.msra.mxu0 0.0
      %4294 = vmatprep.subr.mxu0 0.0
      %4295 = vmatpush1.msra.mxu0 0.0
      %4296 = vmatprep.subr.mxu0 0.0
      %4297 = vmatpush1.msra.mxu0 0.0
      %4298 = vmatprep.subr.mxu0 0.0
      %4299 = vmatpush1.msra.mxu0 0.0
      %4300 = vmatprep.subr.mxu0 0.0
      %4301 = vmatpush1.msra.mxu0 0.0
      %4302 = vmatprep.subr.mxu0 0.0
      %4303 = vmatpush1.msra.mxu0 0.0
      %4304 = vmatprep.subr.mxu0 0.0
      %4305 = vmatpush1.msra.mxu0 0.0
      %4306 = vmatprep.subr.mxu0 0.0
      %4307 = vmatpush1.msra.mxu0 0.0
      %4308 = vmatprep.subr.mxu0 0.0
      %4309 = vmatpush1.msra.mxu0 0.0
      %4310 = vmatprep.subr.mxu0 0.0
      %4311 = vmatpush1.msra.mxu0 0.0
      %4312 = vmatprep.subr.mxu0 0.0
      %4313 = vmatpush1.msra.mxu0 0.0
      %4314 = vmatprep.subr.mxu0 0.0
      %4315 = vmatpush1.msra.mxu0 0.0
      %4316 = vmatprep.subr.mxu0 0.0
      %4317 = vmatpush1.msra.mxu0 0.0
      %4318 = vmatprep.subr.mxu0 0.0
      %4319 = vmatpush1.msra.mxu0 0.0
      %4320 = vmatprep.subr.mxu0 0.0
      %4321 = vmatpush1.msra.mxu0 0.0
      %4322 = vmatprep.subr.mxu0 0.0
      %4323 = vmatpush1.msra.mxu0 0.0
      %4324 = vmatprep.subr.mxu0 0.0
      %4325 = vmatpush1.msra.mxu0 0.0
      %4326 = vmatprep.subr.mxu0 0.0
      %4327 = vmatpush1.msra.mxu0 0.0
      %4328 = vmatprep.subr.mxu0 0.0
      %4329 = vmatpush1.msra.mxu0 0.0
      %4330 = vmatprep.subr.mxu0 0.0
      %4331 = vmatpush1.msra.mxu0 0.0
      %4332 = vmatprep.subr.mxu0 0.0
      %4333 = vmatpush1.msra.mxu0 0.0
      %4334 = vmatprep.subr.mxu0 0.0
      %4335 = vmatpush1.msra.mxu0 0.0
      %4336 = vmatprep.subr.mxu0 0.0
      %4337 = vmatpush1.msra.mxu0 0.0
      %4338 = vmatprep.subr.mxu0 0.0
      %4339 = vmatpush1.msra.mxu0 0.0
      %4340 = vmatprep.subr.mxu0 0.0
      %4341 = vmatpush1.msra.mxu0 0.0
      %4342 = vmatprep.subr.mxu0 0.0
      %4343 = vmatpush1.msra.mxu0 0.0
      %4344 = vmatprep.subr.mxu0 0.0
      %4345 = vmatpush1.msra.mxu0 0.0
      %4346 = vmatprep.subr.mxu0 0.0
      %4347 = vmatpush1.msra.mxu0 0.0
      %4348 = vmatprep.subr.mxu0 0.0
      %4349 = vmatpush1.msra.mxu0 0.0
      %4350 = vmatprep.subr.mxu0 0.0
      %4351 = vmatpush1.msra.mxu0 0.0
      %4352 = vmatprep.subr.mxu0 0.0
      %4353 = vmatpush1.msra.mxu0 0.0
      %4354 = vmatprep.mubr.f32.mxu0 0.0
      %4355 = vmatmul.mubr.f32.gmra.mrb[0].mxu0 %v4285
      %v4356 = vpop.f32.mrb[0].mxu0
      %v4357 = vadd.f32 0.0, %v4356
      %v4358 = vpop.f32.mrb[0].mxu0
      %4359 = vmatprep.mubr.f32.mxu0 0.0
      %4360 = vmatmul.mubr.f32.gmra.mrb[0].mxu0 %v4288
      %v4361 = vpop.f32.mrb[0].mxu0
      %v4362 = vadd.f32 0.0, %v4361
      %v4363 = vpop.f32.mrb[0].mxu0
      %4364 = vdwg.mxu0
      %v4366 = vsel %vm1325, %v4266, 0
      %v4369 = vsel %vm1325, %v4271, 0
      %4371 = vmatprep.subr.mxu0 0.0
      %4372 = vmatpush1.msra.mxu0 %v4196
      %4373 = vmatprep.subr.mxu0 0.0
      %4374 = vmatpush1.msra.mxu0 0.0
      %4375 = vmatprep.subr.mxu0 0.0
      %4376 = vmatpush1.msra.mxu0 0.0
      %4377 = vmatprep.subr.mxu0 0.0
      %4378 = vmatpush1.msra.mxu0 0.0
      %4379 = vmatprep.subr.mxu0 0.0
      %4380 = vmatpush1.msra.mxu0 0.0
      %4381 = vmatprep.subr.mxu0 0.0
      %4382 = vmatpush1.msra.mxu0 0.0
      %4383 = vmatprep.subr.mxu0 0.0
      %4384 = vmatpush1.msra.mxu0 0.0
      %4385 = vmatprep.subr.mxu0 0.0
      %4386 = vmatpush1.msra.mxu0 0.0
      %4387 = vmatprep.subr.mxu0 0.0
      %4388 = vmatpush1.msra.mxu0 0.0
      %4389 = vmatprep.subr.mxu0 0.0
      %4390 = vmatpush1.msra.mxu0 0.0
      %4391 = vmatprep.subr.mxu0 0.0
      %4392 = vmatpush1.msra.mxu0 0.0
      %4393 = vmatprep.subr.mxu0 0.0
      %4394 = vmatpush1.msra.mxu0 0.0
      %4395 = vmatprep.subr.mxu0 0.0
      %4396 = vmatpush1.msra.mxu0 0.0
      %4397 = vmatprep.subr.mxu0 0.0
      %4398 = vmatpush1.msra.mxu0 0.0
      %4399 = vmatprep.subr.mxu0 0.0
      %4400 = vmatpush1.msra.mxu0 0.0
      %4401 = vmatprep.subr.mxu0 0.0
      %4402 = vmatpush1.msra.mxu0 0.0
      %4403 = vmatprep.subr.mxu0 0.0
      %4404 = vmatpush1.msra.mxu0 0.0
      %4405 = vmatprep.subr.mxu0 0.0
      %4406 = vmatpush1.msra.mxu0 0.0
      %4407 = vmatprep.subr.mxu0 0.0
      %4408 = vmatpush1.msra.mxu0 0.0
      %4409 = vmatprep.subr.mxu0 0.0
      %4410 = vmatpush1.msra.mxu0 0.0
      %4411 = vmatprep.subr.mxu0 0.0
      %4412 = vmatpush1.msra.mxu0 0.0
      %4413 = vmatprep.subr.mxu0 0.0
      %4414 = vmatpush1.msra.mxu0 0.0
      %4415 = vmatprep.subr.mxu0 0.0
      %4416 = vmatpush1.msra.mxu0 0.0
      %4417 = vmatprep.subr.mxu0 0.0
      %4418 = vmatpush1.msra.mxu0 0.0
      %4419 = vmatprep.subr.mxu0 0.0
      %4420 = vmatpush1.msra.mxu0 0.0
      %4421 = vmatprep.subr.mxu0 0.0
      %4422 = vmatpush1.msra.mxu0 0.0
      %4423 = vmatprep.subr.mxu0 0.0
      %4424 = vmatpush1.msra.mxu0 0.0
      %4425 = vmatprep.subr.mxu0 0.0
      %4426 = vmatpush1.msra.mxu0 0.0
      %4427 = vmatprep.subr.mxu0 0.0
      %4428 = vmatpush1.msra.mxu0 0.0
      %4429 = vmatprep.subr.mxu0 0.0
      %4430 = vmatpush1.msra.mxu0 0.0
      %4431 = vmatprep.subr.mxu0 0.0
      %4432 = vmatpush1.msra.mxu0 0.0
      %4433 = vmatprep.subr.mxu0 0.0
      %4434 = vmatpush1.msra.mxu0 0.0
      %4435 = vmatprep.mubr.f32.mxu0 0.0
      %4436 = vmatmul.mubr.f32.gmra.mrb[0].mxu0 %v4366
      %v4437 = vpop.f32.mrb[0].mxu0
      %v4438 = vadd.f32 %v4357, %v4437
      %v4439 = vpop.f32.mrb[0].mxu0
      %4440 = vmatprep.mubr.f32.mxu0 0.0
      %4441 = vmatmul.mubr.f32.gmra.mrb[0].mxu0 %v4369
      %v4442 = vpop.f32.mrb[0].mxu0
      %v4443 = vadd.f32 %v4362, %v4442
      %v4444 = vpop.f32.mrb[0].mxu0
      %4445 = vdwg.mxu0
      %v4447 = vlaneseq
      %v4448 = vshrl.u32 %v4447, 7
      %v4449 = vsub.s32 0, %v4448
      %v4450 = vrot.slane %v4198, %v4449
      %v4452 = vadd.f32 %v4438, %v4450
      %v4453 = vadd.f32 %v4443, %v4450
      %v4454 = vadd.f32 %v4452, %v3668
      %v4455 = vadd.f32 %v4453, %v3669
      %v4456 = vmax.f32 %v4454, 0.0
      %v4457 = vmax.f32 %v4455, 0.0
      %4458 = vst.msk [vmem:[%s950] sm:$0xff] %vm2020, %v4456
      %4459 = vst.msk [vmem:[%s950 + $0x8] sm:$0xff] %vm2020, %v4457
      %p4460 = scmp.lt.s32.totalorder %s72, 1
      %s4461 = scalar_select %p4460, %s72, 1
      %s4462 = smul.addr %s4461, 2
      %s4463 = smul.addr %s4462, 8
      %s4464 = scalar_lea.vmem %s61, %s4463
      // Predicated region
      $region141: #{residual_graph_lstm_forward.3} parent=139 // pred_check
        %p4465 = pneg %p730
      $region142: #{residual_graph_lstm_forward.3} parent=139 // pred_check_branch
        %4467 = sbr.rel (%p4465) target = $region144
      $region143: #{residual_graph_lstm_forward.3} parent=139 // pred_region
        _
      $region144: #{residual_graph_lstm_forward.3} parent=139 // pred_fallthru
        _
    $region140: #{residual_graph_lstm_forward.3} parent=5 // pred_fallthru
      _
    %p4468 = scmp.le.s32.totalorder 2, %s67
    // Predicated region
    $region145: #{residual_graph_lstm_forward.3} parent=5 // pred_check
      %p4469 = pneg %p4468
    $region146: #{residual_graph_lstm_forward.3} parent=5 // pred_check_branch
      %4471 = sbr.rel (%p4469) target = $region148
    $region147: #{residual_graph_lstm_forward.3} parent=5 // pred_region
      %s4472 = ssub.s32 %s67, 2
      // Predicated region
      $region149: #{residual_graph_lstm_forward.3} parent=147 // pred_check
        %p4473 = pneg %p736
      $region150: #{residual_graph_lstm_forward.3} parent=147 // pred_check_branch
        %4475 = sbr.rel (%p4473) target = $region152
      $region151: #{residual_graph_lstm_forward.3} parent=147 // pred_region
        %p4476 = scmp.lt.s32.totalorder %s73, 1
        %s4477 = scalar_select %p4476, %s73, 1
        %s4478 = smul.addr %s4477, 2
        %s4479 = smul.addr %s4478, 8
        %s4480 = scalar_lea.vmem %s61, %s4479
      $region152: #{residual_graph_lstm_forward.3} parent=147 // pred_fallthru
        _
    $region148: #{residual_graph_lstm_forward.3} parent=5 // pred_fallthru
      _
  $region6: #{residual_graph_lstm_forward.3} parent=0 // loop_footer
    %s71 = sadd.s32 1, %s67
  $region7: #{residual_graph_lstm_forward.3} parent=0 // loop_footer_branch
    %66 = sbr.rel target = $region3
  $region8: #{residual_graph_lstm_forward.3} parent=0 // loop_exit
    _

</llo_original>
